<compile_context>
chip_gen: v7x
topology: tpu7x:2x2x1
jax: 0.10.0
libtpu: 0.0.40
codegen_flags: <defaults>
</compile_context>

<pallas_src>
import functools
import math

import numpy as np
import jax
import jax.numpy as jnp
from jax.experimental import pallas as pl
from jax.experimental.pallas import tpu as pltpu

PAD_IDX, BOS_IDX, EOS_IDX, UNK_IDX = 0, 1, 2, 3
NEG_MASK = -1e9                       # large finite negative (avoids -inf NaN hazards)

# ---------------- configuration (small, deterministic) ----------------
EMBED_DIM = 32
NB_HEADS = 4
SRC_HID = 64
TRG_HID = 64
SRC_NB_LAYERS = 2
TRG_NB_LAYERS = 2
SRC_VOCAB = 20
TRG_VOCAB = 18
VPAD = 128                            # lane-dense padded target-vocab width
EMBED_SCALE = math.sqrt(EMBED_DIM)


# ---------------- in-kernel helpers (traced inside Pallas kernels) ----------------

def _layer_norm(x, g, b):
    mu = jnp.mean(x, axis=-1, keepdims=True)
    xc = x - mu
    var = jnp.mean(xc * xc, axis=-1, keepdims=True)
    return xc * jax.lax.rsqrt(var + 1e-5) * g + b


def _softmax_rows(s):
    s = s - jnp.max(s, axis=-1, keepdims=True)
    e = jnp.exp(s)
    return e * pl.reciprocal(jnp.sum(e, axis=-1, keepdims=True), approx=True)


def _attn_core(q, k, v, wo, bo, mask, nheads, want_avg):
    """Multi-head attention on one batch slab.

    q: [Tq, D]; k, v: [Tk, D]; wo: [D, D]; bo: [1, D];
    mask: additive, broadcastable to [Tq, Tk].
    """
    _, D = q.shape
    Dh = D // nheads
    scale = 1.0 / math.sqrt(Dh)
    heads = []
    p_sum = None
    for h in range(nheads):
        lo, hi = h * Dh, (h + 1) * Dh
        s = jax.lax.dot_general(q[:, lo:hi], k[:, lo:hi],
                                (((1,), (1,)), ((), ())),
                                preferred_element_type=jnp.float32) * scale
        p = _softmax_rows(s + mask)
        heads.append(jnp.dot(p, v[:, lo:hi], preferred_element_type=jnp.float32))
        if want_avg:
            p_sum = p if p_sum is None else p_sum + p
    ctx = jnp.concatenate(heads, axis=-1)                                # [Tq, D]
    out = jnp.dot(ctx, wo, preferred_element_type=jnp.float32) + bo      # one [D,D] proj
    avg = p_sum * (1.0 / nheads) if want_avg else None
    return out, avg


def _self_attention(x_n, wqkv, bqkv, wo, bo, mask, nheads):
    D = x_n.shape[-1]
    qkv = jnp.dot(x_n, wqkv, preferred_element_type=jnp.float32) + bqkv   # one [D,3D] proj
    out, _ = _attn_core(qkv[:, :D], qkv[:, D:2 * D], qkv[:, 2 * D:],
                        wo, bo, mask, nheads, want_avg=False)
    return out


def _cross_attention(x_n, mem, wq, bq, wkv, bkv, wo, bo, mask, nheads):
    D = x_n.shape[-1]
    q = jnp.dot(x_n, wq, preferred_element_type=jnp.float32) + bq         # [Tq, D]
    kv = jnp.dot(mem, wkv, preferred_element_type=jnp.float32) + bkv      # [Tk, 2D]
    return _attn_core(q, kv[:, :D], kv[:, D:], wo, bo, mask, nheads, want_avg=True)


# ---------------- fused encoder kernel: grid = (B, n_layers) ----------------

def _encoder_kernel(x_ref, pad_ref,
                    ln1g, ln1b, wqkv, bqkv, wo, bo,
                    ln2g, ln2b, w1, b1, w2, b2,
                    fing, finb,
                    o_ref, *, nheads, n_layers):
    l = pl.program_id(1)

    @pl.when(l == 0)
    def _():
        o_ref[0] = x_ref[0]                       # initialize the resident carry

    x = o_ref[0]                                  # [Ts, D]
    mask = pad_ref[0]                             # [1, Ts] additive key-padding mask

    h = _layer_norm(x, ln1g[0], ln1b[0])
    x = x + _self_attention(h, wqkv[0], bqkv[0], wo[0], bo[0], mask, nheads)

    h = _layer_norm(x, ln2g[0], ln2b[0])
    h = jnp.maximum(jnp.dot(h, w1[0], preferred_element_type=jnp.float32) + b1[0], 0.0)
    h = jnp.dot(h, w2[0], preferred_element_type=jnp.float32) + b2[0]
    x = x + h

    o_ref[0] = x                                  # carry for the next layer

    @pl.when(l == n_layers - 1)
    def _():
        o_ref[0] = _layer_norm(x, fing[...], finb[...])   # encoder stack final norm


def encoder_pallas(src_x, src_pad, params):
    B, Ts, D = src_x.shape
    L = SRC_NB_LAYERS
    ep = params['enc']
    b3 = lambda b, l: (b, 0, 0)
    w3 = lambda b, l: (l, 0, 0)
    c2 = lambda b, l: (0, 0)
    kern = functools.partial(_encoder_kernel, nheads=NB_HEADS, n_layers=L)
    return pl.pallas_call(
        kern,
        grid=(B, L),
        in_specs=[
            pl.BlockSpec((1, Ts, D), b3),             # x (read at l==0 only)
            pl.BlockSpec((1, 1, Ts), b3),             # additive pad mask
            pl.BlockSpec((1, 1, D), w3), pl.BlockSpec((1, 1, D), w3),        # ln1
            pl.BlockSpec((1, D, 3 * D), w3), pl.BlockSpec((1, 1, 3 * D), w3),  # wqkv
            pl.BlockSpec((1, D, D), w3), pl.BlockSpec((1, 1, D), w3),        # wo
            pl.BlockSpec((1, 1, D), w3), pl.BlockSpec((1, 1, D), w3),        # ln2
            pl.BlockSpec((1, D, SRC_HID), w3), pl.BlockSpec((1, 1, SRC_HID), w3),  # ffn1
            pl.BlockSpec((1, SRC_HID, D), w3), pl.BlockSpec((1, 1, D), w3),        # ffn2
            pl.BlockSpec((1, D), c2), pl.BlockSpec((1, D), c2),              # final norm
        ],
        out_specs=pl.BlockSpec((1, Ts, D), b3),
        out_shape=jax.ShapeDtypeStruct((B, Ts, D), jnp.float32),
        compiler_params=pltpu.CompilerParams(
            dimension_semantics=("parallel", "arbitrary")),
    )(src_x, src_pad,
      ep['ln1_g'], ep['ln1_b'], ep['wqkv'], ep['bqkv'], ep['wo'], ep['bo'],
      ep['ln2_g'], ep['ln2_b'], ep['w1'], ep['b1'], ep['w2'], ep['b2'],
      params['enc_norm_g'], params['enc_norm_b'])


# -------- fused decoder + pointer-generator kernel: grid = (B, n_layers) --------

def _decoder_kernel(x_ref, mem_ref, tpad_ref, spad_ref, ids_ref,
                    ln1g, ln1b, swqkv, sbqkv, swo, sbo,
                    ln2g, ln2b, cwq, cbq, cwkv, cbkv, cwo, cbo,
                    ln3g, ln3b, w1, b1, w2, b2,
                    dng, dnb, pvw, pvb, wgc, wgd, wge, pgb,
                    o_ref, carry, *, nheads, n_layers, trg_vocab):
    l = pl.program_id(1)
    Tt = x_ref.shape[1]
    Ts = mem_ref.shape[1]
    vpad = pvw.shape[-1]

    @pl.when(l == 0)
    def _():
        carry[...] = x_ref[0]

    x = carry[...]                                # [Tt, D]
    mem = mem_ref[0]                              # [Ts, D]

    # masks built in-kernel (no [B,Tq,Tk] HBM tensors)
    rows = jax.lax.broadcasted_iota(jnp.int32, (Tt, Tt), 0)
    cols = jax.lax.broadcasted_iota(jnp.int32, (Tt, Tt), 1)
    causal = jnp.where(rows >= cols, 0.0, NEG_MASK)
    self_mask = causal + tpad_ref[0]              # [Tt, Tt] + [1, Tt]
    cross_mask = spad_ref[0]                      # [1, Ts]

    # self-attention
    h = _layer_norm(x, ln1g[0], ln1b[0])
    x = x + _self_attention(h, swqkv[0], sbqkv[0], swo[0], sbo[0], self_mask, nheads)

    # cross-attention (head-averaged weights kept as a value; never written to HBM)
    h = _layer_norm(x, ln2g[0], ln2b[0])
    ca_out, attn_avg = _cross_attention(h, mem, cwq[0], cbq[0], cwkv[0], cbkv[0],
                                        cwo[0], cbo[0], cross_mask, nheads)
    x = x + ca_out

    # feed-forward
    h = _layer_norm(x, ln3g[0], ln3b[0])
    h = jnp.maximum(jnp.dot(h, w1[0], preferred_element_type=jnp.float32) + b1[0], 0.0)
    h = jnp.dot(h, w2[0], preferred_element_type=jnp.float32) + b2[0]
    x = x + h
    carry[...] = x

    # ---- pointer-generator head, fused into the final layer iteration ----
    @pl.when(l == n_layers - 1)
    def _():
        dec_n = _layer_norm(x, dng[...], dnb[...])                         # stack final norm
        logits = jnp.dot(dec_n, pvw[...], preferred_element_type=jnp.float32) + pvb[...]
        p_vocab = _softmax_rows(logits)                                    # [Tt, VPAD]
        ctx = jnp.dot(attn_avg, mem, preferred_element_type=jnp.float32)   # [Tt, D]
        # copy distribution via in-kernel iota-compare one-hot over the padded vocab
        vcols = jax.lax.broadcasted_iota(jnp.int32, (Ts, vpad), 1)
        onehot = (ids_ref[0] == vcols).astype(jnp.float32)                 # [Ts, VPAD]
        p_copy = jnp.dot(attn_avg, onehot, preferred_element_type=jnp.float32)
        emb = x_ref[0]                                                     # target embedding
        g = (jnp.sum(ctx * wgc[...], axis=-1, keepdims=True)
             + jnp.sum(dec_n * wgd[...], axis=-1, keepdims=True)
             + jnp.sum(emb * wge[...], axis=-1, keepdims=True)
             + pgb[...])
        p_gen = 1.0 / (1.0 + jnp.exp(-g))                                  # exact sigmoid
        p = p_vocab * p_gen + p_copy * (1.0 - p_gen)
        lane = jax.lax.broadcasted_iota(jnp.int32, (Tt, vpad), 1)
        o_ref[0] = jnp.where(lane < trg_vocab, jnp.log(p), 0.0)            # no -inf in pad lanes


def decoder_pallas(trg_x, enc, trg_pad, src_pad, tgt_ids, params):
    B, Tt, D = trg_x.shape
    Ts = enc.shape[1]
    L = TRG_NB_LAYERS
    dp = params['dec']
    b3 = lambda b, l: (b, 0, 0)
    w3 = lambda b, l: (l, 0, 0)
    c2 = lambda b, l: (0, 0)
    kern = functools.partial(_decoder_kernel, nheads=NB_HEADS, n_layers=L,
                             trg_vocab=TRG_VOCAB)
    return pl.pallas_call(
        kern,
        grid=(B, L),
        in_specs=[
            pl.BlockSpec((1, Tt, D), b3),             # trg embeddings (layer-0 input + p_gen)
            pl.BlockSpec((1, Ts, D), b3),             # encoder memory
            pl.BlockSpec((1, 1, Tt), b3),             # trg additive pad mask
            pl.BlockSpec((1, 1, Ts), b3),             # src additive pad mask
            pl.BlockSpec((1, Ts, 1), b3),             # conv_ids[src] (int32)
            pl.BlockSpec((1, 1, D), w3), pl.BlockSpec((1, 1, D), w3),          # ln1
            pl.BlockSpec((1, D, 3 * D), w3), pl.BlockSpec((1, 1, 3 * D), w3),  # self wqkv
            pl.BlockSpec((1, D, D), w3), pl.BlockSpec((1, 1, D), w3),          # self wo
            pl.BlockSpec((1, 1, D), w3), pl.BlockSpec((1, 1, D), w3),          # ln2
            pl.BlockSpec((1, D, D), w3), pl.BlockSpec((1, 1, D), w3),          # cross wq
            pl.BlockSpec((1, D, 2 * D), w3), pl.BlockSpec((1, 1, 2 * D), w3),  # cross wkv
            pl.BlockSpec((1, D, D), w3), pl.BlockSpec((1, 1, D), w3),          # cross wo
            pl.BlockSpec((1, 1, D), w3), pl.BlockSpec((1, 1, D), w3),          # ln3
            pl.BlockSpec((1, D, TRG_HID), w3), pl.BlockSpec((1, 1, TRG_HID), w3),  # ffn1
            pl.BlockSpec((1, TRG_HID, D), w3), pl.BlockSpec((1, 1, D), w3),        # ffn2
            pl.BlockSpec((1, D), c2), pl.BlockSpec((1, D), c2),                # dec final norm
            pl.BlockSpec((D, VPAD), c2), pl.BlockSpec((1, VPAD), c2),          # p_vocab
            pl.BlockSpec((1, D), c2), pl.BlockSpec((1, D), c2),                # p_gen w (ctx,dec)
            pl.BlockSpec((1, D), c2), pl.BlockSpec((1, 1), c2),                # p_gen w (emb), b
        ],
        out_specs=pl.BlockSpec((1, Tt, VPAD), b3),
        out_shape=jax.ShapeDtypeStruct((B, Tt, VPAD), jnp.float32),
        scratch_shapes=[pltpu.VMEM((Tt, D), jnp.float32)],
        compiler_params=pltpu.CompilerParams(
            dimension_semantics=("parallel", "arbitrary")),
    )(trg_x, enc, trg_pad, src_pad, tgt_ids,
      dp['ln1_g'], dp['ln1_b'], dp['s_wqkv'], dp['s_bqkv'], dp['s_wo'], dp['s_bo'],
      dp['ln2_g'], dp['ln2_b'], dp['c_wq'], dp['c_bq'], dp['c_wkv'], dp['c_bkv'],
      dp['c_wo'], dp['c_bo'],
      dp['ln3_g'], dp['ln3_b'], dp['w1'], dp['b1'], dp['w2'], dp['b2'],
      params['dec_norm_g'], params['dec_norm_b'],
      params['pv_w_pad'], params['pv_b_pad'],
      params['pg_w_ctx'], params['pg_w_dec'], params['pg_w_emb'], params['pg_b'])


# ---------------- model glue (plain JAX: gathers, embeddings, layout) ----------------

def sinusoidal_embedding(num_embeddings, embedding_dim, padding_idx):
    half_dim = embedding_dim // 2
    emb = math.log(10000) / (half_dim - 1)
    emb = np.exp(np.arange(half_dim, dtype=np.float32) * -emb)
    emb = np.arange(num_embeddings, dtype=np.float32)[:, None] * emb[None, :]
    emb = np.concatenate([np.sin(emb), np.cos(emb)], axis=1).reshape(num_embeddings, -1)
    if embedding_dim % 2 == 1:
        emb = np.concatenate([emb, np.zeros((num_embeddings, 1), np.float32)], axis=1)
    if padding_idx is not None:
        emb[padding_idx, :] = 0
    return jnp.asarray(emb, jnp.float32)


def position_lookup(tokens, pos_table):
    # tokens: [T, B]; matches SinusoidalPositionalEmbedding.forward (cumsum over dim 0)
    mask = (tokens != PAD_IDX).astype(jnp.int32)
    positions = jnp.cumsum(mask, axis=0) * mask + PAD_IDX
    return pos_table[positions]                      # [T, B, D]


def forward(params, src_batch, src_mask, trg_batch, trg_mask):
    """src_batch/trg_batch: [T, B] int32; src_mask/trg_mask: [T, B] float (1=real, 0=pad)."""
    D = EMBED_DIM
    Ts, B = src_batch.shape
    Tt = trg_batch.shape[0]

    # embeddings (gathers stay in XLA)
    src_emb = EMBED_SCALE * params['src_embed'][src_batch] + position_lookup(src_batch, params['pos_table'])
    trg_emb = EMBED_SCALE * params['trg_embed'][trg_batch] + position_lookup(trg_batch, params['pos_table'])
    src_x = src_emb.transpose(1, 0, 2)               # [B, Ts, D]
    trg_x = trg_emb.transpose(1, 0, 2)               # [B, Tt, D]

    # per-key additive pad vectors (masks are expanded in-kernel)
    src_pad = jnp.where(src_mask.T == 0, NEG_MASK, 0.0).astype(jnp.float32)[:, None, :]  # [B,1,Ts]
    trg_pad = jnp.where(trg_mask.T == 0, NEG_MASK, 0.0).astype(jnp.float32)[:, None, :]  # [B,1,Tt]

    # encoder: ONE grid-iterated kernel (batch parallel x layers arbitrary)
    enc = encoder_pallas(src_x, src_pad, params)     # [B, Ts, D]

    # conversion matrix folded into a gather of target ids (one-hot is built in-kernel)
    tgt_ids = params['conv_ids'][src_batch].T[:, :, None].astype(jnp.int32)  # [B, Ts, 1]

    # decoder + pointer-generator head: ONE grid-iterated kernel
    logp = decoder_pallas(trg_x, enc, trg_pad, src_pad, tgt_ids, params)     # [B, Tt, VPAD]
    return logp[:, :, :TRG_VOCAB].transpose(1, 0, 2)                          # [Tt, B, V]


# ---------------- deterministic parameter init ----------------

class KeyGen:
    def __init__(self, key):
        self.key = key

    def __call__(self):
        self.key, sub = jax.random.split(self.key)
        return sub


def xavier(key, shape):
    fan_in, fan_out = shape
    bound = math.sqrt(6.0 / (fan_in + fan_out))
    return jax.random.uniform(key, shape, jnp.float32, -bound, bound)


def _stack_layers(layers):
    return {k: jnp.stack([lay[k] for lay in layers], axis=0) for k in layers[0]}


def init_encoder_params(kg, D, Hff, L):
    def one_layer():
        return dict(
            ln1_g=jnp.ones((1, D), jnp.float32), ln1_b=jnp.zeros((1, D), jnp.float32),
            wqkv=xavier(kg(), (D, 3 * D)), bqkv=jnp.zeros((1, 3 * D), jnp.float32),
            wo=xavier(kg(), (D, D)), bo=jnp.zeros((1, D), jnp.float32),
            ln2_g=jnp.ones((1, D), jnp.float32), ln2_b=jnp.zeros((1, D), jnp.float32),
            w1=xavier(kg(), (D, Hff)), b1=jnp.zeros((1, Hff), jnp.float32),
            w2=xavier(kg(), (Hff, D)), b2=jnp.zeros((1, D), jnp.float32),
        )
    return _stack_layers([one_layer() for _ in range(L)])


def init_decoder_params(kg, D, Hff, L):
    def one_layer():
        return dict(
            ln1_g=jnp.ones((1, D), jnp.float32), ln1_b=jnp.zeros((1, D), jnp.float32),
            s_wqkv=xavier(kg(), (D, 3 * D)), s_bqkv=jnp.zeros((1, 3 * D), jnp.float32),
            s_wo=xavier(kg(), (D, D)), s_bo=jnp.zeros((1, D), jnp.float32),
            ln2_g=jnp.ones((1, D), jnp.float32), ln2_b=jnp.zeros((1, D), jnp.float32),
            c_wq=xavier(kg(), (D, D)), c_bq=jnp.zeros((1, D), jnp.float32),
            c_wkv=xavier(kg(), (D, 2 * D)), c_bkv=jnp.zeros((1, 2 * D), jnp.float32),
            c_wo=xavier(kg(), (D, D)), c_bo=jnp.zeros((1, D), jnp.float32),
            ln3_g=jnp.ones((1, D), jnp.float32), ln3_b=jnp.zeros((1, D), jnp.float32),
            w1=xavier(kg(), (D, Hff)), b1=jnp.zeros((1, Hff), jnp.float32),
            w2=xavier(kg(), (Hff, D)), b2=jnp.zeros((1, D), jnp.float32),
        )
    return _stack_layers([one_layer() for _ in range(L)])


def build_conversion_ids():
    specials = ['<pad>', '<bos>', '<eos>', '<unk>']
    src_chars = list('abcdefghij')                                   # 10
    attr_toks = ['V;PST', 'V;PRS', 'N;SG', 'N;PL', 'ADJ', 'ADV']     # 6 -> src vocab 20
    trg_chars = list('abcdefghijklmn')                               # 14 -> trg vocab 18
    src_c2i = {t: i for i, t in enumerate(specials + src_chars)}
    attr_c2i = {t: i for i, t in enumerate(attr_toks, start=len(specials) + len(src_chars))}
    trg_c2i = {t: i for i, t in enumerate(specials + trg_chars)}
    conv = np.zeros((SRC_VOCAB, TRG_VOCAB), np.float32)
    input_vocab = {**src_c2i, **attr_c2i}
    for tok, sid in input_vocab.items():
        tid = trg_c2i.get(tok, UNK_IDX)
        conv[sid][tid] = 1.0
    # every row has exactly one 1 -> the matmul with conv is a gather of the target id
    return jnp.asarray(np.argmax(conv, axis=1).astype(np.int32))


def init_params(seed=0):
    kg = KeyGen(jax.random.PRNGKey(seed))
    D = EMBED_DIM
    src_embed = jax.random.normal(kg(), (SRC_VOCAB, D), jnp.float32) * (D ** -0.5)
    src_embed = src_embed.at[PAD_IDX].set(0.0)
    trg_embed = jax.random.normal(kg(), (TRG_VOCAB, D), jnp.float32) * (D ** -0.5)
    trg_embed = trg_embed.at[PAD_IDX].set(0.0)

    pv_w = xavier(kg(), (D, TRG_VOCAB))
    pv_w_pad = jnp.zeros((D, VPAD), jnp.float32).at[:, :TRG_VOCAB].set(pv_w)
    pv_b_pad = jnp.full((1, VPAD), NEG_MASK, jnp.float32).at[:, :TRG_VOCAB].set(0.0)
    pg_w = xavier(kg(), (3 * D, 1)).reshape(1, 3 * D)

    return dict(
        src_embed=src_embed, trg_embed=trg_embed,
        pos_table=sinusoidal_embedding(1024, D, PAD_IDX),
        enc=init_encoder_params(kg, D, SRC_HID, SRC_NB_LAYERS),
        enc_norm_g=jnp.ones((1, D), jnp.float32), enc_norm_b=jnp.zeros((1, D), jnp.float32),
        dec=init_decoder_params(kg, D, TRG_HID, TRG_NB_LAYERS),
        dec_norm_g=jnp.ones((1, D), jnp.float32), dec_norm_b=jnp.zeros((1, D), jnp.float32),
        pv_w_pad=pv_w_pad, pv_b_pad=pv_b_pad,
        pg_w_ctx=pg_w[:, :D], pg_w_dec=pg_w[:, D:2 * D], pg_w_emb=pg_w[:, 2 * D:],
        pg_b=jnp.zeros((1, 1), jnp.float32),
        conv_ids=build_conversion_ids(),
    )


# ---------------- main ----------------

if __name__ == "__main__":
    params = init_params(seed=0)

    key = jax.random.PRNGKey(0)
    Ts, Tt, B = 8, 8, 2
    k1, k2 = jax.random.split(key)
    # np.array(...) makes a *writable* host copy
    src_np = np.array(jax.random.randint(k1, (Ts, B), 4, SRC_VOCAB), dtype=np.int32)
    trg_np = np.array(jax.random.randint(k2, (Tt, B), 4, TRG_VOCAB), dtype=np.int32)

    # sequence structure: BOS ... EOS PAD*
    src_lens = [8, 6]
    trg_lens = [7, 8]
    for b in range(B):
        L = src_lens[b]
        src_np[0, b] = BOS_IDX
        src_np[L - 1, b] = EOS_IDX
        src_np[L:, b] = PAD_IDX
        L = trg_lens[b]
        trg_np[0, b] = BOS_IDX
        trg_np[L - 1, b] = EOS_IDX
        trg_np[L:, b] = PAD_IDX

    src_batch = jnp.asarray(src_np)
    trg_batch = jnp.asarray(trg_np)
    src_mask = (src_batch != PAD_IDX).astype(jnp.float32)   # [Ts, B], 1 = real token
    trg_mask = (trg_batch != PAD_IDX).astype(jnp.float32)   # [Tt, B]

    fwd = jax.jit(forward)
    out = jax.block_until_ready(fwd(params, src_batch, src_mask, trg_batch, trg_mask))

    assert out.shape == (Tt, B, TRG_VOCAB)
    assert bool(jnp.all(jnp.isfinite(out)))
    # log-probabilities of the pointer-generator mixture should (almost) normalize
    assert bool(jnp.all(jnp.abs(jnp.exp(out).sum(-1) - 1.0) < 1e-2))
    print("KERNEL_OK")
</pallas_src>

<mosaic_0001>
module attributes {stable_mosaic.version = 11 : i64} {
  func.func @_encoder_kernel(%arg0: i32, %arg1: i32, %arg2: memref<1x8x32xf32, #tpu.memory_space<vmem>>, %arg3: memref<1x1x8xf32, #tpu.memory_space<vmem>>, %arg4: memref<1x1x32xf32, #tpu.memory_space<vmem>>, %arg5: memref<1x1x32xf32, #tpu.memory_space<vmem>>, %arg6: memref<1x32x96xf32, #tpu.memory_space<vmem>>, %arg7: memref<1x1x96xf32, #tpu.memory_space<vmem>>, %arg8: memref<1x32x32xf32, #tpu.memory_space<vmem>>, %arg9: memref<1x1x32xf32, #tpu.memory_space<vmem>>, %arg10: memref<1x1x32xf32, #tpu.memory_space<vmem>>, %arg11: memref<1x1x32xf32, #tpu.memory_space<vmem>>, %arg12: memref<1x32x64xf32, #tpu.memory_space<vmem>>, %arg13: memref<1x1x64xf32, #tpu.memory_space<vmem>>, %arg14: memref<1x64x32xf32, #tpu.memory_space<vmem>>, %arg15: memref<1x1x32xf32, #tpu.memory_space<vmem>>, %arg16: memref<1x32xf32, #tpu.memory_space<vmem>>, %arg17: memref<1x32xf32, #tpu.memory_space<vmem>>, %arg18: memref<1x8x32xf32, #tpu.memory_space<vmem>>) attributes {dimension_semantics = [#tpu.dimension_semantics<parallel>, #tpu.dimension_semantics<arbitrary>], iteration_bounds = array<i64: 2, 2>, scalar_prefetch = 0 : i64, scratch_operands = 0 : i64, tpu.core_type = #tpu.core_type<tc>, window_params = [{transform_indices = @transform_0, window_bounds = array<i64: 1, 8, 32>}, {transform_indices = @transform_1, window_bounds = array<i64: 1, 1, 8>}, {transform_indices = @transform_2, window_bounds = array<i64: 1, 1, 32>}, {transform_indices = @transform_3, window_bounds = array<i64: 1, 1, 32>}, {transform_indices = @transform_4, window_bounds = array<i64: 1, 32, 96>}, {transform_indices = @transform_5, window_bounds = array<i64: 1, 1, 96>}, {transform_indices = @transform_6, window_bounds = array<i64: 1, 32, 32>}, {transform_indices = @transform_7, window_bounds = array<i64: 1, 1, 32>}, {transform_indices = @transform_8, window_bounds = array<i64: 1, 1, 32>}, {transform_indices = @transform_9, window_bounds = array<i64: 1, 1, 32>}, {transform_indices = @transform_10, window_bounds = array<i64: 1, 32, 64>}, {transform_indices = @transform_11, window_bounds = array<i64: 1, 1, 64>}, {transform_indices = @transform_12, window_bounds = array<i64: 1, 64, 32>}, {transform_indices = @transform_13, window_bounds = array<i64: 1, 1, 32>}, {pipeline_mode = #tpu.pipeline_mode<synchronous>, transform_indices = @transform_14, window_bounds = array<i64: 1, 32>}, {pipeline_mode = #tpu.pipeline_mode<synchronous>, transform_indices = @transform_15, window_bounds = array<i64: 1, 32>}, {transform_indices = @transform_16, window_bounds = array<i64: 1, 8, 32>}]} {
    %c0_i32 = arith.constant 0 : i32
    %0 = arith.cmpi eq, %arg1, %c0_i32 : i32
    %1 = arith.extui %0 : i1 to i32
    %c0_i32_0 = arith.constant 0 : i32
    %2 = arith.cmpi ne, %1, %c0_i32_0 : i32
    scf.if %2 {
      %c0_80 = arith.constant 0 : index
      %c0_81 = arith.constant 0 : index
      %c0_82 = arith.constant 0 : index
      %173 = vector.load %arg2[%c0_80, %c0_81, %c0_82] : memref<1x8x32xf32, #tpu.memory_space<vmem>>, vector<1x8x32xf32>
      %174 = vector.shape_cast %173 : vector<1x8x32xf32> to vector<8x32xf32>
      %c0_83 = arith.constant 0 : index
      %c0_84 = arith.constant 0 : index
      %c0_85 = arith.constant 0 : index
      %175 = vector.load %arg18[%c0_83, %c0_84, %c0_85] : memref<1x8x32xf32, #tpu.memory_space<vmem>>, vector<1x8x32xf32>
      %176 = vector.shape_cast %175 : vector<1x8x32xf32> to vector<8x32xf32>
      %177 = vector.shape_cast %174 : vector<8x32xf32> to vector<1x8x32xf32>
      tpu.vector_store %arg18[%c0_83, %c0_84, %c0_85], %177 {strides = array<i32>} : memref<1x8x32xf32, #tpu.memory_space<vmem>>, vector<1x8x32xf32>,
    } else {
    }
    %c0 = arith.constant 0 : index
    %c0_1 = arith.constant 0 : index
    %c0_2 = arith.constant 0 : index
    %3 = vector.load %arg18[%c0, %c0_1, %c0_2] : memref<1x8x32xf32, #tpu.memory_space<vmem>>, vector<1x8x32xf32>
    %4 = vector.shape_cast %3 : vector<1x8x32xf32> to vector<8x32xf32>
    %c0_3 = arith.constant 0 : index
    %c0_4 = arith.constant 0 : index
    %c0_5 = arith.constant 0 : index
    %5 = vector.load %arg3[%c0_3, %c0_4, %c0_5] : memref<1x1x8xf32, #tpu.memory_space<vmem>>, vector<1x1x8xf32>
    %6 = vector.shape_cast %5 : vector<1x1x8xf32> to vector<1x8xf32>
    %c0_6 = arith.constant 0 : index
    %c0_7 = arith.constant 0 : index
    %c0_8 = arith.constant 0 : index
    %7 = vector.load %arg4[%c0_6, %c0_7, %c0_8] : memref<1x1x32xf32, #tpu.memory_space<vmem>>, vector<1x1x32xf32>
    %8 = vector.shape_cast %7 : vector<1x1x32xf32> to vector<1x32xf32>
    %c0_9 = arith.constant 0 : index
    %c0_10 = arith.constant 0 : index
    %c0_11 = arith.constant 0 : index
    %9 = vector.load %arg5[%c0_9, %c0_10, %c0_11] : memref<1x1x32xf32, #tpu.memory_space<vmem>>, vector<1x1x32xf32>
    %10 = vector.shape_cast %9 : vector<1x1x32xf32> to vector<1x32xf32>
    %cst = arith.constant dense<0.000000e+00> : vector<8xf32>
    %11 = vector.multi_reduction <add>, %4, %cst [1] : vector<8x32xf32> to vector<8xf32>
    %12 = vector.shape_cast %11 : vector<8xf32> to vector<8x1xf32>
    %cst_12 = arith.constant 3.200000e+01 : f32
    %13 = vector.broadcast %cst_12 : f32 to vector<8x1xf32>
    %14 = arith.divf %12, %13 : vector<8x1xf32>
    %15 = vector.broadcast %14 : vector<8x1xf32> to vector<8x32xf32>
    %16 = arith.subf %4, %15 : vector<8x32xf32>
    %17 = arith.mulf %16, %16 : vector<8x32xf32>
    %cst_13 = arith.constant dense<0.000000e+00> : vector<8xf32>
    %18 = vector.multi_reduction <add>, %17, %cst_13 [1] : vector<8x32xf32> to vector<8xf32>
    %19 = vector.shape_cast %18 : vector<8xf32> to vector<8x1xf32>
    %cst_14 = arith.constant 3.200000e+01 : f32
    %20 = vector.broadcast %cst_14 : f32 to vector<8x1xf32>
    %21 = arith.divf %19, %20 : vector<8x1xf32>
    %cst_15 = arith.constant 9.99999974E-6 : f32
    %22 = vector.broadcast %cst_15 : f32 to vector<8x1xf32>
    %23 = arith.addf %21, %22 : vector<8x1xf32>
    %24 = math.rsqrt %23 : vector<8x1xf32>
    %25 = vector.broadcast %24 : vector<8x1xf32> to vector<8x32xf32>
    %26 = arith.mulf %16, %25 : vector<8x32xf32>
    %27 = vector.broadcast %8 : vector<1x32xf32> to vector<8x32xf32>
    %28 = arith.mulf %26, %27 : vector<8x32xf32>
    %29 = vector.broadcast %10 : vector<1x32xf32> to vector<8x32xf32>
    %30 = arith.addf %28, %29 : vector<8x32xf32>
    %c0_16 = arith.constant 0 : index
    %c0_17 = arith.constant 0 : index
    %c0_18 = arith.constant 0 : index
    %31 = vector.load %arg6[%c0_16, %c0_17, %c0_18] : memref<1x32x96xf32, #tpu.memory_space<vmem>>, vector<1x32x96xf32>
    %32 = vector.shape_cast %31 : vector<1x32x96xf32> to vector<32x96xf32>
    %c0_19 = arith.constant 0 : index
    %c0_20 = arith.constant 0 : index
    %c0_21 = arith.constant 0 : index
    %33 = vector.load %arg7[%c0_19, %c0_20, %c0_21] : memref<1x1x96xf32, #tpu.memory_space<vmem>>, vector<1x1x96xf32>
    %34 = vector.shape_cast %33 : vector<1x1x96xf32> to vector<1x96xf32>
    %c0_22 = arith.constant 0 : index
    %c0_23 = arith.constant 0 : index
    %c0_24 = arith.constant 0 : index
    %35 = vector.load %arg8[%c0_22, %c0_23, %c0_24] : memref<1x32x32xf32, #tpu.memory_space<vmem>>, vector<1x32x32xf32>
    %36 = vector.shape_cast %35 : vector<1x32x32xf32> to vector<32x32xf32>
    %c0_25 = arith.constant 0 : index
    %c0_26 = arith.constant 0 : index
    %c0_27 = arith.constant 0 : index
    %37 = vector.load %arg9[%c0_25, %c0_26, %c0_27] : memref<1x1x32xf32, #tpu.memory_space<vmem>>, vector<1x1x32xf32>
    %38 = vector.shape_cast %37 : vector<1x1x32xf32> to vector<1x32xf32>
    %cst_28 = arith.constant dense<0.000000e+00> : vector<8x96xf32>
    %39 = tpu.matmul %30, %32, %cst_28 {dimension_numbers = #tpu.dot_dimension_numbers<[1], [0], [0], [1], [0, 0, 1, 1], [], []>} : vector<8x32xf32>, vector<32x96xf32>, vector<8x96xf32> -> vector<8x96xf32>
    %40 = vector.broadcast %34 : vector<1x96xf32> to vector<8x96xf32>
    %41 = arith.addf %39, %40 : vector<8x96xf32>
    %42 = vector.extract_strided_slice %41 {offsets = [0, 0], sizes = [8, 32], strides = [1, 1]} : vector<8x96xf32> to vector<8x32xf32>
    %43 = vector.extract_strided_slice %41 {offsets = [0, 32], sizes = [8, 32], strides = [1, 1]} : vector<8x96xf32> to vector<8x32xf32>
    %44 = vector.extract_strided_slice %41 {offsets = [0, 64], sizes = [8, 32], strides = [1, 1]} : vector<8x96xf32> to vector<8x32xf32>
    %45 = vector.extract_strided_slice %42 {offsets = [0, 0], sizes = [8, 8], strides = [1, 1]} : vector<8x32xf32> to vector<8x8xf32>
    %46 = vector.extract_strided_slice %43 {offsets = [0, 0], sizes = [8, 8], strides = [1, 1]} : vector<8x32xf32> to vector<8x8xf32>
    %cst_29 = arith.constant dense<0.000000e+00> : vector<8x8xf32>
    %47 = tpu.matmul %45, %46, %cst_29 {dimension_numbers = #tpu.dot_dimension_numbers<[1], [1], [0], [0], [0, 0, 1, 0], [], []>} : vector<8x8xf32>, vector<8x8xf32>, vector<8x8xf32> -> vector<8x8xf32>
    %cst_30 = arith.constant 0.353553385 : f32
    %48 = vector.broadcast %cst_30 : f32 to vector<8x8xf32>
    %49 = arith.mulf %47, %48 : vector<8x8xf32>
    %50 = vector.broadcast %6 : vector<1x8xf32> to vector<8x8xf32>
    %51 = arith.addf %49, %50 : vector<8x8xf32>
    %cst_31 = arith.constant dense<0xFF800000> : vector<8xf32>
    %52 = vector.multi_reduction <maximumf>, %51, %cst_31 [1] : vector<8x8xf32> to vector<8xf32>
    %53 = vector.shape_cast %52 : vector<8xf32> to vector<8x1xf32>
    %54 = vector.broadcast %53 : vector<8x1xf32> to vector<8x8xf32>
    %55 = arith.subf %51, %54 : vector<8x8xf32>
    %56 = math.exp %55 : vector<8x8xf32>
    %cst_32 = arith.constant dense<0.000000e+00> : vector<8xf32>
    %57 = vector.multi_reduction <add>, %56, %cst_32 [1] : vector<8x8xf32> to vector<8xf32>
    %58 = vector.shape_cast %57 : vector<8xf32> to vector<8x1xf32>
    %59 = tpu.reciprocal %58 {approx = true} : vector<8x1xf32> -> vector<8x1xf32>
    %60 = vector.broadcast %59 : vector<8x1xf32> to vector<8x8xf32>
    %61 = arith.mulf %56, %60 : vector<8x8xf32>
    %62 = vector.extract_strided_slice %44 {offsets = [0, 0], sizes = [8, 8], strides = [1, 1]} : vector<8x32xf32> to vector<8x8xf32>
    %cst_33 = arith.constant dense<0.000000e+00> : vector<8x8xf32>
    %63 = tpu.matmul %61, %62, %cst_33 {dimension_numbers = #tpu.dot_dimension_numbers<[1], [0], [0], [1], [0, 0, 1, 1], [], []>} : vector<8x8xf32>, vector<8x8xf32>, vector<8x8xf32> -> vector<8x8xf32>
    %64 = vector.extract_strided_slice %42 {offsets = [0, 8], sizes = [8, 8], strides = [1, 1]} : vector<8x32xf32> to vector<8x8xf32>
    %65 = vector.extract_strided_slice %43 {offsets = [0, 8], sizes = [8, 8], strides = [1, 1]} : vector<8x32xf32> to vector<8x8xf32>
    %cst_34 = arith.constant dense<0.000000e+00> : vector<8x8xf32>
    %66 = tpu.matmul %64, %65, %cst_34 {dimension_numbers = #tpu.dot_dimension_numbers<[1], [1], [0], [0], [0, 0, 1, 0], [], []>} : vector<8x8xf32>, vector<8x8xf32>, vector<8x8xf32> -> vector<8x8xf32>
    %cst_35 = arith.constant 0.353553385 : f32
    %67 = vector.broadcast %cst_35 : f32 to vector<8x8xf32>
    %68 = arith.mulf %66, %67 : vector<8x8xf32>
    %69 = vector.broadcast %6 : vector<1x8xf32> to vector<8x8xf32>
    %70 = arith.addf %68, %69 : vector<8x8xf32>
    %cst_36 = arith.constant dense<0xFF800000> : vector<8xf32>
    %71 = vector.multi_reduction <maximumf>, %70, %cst_36 [1] : vector<8x8xf32> to vector<8xf32>
    %72 = vector.shape_cast %71 : vector<8xf32> to vector<8x1xf32>
    %73 = vector.broadcast %72 : vector<8x1xf32> to vector<8x8xf32>
    %74 = arith.subf %70, %73 : vector<8x8xf32>
    %75 = math.exp %74 : vector<8x8xf32>
    %cst_37 = arith.constant dense<0.000000e+00> : vector<8xf32>
    %76 = vector.multi_reduction <add>, %75, %cst_37 [1] : vector<8x8xf32> to vector<8xf32>
    %77 = vector.shape_cast %76 : vector<8xf32> to vector<8x1xf32>
    %78 = tpu.reciprocal %77 {approx = true} : vector<8x1xf32> -> vector<8x1xf32>
    %79 = vector.broadcast %78 : vector<8x1xf32> to vector<8x8xf32>
    %80 = arith.mulf %75, %79 : vector<8x8xf32>
    %81 = vector.extract_strided_slice %44 {offsets = [0, 8], sizes = [8, 8], strides = [1, 1]} : vector<8x32xf32> to vector<8x8xf32>
    %cst_38 = arith.constant dense<0.000000e+00> : vector<8x8xf32>
    %82 = tpu.matmul %80, %81, %cst_38 {dimension_numbers = #tpu.dot_dimension_numbers<[1], [0], [0], [1], [0, 0, 1, 1], [], []>} : vector<8x8xf32>, vector<8x8xf32>, vector<8x8xf32> -> vector<8x8xf32>
    %83 = vector.extract_strided_slice %42 {offsets = [0, 16], sizes = [8, 8], strides = [1, 1]} : vector<8x32xf32> to vector<8x8xf32>
    %84 = vector.extract_strided_slice %43 {offsets = [0, 16], sizes = [8, 8], strides = [1, 1]} : vector<8x32xf32> to vector<8x8xf32>
    %cst_39 = arith.constant dense<0.000000e+00> : vector<8x8xf32>
    %85 = tpu.matmul %83, %84, %cst_39 {dimension_numbers = #tpu.dot_dimension_numbers<[1], [1], [0], [0], [0, 0, 1, 0], [], []>} : vector<8x8xf32>, vector<8x8xf32>, vector<8x8xf32> -> vector<8x8xf32>
    %cst_40 = arith.constant 0.353553385 : f32
    %86 = vector.broadcast %cst_40 : f32 to vector<8x8xf32>
    %87 = arith.mulf %85, %86 : vector<8x8xf32>
    %88 = vector.broadcast %6 : vector<1x8xf32> to vector<8x8xf32>
    %89 = arith.addf %87, %88 : vector<8x8xf32>
    %cst_41 = arith.constant dense<0xFF800000> : vector<8xf32>
    %90 = vector.multi_reduction <maximumf>, %89, %cst_41 [1] : vector<8x8xf32> to vector<8xf32>
    %91 = vector.shape_cast %90 : vector<8xf32> to vector<8x1xf32>
    %92 = vector.broadcast %91 : vector<8x1xf32> to vector<8x8xf32>
    %93 = arith.subf %89, %92 : vector<8x8xf32>
    %94 = math.exp %93 : vector<8x8xf32>
    %cst_42 = arith.constant dense<0.000000e+00> : vector<8xf32>
    %95 = vector.multi_reduction <add>, %94, %cst_42 [1] : vector<8x8xf32> to vector<8xf32>
    %96 = vector.shape_cast %95 : vector<8xf32> to vector<8x1xf32>
    %97 = tpu.reciprocal %96 {approx = true} : vector<8x1xf32> -> vector<8x1xf32>
    %98 = vector.broadcast %97 : vector<8x1xf32> to vector<8x8xf32>
    %99 = arith.mulf %94, %98 : vector<8x8xf32>
    %100 = vector.extract_strided_slice %44 {offsets = [0, 16], sizes = [8, 8], strides = [1, 1]} : vector<8x32xf32> to vector<8x8xf32>
    %cst_43 = arith.constant dense<0.000000e+00> : vector<8x8xf32>
    %101 = tpu.matmul %99, %100, %cst_43 {dimension_numbers = #tpu.dot_dimension_numbers<[1], [0], [0], [1], [0, 0, 1, 1], [], []>} : vector<8x8xf32>, vector<8x8xf32>, vector<8x8xf32> -> vector<8x8xf32>
    %102 = vector.extract_strided_slice %42 {offsets = [0, 24], sizes = [8, 8], strides = [1, 1]} : vector<8x32xf32> to vector<8x8xf32>
    %103 = vector.extract_strided_slice %43 {offsets = [0, 24], sizes = [8, 8], strides = [1, 1]} : vector<8x32xf32> to vector<8x8xf32>
    %cst_44 = arith.constant dense<0.000000e+00> : vector<8x8xf32>
    %104 = tpu.matmul %102, %103, %cst_44 {dimension_numbers = #tpu.dot_dimension_numbers<[1], [1], [0], [0], [0, 0, 1, 0], [], []>} : vector<8x8xf32>, vector<8x8xf32>, vector<8x8xf32> -> vector<8x8xf32>
    %cst_45 = arith.constant 0.353553385 : f32
    %105 = vector.broadcast %cst_45 : f32 to vector<8x8xf32>
    %106 = arith.mulf %104, %105 : vector<8x8xf32>
    %107 = vector.broadcast %6 : vector<1x8xf32> to vector<8x8xf32>
    %108 = arith.addf %106, %107 : vector<8x8xf32>
    %cst_46 = arith.constant dense<0xFF800000> : vector<8xf32>
    %109 = vector.multi_reduction <maximumf>, %108, %cst_46 [1] : vector<8x8xf32> to vector<8xf32>
    %110 = vector.shape_cast %109 : vector<8xf32> to vector<8x1xf32>
    %111 = vector.broadcast %110 : vector<8x1xf32> to vector<8x8xf32>
    %112 = arith.subf %108, %111 : vector<8x8xf32>
    %113 = math.exp %112 : vector<8x8xf32>
    %cst_47 = arith.constant dense<0.000000e+00> : vector<8xf32>
    %114 = vector.multi_reduction <add>, %113, %cst_47 [1] : vector<8x8xf32> to vector<8xf32>
    %115 = vector.shape_cast %114 : vector<8xf32> to vector<8x1xf32>
    %116 = tpu.reciprocal %115 {approx = true} : vector<8x1xf32> -> vector<8x1xf32>
    %117 = vector.broadcast %116 : vector<8x1xf32> to vector<8x8xf32>
    %118 = arith.mulf %113, %117 : vector<8x8xf32>
    %119 = vector.extract_strided_slice %44 {offsets = [0, 24], sizes = [8, 8], strides = [1, 1]} : vector<8x32xf32> to vector<8x8xf32>
    %cst_48 = arith.constant dense<0.000000e+00> : vector<8x8xf32>
    %120 = tpu.matmul %118, %119, %cst_48 {dimension_numbers = #tpu.dot_dimension_numbers<[1], [0], [0], [1], [0, 0, 1, 1], [], []>} : vector<8x8xf32>, vector<8x8xf32>, vector<8x8xf32> -> vector<8x8xf32>
    %121 = tpu.concatenate %63, %82, %101, %120 in 1 : vector<8x8xf32>, vector<8x8xf32>, vector<8x8xf32>, vector<8x8xf32> -> vector<8x32xf32>
    %cst_49 = arith.constant dense<0.000000e+00> : vector<8x32xf32>
    %122 = tpu.matmul %121, %36, %cst_49 {dimension_numbers = #tpu.dot_dimension_numbers<[1], [0], [0], [1], [0, 0, 1, 1], [], []>} : vector<8x32xf32>, vector<32x32xf32>, vector<8x32xf32> -> vector<8x32xf32>
    %123 = vector.broadcast %38 : vector<1x32xf32> to vector<8x32xf32>
    %124 = arith.addf %122, %123 : vector<8x32xf32>
    %125 = arith.addf %4, %124 : vector<8x32xf32>
    %c0_50 = arith.constant 0 : index
    %c0_51 = arith.constant 0 : index
    %c0_52 = arith.constant 0 : index
    %126 = vector.load %arg10[%c0_50, %c0_51, %c0_52] : memref<1x1x32xf32, #tpu.memory_space<vmem>>, vector<1x1x32xf32>
    %127 = vector.shape_cast %126 : vector<1x1x32xf32> to vector<1x32xf32>
    %c0_53 = arith.constant 0 : index
    %c0_54 = arith.constant 0 : index
    %c0_55 = arith.constant 0 : index
    %128 = vector.load %arg11[%c0_53, %c0_54, %c0_55] : memref<1x1x32xf32, #tpu.memory_space<vmem>>, vector<1x1x32xf32>
    %129 = vector.shape_cast %128 : vector<1x1x32xf32> to vector<1x32xf32>
    %cst_56 = arith.constant dense<0.000000e+00> : vector<8xf32>
    %130 = vector.multi_reduction <add>, %125, %cst_56 [1] : vector<8x32xf32> to vector<8xf32>
    %131 = vector.shape_cast %130 : vector<8xf32> to vector<8x1xf32>
    %cst_57 = arith.constant 3.200000e+01 : f32
    %132 = vector.broadcast %cst_57 : f32 to vector<8x1xf32>
    %133 = arith.divf %131, %132 : vector<8x1xf32>
    %134 = vector.broadcast %133 : vector<8x1xf32> to vector<8x32xf32>
    %135 = arith.subf %125, %134 : vector<8x32xf32>
    %136 = arith.mulf %135, %135 : vector<8x32xf32>
    %cst_58 = arith.constant dense<0.000000e+00> : vector<8xf32>
    %137 = vector.multi_reduction <add>, %136, %cst_58 [1] : vector<8x32xf32> to vector<8xf32>
    %138 = vector.shape_cast %137 : vector<8xf32> to vector<8x1xf32>
    %cst_59 = arith.constant 3.200000e+01 : f32
    %139 = vector.broadcast %cst_59 : f32 to vector<8x1xf32>
    %140 = arith.divf %138, %139 : vector<8x1xf32>
    %cst_60 = arith.constant 9.99999974E-6 : f32
    %141 = vector.broadcast %cst_60 : f32 to vector<8x1xf32>
    %142 = arith.addf %140, %141 : vector<8x1xf32>
    %143 = math.rsqrt %142 : vector<8x1xf32>
    %144 = vector.broadcast %143 : vector<8x1xf32> to vector<8x32xf32>
    %145 = arith.mulf %135, %144 : vector<8x32xf32>
    %146 = vector.broadcast %127 : vector<1x32xf32> to vector<8x32xf32>
    %147 = arith.mulf %145, %146 : vector<8x32xf32>
    %148 = vector.broadcast %129 : vector<1x32xf32> to vector<8x32xf32>
    %149 = arith.addf %147, %148 : vector<8x32xf32>
    %c0_61 = arith.constant 0 : index
    %c0_62 = arith.constant 0 : index
    %c0_63 = arith.constant 0 : index
    %150 = vector.load %arg12[%c0_61, %c0_62, %c0_63] : memref<1x32x64xf32, #tpu.memory_space<vmem>>, vector<1x32x64xf32>
    %151 = vector.shape_cast %150 : vector<1x32x64xf32> to vector<32x64xf32>
    %cst_64 = arith.constant dense<0.000000e+00> : vector<8x64xf32>
    %152 = tpu.matmul %149, %151, %cst_64 {dimension_numbers = #tpu.dot_dimension_numbers<[1], [0], [0], [1], [0, 0, 1, 1], [], []>} : vector<8x32xf32>, vector<32x64xf32>, vector<8x64xf32> -> vector<8x64xf32>
    %c0_65 = arith.constant 0 : index
    %c0_66 = arith.constant 0 : index
    %c0_67 = arith.constant 0 : index
    %153 = vector.load %arg13[%c0_65, %c0_66, %c0_67] : memref<1x1x64xf32, #tpu.memory_space<vmem>>, vector<1x1x64xf32>
    %154 = vector.shape_cast %153 : vector<1x1x64xf32> to vector<1x64xf32>
    %155 = vector.broadcast %154 : vector<1x64xf32> to vector<8x64xf32>
    %156 = arith.addf %152, %155 : vector<8x64xf32>
    %cst_68 = arith.constant 0.000000e+00 : f32
    %157 = vector.broadcast %cst_68 : f32 to vector<8x64xf32>
    %158 = arith.maximumf %156, %157 : vector<8x64xf32>
    %c0_69 = arith.constant 0 : index
    %c0_70 = arith.constant 0 : index
    %c0_71 = arith.constant 0 : index
    %159 = vector.load %arg14[%c0_69, %c0_70, %c0_71] : memref<1x64x32xf32, #tpu.memory_space<vmem>>, vector<1x64x32xf32>
    %160 = vector.shape_cast %159 : vector<1x64x32xf32> to vector<64x32xf32>
    %cst_72 = arith.constant dense<0.000000e+00> : vector<8x32xf32>
    %161 = tpu.matmul %158, %160, %cst_72 {dimension_numbers = #tpu.dot_dimension_numbers<[1], [0], [0], [1], [0, 0, 1, 1], [], []>} : vector<8x64xf32>, vector<64x32xf32>, vector<8x32xf32> -> vector<8x32xf32>
    %c0_73 = arith.constant 0 : index
    %c0_74 = arith.constant 0 : index
    %c0_75 = arith.constant 0 : index
    %162 = vector.load %arg15[%c0_73, %c0_74, %c0_75] : memref<1x1x32xf32, #tpu.memory_space<vmem>>, vector<1x1x32xf32>
    %163 = vector.shape_cast %162 : vector<1x1x32xf32> to vector<1x32xf32>
    %164 = vector.broadcast %163 : vector<1x32xf32> to vector<8x32xf32>
    %165 = arith.addf %161, %164 : vector<8x32xf32>
    %166 = arith.addf %125, %165 : vector<8x32xf32>
    %c0_76 = arith.constant 0 : index
    %c0_77 = arith.constant 0 : index
    %c0_78 = arith.constant 0 : index
    %167 = vector.load %arg18[%c0_76, %c0_77, %c0_78] : memref<1x8x32xf32, #tpu.memory_space<vmem>>, vector<1x8x32xf32>
    %168 = vector.shape_cast %167 : vector<1x8x32xf32> to vector<8x32xf32>
    %169 = vector.shape_cast %166 : vector<8x32xf32> to vector<1x8x32xf32>
    tpu.vector_store %arg18[%c0_76, %c0_77, %c0_78], %169 {strides = array<i32>} : memref<1x8x32xf32, #tpu.memory_space<vmem>>, vector<1x8x32xf32>,
    %c1_i32 = arith.constant 1 : i32
    %170 = arith.cmpi eq, %arg1, %c1_i32 : i32
    %171 = arith.extui %170 : i1 to i32
    %c0_i32_79 = arith.constant 0 : i32
    %172 = arith.cmpi ne, %171, %c0_i32_79 : i32
    scf.if %172 {
      %c0_80 = arith.constant 0 : index
      %c0_81 = arith.constant 0 : index
      %173 = vector.load %arg16[%c0_80, %c0_81] : memref<1x32xf32, #tpu.memory_space<vmem>>, vector<1x32xf32>
      %c0_82 = arith.constant 0 : index
      %c0_83 = arith.constant 0 : index
      %174 = vector.load %arg17[%c0_82, %c0_83] : memref<1x32xf32, #tpu.memory_space<vmem>>, vector<1x32xf32>
      %cst_84 = arith.constant dense<0.000000e+00> : vector<8xf32>
      %175 = vector.multi_reduction <add>, %166, %cst_84 [1] : vector<8x32xf32> to vector<8xf32>
      %176 = vector.shape_cast %175 : vector<8xf32> to vector<8x1xf32>
      %cst_85 = arith.constant 3.200000e+01 : f32
      %177 = vector.broadcast %cst_85 : f32 to vector<8x1xf32>
      %178 = arith.divf %176, %177 : vector<8x1xf32>
      %179 = vector.broadcast %178 : vector<8x1xf32> to vector<8x32xf32>
      %180 = arith.subf %166, %179 : vector<8x32xf32>
      %181 = arith.mulf %180, %180 : vector<8x32xf32>
      %cst_86 = arith.constant dense<0.000000e+00> : vector<8xf32>
      %182 = vector.multi_reduction <add>, %181, %cst_86 [1] : vector<8x32xf32> to vector<8xf32>
      %183 = vector.shape_cast %182 : vector<8xf32> to vector<8x1xf32>
      %cst_87 = arith.constant 3.200000e+01 : f32
      %184 = vector.broadcast %cst_87 : f32 to vector<8x1xf32>
      %185 = arith.divf %183, %184 : vector<8x1xf32>
      %cst_88 = arith.constant 9.99999974E-6 : f32
      %186 = vector.broadcast %cst_88 : f32 to vector<8x1xf32>
      %187 = arith.addf %185, %186 : vector<8x1xf32>
      %188 = math.rsqrt %187 : vector<8x1xf32>
      %189 = vector.broadcast %188 : vector<8x1xf32> to vector<8x32xf32>
      %190 = arith.mulf %180, %189 : vector<8x32xf32>
      %191 = vector.broadcast %173 : vector<1x32xf32> to vector<8x32xf32>
      %192 = arith.mulf %190, %191 : vector<8x32xf32>
      %193 = vector.broadcast %174 : vector<1x32xf32> to vector<8x32xf32>
      %194 = arith.addf %192, %193 : vector<8x32xf32>
      %c0_89 = arith.constant 0 : index
      %c0_90 = arith.constant 0 : index
      %c0_91 = arith.constant 0 : index
      %195 = vector.load %arg18[%c0_89, %c0_90, %c0_91] : memref<1x8x32xf32, #tpu.memory_space<vmem>>, vector<1x8x32xf32>
      %196 = vector.shape_cast %195 : vector<1x8x32xf32> to vector<8x32xf32>
      %197 = vector.shape_cast %194 : vector<8x32xf32> to vector<1x8x32xf32>
      tpu.vector_store %arg18[%c0_89, %c0_90, %c0_91], %197 {strides = array<i32>} : memref<1x8x32xf32, #tpu.memory_space<vmem>>, vector<1x8x32xf32>,
    } else {
    }
    return
  }
  func.func @transform_0(%arg0: i32, %arg1: i32) -> (i32, i32, i32) {
    %c0_i32 = arith.constant 0 : i32
    %c0_i32_0 = arith.constant 0 : i32
    %c0_i32_1 = arith.constant 0 : i32
    return %arg0, %c0_i32, %c0_i32_0 : i32, i32, i32
  }
  func.func @transform_1(%arg0: i32, %arg1: i32) -> (i32, i32, i32) {
    %c0_i32 = arith.constant 0 : i32
    %c0_i32_0 = arith.constant 0 : i32
    %c0_i32_1 = arith.constant 0 : i32
    return %arg0, %c0_i32, %c0_i32_0 : i32, i32, i32
  }
  func.func @transform_2(%arg0: i32, %arg1: i32) -> (i32, i32, i32) {
    %c0_i32 = arith.constant 0 : i32
    %c0_i32_0 = arith.constant 0 : i32
    %c0_i32_1 = arith.constant 0 : i32
    return %arg1, %c0_i32, %c0_i32_0 : i32, i32, i32
  }
  func.func @transform_3(%arg0: i32, %arg1: i32) -> (i32, i32, i32) {
    %c0_i32 = arith.constant 0 : i32
    %c0_i32_0 = arith.constant 0 : i32
    %c0_i32_1 = arith.constant 0 : i32
    return %arg1, %c0_i32, %c0_i32_0 : i32, i32, i32
  }
  func.func @transform_4(%arg0: i32, %arg1: i32) -> (i32, i32, i32) {
    %c0_i32 = arith.constant 0 : i32
    %c0_i32_0 = arith.constant 0 : i32
    %c0_i32_1 = arith.constant 0 : i32
    return %arg1, %c0_i32, %c0_i32_0 : i32, i32, i32
  }
  func.func @transform_5(%arg0: i32, %arg1: i32) -> (i32, i32, i32) {
    %c0_i32 = arith.constant 0 : i32
    %c0_i32_0 = arith.constant 0 : i32
    %c0_i32_1 = arith.constant 0 : i32
    return %arg1, %c0_i32, %c0_i32_0 : i32, i32, i32
  }
  func.func @transform_6(%arg0: i32, %arg1: i32) -> (i32, i32, i32) {
    %c0_i32 = arith.constant 0 : i32
    %c0_i32_0 = arith.constant 0 : i32
    %c0_i32_1 = arith.constant 0 : i32
    return %arg1, %c0_i32, %c0_i32_0 : i32, i32, i32
  }
  func.func @transform_7(%arg0: i32, %arg1: i32) -> (i32, i32, i32) {
    %c0_i32 = arith.constant 0 : i32
    %c0_i32_0 = arith.constant 0 : i32
    %c0_i32_1 = arith.constant 0 : i32
    return %arg1, %c0_i32, %c0_i32_0 : i32, i32, i32
  }
  func.func @transform_8(%arg0: i32, %arg1: i32) -> (i32, i32, i32) {
    %c0_i32 = arith.constant 0 : i32
    %c0_i32_0 = arith.constant 0 : i32
    %c0_i32_1 = arith.constant 0 : i32
    return %arg1, %c0_i32, %c0_i32_0 : i32, i32, i32
  }
  func.func @transform_9(%arg0: i32, %arg1: i32) -> (i32, i32, i32) {
    %c0_i32 = arith.constant 0 : i32
    %c0_i32_0 = arith.constant 0 : i32
    %c0_i32_1 = arith.constant 0 : i32
    return %arg1, %c0_i32, %c0_i32_0 : i32, i32, i32
  }
  func.func @transform_10(%arg0: i32, %arg1: i32) -> (i32, i32, i32) {
    %c0_i32 = arith.constant 0 : i32
    %c0_i32_0 = arith.constant 0 : i32
    %c0_i32_1 = arith.constant 0 : i32
    return %arg1, %c0_i32, %c0_i32_0 : i32, i32, i32
  }
  func.func @transform_11(%arg0: i32, %arg1: i32) -> (i32, i32, i32) {
    %c0_i32 = arith.constant 0 : i32
    %c0_i32_0 = arith.constant 0 : i32
    %c0_i32_1 = arith.constant 0 : i32
    return %arg1, %c0_i32, %c0_i32_0 : i32, i32, i32
  }
  func.func @transform_12(%arg0: i32, %arg1: i32) -> (i32, i32, i32) {
    %c0_i32 = arith.constant 0 : i32
    %c0_i32_0 = arith.constant 0 : i32
    %c0_i32_1 = arith.constant 0 : i32
    return %arg1, %c0_i32, %c0_i32_0 : i32, i32, i32
  }
  func.func @transform_13(%arg0: i32, %arg1: i32) -> (i32, i32, i32) {
    %c0_i32 = arith.constant 0 : i32
    %c0_i32_0 = arith.constant 0 : i32
    %c0_i32_1 = arith.constant 0 : i32
    return %arg1, %c0_i32, %c0_i32_0 : i32, i32, i32
  }
  func.func @transform_14(%arg0: i32, %arg1: i32) -> (i32, i32) {
    %c0_i32 = arith.constant 0 : i32
    %c0_i32_0 = arith.constant 0 : i32
    %c0_i32_1 = arith.constant 0 : i32
    return %c0_i32, %c0_i32_0 : i32, i32
  }
  func.func @transform_15(%arg0: i32, %arg1: i32) -> (i32, i32) {
    %c0_i32 = arith.constant 0 : i32
    %c0_i32_0 = arith.constant 0 : i32
    %c0_i32_1 = arith.constant 0 : i32
    return %c0_i32, %c0_i32_0 : i32, i32
  }
  func.func @transform_16(%arg0: i32, %arg1: i32) -> (i32, i32, i32) {
    %c0_i32 = arith.constant 0 : i32
    %c0_i32_0 = arith.constant 0 : i32
    %c0_i32_1 = arith.constant 0 : i32
    return %arg0, %c0_i32, %c0_i32_0 : i32, i32, i32
  }
}

module attributes {stable_mosaic.version = 11 : i64} {
  func.func @_decoder_kernel(%arg0: i32, %arg1: i32, %arg2: memref<1x8x32xf32, #tpu.memory_space<vmem>>, %arg3: memref<1x8x32xf32, #tpu.memory_space<vmem>>, %arg4: memref<1x1x8xf32, #tpu.memory_space<vmem>>, %arg5: memref<1x1x8xf32, #tpu.memory_space<vmem>>, %arg6: memref<1x8x1xi32, #tpu.memory_space<vmem>>, %arg7: memref<1x1x32xf32, #tpu.memory_space<vmem>>, %arg8: memref<1x1x32xf32, #tpu.memory_space<vmem>>, %arg9: memref<1x32x96xf32, #tpu.memory_space<vmem>>, %arg10: memref<1x1x96xf32, #tpu.memory_space<vmem>>, %arg11: memref<1x32x32xf32, #tpu.memory_space<vmem>>, %arg12: memref<1x1x32xf32, #tpu.memory_space<vmem>>, %arg13: memref<1x1x32xf32, #tpu.memory_space<vmem>>, %arg14: memref<1x1x32xf32, #tpu.memory_space<vmem>>, %arg15: memref<1x32x32xf32, #tpu.memory_space<vmem>>, %arg16: memref<1x1x32xf32, #tpu.memory_space<vmem>>, %arg17: memref<1x32x64xf32, #tpu.memory_space<vmem>>, %arg18: memref<1x1x64xf32, #tpu.memory_space<vmem>>, %arg19: memref<1x32x32xf32, #tpu.memory_space<vmem>>, %arg20: memref<1x1x32xf32, #tpu.memory_space<vmem>>, %arg21: memref<1x1x32xf32, #tpu.memory_space<vmem>>, %arg22: memref<1x1x32xf32, #tpu.memory_space<vmem>>, %arg23: memref<1x32x64xf32, #tpu.memory_space<vmem>>, %arg24: memref<1x1x64xf32, #tpu.memory_space<vmem>>, %arg25: memref<1x64x32xf32, #tpu.memory_space<vmem>>, %arg26: memref<1x1x32xf32, #tpu.memory_space<vmem>>, %arg27: memref<1x32xf32, #tpu.memory_space<vmem>>, %arg28: memref<1x32xf32, #tpu.memory_space<vmem>>, %arg29: memref<32x128xf32, #tpu.memory_space<vmem>>, %arg30: memref<1x128xf32, #tpu.memory_space<vmem>>, %arg31: memref<1x32xf32, #tpu.memory_space<vmem>>, %arg32: memref<1x32xf32, #tpu.memory_space<vmem>>, %arg33: memref<1x32xf32, #tpu.memory_space<vmem>>, %arg34: memref<1x1xf32, #tpu.memory_space<vmem>>, %arg35: memref<1x8x128xf32, #tpu.memory_space<vmem>>, %arg36: memref<8x32xf32, #tpu.memory_space<vmem>>) attributes {dimension_semantics = [#tpu.dimension_semantics<parallel>, #tpu.dimension_semantics<arbitrary>], iteration_bounds = array<i64: 2, 2>, scalar_prefetch = 0 : i64, scratch_operands = 1 : i64, tpu.core_type = #tpu.core_type<tc>, window_params = [{transform_indices = @transform_0, window_bounds = array<i64: 1, 8, 32>}, {transform_indices = @transform_1, window_bounds = array<i64: 1, 8, 32>}, {transform_indices = @transform_2, window_bounds = array<i64: 1, 1, 8>}, {transform_indices = @transform_3, window_bounds = array<i64: 1, 1, 8>}, {transform_indices = @transform_4, window_bounds = array<i64: 1, 8, 1>}, {transform_indices = @transform_5, window_bounds = array<i64: 1, 1, 32>}, {transform_indices = @transform_6, window_bounds = array<i64: 1, 1, 32>}, {transform_indices = @transform_7, window_bounds = array<i64: 1, 32, 96>}, {transform_indices = @transform_8, window_bounds = array<i64: 1, 1, 96>}, {transform_indices = @transform_9, window_bounds = array<i64: 1, 32, 32>}, {transform_indices = @transform_10, window_bounds = array<i64: 1, 1, 32>}, {transform_indices = @transform_11, window_bounds = array<i64: 1, 1, 32>}, {transform_indices = @transform_12, window_bounds = array<i64: 1, 1, 32>}, {transform_indices = @transform_13, window_bounds = array<i64: 1, 32, 32>}, {transform_indices = @transform_14, window_bounds = array<i64: 1, 1, 32>}, {transform_indices = @transform_15, window_bounds = array<i64: 1, 32, 64>}, {transform_indices = @transform_16, window_bounds = array<i64: 1, 1, 64>}, {transform_indices = @transform_17, window_bounds = array<i64: 1, 32, 32>}, {transform_indices = @transform_18, window_bounds = array<i64: 1, 1, 32>}, {transform_indices = @transform_19, window_bounds = array<i64: 1, 1, 32>}, {transform_indices = @transform_20, window_bounds = array<i64: 1, 1, 32>}, {transform_indices = @transform_21, window_bounds = array<i64: 1, 32, 64>}, {transform_indices = @transform_22, window_bounds = array<i64: 1, 1, 64>}, {transform_indices = @transform_23, window_bounds = array<i64: 1, 64, 32>}, {transform_indices = @transform_24, window_bounds = array<i64: 1, 1, 32>}, {pipeline_mode = #tpu.pipeline_mode<synchronous>, transform_indices = @transform_25, window_bounds = array<i64: 1, 32>}, {pipeline_mode = #tpu.pipeline_mode<synchronous>, transform_indices = @transform_26, window_bounds = array<i64: 1, 32>}, {pipeline_mode = #tpu.pipeline_mode<synchronous>, transform_indices = @transform_27, window_bounds = array<i64: 32, 128>}, {pipeline_mode = #tpu.pipeline_mode<synchronous>, transform_indices = @transform_28, window_bounds = array<i64: 1, 128>}, {pipeline_mode = #tpu.pipeline_mode<synchronous>, transform_indices = @transform_29, window_bounds = array<i64: 1, 32>}, {pipeline_mode = #tpu.pipeline_mode<synchronous>, transform_indices = @transform_30, window_bounds = array<i64: 1, 32>}, {pipeline_mode = #tpu.pipeline_mode<synchronous>, transform_indices = @transform_31, window_bounds = array<i64: 1, 32>}, {pipeline_mode = #tpu.pipeline_mode<synchronous>, transform_indices = @transform_32, window_bounds = array<i64: 1, 1>}, {transform_indices = @transform_33, window_bounds = array<i64: 1, 8, 128>}]} {
    %c0_i32 = arith.constant 0 : i32
    %0 = arith.cmpi eq, %arg1, %c0_i32 : i32
    %1 = arith.extui %0 : i1 to i32
    %c0_i32_0 = arith.constant 0 : i32
    %2 = arith.cmpi ne, %1, %c0_i32_0 : i32
    scf.if %2 {
      %c0_139 = arith.constant 0 : index
      %c0_140 = arith.constant 0 : index
      %c0_141 = arith.constant 0 : index
      %308 = vector.load %arg2[%c0_139, %c0_140, %c0_141] : memref<1x8x32xf32, #tpu.memory_space<vmem>>, vector<1x8x32xf32>
      %309 = vector.shape_cast %308 : vector<1x8x32xf32> to vector<8x32xf32>
      %c0_142 = arith.constant 0 : index
      %c0_143 = arith.constant 0 : index
      %310 = vector.load %arg36[%c0_142, %c0_143] : memref<8x32xf32, #tpu.memory_space<vmem>>, vector<8x32xf32>
      tpu.vector_store %arg36[%c0_142, %c0_143], %309 {strides = array<i32>} : memref<8x32xf32, #tpu.memory_space<vmem>>, vector<8x32xf32>,
    } else {
    }
    %c0 = arith.constant 0 : index
    %c0_1 = arith.constant 0 : index
    %3 = vector.load %arg36[%c0, %c0_1] : memref<8x32xf32, #tpu.memory_space<vmem>>, vector<8x32xf32>
    %c0_2 = arith.constant 0 : index
    %c0_3 = arith.constant 0 : index
    %c0_4 = arith.constant 0 : index
    %4 = vector.load %arg3[%c0_2, %c0_3, %c0_4] : memref<1x8x32xf32, #tpu.memory_space<vmem>>, vector<1x8x32xf32>
    %5 = vector.shape_cast %4 : vector<1x8x32xf32> to vector<8x32xf32>
    %6 = tpu.iota {dimensions = array<i32: 0>} : vector<8x8xi32>
    %7 = tpu.iota {dimensions = array<i32: 1>} : vector<8x8xi32>
    %8 = arith.cmpi sge, %6, %7 : vector<8x8xi32>
    %cst = arith.constant 0.000000e+00 : f32
    %cst_5 = arith.constant -1.000000e+09 : f32
    %9 = vector.broadcast %cst : f32 to vector<8x8xf32>
    %10 = vector.broadcast %cst_5 : f32 to vector<8x8xf32>
    %11 = arith.select %8, %9, %10 : vector<8x8xi1>, vector<8x8xf32>
    %c0_6 = arith.constant 0 : index
    %c0_7 = arith.constant 0 : index
    %c0_8 = arith.constant 0 : index
    %12 = vector.load %arg4[%c0_6, %c0_7, %c0_8] : memref<1x1x8xf32, #tpu.memory_space<vmem>>, vector<1x1x8xf32>
    %13 = vector.shape_cast %12 : vector<1x1x8xf32> to vector<1x8xf32>
    %14 = vector.broadcast %13 : vector<1x8xf32> to vector<8x8xf32>
    %15 = arith.addf %11, %14 : vector<8x8xf32>
    %c0_9 = arith.constant 0 : index
    %c0_10 = arith.constant 0 : index
    %c0_11 = arith.constant 0 : index
    %16 = vector.load %arg5[%c0_9, %c0_10, %c0_11] : memref<1x1x8xf32, #tpu.memory_space<vmem>>, vector<1x1x8xf32>
    %17 = vector.shape_cast %16 : vector<1x1x8xf32> to vector<1x8xf32>
    %c0_12 = arith.constant 0 : index
    %c0_13 = arith.constant 0 : index
    %c0_14 = arith.constant 0 : index
    %18 = vector.load %arg7[%c0_12, %c0_13, %c0_14] : memref<1x1x32xf32, #tpu.memory_space<vmem>>, vector<1x1x32xf32>
    %19 = vector.shape_cast %18 : vector<1x1x32xf32> to vector<1x32xf32>
    %c0_15 = arith.constant 0 : index
    %c0_16 = arith.constant 0 : index
    %c0_17 = arith.constant 0 : index
    %20 = vector.load %arg8[%c0_15, %c0_16, %c0_17] : memref<1x1x32xf32, #tpu.memory_space<vmem>>, vector<1x1x32xf32>
    %21 = vector.shape_cast %20 : vector<1x1x32xf32> to vector<1x32xf32>
    %cst_18 = arith.constant dense<0.000000e+00> : vector<8xf32>
    %22 = vector.multi_reduction <add>, %3, %cst_18 [1] : vector<8x32xf32> to vector<8xf32>
    %23 = vector.shape_cast %22 : vector<8xf32> to vector<8x1xf32>
    %cst_19 = arith.constant 3.200000e+01 : f32
    %24 = vector.broadcast %cst_19 : f32 to vector<8x1xf32>
    %25 = arith.divf %23, %24 : vector<8x1xf32>
    %26 = vector.broadcast %25 : vector<8x1xf32> to vector<8x32xf32>
    %27 = arith.subf %3, %26 : vector<8x32xf32>
    %28 = arith.mulf %27, %27 : vector<8x32xf32>
    %cst_20 = arith.constant dense<0.000000e+00> : vector<8xf32>
    %29 = vector.multi_reduction <add>, %28, %cst_20 [1] : vector<8x32xf32> to vector<8xf32>
    %30 = vector.shape_cast %29 : vector<8xf32> to vector<8x1xf32>
    %cst_21 = arith.constant 3.200000e+01 : f32
    %31 = vector.broadcast %cst_21 : f32 to vector<8x1xf32>
    %32 = arith.divf %30, %31 : vector<8x1xf32>
    %cst_22 = arith.constant 9.99999974E-6 : f32
    %33 = vector.broadcast %cst_22 : f32 to vector<8x1xf32>
    %34 = arith.addf %32, %33 : vector<8x1xf32>
    %35 = math.rsqrt %34 : vector<8x1xf32>
    %36 = vector.broadcast %35 : vector<8x1xf32> to vector<8x32xf32>
    %37 = arith.mulf %27, %36 : vector<8x32xf32>
    %38 = vector.broadcast %19 : vector<1x32xf32> to vector<8x32xf32>
    %39 = arith.mulf %37, %38 : vector<8x32xf32>
    %40 = vector.broadcast %21 : vector<1x32xf32> to vector<8x32xf32>
    %41 = arith.addf %39, %40 : vector<8x32xf32>
    %c0_23 = arith.constant 0 : index
    %c0_24 = arith.constant 0 : index
    %c0_25 = arith.constant 0 : index
    %42 = vector.load %arg9[%c0_23, %c0_24, %c0_25] : memref<1x32x96xf32, #tpu.memory_space<vmem>>, vector<1x32x96xf32>
    %43 = vector.shape_cast %42 : vector<1x32x96xf32> to vector<32x96xf32>
    %c0_26 = arith.constant 0 : index
    %c0_27 = arith.constant 0 : index
    %c0_28 = arith.constant 0 : index
    %44 = vector.load %arg10[%c0_26, %c0_27, %c0_28] : memref<1x1x96xf32, #tpu.memory_space<vmem>>, vector<1x1x96xf32>
    %45 = vector.shape_cast %44 : vector<1x1x96xf32> to vector<1x96xf32>
    %c0_29 = arith.constant 0 : index
    %c0_30 = arith.constant 0 : index
    %c0_31 = arith.constant 0 : index
    %46 = vector.load %arg11[%c0_29, %c0_30, %c0_31] : memref<1x32x32xf32, #tpu.memory_space<vmem>>, vector<1x32x32xf32>
    %47 = vector.shape_cast %46 : vector<1x32x32xf32> to vector<32x32xf32>
    %c0_32 = arith.constant 0 : index
    %c0_33 = arith.constant 0 : index
    %c0_34 = arith.constant 0 : index
    %48 = vector.load %arg12[%c0_32, %c0_33, %c0_34] : memref<1x1x32xf32, #tpu.memory_space<vmem>>, vector<1x1x32xf32>
    %49 = vector.shape_cast %48 : vector<1x1x32xf32> to vector<1x32xf32>
    %cst_35 = arith.constant dense<0.000000e+00> : vector<8x96xf32>
    %50 = tpu.matmul %41, %43, %cst_35 {dimension_numbers = #tpu.dot_dimension_numbers<[1], [0], [0], [1], [0, 0, 1, 1], [], []>} : vector<8x32xf32>, vector<32x96xf32>, vector<8x96xf32> -> vector<8x96xf32>
    %51 = vector.broadcast %45 : vector<1x96xf32> to vector<8x96xf32>
    %52 = arith.addf %50, %51 : vector<8x96xf32>
    %53 = vector.extract_strided_slice %52 {offsets = [0, 0], sizes = [8, 32], strides = [1, 1]} : vector<8x96xf32> to vector<8x32xf32>
    %54 = vector.extract_strided_slice %52 {offsets = [0, 32], sizes = [8, 32], strides = [1, 1]} : vector<8x96xf32> to vector<8x32xf32>
    %55 = vector.extract_strided_slice %52 {offsets = [0, 64], sizes = [8, 32], strides = [1, 1]} : vector<8x96xf32> to vector<8x32xf32>
    %56 = vector.extract_strided_slice %53 {offsets = [0, 0], sizes = [8, 8], strides = [1, 1]} : vector<8x32xf32> to vector<8x8xf32>
    %57 = vector.extract_strided_slice %54 {offsets = [0, 0], sizes = [8, 8], strides = [1, 1]} : vector<8x32xf32> to vector<8x8xf32>
    %cst_36 = arith.constant dense<0.000000e+00> : vector<8x8xf32>
    %58 = tpu.matmul %56, %57, %cst_36 {dimension_numbers = #tpu.dot_dimension_numbers<[1], [1], [0], [0], [0, 0, 1, 0], [], []>} : vector<8x8xf32>, vector<8x8xf32>, vector<8x8xf32> -> vector<8x8xf32>
    %cst_37 = arith.constant 0.353553385 : f32
    %59 = vector.broadcast %cst_37 : f32 to vector<8x8xf32>
    %60 = arith.mulf %58, %59 : vector<8x8xf32>
    %61 = arith.addf %60, %15 : vector<8x8xf32>
    %cst_38 = arith.constant dense<0xFF800000> : vector<8xf32>
    %62 = vector.multi_reduction <maximumf>, %61, %cst_38 [1] : vector<8x8xf32> to vector<8xf32>
    %63 = vector.shape_cast %62 : vector<8xf32> to vector<8x1xf32>
    %64 = vector.broadcast %63 : vector<8x1xf32> to vector<8x8xf32>
    %65 = arith.subf %61, %64 : vector<8x8xf32>
    %66 = math.exp %65 : vector<8x8xf32>
    %cst_39 = arith.constant dense<0.000000e+00> : vector<8xf32>
    %67 = vector.multi_reduction <add>, %66, %cst_39 [1] : vector<8x8xf32> to vector<8xf32>
    %68 = vector.shape_cast %67 : vector<8xf32> to vector<8x1xf32>
    %69 = tpu.reciprocal %68 {approx = true} : vector<8x1xf32> -> vector<8x1xf32>
    %70 = vector.broadcast %69 : vector<8x1xf32> to vector<8x8xf32>
    %71 = arith.mulf %66, %70 : vector<8x8xf32>
    %72 = vector.extract_strided_slice %55 {offsets = [0, 0], sizes = [8, 8], strides = [1, 1]} : vector<8x32xf32> to vector<8x8xf32>
    %cst_40 = arith.constant dense<0.000000e+00> : vector<8x8xf32>
    %73 = tpu.matmul %71, %72, %cst_40 {dimension_numbers = #tpu.dot_dimension_numbers<[1], [0], [0], [1], [0, 0, 1, 1], [], []>} : vector<8x8xf32>, vector<8x8xf32>, vector<8x8xf32> -> vector<8x8xf32>
    %74 = vector.extract_strided_slice %53 {offsets = [0, 8], sizes = [8, 8], strides = [1, 1]} : vector<8x32xf32> to vector<8x8xf32>
    %75 = vector.extract_strided_slice %54 {offsets = [0, 8], sizes = [8, 8], strides = [1, 1]} : vector<8x32xf32> to vector<8x8xf32>
    %cst_41 = arith.constant dense<0.000000e+00> : vector<8x8xf32>
    %76 = tpu.matmul %74, %75, %cst_41 {dimension_numbers = #tpu.dot_dimension_numbers<[1], [1], [0], [0], [0, 0, 1, 0], [], []>} : vector<8x8xf32>, vector<8x8xf32>, vector<8x8xf32> -> vector<8x8xf32>
    %cst_42 = arith.constant 0.353553385 : f32
    %77 = vector.broadcast %cst_42 : f32 to vector<8x8xf32>
    %78 = arith.mulf %76, %77 : vector<8x8xf32>
    %79 = arith.addf %78, %15 : vector<8x8xf32>
    %cst_43 = arith.constant dense<0xFF800000> : vector<8xf32>
    %80 = vector.multi_reduction <maximumf>, %79, %cst_43 [1] : vector<8x8xf32> to vector<8xf32>
    %81 = vector.shape_cast %80 : vector<8xf32> to vector<8x1xf32>
    %82 = vector.broadcast %81 : vector<8x1xf32> to vector<8x8xf32>
    %83 = arith.subf %79, %82 : vector<8x8xf32>
    %84 = math.exp %83 : vector<8x8xf32>
    %cst_44 = arith.constant dense<0.000000e+00> : vector<8xf32>
    %85 = vector.multi_reduction <add>, %84, %cst_44 [1] : vector<8x8xf32> to vector<8xf32>
    %86 = vector.shape_cast %85 : vector<8xf32> to vector<8x1xf32>
    %87 = tpu.reciprocal %86 {approx = true} : vector<8x1xf32> -> vector<8x1xf32>
    %88 = vector.broadcast %87 : vector<8x1xf32> to vector<8x8xf32>
    %89 = arith.mulf %84, %88 : vector<8x8xf32>
    %90 = vector.extract_strided_slice %55 {offsets = [0, 8], sizes = [8, 8], strides = [1, 1]} : vector<8x32xf32> to vector<8x8xf32>
    %cst_45 = arith.constant dense<0.000000e+00> : vector<8x8xf32>
    %91 = tpu.matmul %89, %90, %cst_45 {dimension_numbers = #tpu.dot_dimension_numbers<[1], [0], [0], [1], [0, 0, 1, 1], [], []>} : vector<8x8xf32>, vector<8x8xf32>, vector<8x8xf32> -> vector<8x8xf32>
    %92 = vector.extract_strided_slice %53 {offsets = [0, 16], sizes = [8, 8], strides = [1, 1]} : vector<8x32xf32> to vector<8x8xf32>
    %93 = vector.extract_strided_slice %54 {offsets = [0, 16], sizes = [8, 8], strides = [1, 1]} : vector<8x32xf32> to vector<8x8xf32>
    %cst_46 = arith.constant dense<0.000000e+00> : vector<8x8xf32>
    %94 = tpu.matmul %92, %93, %cst_46 {dimension_numbers = #tpu.dot_dimension_numbers<[1], [1], [0], [0], [0, 0, 1, 0], [], []>} : vector<8x8xf32>, vector<8x8xf32>, vector<8x8xf32> -> vector<8x8xf32>
    %cst_47 = arith.constant 0.353553385 : f32
    %95 = vector.broadcast %cst_47 : f32 to vector<8x8xf32>
    %96 = arith.mulf %94, %95 : vector<8x8xf32>
    %97 = arith.addf %96, %15 : vector<8x8xf32>
    %cst_48 = arith.constant dense<0xFF800000> : vector<8xf32>
    %98 = vector.multi_reduction <maximumf>, %97, %cst_48 [1] : vector<8x8xf32> to vector<8xf32>
    %99 = vector.shape_cast %98 : vector<8xf32> to vector<8x1xf32>
    %100 = vector.broadcast %99 : vector<8x1xf32> to vector<8x8xf32>
    %101 = arith.subf %97, %100 : vector<8x8xf32>
    %102 = math.exp %101 : vector<8x8xf32>
    %cst_49 = arith.constant dense<0.000000e+00> : vector<8xf32>
    %103 = vector.multi_reduction <add>, %102, %cst_49 [1] : vector<8x8xf32> to vector<8xf32>
    %104 = vector.shape_cast %103 : vector<8xf32> to vector<8x1xf32>
    %105 = tpu.reciprocal %104 {approx = true} : vector<8x1xf32> -> vector<8x1xf32>
    %106 = vector.broadcast %105 : vector<8x1xf32> to vector<8x8xf32>
    %107 = arith.mulf %102, %106 : vector<8x8xf32>
    %108 = vector.extract_strided_slice %55 {offsets = [0, 16], sizes = [8, 8], strides = [1, 1]} : vector<8x32xf32> to vector<8x8xf32>
    %cst_50 = arith.constant dense<0.000000e+00> : vector<8x8xf32>
    %109 = tpu.matmul %107, %108, %cst_50 {dimension_numbers = #tpu.dot_dimension_numbers<[1], [0], [0], [1], [0, 0, 1, 1], [], []>} : vector<8x8xf32>, vector<8x8xf32>, vector<8x8xf32> -> vector<8x8xf32>
    %110 = vector.extract_strided_slice %53 {offsets = [0, 24], sizes = [8, 8], strides = [1, 1]} : vector<8x32xf32> to vector<8x8xf32>
    %111 = vector.extract_strided_slice %54 {offsets = [0, 24], sizes = [8, 8], strides = [1, 1]} : vector<8x32xf32> to vector<8x8xf32>
    %cst_51 = arith.constant dense<0.000000e+00> : vector<8x8xf32>
    %112 = tpu.matmul %110, %111, %cst_51 {dimension_numbers = #tpu.dot_dimension_numbers<[1], [1], [0], [0], [0, 0, 1, 0], [], []>} : vector<8x8xf32>, vector<8x8xf32>, vector<8x8xf32> -> vector<8x8xf32>
    %cst_52 = arith.constant 0.353553385 : f32
    %113 = vector.broadcast %cst_52 : f32 to vector<8x8xf32>
    %114 = arith.mulf %112, %113 : vector<8x8xf32>
    %115 = arith.addf %114, %15 : vector<8x8xf32>
    %cst_53 = arith.constant dense<0xFF800000> : vector<8xf32>
    %116 = vector.multi_reduction <maximumf>, %115, %cst_53 [1] : vector<8x8xf32> to vector<8xf32>
    %117 = vector.shape_cast %116 : vector<8xf32> to vector<8x1xf32>
    %118 = vector.broadcast %117 : vector<8x1xf32> to vector<8x8xf32>
    %119 = arith.subf %115, %118 : vector<8x8xf32>
    %120 = math.exp %119 : vector<8x8xf32>
    %cst_54 = arith.constant dense<0.000000e+00> : vector<8xf32>
    %121 = vector.multi_reduction <add>, %120, %cst_54 [1] : vector<8x8xf32> to vector<8xf32>
    %122 = vector.shape_cast %121 : vector<8xf32> to vector<8x1xf32>
    %123 = tpu.reciprocal %122 {approx = true} : vector<8x1xf32> -> vector<8x1xf32>
    %124 = vector.broadcast %123 : vector<8x1xf32> to vector<8x8xf32>
    %125 = arith.mulf %120, %124 : vector<8x8xf32>
    %126 = vector.extract_strided_slice %55 {offsets = [0, 24], sizes = [8, 8], strides = [1, 1]} : vector<8x32xf32> to vector<8x8xf32>
    %cst_55 = arith.constant dense<0.000000e+00> : vector<8x8xf32>
    %127 = tpu.matmul %125, %126, %cst_55 {dimension_numbers = #tpu.dot_dimension_numbers<[1], [0], [0], [1], [0, 0, 1, 1], [], []>} : vector<8x8xf32>, vector<8x8xf32>, vector<8x8xf32> -> vector<8x8xf32>
    %128 = tpu.concatenate %73, %91, %109, %127 in 1 : vector<8x8xf32>, vector<8x8xf32>, vector<8x8xf32>, vector<8x8xf32> -> vector<8x32xf32>
    %cst_56 = arith.constant dense<0.000000e+00> : vector<8x32xf32>
    %129 = tpu.matmul %128, %47, %cst_56 {dimension_numbers = #tpu.dot_dimension_numbers<[1], [0], [0], [1], [0, 0, 1, 1], [], []>} : vector<8x32xf32>, vector<32x32xf32>, vector<8x32xf32> -> vector<8x32xf32>
    %130 = vector.broadcast %49 : vector<1x32xf32> to vector<8x32xf32>
    %131 = arith.addf %129, %130 : vector<8x32xf32>
    %132 = arith.addf %3, %131 : vector<8x32xf32>
    %c0_57 = arith.constant 0 : index
    %c0_58 = arith.constant 0 : index
    %c0_59 = arith.constant 0 : index
    %133 = vector.load %arg13[%c0_57, %c0_58, %c0_59] : memref<1x1x32xf32, #tpu.memory_space<vmem>>, vector<1x1x32xf32>
    %134 = vector.shape_cast %133 : vector<1x1x32xf32> to vector<1x32xf32>
    %c0_60 = arith.constant 0 : index
    %c0_61 = arith.constant 0 : index
    %c0_62 = arith.constant 0 : index
    %135 = vector.load %arg14[%c0_60, %c0_61, %c0_62] : memref<1x1x32xf32, #tpu.memory_space<vmem>>, vector<1x1x32xf32>
    %136 = vector.shape_cast %135 : vector<1x1x32xf32> to vector<1x32xf32>
    %cst_63 = arith.constant dense<0.000000e+00> : vector<8xf32>
    %137 = vector.multi_reduction <add>, %132, %cst_63 [1] : vector<8x32xf32> to vector<8xf32>
    %138 = vector.shape_cast %137 : vector<8xf32> to vector<8x1xf32>
    %cst_64 = arith.constant 3.200000e+01 : f32
    %139 = vector.broadcast %cst_64 : f32 to vector<8x1xf32>
    %140 = arith.divf %138, %139 : vector<8x1xf32>
    %141 = vector.broadcast %140 : vector<8x1xf32> to vector<8x32xf32>
    %142 = arith.subf %132, %141 : vector<8x32xf32>
    %143 = arith.mulf %142, %142 : vector<8x32xf32>
    %cst_65 = arith.constant dense<0.000000e+00> : vector<8xf32>
    %144 = vector.multi_reduction <add>, %143, %cst_65 [1] : vector<8x32xf32> to vector<8xf32>
    %145 = vector.shape_cast %144 : vector<8xf32> to vector<8x1xf32>
    %cst_66 = arith.constant 3.200000e+01 : f32
    %146 = vector.broadcast %cst_66 : f32 to vector<8x1xf32>
    %147 = arith.divf %145, %146 : vector<8x1xf32>
    %cst_67 = arith.constant 9.99999974E-6 : f32
    %148 = vector.broadcast %cst_67 : f32 to vector<8x1xf32>
    %149 = arith.addf %147, %148 : vector<8x1xf32>
    %150 = math.rsqrt %149 : vector<8x1xf32>
    %151 = vector.broadcast %150 : vector<8x1xf32> to vector<8x32xf32>
    %152 = arith.mulf %142, %151 : vector<8x32xf32>
    %153 = vector.broadcast %134 : vector<1x32xf32> to vector<8x32xf32>
    %154 = arith.mulf %152, %153 : vector<8x32xf32>
    %155 = vector.broadcast %136 : vector<1x32xf32> to vector<8x32xf32>
    %156 = arith.addf %154, %155 : vector<8x32xf32>
    %c0_68 = arith.constant 0 : index
    %c0_69 = arith.constant 0 : index
    %c0_70 = arith.constant 0 : index
    %157 = vector.load %arg15[%c0_68, %c0_69, %c0_70] : memref<1x32x32xf32, #tpu.memory_space<vmem>>, vector<1x32x32xf32>
    %158 = vector.shape_cast %157 : vector<1x32x32xf32> to vector<32x32xf32>
    %c0_71 = arith.constant 0 : index
    %c0_72 = arith.constant 0 : index
    %c0_73 = arith.constant 0 : index
    %159 = vector.load %arg16[%c0_71, %c0_72, %c0_73] : memref<1x1x32xf32, #tpu.memory_space<vmem>>, vector<1x1x32xf32>
    %160 = vector.shape_cast %159 : vector<1x1x32xf32> to vector<1x32xf32>
    %c0_74 = arith.constant 0 : index
    %c0_75 = arith.constant 0 : index
    %c0_76 = arith.constant 0 : index
    %161 = vector.load %arg17[%c0_74, %c0_75, %c0_76] : memref<1x32x64xf32, #tpu.memory_space<vmem>>, vector<1x32x64xf32>
    %162 = vector.shape_cast %161 : vector<1x32x64xf32> to vector<32x64xf32>
    %c0_77 = arith.constant 0 : index
    %c0_78 = arith.constant 0 : index
    %c0_79 = arith.constant 0 : index
    %163 = vector.load %arg18[%c0_77, %c0_78, %c0_79] : memref<1x1x64xf32, #tpu.memory_space<vmem>>, vector<1x1x64xf32>
    %164 = vector.shape_cast %163 : vector<1x1x64xf32> to vector<1x64xf32>
    %c0_80 = arith.constant 0 : index
    %c0_81 = arith.constant 0 : index
    %c0_82 = arith.constant 0 : index
    %165 = vector.load %arg19[%c0_80, %c0_81, %c0_82] : memref<1x32x32xf32, #tpu.memory_space<vmem>>, vector<1x32x32xf32>
    %166 = vector.shape_cast %165 : vector<1x32x32xf32> to vector<32x32xf32>
    %c0_83 = arith.constant 0 : index
    %c0_84 = arith.constant 0 : index
    %c0_85 = arith.constant 0 : index
    %167 = vector.load %arg20[%c0_83, %c0_84, %c0_85] : memref<1x1x32xf32, #tpu.memory_space<vmem>>, vector<1x1x32xf32>
    %168 = vector.shape_cast %167 : vector<1x1x32xf32> to vector<1x32xf32>
    %cst_86 = arith.constant dense<0.000000e+00> : vector<8x32xf32>
    %169 = tpu.matmul %156, %158, %cst_86 {dimension_numbers = #tpu.dot_dimension_numbers<[1], [0], [0], [1], [0, 0, 1, 1], [], []>} : vector<8x32xf32>, vector<32x32xf32>, vector<8x32xf32> -> vector<8x32xf32>
    %170 = vector.broadcast %160 : vector<1x32xf32> to vector<8x32xf32>
    %171 = arith.addf %169, %170 : vector<8x32xf32>
    %cst_87 = arith.constant dense<0.000000e+00> : vector<8x64xf32>
    %172 = tpu.matmul %5, %162, %cst_87 {dimension_numbers = #tpu.dot_dimension_numbers<[1], [0], [0], [1], [0, 0, 1, 1], [], []>} : vector<8x32xf32>, vector<32x64xf32>, vector<8x64xf32> -> vector<8x64xf32>
    %173 = vector.broadcast %164 : vector<1x64xf32> to vector<8x64xf32>
    %174 = arith.addf %172, %173 : vector<8x64xf32>
    %175 = vector.extract_strided_slice %174 {offsets = [0, 0], sizes = [8, 32], strides = [1, 1]} : vector<8x64xf32> to vector<8x32xf32>
    %176 = vector.extract_strided_slice %174 {offsets = [0, 32], sizes = [8, 32], strides = [1, 1]} : vector<8x64xf32> to vector<8x32xf32>
    %177 = vector.extract_strided_slice %171 {offsets = [0, 0], sizes = [8, 8], strides = [1, 1]} : vector<8x32xf32> to vector<8x8xf32>
    %178 = vector.extract_strided_slice %175 {offsets = [0, 0], sizes = [8, 8], strides = [1, 1]} : vector<8x32xf32> to vector<8x8xf32>
    %cst_88 = arith.constant dense<0.000000e+00> : vector<8x8xf32>
    %179 = tpu.matmul %177, %178, %cst_88 {dimension_numbers = #tpu.dot_dimension_numbers<[1], [1], [0], [0], [0, 0, 1, 0], [], []>} : vector<8x8xf32>, vector<8x8xf32>, vector<8x8xf32> -> vector<8x8xf32>
    %cst_89 = arith.constant 0.353553385 : f32
    %180 = vector.broadcast %cst_89 : f32 to vector<8x8xf32>
    %181 = arith.mulf %179, %180 : vector<8x8xf32>
    %182 = vector.broadcast %17 : vector<1x8xf32> to vector<8x8xf32>
    %183 = arith.addf %181, %182 : vector<8x8xf32>
    %cst_90 = arith.constant dense<0xFF800000> : vector<8xf32>
    %184 = vector.multi_reduction <maximumf>, %183, %cst_90 [1] : vector<8x8xf32> to vector<8xf32>
    %185 = vector.shape_cast %184 : vector<8xf32> to vector<8x1xf32>
    %186 = vector.broadcast %185 : vector<8x1xf32> to vector<8x8xf32>
    %187 = arith.subf %183, %186 : vector<8x8xf32>
    %188 = math.exp %187 : vector<8x8xf32>
    %cst_91 = arith.constant dense<0.000000e+00> : vector<8xf32>
    %189 = vector.multi_reduction <add>, %188, %cst_91 [1] : vector<8x8xf32> to vector<8xf32>
    %190 = vector.shape_cast %189 : vector<8xf32> to vector<8x1xf32>
    %191 = tpu.reciprocal %190 {approx = true} : vector<8x1xf32> -> vector<8x1xf32>
    %192 = vector.broadcast %191 : vector<8x1xf32> to vector<8x8xf32>
    %193 = arith.mulf %188, %192 : vector<8x8xf32>
    %194 = vector.extract_strided_slice %176 {offsets = [0, 0], sizes = [8, 8], strides = [1, 1]} : vector<8x32xf32> to vector<8x8xf32>
    %cst_92 = arith.constant dense<0.000000e+00> : vector<8x8xf32>
    %195 = tpu.matmul %193, %194, %cst_92 {dimension_numbers = #tpu.dot_dimension_numbers<[1], [0], [0], [1], [0, 0, 1, 1], [], []>} : vector<8x8xf32>, vector<8x8xf32>, vector<8x8xf32> -> vector<8x8xf32>
    %196 = vector.extract_strided_slice %171 {offsets = [0, 8], sizes = [8, 8], strides = [1, 1]} : vector<8x32xf32> to vector<8x8xf32>
    %197 = vector.extract_strided_slice %175 {offsets = [0, 8], sizes = [8, 8], strides = [1, 1]} : vector<8x32xf32> to vector<8x8xf32>
    %cst_93 = arith.constant dense<0.000000e+00> : vector<8x8xf32>
    %198 = tpu.matmul %196, %197, %cst_93 {dimension_numbers = #tpu.dot_dimension_numbers<[1], [1], [0], [0], [0, 0, 1, 0], [], []>} : vector<8x8xf32>, vector<8x8xf32>, vector<8x8xf32> -> vector<8x8xf32>
    %cst_94 = arith.constant 0.353553385 : f32
    %199 = vector.broadcast %cst_94 : f32 to vector<8x8xf32>
    %200 = arith.mulf %198, %199 : vector<8x8xf32>
    %201 = vector.broadcast %17 : vector<1x8xf32> to vector<8x8xf32>
    %202 = arith.addf %200, %201 : vector<8x8xf32>
    %cst_95 = arith.constant dense<0xFF800000> : vector<8xf32>
    %203 = vector.multi_reduction <maximumf>, %202, %cst_95 [1] : vector<8x8xf32> to vector<8xf32>
    %204 = vector.shape_cast %203 : vector<8xf32> to vector<8x1xf32>
    %205 = vector.broadcast %204 : vector<8x1xf32> to vector<8x8xf32>
    %206 = arith.subf %202, %205 : vector<8x8xf32>
    %207 = math.exp %206 : vector<8x8xf32>
    %cst_96 = arith.constant dense<0.000000e+00> : vector<8xf32>
    %208 = vector.multi_reduction <add>, %207, %cst_96 [1] : vector<8x8xf32> to vector<8xf32>
    %209 = vector.shape_cast %208 : vector<8xf32> to vector<8x1xf32>
    %210 = tpu.reciprocal %209 {approx = true} : vector<8x1xf32> -> vector<8x1xf32>
    %211 = vector.broadcast %210 : vector<8x1xf32> to vector<8x8xf32>
    %212 = arith.mulf %207, %211 : vector<8x8xf32>
    %213 = vector.extract_strided_slice %176 {offsets = [0, 8], sizes = [8, 8], strides = [1, 1]} : vector<8x32xf32> to vector<8x8xf32>
    %cst_97 = arith.constant dense<0.000000e+00> : vector<8x8xf32>
    %214 = tpu.matmul %212, %213, %cst_97 {dimension_numbers = #tpu.dot_dimension_numbers<[1], [0], [0], [1], [0, 0, 1, 1], [], []>} : vector<8x8xf32>, vector<8x8xf32>, vector<8x8xf32> -> vector<8x8xf32>
    %215 = arith.addf %193, %212 : vector<8x8xf32>
    %216 = vector.extract_strided_slice %171 {offsets = [0, 16], sizes = [8, 8], strides = [1, 1]} : vector<8x32xf32> to vector<8x8xf32>
    %217 = vector.extract_strided_slice %175 {offsets = [0, 16], sizes = [8, 8], strides = [1, 1]} : vector<8x32xf32> to vector<8x8xf32>
    %cst_98 = arith.constant dense<0.000000e+00> : vector<8x8xf32>
    %218 = tpu.matmul %216, %217, %cst_98 {dimension_numbers = #tpu.dot_dimension_numbers<[1], [1], [0], [0], [0, 0, 1, 0], [], []>} : vector<8x8xf32>, vector<8x8xf32>, vector<8x8xf32> -> vector<8x8xf32>
    %cst_99 = arith.constant 0.353553385 : f32
    %219 = vector.broadcast %cst_99 : f32 to vector<8x8xf32>
    %220 = arith.mulf %218, %219 : vector<8x8xf32>
    %221 = vector.broadcast %17 : vector<1x8xf32> to vector<8x8xf32>
    %222 = arith.addf %220, %221 : vector<8x8xf32>
    %cst_100 = arith.constant dense<0xFF800000> : vector<8xf32>
    %223 = vector.multi_reduction <maximumf>, %222, %cst_100 [1] : vector<8x8xf32> to vector<8xf32>
    %224 = vector.shape_cast %223 : vector<8xf32> to vector<8x1xf32>
    %225 = vector.broadcast %224 : vector<8x1xf32> to vector<8x8xf32>
    %226 = arith.subf %222, %225 : vector<8x8xf32>
    %227 = math.exp %226 : vector<8x8xf32>
    %cst_101 = arith.constant dense<0.000000e+00> : vector<8xf32>
    %228 = vector.multi_reduction <add>, %227, %cst_101 [1] : vector<8x8xf32> to vector<8xf32>
    %229 = vector.shape_cast %228 : vector<8xf32> to vector<8x1xf32>
    %230 = tpu.reciprocal %229 {approx = true} : vector<8x1xf32> -> vector<8x1xf32>
    %231 = vector.broadcast %230 : vector<8x1xf32> to vector<8x8xf32>
    %232 = arith.mulf %227, %231 : vector<8x8xf32>
    %233 = vector.extract_strided_slice %176 {offsets = [0, 16], sizes = [8, 8], strides = [1, 1]} : vector<8x32xf32> to vector<8x8xf32>
    %cst_102 = arith.constant dense<0.000000e+00> : vector<8x8xf32>
    %234 = tpu.matmul %232, %233, %cst_102 {dimension_numbers = #tpu.dot_dimension_numbers<[1], [0], [0], [1], [0, 0, 1, 1], [], []>} : vector<8x8xf32>, vector<8x8xf32>, vector<8x8xf32> -> vector<8x8xf32>
    %235 = arith.addf %215, %232 : vector<8x8xf32>
    %236 = vector.extract_strided_slice %171 {offsets = [0, 24], sizes = [8, 8], strides = [1, 1]} : vector<8x32xf32> to vector<8x8xf32>
    %237 = vector.extract_strided_slice %175 {offsets = [0, 24], sizes = [8, 8], strides = [1, 1]} : vector<8x32xf32> to vector<8x8xf32>
    %cst_103 = arith.constant dense<0.000000e+00> : vector<8x8xf32>
    %238 = tpu.matmul %236, %237, %cst_103 {dimension_numbers = #tpu.dot_dimension_numbers<[1], [1], [0], [0], [0, 0, 1, 0], [], []>} : vector<8x8xf32>, vector<8x8xf32>, vector<8x8xf32> -> vector<8x8xf32>
    %cst_104 = arith.constant 0.353553385 : f32
    %239 = vector.broadcast %cst_104 : f32 to vector<8x8xf32>
    %240 = arith.mulf %238, %239 : vector<8x8xf32>
    %241 = vector.broadcast %17 : vector<1x8xf32> to vector<8x8xf32>
    %242 = arith.addf %240, %241 : vector<8x8xf32>
    %cst_105 = arith.constant dense<0xFF800000> : vector<8xf32>
    %243 = vector.multi_reduction <maximumf>, %242, %cst_105 [1] : vector<8x8xf32> to vector<8xf32>
    %244 = vector.shape_cast %243 : vector<8xf32> to vector<8x1xf32>
    %245 = vector.broadcast %244 : vector<8x1xf32> to vector<8x8xf32>
    %246 = arith.subf %242, %245 : vector<8x8xf32>
    %247 = math.exp %246 : vector<8x8xf32>
    %cst_106 = arith.constant dense<0.000000e+00> : vector<8xf32>
    %248 = vector.multi_reduction <add>, %247, %cst_106 [1] : vector<8x8xf32> to vector<8xf32>
    %249 = vector.shape_cast %248 : vector<8xf32> to vector<8x1xf32>
    %250 = tpu.reciprocal %249 {approx = true} : vector<8x1xf32> -> vector<8x1xf32>
    %251 = vector.broadcast %250 : vector<8x1xf32> to vector<8x8xf32>
    %252 = arith.mulf %247, %251 : vector<8x8xf32>
    %253 = vector.extract_strided_slice %176 {offsets = [0, 24], sizes = [8, 8], strides = [1, 1]} : vector<8x32xf32> to vector<8x8xf32>
    %cst_107 = arith.constant dense<0.000000e+00> : vector<8x8xf32>
    %254 = tpu.matmul %252, %253, %cst_107 {dimension_numbers = #tpu.dot_dimension_numbers<[1], [0], [0], [1], [0, 0, 1, 1], [], []>} : vector<8x8xf32>, vector<8x8xf32>, vector<8x8xf32> -> vector<8x8xf32>
    %255 = arith.addf %235, %252 : vector<8x8xf32>
    %256 = tpu.concatenate %195, %214, %234, %254 in 1 : vector<8x8xf32>, vector<8x8xf32>, vector<8x8xf32>, vector<8x8xf32> -> vector<8x32xf32>
    %cst_108 = arith.constant dense<0.000000e+00> : vector<8x32xf32>
    %257 = tpu.matmul %256, %166, %cst_108 {dimension_numbers = #tpu.dot_dimension_numbers<[1], [0], [0], [1], [0, 0, 1, 1], [], []>} : vector<8x32xf32>, vector<32x32xf32>, vector<8x32xf32> -> vector<8x32xf32>
    %258 = vector.broadcast %168 : vector<1x32xf32> to vector<8x32xf32>
    %259 = arith.addf %257, %258 : vector<8x32xf32>
    %cst_109 = arith.constant 2.500000e-01 : f32
    %260 = vector.broadcast %cst_109 : f32 to vector<8x8xf32>
    %261 = arith.mulf %255, %260 : vector<8x8xf32>
    %262 = arith.addf %132, %259 : vector<8x32xf32>
    %c0_110 = arith.constant 0 : index
    %c0_111 = arith.constant 0 : index
    %c0_112 = arith.constant 0 : index
    %263 = vector.load %arg21[%c0_110, %c0_111, %c0_112] : memref<1x1x32xf32, #tpu.memory_space<vmem>>, vector<1x1x32xf32>
    %264 = vector.shape_cast %263 : vector<1x1x32xf32> to vector<1x32xf32>
    %c0_113 = arith.constant 0 : index
    %c0_114 = arith.constant 0 : index
    %c0_115 = arith.constant 0 : index
    %265 = vector.load %arg22[%c0_113, %c0_114, %c0_115] : memref<1x1x32xf32, #tpu.memory_space<vmem>>, vector<1x1x32xf32>
    %266 = vector.shape_cast %265 : vector<1x1x32xf32> to vector<1x32xf32>
    %cst_116 = arith.constant dense<0.000000e+00> : vector<8xf32>
    %267 = vector.multi_reduction <add>, %262, %cst_116 [1] : vector<8x32xf32> to vector<8xf32>
    %268 = vector.shape_cast %267 : vector<8xf32> to vector<8x1xf32>
    %cst_117 = arith.constant 3.200000e+01 : f32
    %269 = vector.broadcast %cst_117 : f32 to vector<8x1xf32>
    %270 = arith.divf %268, %269 : vector<8x1xf32>
    %271 = vector.broadcast %270 : vector<8x1xf32> to vector<8x32xf32>
    %272 = arith.subf %262, %271 : vector<8x32xf32>
    %273 = arith.mulf %272, %272 : vector<8x32xf32>
    %cst_118 = arith.constant dense<0.000000e+00> : vector<8xf32>
    %274 = vector.multi_reduction <add>, %273, %cst_118 [1] : vector<8x32xf32> to vector<8xf32>
    %275 = vector.shape_cast %274 : vector<8xf32> to vector<8x1xf32>
    %cst_119 = arith.constant 3.200000e+01 : f32
    %276 = vector.broadcast %cst_119 : f32 to vector<8x1xf32>
    %277 = arith.divf %275, %276 : vector<8x1xf32>
    %cst_120 = arith.constant 9.99999974E-6 : f32
    %278 = vector.broadcast %cst_120 : f32 to vector<8x1xf32>
    %279 = arith.addf %277, %278 : vector<8x1xf32>
    %280 = math.rsqrt %279 : vector<8x1xf32>
    %281 = vector.broadcast %280 : vector<8x1xf32> to vector<8x32xf32>
    %282 = arith.mulf %272, %281 : vector<8x32xf32>
    %283 = vector.broadcast %264 : vector<1x32xf32> to vector<8x32xf32>
    %284 = arith.mulf %282, %283 : vector<8x32xf32>
    %285 = vector.broadcast %266 : vector<1x32xf32> to vector<8x32xf32>
    %286 = arith.addf %284, %285 : vector<8x32xf32>
    %c0_121 = arith.constant 0 : index
    %c0_122 = arith.constant 0 : index
    %c0_123 = arith.constant 0 : index
    %287 = vector.load %arg23[%c0_121, %c0_122, %c0_123] : memref<1x32x64xf32, #tpu.memory_space<vmem>>, vector<1x32x64xf32>
    %288 = vector.shape_cast %287 : vector<1x32x64xf32> to vector<32x64xf32>
    %cst_124 = arith.constant dense<0.000000e+00> : vector<8x64xf32>
    %289 = tpu.matmul %286, %288, %cst_124 {dimension_numbers = #tpu.dot_dimension_numbers<[1], [0], [0], [1], [0, 0, 1, 1], [], []>} : vector<8x32xf32>, vector<32x64xf32>, vector<8x64xf32> -> vector<8x64xf32>
    %c0_125 = arith.constant 0 : index
    %c0_126 = arith.constant 0 : index
    %c0_127 = arith.constant 0 : index
    %290 = vector.load %arg24[%c0_125, %c0_126, %c0_127] : memref<1x1x64xf32, #tpu.memory_space<vmem>>, vector<1x1x64xf32>
    %291 = vector.shape_cast %290 : vector<1x1x64xf32> to vector<1x64xf32>
    %292 = vector.broadcast %291 : vector<1x64xf32> to vector<8x64xf32>
    %293 = arith.addf %289, %292 : vector<8x64xf32>
    %cst_128 = arith.constant 0.000000e+00 : f32
    %294 = vector.broadcast %cst_128 : f32 to vector<8x64xf32>
    %295 = arith.maximumf %293, %294 : vector<8x64xf32>
    %c0_129 = arith.constant 0 : index
    %c0_130 = arith.constant 0 : index
    %c0_131 = arith.constant 0 : index
    %296 = vector.load %arg25[%c0_129, %c0_130, %c0_131] : memref<1x64x32xf32, #tpu.memory_space<vmem>>, vector<1x64x32xf32>
    %297 = vector.shape_cast %296 : vector<1x64x32xf32> to vector<64x32xf32>
    %cst_132 = arith.constant dense<0.000000e+00> : vector<8x32xf32>
    %298 = tpu.matmul %295, %297, %cst_132 {dimension_numbers = #tpu.dot_dimension_numbers<[1], [0], [0], [1], [0, 0, 1, 1], [], []>} : vector<8x64xf32>, vector<64x32xf32>, vector<8x32xf32> -> vector<8x32xf32>
    %c0_133 = arith.constant 0 : index
    %c0_134 = arith.constant 0 : index
    %c0_135 = arith.constant 0 : index
    %299 = vector.load %arg26[%c0_133, %c0_134, %c0_135] : memref<1x1x32xf32, #tpu.memory_space<vmem>>, vector<1x1x32xf32>
    %300 = vector.shape_cast %299 : vector<1x1x32xf32> to vector<1x32xf32>
    %301 = vector.broadcast %300 : vector<1x32xf32> to vector<8x32xf32>
    %302 = arith.addf %298, %301 : vector<8x32xf32>
    %303 = arith.addf %262, %302 : vector<8x32xf32>
    %c0_136 = arith.constant 0 : index
    %c0_137 = arith.constant 0 : index
    %304 = vector.load %arg36[%c0_136, %c0_137] : memref<8x32xf32, #tpu.memory_space<vmem>>, vector<8x32xf32>
    tpu.vector_store %arg36[%c0_136, %c0_137], %303 {strides = array<i32>} : memref<8x32xf32, #tpu.memory_space<vmem>>, vector<8x32xf32>,
    %c1_i32 = arith.constant 1 : i32
    %305 = arith.cmpi eq, %arg1, %c1_i32 : i32
    %306 = arith.extui %305 : i1 to i32
    %c0_i32_138 = arith.constant 0 : i32
    %307 = arith.cmpi ne, %306, %c0_i32_138 : i32
    scf.if %307 {
      %c0_139 = arith.constant 0 : index
      %c0_140 = arith.constant 0 : index
      %308 = vector.load %arg27[%c0_139, %c0_140] : memref<1x32xf32, #tpu.memory_space<vmem>>, vector<1x32xf32>
      %c0_141 = arith.constant 0 : index
      %c0_142 = arith.constant 0 : index
      %309 = vector.load %arg28[%c0_141, %c0_142] : memref<1x32xf32, #tpu.memory_space<vmem>>, vector<1x32xf32>
      %cst_143 = arith.constant dense<0.000000e+00> : vector<8xf32>
      %310 = vector.multi_reduction <add>, %303, %cst_143 [1] : vector<8x32xf32> to vector<8xf32>
      %311 = vector.shape_cast %310 : vector<8xf32> to vector<8x1xf32>
      %cst_144 = arith.constant 3.200000e+01 : f32
      %312 = vector.broadcast %cst_144 : f32 to vector<8x1xf32>
      %313 = arith.divf %311, %312 : vector<8x1xf32>
      %314 = vector.broadcast %313 : vector<8x1xf32> to vector<8x32xf32>
      %315 = arith.subf %303, %314 : vector<8x32xf32>
      %316 = arith.mulf %315, %315 : vector<8x32xf32>
      %cst_145 = arith.constant dense<0.000000e+00> : vector<8xf32>
      %317 = vector.multi_reduction <add>, %316, %cst_145 [1] : vector<8x32xf32> to vector<8xf32>
      %318 = vector.shape_cast %317 : vector<8xf32> to vector<8x1xf32>
      %cst_146 = arith.constant 3.200000e+01 : f32
      %319 = vector.broadcast %cst_146 : f32 to vector<8x1xf32>
      %320 = arith.divf %318, %319 : vector<8x1xf32>
      %cst_147 = arith.constant 9.99999974E-6 : f32
      %321 = vector.broadcast %cst_147 : f32 to vector<8x1xf32>
      %322 = arith.addf %320, %321 : vector<8x1xf32>
      %323 = math.rsqrt %322 : vector<8x1xf32>
      %324 = vector.broadcast %323 : vector<8x1xf32> to vector<8x32xf32>
      %325 = arith.mulf %315, %324 : vector<8x32xf32>
      %326 = vector.broadcast %308 : vector<1x32xf32> to vector<8x32xf32>
      %327 = arith.mulf %325, %326 : vector<8x32xf32>
      %328 = vector.broadcast %309 : vector<1x32xf32> to vector<8x32xf32>
      %329 = arith.addf %327, %328 : vector<8x32xf32>
      %c0_148 = arith.constant 0 : index
      %c0_149 = arith.constant 0 : index
      %330 = vector.load %arg29[%c0_148, %c0_149] : memref<32x128xf32, #tpu.memory_space<vmem>>, vector<32x128xf32>
      %cst_150 = arith.constant dense<0.000000e+00> : vector<8x128xf32>
      %331 = tpu.matmul %329, %330, %cst_150 {dimension_numbers = #tpu.dot_dimension_numbers<[1], [0], [0], [1], [0, 0, 1, 1], [], []>} : vector<8x32xf32>, vector<32x128xf32>, vector<8x128xf32> -> vector<8x128xf32>
      %c0_151 = arith.constant 0 : index
      %c0_152 = arith.constant 0 : index
      %332 = vector.load %arg30[%c0_151, %c0_152] : memref<1x128xf32, #tpu.memory_space<vmem>>, vector<1x128xf32>
      %333 = vector.broadcast %332 : vector<1x128xf32> to vector<8x128xf32>
      %334 = arith.addf %331, %333 : vector<8x128xf32>
      %cst_153 = arith.constant dense<0xFF800000> : vector<8xf32>
      %335 = vector.multi_reduction <maximumf>, %334, %cst_153 [1] : vector<8x128xf32> to vector<8xf32>
      %336 = vector.shape_cast %335 : vector<8xf32> to vector<8x1xf32>
      %337 = vector.broadcast %336 : vector<8x1xf32> to vector<8x128xf32>
      %338 = arith.subf %334, %337 : vector<8x128xf32>
      %339 = math.exp %338 : vector<8x128xf32>
      %cst_154 = arith.constant dense<0.000000e+00> : vector<8xf32>
      %340 = vector.multi_reduction <add>, %339, %cst_154 [1] : vector<8x128xf32> to vector<8xf32>
      %341 = vector.shape_cast %340 : vector<8xf32> to vector<8x1xf32>
      %342 = tpu.reciprocal %341 {approx = true} : vector<8x1xf32> -> vector<8x1xf32>
      %343 = vector.broadcast %342 : vector<8x1xf32> to vector<8x128xf32>
      %344 = arith.mulf %339, %343 : vector<8x128xf32>
      %cst_155 = arith.constant dense<0.000000e+00> : vector<8x32xf32>
      %345 = tpu.matmul %261, %5, %cst_155 {dimension_numbers = #tpu.dot_dimension_numbers<[1], [0], [0], [1], [0, 0, 1, 1], [], []>} : vector<8x8xf32>, vector<8x32xf32>, vector<8x32xf32> -> vector<8x32xf32>
      %346 = tpu.iota {dimensions = array<i32: 1>} : vector<8x128xi32>
      %c0_156 = arith.constant 0 : index
      %c0_157 = arith.constant 0 : index
      %c0_158 = arith.constant 0 : index
      %347 = vector.load %arg6[%c0_156, %c0_157, %c0_158] : memref<1x8x1xi32, #tpu.memory_space<vmem>>, vector<1x8x1xi32>
      %348 = vector.shape_cast %347 : vector<1x8x1xi32> to vector<8x1xi32>
      %349 = vector.broadcast %348 : vector<8x1xi32> to vector<8x128xi32>
      %350 = arith.cmpi eq, %349, %346 : vector<8x128xi32>
      %351 = arith.extui %350 : vector<8x128xi1> to vector<8x128xi32>
      %352 = arith.sitofp %351 : vector<8x128xi32> to vector<8x128xf32>
      %cst_159 = arith.constant dense<0.000000e+00> : vector<8x128xf32>
      %353 = tpu.matmul %261, %352, %cst_159 {dimension_numbers = #tpu.dot_dimension_numbers<[1], [0], [0], [1], [0, 0, 1, 1], [], []>} : vector<8x8xf32>, vector<8x128xf32>, vector<8x128xf32> -> vector<8x128xf32>
      %c0_160 = arith.constant 0 : index
      %c0_161 = arith.constant 0 : index
      %c0_162 = arith.constant 0 : index
      %354 = vector.load %arg2[%c0_160, %c0_161, %c0_162] : memref<1x8x32xf32, #tpu.memory_space<vmem>>, vector<1x8x32xf32>
      %355 = vector.shape_cast %354 : vector<1x8x32xf32> to vector<8x32xf32>
      %c0_163 = arith.constant 0 : index
      %c0_164 = arith.constant 0 : index
      %356 = vector.load %arg31[%c0_163, %c0_164] : memref<1x32xf32, #tpu.memory_space<vmem>>, vector<1x32xf32>
      %357 = vector.broadcast %356 : vector<1x32xf32> to vector<8x32xf32>
      %358 = arith.mulf %345, %357 : vector<8x32xf32>
      %cst_165 = arith.constant dense<0.000000e+00> : vector<8xf32>
      %359 = vector.multi_reduction <add>, %358, %cst_165 [1] : vector<8x32xf32> to vector<8xf32>
      %360 = vector.shape_cast %359 : vector<8xf32> to vector<8x1xf32>
      %c0_166 = arith.constant 0 : index
      %c0_167 = arith.constant 0 : index
      %361 = vector.load %arg32[%c0_166, %c0_167] : memref<1x32xf32, #tpu.memory_space<vmem>>, vector<1x32xf32>
      %362 = vector.broadcast %361 : vector<1x32xf32> to vector<8x32xf32>
      %363 = arith.mulf %329, %362 : vector<8x32xf32>
      %cst_168 = arith.constant dense<0.000000e+00> : vector<8xf32>
      %364 = vector.multi_reduction <add>, %363, %cst_168 [1] : vector<8x32xf32> to vector<8xf32>
      %365 = vector.shape_cast %364 : vector<8xf32> to vector<8x1xf32>
      %366 = arith.addf %360, %365 : vector<8x1xf32>
      %c0_169 = arith.constant 0 : index
      %c0_170 = arith.constant 0 : index
      %367 = vector.load %arg33[%c0_169, %c0_170] : memref<1x32xf32, #tpu.memory_space<vmem>>, vector<1x32xf32>
      %368 = vector.broadcast %367 : vector<1x32xf32> to vector<8x32xf32>
      %369 = arith.mulf %355, %368 : vector<8x32xf32>
      %cst_171 = arith.constant dense<0.000000e+00> : vector<8xf32>
      %370 = vector.multi_reduction <add>, %369, %cst_171 [1] : vector<8x32xf32> to vector<8xf32>
      %371 = vector.shape_cast %370 : vector<8xf32> to vector<8x1xf32>
      %372 = arith.addf %366, %371 : vector<8x1xf32>
      %c0_172 = arith.constant 0 : index
      %c0_173 = arith.constant 0 : index
      %373 = vector.load %arg34[%c0_172, %c0_173] : memref<1x1xf32, #tpu.memory_space<vmem>>, vector<1x1xf32>
      %374 = vector.broadcast %373 : vector<1x1xf32> to vector<8x1xf32>
      %375 = arith.addf %372, %374 : vector<8x1xf32>
      %cst_174 = arith.constant 0.000000e+00 : f32
      %376 = vector.broadcast %cst_174 : f32 to vector<8x1xf32>
      %377 = arith.subf %376, %375 : vector<8x1xf32>
      %378 = math.exp %377 : vector<8x1xf32>
      %cst_175 = arith.constant 1.000000e+00 : f32
      %379 = vector.broadcast %cst_175 : f32 to vector<8x1xf32>
      %380 = arith.addf %379, %378 : vector<8x1xf32>
      %cst_176 = arith.constant 1.000000e+00 : f32
      %381 = vector.broadcast %cst_176 : f32 to vector<8x1xf32>
      %382 = arith.divf %381, %380 : vector<8x1xf32>
      %383 = vector.broadcast %382 : vector<8x1xf32> to vector<8x128xf32>
      %384 = arith.mulf %344, %383 : vector<8x128xf32>
      %cst_177 = arith.constant 1.000000e+00 : f32
      %385 = vector.broadcast %cst_177 : f32 to vector<8x1xf32>
      %386 = arith.subf %385, %382 : vector<8x1xf32>
      %387 = vector.broadcast %386 : vector<8x1xf32> to vector<8x128xf32>
      %388 = arith.mulf %353, %387 : vector<8x128xf32>
      %389 = arith.addf %384, %388 : vector<8x128xf32>
      %390 = tpu.iota {dimensions = array<i32: 1>} : vector<8x128xi32>
      %c18_i32 = arith.constant 18 : i32
      %391 = vector.broadcast %c18_i32 : i32 to vector<8x128xi32>
      %392 = arith.cmpi slt, %390, %391 : vector<8x128xi32>
      %393 = math.log %389 : vector<8x128xf32>
      %cst_178 = arith.constant 0.000000e+00 : f32
      %394 = vector.broadcast %cst_178 : f32 to vector<8x128xf32>
      %395 = arith.select %392, %393, %394 : vector<8x128xi1>, vector<8x128xf32>
      %c0_179 = arith.constant 0 : index
      %c0_180 = arith.constant 0 : index
      %c0_181 = arith.constant 0 : index
      %396 = vector.load %arg35[%c0_179, %c0_180, %c0_181] : memref<1x8x128xf32, #tpu.memory_space<vmem>>, vector<1x8x128xf32>
      %397 = vector.shape_cast %396 : vector<1x8x128xf32> to vector<8x128xf32>
      %398 = vector.shape_cast %395 : vector<8x128xf32> to vector<1x8x128xf32>
      tpu.vector_store %arg35[%c0_179, %c0_180, %c0_181], %398 {strides = array<i32>} : memref<1x8x128xf32, #tpu.memory_space<vmem>>, vector<1x8x128xf32>,
    } else {
    }
    return
  }
  func.func @transform_0(%arg0: i32, %arg1: i32) -> (i32, i32, i32) {
    %c0_i32 = arith.constant 0 : i32
    %c0_i32_0 = arith.constant 0 : i32
    %c0_i32_1 = arith.constant 0 : i32
    return %arg0, %c0_i32, %c0_i32_0 : i32, i32, i32
  }
  func.func @transform_1(%arg0: i32, %arg1: i32) -> (i32, i32, i32) {
    %c0_i32 = arith.constant 0 : i32
    %c0_i32_0 = arith.constant 0 : i32
    %c0_i32_1 = arith.constant 0 : i32
    return %arg0, %c0_i32, %c0_i32_0 : i32, i32, i32
  }
  func.func @transform_2(%arg0: i32, %arg1: i32) -> (i32, i32, i32) {
    %c0_i32 = arith.constant 0 : i32
    %c0_i32_0 = arith.constant 0 : i32
    %c0_i32_1 = arith.constant 0 : i32
    return %arg0, %c0_i32, %c0_i32_0 : i32, i32, i32
  }
  func.func @transform_3(%arg0: i32, %arg1: i32) -> (i32, i32, i32) {
    %c0_i32 = arith.constant 0 : i32
    %c0_i32_0 = arith.constant 0 : i32
    %c0_i32_1 = arith.constant 0 : i32
    return %arg0, %c0_i32, %c0_i32_0 : i32, i32, i32
  }
  func.func @transform_4(%arg0: i32, %arg1: i32) -> (i32, i32, i32) {
    %c0_i32 = arith.constant 0 : i32
    %c0_i32_0 = arith.constant 0 : i32
    %c0_i32_1 = arith.constant 0 : i32
    return %arg0, %c0_i32, %c0_i32_0 : i32, i32, i32
  }
  func.func @transform_5(%arg0: i32, %arg1: i32) -> (i32, i32, i32) {
    %c0_i32 = arith.constant 0 : i32
    %c0_i32_0 = arith.constant 0 : i32
    %c0_i32_1 = arith.constant 0 : i32
    return %arg1, %c0_i32, %c0_i32_0 : i32, i32, i32
  }
  func.func @transform_6(%arg0: i32, %arg1: i32) -> (i32, i32, i32) {
    %c0_i32 = arith.constant 0 : i32
    %c0_i32_0 = arith.constant 0 : i32
    %c0_i32_1 = arith.constant 0 : i32
    return %arg1, %c0_i32, %c0_i32_0 : i32, i32, i32
  }
  func.func @transform_7(%arg0: i32, %arg1: i32) -> (i32, i32, i32) {
    %c0_i32 = arith.constant 0 : i32
    %c0_i32_0 = arith.constant 0 : i32
    %c0_i32_1 = arith.constant 0 : i32
    return %arg1, %c0_i32, %c0_i32_0 : i32, i32, i32
  }
  func.func @transform_8(%arg0: i32, %arg1: i32) -> (i32, i32, i32) {
    %c0_i32 = arith.constant 0 : i32
    %c0_i32_0 = arith.constant 0 : i32
    %c0_i32_1 = arith.constant 0 : i32
    return %arg1, %c0_i32, %c0_i32_0 : i32, i32, i32
  }
  func.func @transform_9(%arg0: i32, %arg1: i32) -> (i32, i32, i32) {
    %c0_i32 = arith.constant 0 : i32
    %c0_i32_0 = arith.constant 0 : i32
    %c0_i32_1 = arith.constant 0 : i32
    return %arg1, %c0_i32, %c0_i32_0 : i32, i32, i32
  }
  func.func @transform_10(%arg0: i32, %arg1: i32) -> (i32, i32, i32) {
    %c0_i32 = arith.constant 0 : i32
    %c0_i32_0 = arith.constant 0 : i32
    %c0_i32_1 = arith.constant 0 : i32
    return %arg1, %c0_i32, %c0_i32_0 : i32, i32, i32
  }
  func.func @transform_11(%arg0: i32, %arg1: i32) -> (i32, i32, i32) {
    %c0_i32 = arith.constant 0 : i32
    %c0_i32_0 = arith.constant 0 : i32
    %c0_i32_1 = arith.constant 0 : i32
    return %arg1, %c0_i32, %c0_i32_0 : i32, i32, i32
  }
  func.func @transform_12(%arg0: i32, %arg1: i32) -> (i32, i32, i32) {
    %c0_i32 = arith.constant 0 : i32
    %c0_i32_0 = arith.constant 0 : i32
    %c0_i32_1 = arith.constant 0 : i32
    return %arg1, %c0_i32, %c0_i32_0 : i32, i32, i32
  }
  func.func @transform_13(%arg0: i32, %arg1: i32) -> (i32, i32, i32) {
    %c0_i32 = arith.constant 0 : i32
    %c0_i32_0 = arith.constant 0 : i32
    %c0_i32_1 = arith.constant 0 : i32
    return %arg1, %c0_i32, %c0_i32_0 : i32, i32, i32
  }
  func.func @transform_14(%arg0: i32, %arg1: i32) -> (i32, i32, i32) {
    %c0_i32 = arith.constant 0 : i32
    %c0_i32_0 = arith.constant 0 : i32
    %c0_i32_1 = arith.constant 0 : i32
    return %arg1, %c0_i32, %c0_i32_0 : i32, i32, i32
  }
  func.func @transform_15(%arg0: i32, %arg1: i32) -> (i32, i32, i32) {
    %c0_i32 = arith.constant 0 : i32
    %c0_i32_0 = arith.constant 0 : i32
    %c0_i32_1 = arith.constant 0 : i32
    return %arg1, %c0_i32, %c0_i32_0 : i32, i32, i32
  }
  func.func @transform_16(%arg0: i32, %arg1: i32) -> (i32, i32, i32) {
    %c0_i32 = arith.constant 0 : i32
    %c0_i32_0 = arith.constant 0 : i32
    %c0_i32_1 = arith.constant 0 : i32
    return %arg1, %c0_i32, %c0_i32_0 : i32, i32, i32
  }
  func.func @transform_17(%arg0: i32, %arg1: i32) -> (i32, i32, i32) {
    %c0_i32 = arith.constant 0 : i32
    %c0_i32_0 = arith.constant 0 : i32
    %c0_i32_1 = arith.constant 0 : i32
    return %arg1, %c0_i32, %c0_i32_0 : i32, i32, i32
  }
  func.func @transform_18(%arg0: i32, %arg1: i32) -> (i32, i32, i32) {
    %c0_i32 = arith.constant 0 : i32
    %c0_i32_0 = arith.constant 0 : i32
    %c0_i32_1 = arith.constant 0 : i32
    return %arg1, %c0_i32, %c0_i32_0 : i32, i32, i32
  }
  func.func @transform_19(%arg0: i32, %arg1: i32) -> (i32, i32, i32) {
    %c0_i32 = arith.constant 0 : i32
    %c0_i32_0 = arith.constant 0 : i32
    %c0_i32_1 = arith.constant 0 : i32
    return %arg1, %c0_i32, %c0_i32_0 : i32, i32, i32
  }
  func.func @transform_20(%arg0: i32, %arg1: i32) -> (i32, i32, i32) {
    %c0_i32 = arith.constant 0 : i32
    %c0_i32_0 = arith.constant 0 : i32
    %c0_i32_1 = arith.constant 0 : i32
    return %arg1, %c0_i32, %c0_i32_0 : i32, i32, i32
  }
  func.func @transform_21(%arg0: i32, %arg1: i32) -> (i32, i32, i32) {
    %c0_i32 = arith.constant 0 : i32
    %c0_i32_0 = arith.constant 0 : i32
    %c0_i32_1 = arith.constant 0 : i32
    return %arg1, %c0_i32, %c0_i32_0 : i32, i32, i32
  }
  func.func @transform_22(%arg0: i32, %arg1: i32) -> (i32, i32, i32) {
    %c0_i32 = arith.constant 0 : i32
    %c0_i32_0 = arith.constant 0 : i32
    %c0_i32_1 = arith.constant 0 : i32
    return %arg1, %c0_i32, %c0_i32_0 : i32, i32, i32
  }
  func.func @transform_23(%arg0: i32, %arg1: i32) -> (i32, i32, i32) {
    %c0_i32 = arith.constant 0 : i32
    %c0_i32_0 = arith.constant 0 : i32
    %c0_i32_1 = arith.constant 0 : i32
    return %arg1, %c0_i32, %c0_i32_0 : i32, i32, i32
  }
  func.func @transform_24(%arg0: i32, %arg1: i32) -> (i32, i32, i32) {
    %c0_i32 = arith.constant 0 : i32
    %c0_i32_0 = arith.constant 0 : i32
    %c0_i32_1 = arith.constant 0 : i32
    return %arg1, %c0_i32, %c0_i32_0 : i32, i32, i32
  }
  func.func @transform_25(%arg0: i32, %arg1: i32) -> (i32, i32) {
    %c0_i32 = arith.constant 0 : i32
    %c0_i32_0 = arith.constant 0 : i32
    %c0_i32_1 = arith.constant 0 : i32
    return %c0_i32, %c0_i32_0 : i32, i32
  }
  func.func @transform_26(%arg0: i32, %arg1: i32) -> (i32, i32) {
    %c0_i32 = arith.constant 0 : i32
    %c0_i32_0 = arith.constant 0 : i32
    %c0_i32_1 = arith.constant 0 : i32
    return %c0_i32, %c0_i32_0 : i32, i32
  }
  func.func @transform_27(%arg0: i32, %arg1: i32) -> (i32, i32) {
    %c0_i32 = arith.constant 0 : i32
    %c0_i32_0 = arith.constant 0 : i32
    %c0_i32_1 = arith.constant 0 : i32
    return %c0_i32, %c0_i32_0 : i32, i32
  }
  func.func @transform_28(%arg0: i32, %arg1: i32) -> (i32, i32) {
    %c0_i32 = arith.constant 0 : i32
    %c0_i32_0 = arith.constant 0 : i32
    %c0_i32_1 = arith.constant 0 : i32
    return %c0_i32, %c0_i32_0 : i32, i32
  }
  func.func @transform_29(%arg0: i32, %arg1: i32) -> (i32, i32) {
    %c0_i32 = arith.constant 0 : i32
    %c0_i32_0 = arith.constant 0 : i32
    %c0_i32_1 = arith.constant 0 : i32
    return %c0_i32, %c0_i32_0 : i32, i32
  }
  func.func @transform_30(%arg0: i32, %arg1: i32) -> (i32, i32) {
    %c0_i32 = arith.constant 0 : i32
    %c0_i32_0 = arith.constant 0 : i32
    %c0_i32_1 = arith.constant 0 : i32
    return %c0_i32, %c0_i32_0 : i32, i32
  }
  func.func @transform_31(%arg0: i32, %arg1: i32) -> (i32, i32) {
    %c0_i32 = arith.constant 0 : i32
    %c0_i32_0 = arith.constant 0 : i32
    %c0_i32_1 = arith.constant 0 : i32
    return %c0_i32, %c0_i32_0 : i32, i32
  }
  func.func @transform_32(%arg0: i32, %arg1: i32) -> (i32, i32) {
    %c0_i32 = arith.constant 0 : i32
    %c0_i32_0 = arith.constant 0 : i32
    %c0_i32_1 = arith.constant 0 : i32
    return %c0_i32, %c0_i32_0 : i32, i32
  }
  func.func @transform_33(%arg0: i32, %arg1: i32) -> (i32, i32, i32) {
    %c0_i32 = arith.constant 0 : i32
    %c0_i32_0 = arith.constant 0 : i32
    %c0_i32_1 = arith.constant 0 : i32
    return %arg0, %c0_i32, %c0_i32_0 : i32, i32, i32
  }
}

</mosaic_0001>

<llo_original>
// kernel: forward.2
$region0: #{forward.2}
  #allocation0 [shape = 'u32[]', space=smem, size = 0x4, offset = 0x4, fixed_abs, tag = 'smem constant byte address 0x4 - core index']
  #allocation1 [shape = 'u32[144,128]{1,0:T(1,128)}', space=vmem, size = 0x12000, scoped, tag = 'internal scratch']
  %s0 = inlined_call_operand.vmem [shape: f32[2,8,32], index: 0, kind: input, shape index: {}]
  %s1 = inlined_call_operand.vmem [shape: f32[2,1,8], index: 1, kind: input, shape index: {}]
  %s2 = inlined_call_operand.vmem [shape: f32[2,1,32], index: 2, kind: input, shape index: {}]
  %s3 = inlined_call_operand.vmem [shape: f32[2,1,32], index: 3, kind: input, shape index: {}]
  %s4 = inlined_call_operand.vmem [shape: f32[2,32,96], index: 4, kind: input, shape index: {}]
  %s5 = inlined_call_operand.vmem [shape: f32[2,1,96], index: 5, kind: input, shape index: {}]
  %s6 = inlined_call_operand.vmem [shape: f32[2,32,32], index: 6, kind: input, shape index: {}]
  %s7 = inlined_call_operand.vmem [shape: f32[2,1,32], index: 7, kind: input, shape index: {}]
  %s8 = inlined_call_operand.vmem [shape: f32[2,1,32], index: 8, kind: input, shape index: {}]
  %s9 = inlined_call_operand.vmem [shape: f32[2,1,32], index: 9, kind: input, shape index: {}]
  %s10 = inlined_call_operand.vmem [shape: f32[2,32,64], index: 10, kind: input, shape index: {}]
  %s11 = inlined_call_operand.vmem [shape: f32[2,1,64], index: 11, kind: input, shape index: {}]
  %s12 = inlined_call_operand.vmem [shape: f32[2,64,32], index: 12, kind: input, shape index: {}]
  %s13 = inlined_call_operand.vmem [shape: f32[2,1,32], index: 13, kind: input, shape index: {}]
  %s14 = inlined_call_operand.vmem [shape: f32[1,32], index: 14, kind: input, shape index: {}]
  %s15 = inlined_call_operand.vmem [shape: f32[1,32], index: 15, kind: input, shape index: {}]
  %s16 = inlined_call_operand.vmem [shape: f32[2,8,32], index: 16, kind: output, shape index: {}]
  %s17 = sld [smem:[#allocation0]]
  $region105: #{forward.2} parent=0
    _
  %s19 = ssub.s32 1, %s17
  %s20 = scalar_select 0, %s19, %s17
  loop: start=0, step=1, limit=6
  $region2: #{forward.2} parent=0 // loop_pre_header
    _
  $region3: #{forward.2} parent=0 // loop_header
    %s22 = sphi 0, %s26
    %p23 = scmp.ge.s32.totalorder %s22, 6
    %s29 = sphi 0, %s41
    %s30 = sphi 0, %s37
    %s31 = sphi 0, %s29
    %s32 = sphi 0, %s30
    %s33 = sphi 0, %s31
    %s34 = sphi 0, %s32
    %s44 = sphi 0, %s46
    %s47 = sphi 0, %s44
    %s48 = sphi 0, %s47
    %s64 = sphi 0, %s48
    %s70 = sphi 0, %s72
    %s73 = sphi 0, %s70
    %s74 = sphi 0, %s73
    %s90 = sphi 0, %s74
    %s96 = sphi 0, %s98
    %s99 = sphi 0, %s96
    %s100 = sphi 0, %s99
    %s116 = sphi 0, %s100
    %s122 = sphi 0, %s124
    %s125 = sphi 0, %s122
    %s126 = sphi 0, %s125
    %s142 = sphi 0, %s126
    %s148 = sphi 0, %s150
    %s151 = sphi 0, %s148
    %s152 = sphi 0, %s151
    %s168 = sphi 0, %s152
    %s174 = sphi 0, %s176
    %s177 = sphi 0, %s174
    %s178 = sphi 0, %s177
    %s194 = sphi 0, %s178
    %s200 = sphi 0, %s202
    %s203 = sphi 0, %s200
    %s204 = sphi 0, %s203
    %s220 = sphi 0, %s204
    %s226 = sphi 0, %s228
    %s229 = sphi 0, %s226
    %s230 = sphi 0, %s229
    %s246 = sphi 0, %s230
    %s252 = sphi 0, %s254
    %s255 = sphi 0, %s252
    %s256 = sphi 0, %s255
    %s272 = sphi 0, %s256
    %s278 = sphi 0, %s280
    %s281 = sphi 0, %s278
    %s282 = sphi 0, %s281
    %s298 = sphi 0, %s282
    %s304 = sphi 0, %s306
    %s307 = sphi 0, %s304
    %s308 = sphi 0, %s307
    %s324 = sphi 0, %s308
    %s330 = sphi 0, %s332
    %s333 = sphi 0, %s330
    %s334 = sphi 0, %s333
    %s350 = sphi 0, %s334
    %s356 = sphi 0, %s358
    %s359 = sphi 0, %s356
    %s360 = sphi 0, %s359
    %s376 = sphi 0, %s360
    %s382 = sphi 0, %s384
    %s385 = sphi 0, %s382
    %s386 = sphi 0, %s385
    %s402 = sphi 0, %s386
    %s406 = sphi 0, %s406
    %s408 = sphi 0, %s406
    %s409 = sphi 0, %s408
    %s423 = sphi 0, %s409
    %s427 = sphi 0, %s427
    %s429 = sphi 0, %s427
    %s430 = sphi 0, %s429
    %s444 = sphi 0, %s430
    %s450 = sphi 0, %s452
    %s453 = sphi 0, %s450
    %s454 = sphi 0, %s453
    %s470 = sphi 0, %s454
  $region4: #{forward.2} parent=0 // loop_header_branch
    %25 = sbr.rel (%p23) target = $region8
  $region5: #{forward.2} parent=0 // loop_body
    %s27 = ssub.s32 %s22, 1
    %s28 = ssub.s32 %s22, 2
    %s35 = sadd.s32 1, %s30
    %p36 = scmp.ge.s32.totalorder %s35, 2
    %s37 = scalar_select %p36, 0, %s35
    %s38 = sadd.s32 1, %s29
    %s39 = scalar_select %p36, %s38, %s29
    %p40 = scmp.ge.s32.totalorder %s39, 2
    %s41 = scalar_select %p40, 0, %s39
    %s42 = ssub.s32 %s29, %s41
    %p43 = scmp.eq.s32.totalorder %s42, 0
    %s45 = sadd.s32 %s44, 1
    %s46 = scalar_select %p43, %s44, %s45
    %p49 = pneg %p43
    %p50 = scmp.eq.s32.totalorder %s22, 3
    %p51 = por %p49, %p50
    %p52 = scmp.ne.s32.totalorder %s44, %s47
    %p53 = scmp.eq.s32.totalorder %s22, 0
    %p54 = por %p52, %p53
    %p55 = scmp.ne.s32.totalorder %s44, %s47
    %p56 = scmp.eq.s32.totalorder %s27, 3
    %p57 = por %p55, %p56
    %p58 = scmp.ne.s32.totalorder %s47, %s48
    %p59 = scmp.eq.s32.totalorder %s27, 0
    %p60 = por %p58, %p59
    %p61 = scmp.ne.s32.totalorder %s47, %s48
    %p62 = scmp.eq.s32.totalorder %s28, 3
    %p63 = por %p61, %p62
    %p65 = scmp.ne.s32.totalorder %s48, %s64
    %p66 = scmp.eq.s32.totalorder %s28, 0
    %p67 = por %p65, %p66
    %s68 = ssub.s32 %s29, %s41
    %p69 = scmp.eq.s32.totalorder %s68, 0
    %s71 = sadd.s32 %s70, 1
    %s72 = scalar_select %p69, %s70, %s71
    %p75 = pneg %p69
    %p76 = scmp.eq.s32.totalorder %s22, 3
    %p77 = por %p75, %p76
    %p78 = scmp.ne.s32.totalorder %s70, %s73
    %p79 = scmp.eq.s32.totalorder %s22, 0
    %p80 = por %p78, %p79
    %p81 = scmp.ne.s32.totalorder %s70, %s73
    %p82 = scmp.eq.s32.totalorder %s27, 3
    %p83 = por %p81, %p82
    %p84 = scmp.ne.s32.totalorder %s73, %s74
    %p85 = scmp.eq.s32.totalorder %s27, 0
    %p86 = por %p84, %p85
    %p87 = scmp.ne.s32.totalorder %s73, %s74
    %p88 = scmp.eq.s32.totalorder %s28, 3
    %p89 = por %p87, %p88
    %p91 = scmp.ne.s32.totalorder %s74, %s90
    %p92 = scmp.eq.s32.totalorder %s28, 0
    %p93 = por %p91, %p92
    %s94 = ssub.s32 %s30, %s37
    %p95 = scmp.eq.s32.totalorder %s94, 0
    %s97 = sadd.s32 %s96, 1
    %s98 = scalar_select %p95, %s96, %s97
    %p101 = pneg %p95
    %p102 = scmp.eq.s32.totalorder %s22, 3
    %p103 = por %p101, %p102
    %p104 = scmp.ne.s32.totalorder %s96, %s99
    %p105 = scmp.eq.s32.totalorder %s22, 0
    %p106 = por %p104, %p105
    %p107 = scmp.ne.s32.totalorder %s96, %s99
    %p108 = scmp.eq.s32.totalorder %s27, 3
    %p109 = por %p107, %p108
    %p110 = scmp.ne.s32.totalorder %s99, %s100
    %p111 = scmp.eq.s32.totalorder %s27, 0
    %p112 = por %p110, %p111
    %p113 = scmp.ne.s32.totalorder %s99, %s100
    %p114 = scmp.eq.s32.totalorder %s28, 3
    %p115 = por %p113, %p114
    %p117 = scmp.ne.s32.totalorder %s100, %s116
    %p118 = scmp.eq.s32.totalorder %s28, 0
    %p119 = por %p117, %p118
    %s120 = ssub.s32 %s30, %s37
    %p121 = scmp.eq.s32.totalorder %s120, 0
    %s123 = sadd.s32 %s122, 1
    %s124 = scalar_select %p121, %s122, %s123
    %p127 = pneg %p121
    %p128 = scmp.eq.s32.totalorder %s22, 3
    %p129 = por %p127, %p128
    %p130 = scmp.ne.s32.totalorder %s122, %s125
    %p131 = scmp.eq.s32.totalorder %s22, 0
    %p132 = por %p130, %p131
    %p133 = scmp.ne.s32.totalorder %s122, %s125
    %p134 = scmp.eq.s32.totalorder %s27, 3
    %p135 = por %p133, %p134
    %p136 = scmp.ne.s32.totalorder %s125, %s126
    %p137 = scmp.eq.s32.totalorder %s27, 0
    %p138 = por %p136, %p137
    %p139 = scmp.ne.s32.totalorder %s125, %s126
    %p140 = scmp.eq.s32.totalorder %s28, 3
    %p141 = por %p139, %p140
    %p143 = scmp.ne.s32.totalorder %s126, %s142
    %p144 = scmp.eq.s32.totalorder %s28, 0
    %p145 = por %p143, %p144
    %s146 = ssub.s32 %s30, %s37
    %p147 = scmp.eq.s32.totalorder %s146, 0
    %s149 = sadd.s32 %s148, 1
    %s150 = scalar_select %p147, %s148, %s149
    %p153 = pneg %p147
    %p154 = scmp.eq.s32.totalorder %s22, 3
    %p155 = por %p153, %p154
    %p156 = scmp.ne.s32.totalorder %s148, %s151
    %p157 = scmp.eq.s32.totalorder %s22, 0
    %p158 = por %p156, %p157
    %p159 = scmp.ne.s32.totalorder %s148, %s151
    %p160 = scmp.eq.s32.totalorder %s27, 3
    %p161 = por %p159, %p160
    %p162 = scmp.ne.s32.totalorder %s151, %s152
    %p163 = scmp.eq.s32.totalorder %s27, 0
    %p164 = por %p162, %p163
    %p165 = scmp.ne.s32.totalorder %s151, %s152
    %p166 = scmp.eq.s32.totalorder %s28, 3
    %p167 = por %p165, %p166
    %p169 = scmp.ne.s32.totalorder %s152, %s168
    %p170 = scmp.eq.s32.totalorder %s28, 0
    %p171 = por %p169, %p170
    %s172 = ssub.s32 %s30, %s37
    %p173 = scmp.eq.s32.totalorder %s172, 0
    %s175 = sadd.s32 %s174, 1
    %s176 = scalar_select %p173, %s174, %s175
    %p179 = pneg %p173
    %p180 = scmp.eq.s32.totalorder %s22, 3
    %p181 = por %p179, %p180
    %p182 = scmp.ne.s32.totalorder %s174, %s177
    %p183 = scmp.eq.s32.totalorder %s22, 0
    %p184 = por %p182, %p183
    %p185 = scmp.ne.s32.totalorder %s174, %s177
    %p186 = scmp.eq.s32.totalorder %s27, 3
    %p187 = por %p185, %p186
    %p188 = scmp.ne.s32.totalorder %s177, %s178
    %p189 = scmp.eq.s32.totalorder %s27, 0
    %p190 = por %p188, %p189
    %p191 = scmp.ne.s32.totalorder %s177, %s178
    %p192 = scmp.eq.s32.totalorder %s28, 3
    %p193 = por %p191, %p192
    %p195 = scmp.ne.s32.totalorder %s178, %s194
    %p196 = scmp.eq.s32.totalorder %s28, 0
    %p197 = por %p195, %p196
    %s198 = ssub.s32 %s30, %s37
    %p199 = scmp.eq.s32.totalorder %s198, 0
    %s201 = sadd.s32 %s200, 1
    %s202 = scalar_select %p199, %s200, %s201
    %p205 = pneg %p199
    %p206 = scmp.eq.s32.totalorder %s22, 3
    %p207 = por %p205, %p206
    %p208 = scmp.ne.s32.totalorder %s200, %s203
    %p209 = scmp.eq.s32.totalorder %s22, 0
    %p210 = por %p208, %p209
    %p211 = scmp.ne.s32.totalorder %s200, %s203
    %p212 = scmp.eq.s32.totalorder %s27, 3
    %p213 = por %p211, %p212
    %p214 = scmp.ne.s32.totalorder %s203, %s204
    %p215 = scmp.eq.s32.totalorder %s27, 0
    %p216 = por %p214, %p215
    %p217 = scmp.ne.s32.totalorder %s203, %s204
    %p218 = scmp.eq.s32.totalorder %s28, 3
    %p219 = por %p217, %p218
    %p221 = scmp.ne.s32.totalorder %s204, %s220
    %p222 = scmp.eq.s32.totalorder %s28, 0
    %p223 = por %p221, %p222
    %s224 = ssub.s32 %s30, %s37
    %p225 = scmp.eq.s32.totalorder %s224, 0
    %s227 = sadd.s32 %s226, 1
    %s228 = scalar_select %p225, %s226, %s227
    %p231 = pneg %p225
    %p232 = scmp.eq.s32.totalorder %s22, 3
    %p233 = por %p231, %p232
    %p234 = scmp.ne.s32.totalorder %s226, %s229
    %p235 = scmp.eq.s32.totalorder %s22, 0
    %p236 = por %p234, %p235
    %p237 = scmp.ne.s32.totalorder %s226, %s229
    %p238 = scmp.eq.s32.totalorder %s27, 3
    %p239 = por %p237, %p238
    %p240 = scmp.ne.s32.totalorder %s229, %s230
    %p241 = scmp.eq.s32.totalorder %s27, 0
    %p242 = por %p240, %p241
    %p243 = scmp.ne.s32.totalorder %s229, %s230
    %p244 = scmp.eq.s32.totalorder %s28, 3
    %p245 = por %p243, %p244
    %p247 = scmp.ne.s32.totalorder %s230, %s246
    %p248 = scmp.eq.s32.totalorder %s28, 0
    %p249 = por %p247, %p248
    %s250 = ssub.s32 %s30, %s37
    %p251 = scmp.eq.s32.totalorder %s250, 0
    %s253 = sadd.s32 %s252, 1
    %s254 = scalar_select %p251, %s252, %s253
    %p257 = pneg %p251
    %p258 = scmp.eq.s32.totalorder %s22, 3
    %p259 = por %p257, %p258
    %p260 = scmp.ne.s32.totalorder %s252, %s255
    %p261 = scmp.eq.s32.totalorder %s22, 0
    %p262 = por %p260, %p261
    %p263 = scmp.ne.s32.totalorder %s252, %s255
    %p264 = scmp.eq.s32.totalorder %s27, 3
    %p265 = por %p263, %p264
    %p266 = scmp.ne.s32.totalorder %s255, %s256
    %p267 = scmp.eq.s32.totalorder %s27, 0
    %p268 = por %p266, %p267
    %p269 = scmp.ne.s32.totalorder %s255, %s256
    %p270 = scmp.eq.s32.totalorder %s28, 3
    %p271 = por %p269, %p270
    %p273 = scmp.ne.s32.totalorder %s256, %s272
    %p274 = scmp.eq.s32.totalorder %s28, 0
    %p275 = por %p273, %p274
    %s276 = ssub.s32 %s30, %s37
    %p277 = scmp.eq.s32.totalorder %s276, 0
    %s279 = sadd.s32 %s278, 1
    %s280 = scalar_select %p277, %s278, %s279
    %p283 = pneg %p277
    %p284 = scmp.eq.s32.totalorder %s22, 3
    %p285 = por %p283, %p284
    %p286 = scmp.ne.s32.totalorder %s278, %s281
    %p287 = scmp.eq.s32.totalorder %s22, 0
    %p288 = por %p286, %p287
    %p289 = scmp.ne.s32.totalorder %s278, %s281
    %p290 = scmp.eq.s32.totalorder %s27, 3
    %p291 = por %p289, %p290
    %p292 = scmp.ne.s32.totalorder %s281, %s282
    %p293 = scmp.eq.s32.totalorder %s27, 0
    %p294 = por %p292, %p293
    %p295 = scmp.ne.s32.totalorder %s281, %s282
    %p296 = scmp.eq.s32.totalorder %s28, 3
    %p297 = por %p295, %p296
    %p299 = scmp.ne.s32.totalorder %s282, %s298
    %p300 = scmp.eq.s32.totalorder %s28, 0
    %p301 = por %p299, %p300
    %s302 = ssub.s32 %s30, %s37
    %p303 = scmp.eq.s32.totalorder %s302, 0
    %s305 = sadd.s32 %s304, 1
    %s306 = scalar_select %p303, %s304, %s305
    %p309 = pneg %p303
    %p310 = scmp.eq.s32.totalorder %s22, 3
    %p311 = por %p309, %p310
    %p312 = scmp.ne.s32.totalorder %s304, %s307
    %p313 = scmp.eq.s32.totalorder %s22, 0
    %p314 = por %p312, %p313
    %p315 = scmp.ne.s32.totalorder %s304, %s307
    %p316 = scmp.eq.s32.totalorder %s27, 3
    %p317 = por %p315, %p316
    %p318 = scmp.ne.s32.totalorder %s307, %s308
    %p319 = scmp.eq.s32.totalorder %s27, 0
    %p320 = por %p318, %p319
    %p321 = scmp.ne.s32.totalorder %s307, %s308
    %p322 = scmp.eq.s32.totalorder %s28, 3
    %p323 = por %p321, %p322
    %p325 = scmp.ne.s32.totalorder %s308, %s324
    %p326 = scmp.eq.s32.totalorder %s28, 0
    %p327 = por %p325, %p326
    %s328 = ssub.s32 %s30, %s37
    %p329 = scmp.eq.s32.totalorder %s328, 0
    %s331 = sadd.s32 %s330, 1
    %s332 = scalar_select %p329, %s330, %s331
    %p335 = pneg %p329
    %p336 = scmp.eq.s32.totalorder %s22, 3
    %p337 = por %p335, %p336
    %p338 = scmp.ne.s32.totalorder %s330, %s333
    %p339 = scmp.eq.s32.totalorder %s22, 0
    %p340 = por %p338, %p339
    %p341 = scmp.ne.s32.totalorder %s330, %s333
    %p342 = scmp.eq.s32.totalorder %s27, 3
    %p343 = por %p341, %p342
    %p344 = scmp.ne.s32.totalorder %s333, %s334
    %p345 = scmp.eq.s32.totalorder %s27, 0
    %p346 = por %p344, %p345
    %p347 = scmp.ne.s32.totalorder %s333, %s334
    %p348 = scmp.eq.s32.totalorder %s28, 3
    %p349 = por %p347, %p348
    %p351 = scmp.ne.s32.totalorder %s334, %s350
    %p352 = scmp.eq.s32.totalorder %s28, 0
    %p353 = por %p351, %p352
    %s354 = ssub.s32 %s30, %s37
    %p355 = scmp.eq.s32.totalorder %s354, 0
    %s357 = sadd.s32 %s356, 1
    %s358 = scalar_select %p355, %s356, %s357
    %p361 = pneg %p355
    %p362 = scmp.eq.s32.totalorder %s22, 3
    %p363 = por %p361, %p362
    %p364 = scmp.ne.s32.totalorder %s356, %s359
    %p365 = scmp.eq.s32.totalorder %s22, 0
    %p366 = por %p364, %p365
    %p367 = scmp.ne.s32.totalorder %s356, %s359
    %p368 = scmp.eq.s32.totalorder %s27, 3
    %p369 = por %p367, %p368
    %p370 = scmp.ne.s32.totalorder %s359, %s360
    %p371 = scmp.eq.s32.totalorder %s27, 0
    %p372 = por %p370, %p371
    %p373 = scmp.ne.s32.totalorder %s359, %s360
    %p374 = scmp.eq.s32.totalorder %s28, 3
    %p375 = por %p373, %p374
    %p377 = scmp.ne.s32.totalorder %s360, %s376
    %p378 = scmp.eq.s32.totalorder %s28, 0
    %p379 = por %p377, %p378
    %s380 = ssub.s32 %s30, %s37
    %p381 = scmp.eq.s32.totalorder %s380, 0
    %s383 = sadd.s32 %s382, 1
    %s384 = scalar_select %p381, %s382, %s383
    %p387 = pneg %p381
    %p388 = scmp.eq.s32.totalorder %s22, 3
    %p389 = por %p387, %p388
    %p390 = scmp.ne.s32.totalorder %s382, %s385
    %p391 = scmp.eq.s32.totalorder %s22, 0
    %p392 = por %p390, %p391
    %p393 = scmp.ne.s32.totalorder %s382, %s385
    %p394 = scmp.eq.s32.totalorder %s27, 3
    %p395 = por %p393, %p394
    %p396 = scmp.ne.s32.totalorder %s385, %s386
    %p397 = scmp.eq.s32.totalorder %s27, 0
    %p398 = por %p396, %p397
    %p399 = scmp.ne.s32.totalorder %s385, %s386
    %p400 = scmp.eq.s32.totalorder %s28, 3
    %p401 = por %p399, %p400
    %p403 = scmp.ne.s32.totalorder %s386, %s402
    %p404 = scmp.eq.s32.totalorder %s28, 0
    %p405 = por %p403, %p404
    %s407 = sadd.s32 %s406, 1
    %p410 = scmp.eq.s32.totalorder %s22, 3
    %p411 = scmp.ne.s32.totalorder %s406, %s408
    %p412 = scmp.eq.s32.totalorder %s22, 0
    %p413 = por %p411, %p412
    %p414 = scmp.ne.s32.totalorder %s406, %s408
    %p415 = scmp.eq.s32.totalorder %s27, 3
    %p416 = por %p414, %p415
    %p417 = scmp.ne.s32.totalorder %s408, %s409
    %p418 = scmp.eq.s32.totalorder %s27, 0
    %p419 = por %p417, %p418
    %p420 = scmp.ne.s32.totalorder %s408, %s409
    %p421 = scmp.eq.s32.totalorder %s28, 3
    %p422 = por %p420, %p421
    %p424 = scmp.ne.s32.totalorder %s409, %s423
    %p425 = scmp.eq.s32.totalorder %s28, 0
    %p426 = por %p424, %p425
    %s428 = sadd.s32 %s427, 1
    %p431 = scmp.eq.s32.totalorder %s22, 3
    %p432 = scmp.ne.s32.totalorder %s427, %s429
    %p433 = scmp.eq.s32.totalorder %s22, 0
    %p434 = por %p432, %p433
    %p435 = scmp.ne.s32.totalorder %s427, %s429
    %p436 = scmp.eq.s32.totalorder %s27, 3
    %p437 = por %p435, %p436
    %p438 = scmp.ne.s32.totalorder %s429, %s430
    %p439 = scmp.eq.s32.totalorder %s27, 0
    %p440 = por %p438, %p439
    %p441 = scmp.ne.s32.totalorder %s429, %s430
    %p442 = scmp.eq.s32.totalorder %s28, 3
    %p443 = por %p441, %p442
    %p445 = scmp.ne.s32.totalorder %s430, %s444
    %p446 = scmp.eq.s32.totalorder %s28, 0
    %p447 = por %p445, %p446
    %s448 = ssub.s32 %s29, %s41
    %p449 = scmp.eq.s32.totalorder %s448, 0
    %s451 = sadd.s32 %s450, 1
    %s452 = scalar_select %p449, %s450, %s451
    %p455 = pneg %p449
    %p456 = scmp.eq.s32.totalorder %s22, 3
    %p457 = por %p455, %p456
    %p458 = scmp.ne.s32.totalorder %s450, %s453
    %p459 = scmp.eq.s32.totalorder %s22, 0
    %p460 = por %p458, %p459
    %p461 = scmp.ne.s32.totalorder %s450, %s453
    %p462 = scmp.eq.s32.totalorder %s27, 3
    %p463 = por %p461, %p462
    %p464 = scmp.ne.s32.totalorder %s453, %s454
    %p465 = scmp.eq.s32.totalorder %s27, 0
    %p466 = por %p464, %p465
    %p467 = scmp.ne.s32.totalorder %s453, %s454
    %p468 = scmp.eq.s32.totalorder %s28, 3
    %p469 = por %p467, %p468
    %p471 = scmp.ne.s32.totalorder %s454, %s470
    %p472 = scmp.eq.s32.totalorder %s28, 0
    %p473 = por %p471, %p472
    %p474 = scmp.le.s32.totalorder 1, %s22
    %p475 = scmp.lt.s32.totalorder %s22, 5
    %p476 = pnand %p474, %p475
    %p477 = pneg %p476
    // Predicated region
    $region9: #{forward.2} parent=5 // pred_check
      _
    $region10: #{forward.2} parent=5 // pred_check_branch
      %479 = sbr.rel (%p476) target = $region12
    $region11: #{forward.2} parent=5 // pred_region
      %s480 = ssub.s32 %s22, 1
      // Predicated region
      $region13: #{forward.2} parent=11 // pred_check
        %p481 = pneg %p419
      $region14: #{forward.2} parent=11 // pred_check_branch
        %483 = sbr.rel (%p481) target = $region16
      $region15: #{forward.2} parent=11 // pred_region
        _
      $region16: #{forward.2} parent=11 // pred_fallthru
        _
      // Predicated region
      $region17: #{forward.2} parent=11 // pred_check
        %p484 = pneg %p440
      $region18: #{forward.2} parent=11 // pred_check_branch
        %486 = sbr.rel (%p484) target = $region20
      $region19: #{forward.2} parent=11 // pred_region
        _
      $region20: #{forward.2} parent=11 // pred_fallthru
        _
    $region12: #{forward.2} parent=5 // pred_fallthru
      _
    %p487 = scmp.lt.s32.totalorder %s22, 4
    // Predicated region
    $region21: #{forward.2} parent=5 // pred_check
      %p488 = pneg %p487
    $region22: #{forward.2} parent=5 // pred_check_branch
      %490 = sbr.rel (%p488) target = $region24
    $region23: #{forward.2} parent=5 // pred_region
      // Predicated region
      $region25: #{forward.2} parent=23 // pred_check
        %p491 = pneg %p54
      $region26: #{forward.2} parent=23 // pred_check_branch
        %493 = sbr.rel (%p491) target = $region28
      $region27: #{forward.2} parent=23 // pred_region
        %p494 = scmp.lt.s32.totalorder %s29, 1
        %s495 = scalar_select %p494, %s29, 1
        %s496 = smul.addr %s495, 8
        %s497 = scalar_lea.vmem %s0, %s496
      $region28: #{forward.2} parent=23 // pred_fallthru
        _
      // Predicated region
      $region29: #{forward.2} parent=23 // pred_check
        %p498 = pneg %p80
      $region30: #{forward.2} parent=23 // pred_check_branch
        %500 = sbr.rel (%p498) target = $region32
      $region31: #{forward.2} parent=23 // pred_region
        %p501 = scmp.lt.s32.totalorder %s29, 1
        %s502 = scalar_select %p501, %s29, 1
        %s503 = scalar_lea.vmem %s1, %s502
      $region32: #{forward.2} parent=23 // pred_fallthru
        _
      // Predicated region
      $region33: #{forward.2} parent=23 // pred_check
        %p504 = pneg %p106
      $region34: #{forward.2} parent=23 // pred_check_branch
        %506 = sbr.rel (%p504) target = $region36
      $region35: #{forward.2} parent=23 // pred_region
        %p507 = scmp.lt.s32.totalorder %s30, 1
        %s508 = scalar_select %p507, %s30, 1
        %s509 = scalar_lea.vmem %s2, %s508
      $region36: #{forward.2} parent=23 // pred_fallthru
        _
      // Predicated region
      $region37: #{forward.2} parent=23 // pred_check
        %p510 = pneg %p132
      $region38: #{forward.2} parent=23 // pred_check_branch
        %512 = sbr.rel (%p510) target = $region40
      $region39: #{forward.2} parent=23 // pred_region
        %p513 = scmp.lt.s32.totalorder %s30, 1
        %s514 = scalar_select %p513, %s30, 1
        %s515 = scalar_lea.vmem %s3, %s514
      $region40: #{forward.2} parent=23 // pred_fallthru
        _
      // Predicated region
      $region41: #{forward.2} parent=23 // pred_check
        %p516 = pneg %p158
      $region42: #{forward.2} parent=23 // pred_check_branch
        %518 = sbr.rel (%p516) target = $region44
      $region43: #{forward.2} parent=23 // pred_region
        %p519 = scmp.lt.s32.totalorder %s30, 1
        %s520 = scalar_select %p519, %s30, 1
        %s521 = smul.addr %s520, 4
        %s522 = smul.addr %s521, 8
        %s523 = scalar_lea.vmem %s4, %s522
      $region44: #{forward.2} parent=23 // pred_fallthru
        _
      // Predicated region
      $region45: #{forward.2} parent=23 // pred_check
        %p524 = pneg %p184
      $region46: #{forward.2} parent=23 // pred_check_branch
        %526 = sbr.rel (%p524) target = $region48
      $region47: #{forward.2} parent=23 // pred_region
        %p527 = scmp.lt.s32.totalorder %s30, 1
        %s528 = scalar_select %p527, %s30, 1
        %s529 = scalar_lea.vmem %s5, %s528
      $region48: #{forward.2} parent=23 // pred_fallthru
        _
      // Predicated region
      $region49: #{forward.2} parent=23 // pred_check
        %p530 = pneg %p210
      $region50: #{forward.2} parent=23 // pred_check_branch
        %532 = sbr.rel (%p530) target = $region52
      $region51: #{forward.2} parent=23 // pred_region
        %p533 = scmp.lt.s32.totalorder %s30, 1
        %s534 = scalar_select %p533, %s30, 1
        %s535 = smul.addr %s534, 4
        %s536 = smul.addr %s535, 8
        %s537 = scalar_lea.vmem %s6, %s536
      $region52: #{forward.2} parent=23 // pred_fallthru
        _
      // Predicated region
      $region53: #{forward.2} parent=23 // pred_check
        %p538 = pneg %p236
      $region54: #{forward.2} parent=23 // pred_check_branch
        %540 = sbr.rel (%p538) target = $region56
      $region55: #{forward.2} parent=23 // pred_region
        %p541 = scmp.lt.s32.totalorder %s30, 1
        %s542 = scalar_select %p541, %s30, 1
        %s543 = scalar_lea.vmem %s7, %s542
      $region56: #{forward.2} parent=23 // pred_fallthru
        _
      // Predicated region
      $region57: #{forward.2} parent=23 // pred_check
        %p544 = pneg %p262
      $region58: #{forward.2} parent=23 // pred_check_branch
        %546 = sbr.rel (%p544) target = $region60
      $region59: #{forward.2} parent=23 // pred_region
        %p547 = scmp.lt.s32.totalorder %s30, 1
        %s548 = scalar_select %p547, %s30, 1
        %s549 = scalar_lea.vmem %s8, %s548
      $region60: #{forward.2} parent=23 // pred_fallthru
        _
      // Predicated region
      $region61: #{forward.2} parent=23 // pred_check
        %p550 = pneg %p288
      $region62: #{forward.2} parent=23 // pred_check_branch
        %552 = sbr.rel (%p550) target = $region64
      $region63: #{forward.2} parent=23 // pred_region
        %p553 = scmp.lt.s32.totalorder %s30, 1
        %s554 = scalar_select %p553, %s30, 1
        %s555 = scalar_lea.vmem %s9, %s554
      $region64: #{forward.2} parent=23 // pred_fallthru
        _
      // Predicated region
      $region65: #{forward.2} parent=23 // pred_check
        %p556 = pneg %p314
      $region66: #{forward.2} parent=23 // pred_check_branch
        %558 = sbr.rel (%p556) target = $region68
      $region67: #{forward.2} parent=23 // pred_region
        %p559 = scmp.lt.s32.totalorder %s30, 1
        %s560 = scalar_select %p559, %s30, 1
        %s561 = smul.addr %s560, 4
        %s562 = smul.addr %s561, 8
        %s563 = scalar_lea.vmem %s10, %s562
      $region68: #{forward.2} parent=23 // pred_fallthru
        _
      // Predicated region
      $region69: #{forward.2} parent=23 // pred_check
        %p564 = pneg %p340
      $region70: #{forward.2} parent=23 // pred_check_branch
        %566 = sbr.rel (%p564) target = $region72
      $region71: #{forward.2} parent=23 // pred_region
        %p567 = scmp.lt.s32.totalorder %s30, 1
        %s568 = scalar_select %p567, %s30, 1
        %s569 = scalar_lea.vmem %s11, %s568
      $region72: #{forward.2} parent=23 // pred_fallthru
        _
      // Predicated region
      $region73: #{forward.2} parent=23 // pred_check
        %p570 = pneg %p366
      $region74: #{forward.2} parent=23 // pred_check_branch
        %572 = sbr.rel (%p570) target = $region76
      $region75: #{forward.2} parent=23 // pred_region
        %p573 = scmp.lt.s32.totalorder %s30, 1
        %s574 = scalar_select %p573, %s30, 1
        %s575 = smul.addr %s574, 8
        %s576 = smul.addr %s575, 8
        %s577 = scalar_lea.vmem %s12, %s576
      $region76: #{forward.2} parent=23 // pred_fallthru
        _
      // Predicated region
      $region77: #{forward.2} parent=23 // pred_check
        %p578 = pneg %p392
      $region78: #{forward.2} parent=23 // pred_check_branch
        %580 = sbr.rel (%p578) target = $region80
      $region79: #{forward.2} parent=23 // pred_region
        %p581 = scmp.lt.s32.totalorder %s30, 1
        %s582 = scalar_select %p581, %s30, 1
        %s583 = scalar_lea.vmem %s13, %s582
      $region80: #{forward.2} parent=23 // pred_fallthru
        _
    $region24: #{forward.2} parent=5 // pred_fallthru
      _
    %p584 = scmp.le.s32.totalorder 1, %s22
    %p585 = scmp.lt.s32.totalorder %s22, 5
    %p586 = pnand %p584, %p585
    %p587 = pneg %p586
    // Predicated region
    $region81: #{forward.2} parent=5 // pred_check
      _
    $region82: #{forward.2} parent=5 // pred_check_branch
      %589 = sbr.rel (%p586) target = $region84
    $region83: #{forward.2} parent=5 // pred_region
      %s590 = ssub.s32 %s22, 1
      %p591 = scmp.lt.s32.totalorder %s31, 1
      %s592 = scalar_select %p591, %s31, 1
      %s593 = smul.addr %s592, 8
      %s594 = scalar_lea.vmem %s0, %s593
      %p595 = pneg %p60
      %p596 = pneg %p57
      %p597 = scmp.lt.s32.totalorder %s31, 1
      %s598 = scalar_select %p597, %s31, 1
      %s599 = scalar_lea.vmem %s1, %s598
      %p600 = pneg %p86
      %p601 = pneg %p83
      %p602 = scmp.lt.s32.totalorder %s32, 1
      %s603 = scalar_select %p602, %s32, 1
      %s604 = scalar_lea.vmem %s2, %s603
      %p605 = pneg %p112
      %p606 = pneg %p109
      %p607 = scmp.lt.s32.totalorder %s32, 1
      %s608 = scalar_select %p607, %s32, 1
      %s609 = scalar_lea.vmem %s3, %s608
      %p610 = pneg %p138
      %p611 = pneg %p135
      %p612 = scmp.lt.s32.totalorder %s32, 1
      %s613 = scalar_select %p612, %s32, 1
      %s614 = smul.addr %s613, 4
      %s615 = smul.addr %s614, 8
      %s616 = scalar_lea.vmem %s4, %s615
      %p617 = pneg %p164
      %p618 = pneg %p161
      %p619 = scmp.lt.s32.totalorder %s32, 1
      %s620 = scalar_select %p619, %s32, 1
      %s621 = scalar_lea.vmem %s5, %s620
      %p622 = pneg %p190
      %p623 = pneg %p187
      %p624 = scmp.lt.s32.totalorder %s32, 1
      %s625 = scalar_select %p624, %s32, 1
      %s626 = smul.addr %s625, 4
      %s627 = smul.addr %s626, 8
      %s628 = scalar_lea.vmem %s6, %s627
      %p629 = pneg %p216
      %p630 = pneg %p213
      %p631 = scmp.lt.s32.totalorder %s32, 1
      %s632 = scalar_select %p631, %s32, 1
      %s633 = scalar_lea.vmem %s7, %s632
      %p634 = pneg %p242
      %p635 = pneg %p239
      %p636 = scmp.lt.s32.totalorder %s32, 1
      %s637 = scalar_select %p636, %s32, 1
      %s638 = scalar_lea.vmem %s8, %s637
      %p639 = pneg %p268
      %p640 = pneg %p265
      %p641 = scmp.lt.s32.totalorder %s32, 1
      %s642 = scalar_select %p641, %s32, 1
      %s643 = scalar_lea.vmem %s9, %s642
      %p644 = pneg %p294
      %p645 = pneg %p291
      %p646 = scmp.lt.s32.totalorder %s32, 1
      %s647 = scalar_select %p646, %s32, 1
      %s648 = smul.addr %s647, 4
      %s649 = smul.addr %s648, 8
      %s650 = scalar_lea.vmem %s10, %s649
      %p651 = pneg %p320
      %p652 = pneg %p317
      %p653 = scmp.lt.s32.totalorder %s32, 1
      %s654 = scalar_select %p653, %s32, 1
      %s655 = scalar_lea.vmem %s11, %s654
      %p656 = pneg %p346
      %p657 = pneg %p343
      %p658 = scmp.lt.s32.totalorder %s32, 1
      %s659 = scalar_select %p658, %s32, 1
      %s660 = smul.addr %s659, 8
      %s661 = smul.addr %s660, 8
      %s662 = scalar_lea.vmem %s12, %s661
      %p663 = pneg %p372
      %p664 = pneg %p369
      %p665 = scmp.lt.s32.totalorder %s32, 1
      %s666 = scalar_select %p665, %s32, 1
      %s667 = scalar_lea.vmem %s13, %s666
      %p668 = pneg %p398
      %p669 = pneg %p395
      %p670 = pneg %p419
      %p671 = pneg %p416
      %p672 = pneg %p440
      %p673 = pneg %p437
      %p674 = pneg %p466
      %p675 = pneg %p463
      %p676 = scmp.lt.s32.totalorder %s31, 1
      %s677 = scalar_select %p676, %s31, 1
      %s678 = smul.addr %s677, 8
      %s679 = scalar_lea.vmem %s16, %s678
      %p680 = scmp.lt.s32.totalorder %s31, 1
      %s681 = scalar_select %p680, %s31, 1
      %s682 = smul.addr %s681, 8
      %s683 = scalar_lea.vmem %s0, %s682
      %p684 = scmp.lt.s32.totalorder %s31, 1
      %s685 = scalar_select %p684, %s31, 1
      %s686 = scalar_lea.vmem %s1, %s685
      %p687 = scmp.lt.s32.totalorder %s32, 1
      %s688 = scalar_select %p687, %s32, 1
      %s689 = scalar_lea.vmem %s2, %s688
      %p690 = scmp.lt.s32.totalorder %s32, 1
      %s691 = scalar_select %p690, %s32, 1
      %s692 = scalar_lea.vmem %s3, %s691
      %p693 = scmp.lt.s32.totalorder %s32, 1
      %s694 = scalar_select %p693, %s32, 1
      %s695 = smul.addr %s694, 4
      %s696 = smul.addr %s695, 8
      %s697 = scalar_lea.vmem %s4, %s696
      %p698 = scmp.lt.s32.totalorder %s32, 1
      %s699 = scalar_select %p698, %s32, 1
      %s700 = scalar_lea.vmem %s5, %s699
      %p701 = scmp.lt.s32.totalorder %s32, 1
      %s702 = scalar_select %p701, %s32, 1
      %s703 = smul.addr %s702, 4
      %s704 = smul.addr %s703, 8
      %s705 = scalar_lea.vmem %s6, %s704
      %p706 = scmp.lt.s32.totalorder %s32, 1
      %s707 = scalar_select %p706, %s32, 1
      %s708 = scalar_lea.vmem %s7, %s707
      %p709 = scmp.lt.s32.totalorder %s32, 1
      %s710 = scalar_select %p709, %s32, 1
      %s711 = scalar_lea.vmem %s8, %s710
      %p712 = scmp.lt.s32.totalorder %s32, 1
      %s713 = scalar_select %p712, %s32, 1
      %s714 = scalar_lea.vmem %s9, %s713
      %p715 = scmp.lt.s32.totalorder %s32, 1
      %s716 = scalar_select %p715, %s32, 1
      %s717 = smul.addr %s716, 4
      %s718 = smul.addr %s717, 8
      %s719 = scalar_lea.vmem %s10, %s718
      %p720 = scmp.lt.s32.totalorder %s32, 1
      %s721 = scalar_select %p720, %s32, 1
      %s722 = scalar_lea.vmem %s11, %s721
      %p723 = scmp.lt.s32.totalorder %s32, 1
      %s724 = scalar_select %p723, %s32, 1
      %s725 = smul.addr %s724, 8
      %s726 = smul.addr %s725, 8
      %s727 = scalar_lea.vmem %s12, %s726
      %p728 = scmp.lt.s32.totalorder %s32, 1
      %s729 = scalar_select %p728, %s32, 1
      %s730 = scalar_lea.vmem %s13, %s729
      %p731 = scmp.lt.s32.totalorder %s31, 1
      %s732 = scalar_select %p731, %s31, 1
      %s733 = smul.addr %s732, 8
      %s734 = scalar_lea.vmem %s16, %s733
      %p735 = scmp.eq.s32.totalorder %s32, 0
      // Predicated region
      $region85: #{forward.2} parent=83 // pred_check
        %p736 = pneg %p735
      $region86: #{forward.2} parent=83 // pred_check_branch
        %738 = sbr.rel (%p736) target = $region88
      $region87: #{forward.2} parent=83 // pred_region
        %v739 = vld [vmem:[%s683] sm:$0xff]
        %vm740 = vcmask 261120
        %741 = vst.msk [vmem:[%s734] sm:$0xff] %vm740, %v739
      $region88: #{forward.2} parent=83 // pred_fallthru
        _
      %v742 = vld [vmem:[%s734] sm:$0xff]
      %v743 = vld [vmem:[%s686] sm:$0x1]
      %v744 = vld [vmem:[%s689] sm:$0x1]
      %v745 = vld [vmem:[%s692] sm:$0x1]
      %vm746 = vcmask 261120
      %v747 = vsel %vm746, %v742, 0.0
      %748 = vadd.xlane.f32.xlu0 %v747
      %v749 = vpop.xlane.xlu0 %748
      %v750 = vrcp.pop 32.0
      %v751 = vmul.f32 %v749, %v750
      %v752 = vsub.f32 %v742, %v751
      %v753 = vmul.f32 %v752, %v752
      %v754 = vsel %vm746, %v753, 0.0
      %755 = vadd.xlane.f32.xlu0 %v754
      %v756 = vpop.xlane.xlu0 %755
      %v757 = vmul.f32 %v756, %v750
      %v758 = vadd.f32 %v757, 1e-05
      %v759 = vrsqrt.pop %v758
      %v760 = vmul.f32 %v752, %v759
      %v762 = vlaneseq
      %v763 = vshrl.u32 %v762, 7
      %v764 = vsub.s32 0, %v763
      %v765 = vrot.slane %v744, %v764
      %v767 = vmul.f32 %v760, %v765
      %v769 = vlaneseq
      %v770 = vshrl.u32 %v769, 7
      %v771 = vsub.s32 0, %v770
      %v772 = vrot.slane %v745, %v771
      %v774 = vadd.f32 %v767, %v772
      %v775 = vld [vmem:[%s697] sm:$0xff]
      %v776 = vld [vmem:[%s697 + $0x8] sm:$0xff]
      %v777 = vld [vmem:[%s697 + $0x10] sm:$0xff]
      %v778 = vld [vmem:[%s697 + $0x18] sm:$0xff]
      %v779 = vld [vmem:[%s700] sm:$0x1]
      %v780 = vld [vmem:[%s705] sm:$0xff]
      %v781 = vld [vmem:[%s705 + $0x8] sm:$0xff]
      %v782 = vld [vmem:[%s705 + $0x10] sm:$0xff]
      %v783 = vld [vmem:[%s705 + $0x18] sm:$0xff]
      %v784 = vld [vmem:[%s708] sm:$0x1]
      %v786 = vlaneseq
      %v787 = vshrl.u32 %v786, 7
      %v788 = vsub.s32 0, %v787
      %v789 = vrot.slane %v779, %v788
      %v792 = vsel %vm746, %v774, 0
      %794 = vmatprep.subr.mxu0 0.0
      %795 = vmatpush1.msra.mxu0 %v775
      %796 = vmatprep.subr.mxu0 0.0
      %797 = vmatpush1.msra.mxu0 %v776
      %798 = vmatprep.subr.mxu0 0.0
      %799 = vmatpush1.msra.mxu0 %v777
      %800 = vmatprep.subr.mxu0 0.0
      %801 = vmatpush1.msra.mxu0 %v778
      %802 = vmatprep.subr.mxu0 0.0
      %803 = vmatpush1.msra.mxu0 0.0
      %804 = vmatprep.subr.mxu0 0.0
      %805 = vmatpush1.msra.mxu0 0.0
      %806 = vmatprep.subr.mxu0 0.0
      %807 = vmatpush1.msra.mxu0 0.0
      %808 = vmatprep.subr.mxu0 0.0
      %809 = vmatpush1.msra.mxu0 0.0
      %810 = vmatprep.subr.mxu0 0.0
      %811 = vmatpush1.msra.mxu0 0.0
      %812 = vmatprep.subr.mxu0 0.0
      %813 = vmatpush1.msra.mxu0 0.0
      %814 = vmatprep.subr.mxu0 0.0
      %815 = vmatpush1.msra.mxu0 0.0
      %816 = vmatprep.subr.mxu0 0.0
      %817 = vmatpush1.msra.mxu0 0.0
      %818 = vmatprep.subr.mxu0 0.0
      %819 = vmatpush1.msra.mxu0 0.0
      %820 = vmatprep.subr.mxu0 0.0
      %821 = vmatpush1.msra.mxu0 0.0
      %822 = vmatprep.subr.mxu0 0.0
      %823 = vmatpush1.msra.mxu0 0.0
      %824 = vmatprep.subr.mxu0 0.0
      %825 = vmatpush1.msra.mxu0 0.0
      %826 = vmatprep.subr.mxu0 0.0
      %827 = vmatpush1.msra.mxu0 0.0
      %828 = vmatprep.subr.mxu0 0.0
      %829 = vmatpush1.msra.mxu0 0.0
      %830 = vmatprep.subr.mxu0 0.0
      %831 = vmatpush1.msra.mxu0 0.0
      %832 = vmatprep.subr.mxu0 0.0
      %833 = vmatpush1.msra.mxu0 0.0
      %834 = vmatprep.subr.mxu0 0.0
      %835 = vmatpush1.msra.mxu0 0.0
      %836 = vmatprep.subr.mxu0 0.0
      %837 = vmatpush1.msra.mxu0 0.0
      %838 = vmatprep.subr.mxu0 0.0
      %839 = vmatpush1.msra.mxu0 0.0
      %840 = vmatprep.subr.mxu0 0.0
      %841 = vmatpush1.msra.mxu0 0.0
      %842 = vmatprep.subr.mxu0 0.0
      %843 = vmatpush1.msra.mxu0 0.0
      %844 = vmatprep.subr.mxu0 0.0
      %845 = vmatpush1.msra.mxu0 0.0
      %846 = vmatprep.subr.mxu0 0.0
      %847 = vmatpush1.msra.mxu0 0.0
      %848 = vmatprep.subr.mxu0 0.0
      %849 = vmatpush1.msra.mxu0 0.0
      %850 = vmatprep.subr.mxu0 0.0
      %851 = vmatpush1.msra.mxu0 0.0
      %852 = vmatprep.subr.mxu0 0.0
      %853 = vmatpush1.msra.mxu0 0.0
      %854 = vmatprep.subr.mxu0 0.0
      %855 = vmatpush1.msra.mxu0 0.0
      %856 = vmatprep.subr.mxu0 0.0
      %857 = vmatpush1.msra.mxu0 0.0
      %858 = vmatprep.mubr.f32.mxu0 0.0
      %859 = vmatmul.mubr.f32.gmra.mrb[0].mxu0 %v792
      %v860 = vpop.f32.mrb[0].mxu0
      %v861 = vadd.f32 %v789, %v860
      %v862 = vpop.f32.mrb[0].mxu0
      %863 = vdwg.mxu0
      %865 = vrot.lane.b32.xlu0 %v861, 96
      %v866 = vpop.permute.xlu0 %865
      %vm867 = vcmask 64512
      %v868 = vsel %vm867, %v861, 0
      %v870 = vsel %vm867, %v866, 0
      %872 = vmatprep.subr.mxu0 0.0
      %873 = vmatpush1.xpose.msra.mxu0 %v870
      %874 = vmatprep.subr.mxu0 0.0
      %875 = vmatpush1.xpose.msra.mxu0 0.0
      %876 = vmatprep.subr.mxu0 0.0
      %877 = vmatpush1.xpose.msra.mxu0 0.0
      %878 = vmatprep.subr.mxu0 0.0
      %879 = vmatpush1.xpose.msra.mxu0 0.0
      %880 = vmatprep.subr.mxu0 0.0
      %881 = vmatpush1.xpose.msra.mxu0 0.0
      %882 = vmatprep.subr.mxu0 0.0
      %883 = vmatpush1.xpose.msra.mxu0 0.0
      %884 = vmatprep.subr.mxu0 0.0
      %885 = vmatpush1.xpose.msra.mxu0 0.0
      %886 = vmatprep.subr.mxu0 0.0
      %887 = vmatpush1.xpose.msra.mxu0 0.0
      %888 = vmatprep.subr.mxu0 0.0
      %889 = vmatpush1.xpose.msra.mxu0 0.0
      %890 = vmatprep.subr.mxu0 0.0
      %891 = vmatpush1.xpose.msra.mxu0 0.0
      %892 = vmatprep.subr.mxu0 0.0
      %893 = vmatpush1.xpose.msra.mxu0 0.0
      %894 = vmatprep.subr.mxu0 0.0
      %895 = vmatpush1.xpose.msra.mxu0 0.0
      %896 = vmatprep.subr.mxu0 0.0
      %897 = vmatpush1.xpose.msra.mxu0 0.0
      %898 = vmatprep.subr.mxu0 0.0
      %899 = vmatpush1.xpose.msra.mxu0 0.0
      %900 = vmatprep.subr.mxu0 0.0
      %901 = vmatpush1.xpose.msra.mxu0 0.0
      %902 = vmatprep.subr.mxu0 0.0
      %903 = vmatpush1.xpose.msra.mxu0 0.0
      %904 = vmatprep.subr.mxu0 0.0
      %905 = vmatpush1.xpose.msra.mxu0 0.0
      %906 = vmatprep.subr.mxu0 0.0
      %907 = vmatpush1.xpose.msra.mxu0 0.0
      %908 = vmatprep.subr.mxu0 0.0
      %909 = vmatpush1.xpose.msra.mxu0 0.0
      %910 = vmatprep.subr.mxu0 0.0
      %911 = vmatpush1.xpose.msra.mxu0 0.0
      %912 = vmatprep.subr.mxu0 0.0
      %913 = vmatpush1.xpose.msra.mxu0 0.0
      %914 = vmatprep.subr.mxu0 0.0
      %915 = vmatpush1.xpose.msra.mxu0 0.0
      %916 = vmatprep.subr.mxu0 0.0
      %917 = vmatpush1.xpose.msra.mxu0 0.0
      %918 = vmatprep.subr.mxu0 0.0
      %919 = vmatpush1.xpose.msra.mxu0 0.0
      %920 = vmatprep.subr.mxu0 0.0
      %921 = vmatpush1.xpose.msra.mxu0 0.0
      %922 = vmatprep.subr.mxu0 0.0
      %923 = vmatpush1.xpose.msra.mxu0 0.0
      %924 = vmatprep.subr.mxu0 0.0
      %925 = vmatpush1.xpose.msra.mxu0 0.0
      %926 = vmatprep.subr.mxu0 0.0
      %927 = vmatpush1.xpose.msra.mxu0 0.0
      %928 = vmatprep.subr.mxu0 0.0
      %929 = vmatpush1.xpose.msra.mxu0 0.0
      %930 = vmatprep.subr.mxu0 0.0
      %931 = vmatpush1.xpose.msra.mxu0 0.0
      %932 = vmatprep.subr.mxu0 0.0
      %933 = vmatpush1.xpose.msra.mxu0 0.0
      %934 = vmatprep.subr.mxu0 0.0
      %935 = vmatpush1.xpose.msra.mxu0 0.0
      %936 = vmatprep.mubr.f32.mxu0 0.0
      %937 = vmatmul.mubr.f32.gmra.mrb[0].mxu0 %v868
      %v938 = vpop.f32.mrb[0].mxu0
      %v939 = vadd.f32 0.0, %v938
      %v940 = vpop.f32.mrb[0].mxu0
      %941 = vdwg.mxu0
      %v942 = vmul.f32 %v939, 0.35355338
      %v944 = vlaneseq
      %v945 = vshrl.u32 %v944, 7
      %v946 = vsub.s32 0, %v945
      %v947 = vrot.slane %v743, %v946
      %v949 = vadd.f32 %v942, %v947
      %v950 = vsel %vm867, %v949, -inf
      %951 = vmax.xlane.f32.xlu0 %v950
      %v952 = vpop.xlane.xlu0 %951
      %v953 = vsub.f32 %v949, %v952
      %v954 = vmul.f32 %v953, 1.442695
      %v955 = vpow.pop %v954
      %v956 = vsel %vm867, %v955, 0.0
      %957 = vadd.xlane.f32.xlu0 %v956
      %v958 = vpop.xlane.xlu0 %957
      %v959 = vrcp.pop %v958
      %v960 = vmul.f32 %v955, %v959
      %961 = vrot.lane.b32.xlu0 %v861, 64
      %v962 = vpop.permute.xlu0 %961
      %v965 = vsel %vm867, %v960, 0
      %967 = vmatprep.subr.mxu0 0.0
      %968 = vmatpush1.msra.mxu0 %v962
      %969 = vmatprep.subr.mxu0 0.0
      %970 = vmatpush1.msra.mxu0 0.0
      %971 = vmatprep.subr.mxu0 0.0
      %972 = vmatpush1.msra.mxu0 0.0
      %973 = vmatprep.subr.mxu0 0.0
      %974 = vmatpush1.msra.mxu0 0.0
      %975 = vmatprep.subr.mxu0 0.0
      %976 = vmatpush1.msra.mxu0 0.0
      %977 = vmatprep.subr.mxu0 0.0
      %978 = vmatpush1.msra.mxu0 0.0
      %979 = vmatprep.subr.mxu0 0.0
      %980 = vmatpush1.msra.mxu0 0.0
      %981 = vmatprep.subr.mxu0 0.0
      %982 = vmatpush1.msra.mxu0 0.0
      %983 = vmatprep.subr.mxu0 0.0
      %984 = vmatpush1.msra.mxu0 0.0
      %985 = vmatprep.subr.mxu0 0.0
      %986 = vmatpush1.msra.mxu0 0.0
      %987 = vmatprep.subr.mxu0 0.0
      %988 = vmatpush1.msra.mxu0 0.0
      %989 = vmatprep.subr.mxu0 0.0
      %990 = vmatpush1.msra.mxu0 0.0
      %991 = vmatprep.subr.mxu0 0.0
      %992 = vmatpush1.msra.mxu0 0.0
      %993 = vmatprep.subr.mxu0 0.0
      %994 = vmatpush1.msra.mxu0 0.0
      %995 = vmatprep.subr.mxu0 0.0
      %996 = vmatpush1.msra.mxu0 0.0
      %997 = vmatprep.subr.mxu0 0.0
      %998 = vmatpush1.msra.mxu0 0.0
      %999 = vmatprep.subr.mxu0 0.0
      %1000 = vmatpush1.msra.mxu0 0.0
      %1001 = vmatprep.subr.mxu0 0.0
      %1002 = vmatpush1.msra.mxu0 0.0
      %1003 = vmatprep.subr.mxu0 0.0
      %1004 = vmatpush1.msra.mxu0 0.0
      %1005 = vmatprep.subr.mxu0 0.0
      %1006 = vmatpush1.msra.mxu0 0.0
      %1007 = vmatprep.subr.mxu0 0.0
      %1008 = vmatpush1.msra.mxu0 0.0
      %1009 = vmatprep.subr.mxu0 0.0
      %1010 = vmatpush1.msra.mxu0 0.0
      %1011 = vmatprep.subr.mxu0 0.0
      %1012 = vmatpush1.msra.mxu0 0.0
      %1013 = vmatprep.subr.mxu0 0.0
      %1014 = vmatpush1.msra.mxu0 0.0
      %1015 = vmatprep.subr.mxu0 0.0
      %1016 = vmatpush1.msra.mxu0 0.0
      %1017 = vmatprep.subr.mxu0 0.0
      %1018 = vmatpush1.msra.mxu0 0.0
      %1019 = vmatprep.subr.mxu0 0.0
      %1020 = vmatpush1.msra.mxu0 0.0
      %1021 = vmatprep.subr.mxu0 0.0
      %1022 = vmatpush1.msra.mxu0 0.0
      %1023 = vmatprep.subr.mxu0 0.0
      %1024 = vmatpush1.msra.mxu0 0.0
      %1025 = vmatprep.subr.mxu0 0.0
      %1026 = vmatpush1.msra.mxu0 0.0
      %1027 = vmatprep.subr.mxu0 0.0
      %1028 = vmatpush1.msra.mxu0 0.0
      %1029 = vmatprep.subr.mxu0 0.0
      %1030 = vmatpush1.msra.mxu0 0.0
      %1031 = vmatprep.mubr.f32.mxu0 0.0
      %1032 = vmatmul.mubr.f32.gmra.mrb[0].mxu0 %v965
      %v1033 = vpop.f32.mrb[0].mxu0
      %v1034 = vadd.f32 0.0, %v1033
      %v1035 = vpop.f32.mrb[0].mxu0
      %1036 = vdwg.mxu0
      %1037 = vrot.lane.b32.xlu0 %v861, 120
      %v1038 = vpop.permute.xlu0 %1037
      %1039 = vrot.lane.b32.xlu0 %v861, 88
      %v1040 = vpop.permute.xlu0 %1039
      %v1041 = vsel %vm867, %v1038, 0
      %v1043 = vsel %vm867, %v1040, 0
      %1045 = vmatprep.subr.mxu0 0.0
      %1046 = vmatpush1.xpose.msra.mxu0 %v1043
      %1047 = vmatprep.subr.mxu0 0.0
      %1048 = vmatpush1.xpose.msra.mxu0 0.0
      %1049 = vmatprep.subr.mxu0 0.0
      %1050 = vmatpush1.xpose.msra.mxu0 0.0
      %1051 = vmatprep.subr.mxu0 0.0
      %1052 = vmatpush1.xpose.msra.mxu0 0.0
      %1053 = vmatprep.subr.mxu0 0.0
      %1054 = vmatpush1.xpose.msra.mxu0 0.0
      %1055 = vmatprep.subr.mxu0 0.0
      %1056 = vmatpush1.xpose.msra.mxu0 0.0
      %1057 = vmatprep.subr.mxu0 0.0
      %1058 = vmatpush1.xpose.msra.mxu0 0.0
      %1059 = vmatprep.subr.mxu0 0.0
      %1060 = vmatpush1.xpose.msra.mxu0 0.0
      %1061 = vmatprep.subr.mxu0 0.0
      %1062 = vmatpush1.xpose.msra.mxu0 0.0
      %1063 = vmatprep.subr.mxu0 0.0
      %1064 = vmatpush1.xpose.msra.mxu0 0.0
      %1065 = vmatprep.subr.mxu0 0.0
      %1066 = vmatpush1.xpose.msra.mxu0 0.0
      %1067 = vmatprep.subr.mxu0 0.0
      %1068 = vmatpush1.xpose.msra.mxu0 0.0
      %1069 = vmatprep.subr.mxu0 0.0
      %1070 = vmatpush1.xpose.msra.mxu0 0.0
      %1071 = vmatprep.subr.mxu0 0.0
      %1072 = vmatpush1.xpose.msra.mxu0 0.0
      %1073 = vmatprep.subr.mxu0 0.0
      %1074 = vmatpush1.xpose.msra.mxu0 0.0
      %1075 = vmatprep.subr.mxu0 0.0
      %1076 = vmatpush1.xpose.msra.mxu0 0.0
      %1077 = vmatprep.subr.mxu0 0.0
      %1078 = vmatpush1.xpose.msra.mxu0 0.0
      %1079 = vmatprep.subr.mxu0 0.0
      %1080 = vmatpush1.xpose.msra.mxu0 0.0
      %1081 = vmatprep.subr.mxu0 0.0
      %1082 = vmatpush1.xpose.msra.mxu0 0.0
      %1083 = vmatprep.subr.mxu0 0.0
      %1084 = vmatpush1.xpose.msra.mxu0 0.0
      %1085 = vmatprep.subr.mxu0 0.0
      %1086 = vmatpush1.xpose.msra.mxu0 0.0
      %1087 = vmatprep.subr.mxu0 0.0
      %1088 = vmatpush1.xpose.msra.mxu0 0.0
      %1089 = vmatprep.subr.mxu0 0.0
      %1090 = vmatpush1.xpose.msra.mxu0 0.0
      %1091 = vmatprep.subr.mxu0 0.0
      %1092 = vmatpush1.xpose.msra.mxu0 0.0
      %1093 = vmatprep.subr.mxu0 0.0
      %1094 = vmatpush1.xpose.msra.mxu0 0.0
      %1095 = vmatprep.subr.mxu0 0.0
      %1096 = vmatpush1.xpose.msra.mxu0 0.0
      %1097 = vmatprep.subr.mxu0 0.0
      %1098 = vmatpush1.xpose.msra.mxu0 0.0
      %1099 = vmatprep.subr.mxu0 0.0
      %1100 = vmatpush1.xpose.msra.mxu0 0.0
      %1101 = vmatprep.subr.mxu0 0.0
      %1102 = vmatpush1.xpose.msra.mxu0 0.0
      %1103 = vmatprep.subr.mxu0 0.0
      %1104 = vmatpush1.xpose.msra.mxu0 0.0
      %1105 = vmatprep.subr.mxu0 0.0
      %1106 = vmatpush1.xpose.msra.mxu0 0.0
      %1107 = vmatprep.subr.mxu0 0.0
      %1108 = vmatpush1.xpose.msra.mxu0 0.0
      %1109 = vmatprep.mubr.f32.mxu0 0.0
      %1110 = vmatmul.mubr.f32.gmra.mrb[0].mxu0 %v1041
      %v1111 = vpop.f32.mrb[0].mxu0
      %v1112 = vadd.f32 0.0, %v1111
      %v1113 = vpop.f32.mrb[0].mxu0
      %1114 = vdwg.mxu0
      %v1115 = vmul.f32 %v1112, 0.35355338
      %v1116 = vadd.f32 %v1115, %v947
      %v1117 = vsel %vm867, %v1116, -inf
      %1118 = vmax.xlane.f32.xlu0 %v1117
      %v1119 = vpop.xlane.xlu0 %1118
      %v1120 = vsub.f32 %v1116, %v1119
      %v1121 = vmul.f32 %v1120, 1.442695
      %v1122 = vpow.pop %v1121
      %v1123 = vsel %vm867, %v1122, 0.0
      %1124 = vadd.xlane.f32.xlu0 %v1123
      %v1125 = vpop.xlane.xlu0 %1124
      %v1126 = vrcp.pop %v1125
      %v1127 = vmul.f32 %v1122, %v1126
      %1128 = vrot.lane.b32.xlu0 %v861, 56
      %v1129 = vpop.permute.xlu0 %1128
      %v1132 = vsel %vm867, %v1127, 0
      %1134 = vmatprep.subr.mxu0 0.0
      %1135 = vmatpush1.msra.mxu0 %v1129
      %1136 = vmatprep.subr.mxu0 0.0
      %1137 = vmatpush1.msra.mxu0 0.0
      %1138 = vmatprep.subr.mxu0 0.0
      %1139 = vmatpush1.msra.mxu0 0.0
      %1140 = vmatprep.subr.mxu0 0.0
      %1141 = vmatpush1.msra.mxu0 0.0
      %1142 = vmatprep.subr.mxu0 0.0
      %1143 = vmatpush1.msra.mxu0 0.0
      %1144 = vmatprep.subr.mxu0 0.0
      %1145 = vmatpush1.msra.mxu0 0.0
      %1146 = vmatprep.subr.mxu0 0.0
      %1147 = vmatpush1.msra.mxu0 0.0
      %1148 = vmatprep.subr.mxu0 0.0
      %1149 = vmatpush1.msra.mxu0 0.0
      %1150 = vmatprep.subr.mxu0 0.0
      %1151 = vmatpush1.msra.mxu0 0.0
      %1152 = vmatprep.subr.mxu0 0.0
      %1153 = vmatpush1.msra.mxu0 0.0
      %1154 = vmatprep.subr.mxu0 0.0
      %1155 = vmatpush1.msra.mxu0 0.0
      %1156 = vmatprep.subr.mxu0 0.0
      %1157 = vmatpush1.msra.mxu0 0.0
      %1158 = vmatprep.subr.mxu0 0.0
      %1159 = vmatpush1.msra.mxu0 0.0
      %1160 = vmatprep.subr.mxu0 0.0
      %1161 = vmatpush1.msra.mxu0 0.0
      %1162 = vmatprep.subr.mxu0 0.0
      %1163 = vmatpush1.msra.mxu0 0.0
      %1164 = vmatprep.subr.mxu0 0.0
      %1165 = vmatpush1.msra.mxu0 0.0
      %1166 = vmatprep.subr.mxu0 0.0
      %1167 = vmatpush1.msra.mxu0 0.0
      %1168 = vmatprep.subr.mxu0 0.0
      %1169 = vmatpush1.msra.mxu0 0.0
      %1170 = vmatprep.subr.mxu0 0.0
      %1171 = vmatpush1.msra.mxu0 0.0
      %1172 = vmatprep.subr.mxu0 0.0
      %1173 = vmatpush1.msra.mxu0 0.0
      %1174 = vmatprep.subr.mxu0 0.0
      %1175 = vmatpush1.msra.mxu0 0.0
      %1176 = vmatprep.subr.mxu0 0.0
      %1177 = vmatpush1.msra.mxu0 0.0
      %1178 = vmatprep.subr.mxu0 0.0
      %1179 = vmatpush1.msra.mxu0 0.0
      %1180 = vmatprep.subr.mxu0 0.0
      %1181 = vmatpush1.msra.mxu0 0.0
      %1182 = vmatprep.subr.mxu0 0.0
      %1183 = vmatpush1.msra.mxu0 0.0
      %1184 = vmatprep.subr.mxu0 0.0
      %1185 = vmatpush1.msra.mxu0 0.0
      %1186 = vmatprep.subr.mxu0 0.0
      %1187 = vmatpush1.msra.mxu0 0.0
      %1188 = vmatprep.subr.mxu0 0.0
      %1189 = vmatpush1.msra.mxu0 0.0
      %1190 = vmatprep.subr.mxu0 0.0
      %1191 = vmatpush1.msra.mxu0 0.0
      %1192 = vmatprep.subr.mxu0 0.0
      %1193 = vmatpush1.msra.mxu0 0.0
      %1194 = vmatprep.subr.mxu0 0.0
      %1195 = vmatpush1.msra.mxu0 0.0
      %1196 = vmatprep.subr.mxu0 0.0
      %1197 = vmatpush1.msra.mxu0 0.0
      %1198 = vmatprep.mubr.f32.mxu0 0.0
      %1199 = vmatmul.mubr.f32.gmra.mrb[0].mxu0 %v1132
      %v1200 = vpop.f32.mrb[0].mxu0
      %v1201 = vadd.f32 0.0, %v1200
      %v1202 = vpop.f32.mrb[0].mxu0
      %1203 = vdwg.mxu0
      %1204 = vrot.lane.b32.xlu0 %v861, 112
      %v1205 = vpop.permute.xlu0 %1204
      %1206 = vrot.lane.b32.xlu0 %v861, 80
      %v1207 = vpop.permute.xlu0 %1206
      %v1208 = vsel %vm867, %v1205, 0
      %v1210 = vsel %vm867, %v1207, 0
      %1212 = vmatprep.subr.mxu0 0.0
      %1213 = vmatpush1.xpose.msra.mxu0 %v1210
      %1214 = vmatprep.subr.mxu0 0.0
      %1215 = vmatpush1.xpose.msra.mxu0 0.0
      %1216 = vmatprep.subr.mxu0 0.0
      %1217 = vmatpush1.xpose.msra.mxu0 0.0
      %1218 = vmatprep.subr.mxu0 0.0
      %1219 = vmatpush1.xpose.msra.mxu0 0.0
      %1220 = vmatprep.subr.mxu0 0.0
      %1221 = vmatpush1.xpose.msra.mxu0 0.0
      %1222 = vmatprep.subr.mxu0 0.0
      %1223 = vmatpush1.xpose.msra.mxu0 0.0
      %1224 = vmatprep.subr.mxu0 0.0
      %1225 = vmatpush1.xpose.msra.mxu0 0.0
      %1226 = vmatprep.subr.mxu0 0.0
      %1227 = vmatpush1.xpose.msra.mxu0 0.0
      %1228 = vmatprep.subr.mxu0 0.0
      %1229 = vmatpush1.xpose.msra.mxu0 0.0
      %1230 = vmatprep.subr.mxu0 0.0
      %1231 = vmatpush1.xpose.msra.mxu0 0.0
      %1232 = vmatprep.subr.mxu0 0.0
      %1233 = vmatpush1.xpose.msra.mxu0 0.0
      %1234 = vmatprep.subr.mxu0 0.0
      %1235 = vmatpush1.xpose.msra.mxu0 0.0
      %1236 = vmatprep.subr.mxu0 0.0
      %1237 = vmatpush1.xpose.msra.mxu0 0.0
      %1238 = vmatprep.subr.mxu0 0.0
      %1239 = vmatpush1.xpose.msra.mxu0 0.0
      %1240 = vmatprep.subr.mxu0 0.0
      %1241 = vmatpush1.xpose.msra.mxu0 0.0
      %1242 = vmatprep.subr.mxu0 0.0
      %1243 = vmatpush1.xpose.msra.mxu0 0.0
      %1244 = vmatprep.subr.mxu0 0.0
      %1245 = vmatpush1.xpose.msra.mxu0 0.0
      %1246 = vmatprep.subr.mxu0 0.0
      %1247 = vmatpush1.xpose.msra.mxu0 0.0
      %1248 = vmatprep.subr.mxu0 0.0
      %1249 = vmatpush1.xpose.msra.mxu0 0.0
      %1250 = vmatprep.subr.mxu0 0.0
      %1251 = vmatpush1.xpose.msra.mxu0 0.0
      %1252 = vmatprep.subr.mxu0 0.0
      %1253 = vmatpush1.xpose.msra.mxu0 0.0
      %1254 = vmatprep.subr.mxu0 0.0
      %1255 = vmatpush1.xpose.msra.mxu0 0.0
      %1256 = vmatprep.subr.mxu0 0.0
      %1257 = vmatpush1.xpose.msra.mxu0 0.0
      %1258 = vmatprep.subr.mxu0 0.0
      %1259 = vmatpush1.xpose.msra.mxu0 0.0
      %1260 = vmatprep.subr.mxu0 0.0
      %1261 = vmatpush1.xpose.msra.mxu0 0.0
      %1262 = vmatprep.subr.mxu0 0.0
      %1263 = vmatpush1.xpose.msra.mxu0 0.0
      %1264 = vmatprep.subr.mxu0 0.0
      %1265 = vmatpush1.xpose.msra.mxu0 0.0
      %1266 = vmatprep.subr.mxu0 0.0
      %1267 = vmatpush1.xpose.msra.mxu0 0.0
      %1268 = vmatprep.subr.mxu0 0.0
      %1269 = vmatpush1.xpose.msra.mxu0 0.0
      %1270 = vmatprep.subr.mxu0 0.0
      %1271 = vmatpush1.xpose.msra.mxu0 0.0
      %1272 = vmatprep.subr.mxu0 0.0
      %1273 = vmatpush1.xpose.msra.mxu0 0.0
      %1274 = vmatprep.subr.mxu0 0.0
      %1275 = vmatpush1.xpose.msra.mxu0 0.0
      %1276 = vmatprep.mubr.f32.mxu0 0.0
      %1277 = vmatmul.mubr.f32.gmra.mrb[0].mxu0 %v1208
      %v1278 = vpop.f32.mrb[0].mxu0
      %v1279 = vadd.f32 0.0, %v1278
      %v1280 = vpop.f32.mrb[0].mxu0
      %1281 = vdwg.mxu0
      %v1282 = vmul.f32 %v1279, 0.35355338
      %v1283 = vadd.f32 %v1282, %v947
      %v1284 = vsel %vm867, %v1283, -inf
      %1285 = vmax.xlane.f32.xlu0 %v1284
      %v1286 = vpop.xlane.xlu0 %1285
      %v1287 = vsub.f32 %v1283, %v1286
      %v1288 = vmul.f32 %v1287, 1.442695
      %v1289 = vpow.pop %v1288
      %v1290 = vsel %vm867, %v1289, 0.0
      %1291 = vadd.xlane.f32.xlu0 %v1290
      %v1292 = vpop.xlane.xlu0 %1291
      %v1293 = vrcp.pop %v1292
      %v1294 = vmul.f32 %v1289, %v1293
      %1295 = vrot.lane.b32.xlu0 %v861, 48
      %v1296 = vpop.permute.xlu0 %1295
      %v1299 = vsel %vm867, %v1294, 0
      %1301 = vmatprep.subr.mxu0 0.0
      %1302 = vmatpush1.msra.mxu0 %v1296
      %1303 = vmatprep.subr.mxu0 0.0
      %1304 = vmatpush1.msra.mxu0 0.0
      %1305 = vmatprep.subr.mxu0 0.0
      %1306 = vmatpush1.msra.mxu0 0.0
      %1307 = vmatprep.subr.mxu0 0.0
      %1308 = vmatpush1.msra.mxu0 0.0
      %1309 = vmatprep.subr.mxu0 0.0
      %1310 = vmatpush1.msra.mxu0 0.0
      %1311 = vmatprep.subr.mxu0 0.0
      %1312 = vmatpush1.msra.mxu0 0.0
      %1313 = vmatprep.subr.mxu0 0.0
      %1314 = vmatpush1.msra.mxu0 0.0
      %1315 = vmatprep.subr.mxu0 0.0
      %1316 = vmatpush1.msra.mxu0 0.0
      %1317 = vmatprep.subr.mxu0 0.0
      %1318 = vmatpush1.msra.mxu0 0.0
      %1319 = vmatprep.subr.mxu0 0.0
      %1320 = vmatpush1.msra.mxu0 0.0
      %1321 = vmatprep.subr.mxu0 0.0
      %1322 = vmatpush1.msra.mxu0 0.0
      %1323 = vmatprep.subr.mxu0 0.0
      %1324 = vmatpush1.msra.mxu0 0.0
      %1325 = vmatprep.subr.mxu0 0.0
      %1326 = vmatpush1.msra.mxu0 0.0
      %1327 = vmatprep.subr.mxu0 0.0
      %1328 = vmatpush1.msra.mxu0 0.0
      %1329 = vmatprep.subr.mxu0 0.0
      %1330 = vmatpush1.msra.mxu0 0.0
      %1331 = vmatprep.subr.mxu0 0.0
      %1332 = vmatpush1.msra.mxu0 0.0
      %1333 = vmatprep.subr.mxu0 0.0
      %1334 = vmatpush1.msra.mxu0 0.0
      %1335 = vmatprep.subr.mxu0 0.0
      %1336 = vmatpush1.msra.mxu0 0.0
      %1337 = vmatprep.subr.mxu0 0.0
      %1338 = vmatpush1.msra.mxu0 0.0
      %1339 = vmatprep.subr.mxu0 0.0
      %1340 = vmatpush1.msra.mxu0 0.0
      %1341 = vmatprep.subr.mxu0 0.0
      %1342 = vmatpush1.msra.mxu0 0.0
      %1343 = vmatprep.subr.mxu0 0.0
      %1344 = vmatpush1.msra.mxu0 0.0
      %1345 = vmatprep.subr.mxu0 0.0
      %1346 = vmatpush1.msra.mxu0 0.0
      %1347 = vmatprep.subr.mxu0 0.0
      %1348 = vmatpush1.msra.mxu0 0.0
      %1349 = vmatprep.subr.mxu0 0.0
      %1350 = vmatpush1.msra.mxu0 0.0
      %1351 = vmatprep.subr.mxu0 0.0
      %1352 = vmatpush1.msra.mxu0 0.0
      %1353 = vmatprep.subr.mxu0 0.0
      %1354 = vmatpush1.msra.mxu0 0.0
      %1355 = vmatprep.subr.mxu0 0.0
      %1356 = vmatpush1.msra.mxu0 0.0
      %1357 = vmatprep.subr.mxu0 0.0
      %1358 = vmatpush1.msra.mxu0 0.0
      %1359 = vmatprep.subr.mxu0 0.0
      %1360 = vmatpush1.msra.mxu0 0.0
      %1361 = vmatprep.subr.mxu0 0.0
      %1362 = vmatpush1.msra.mxu0 0.0
      %1363 = vmatprep.subr.mxu0 0.0
      %1364 = vmatpush1.msra.mxu0 0.0
      %1365 = vmatprep.mubr.f32.mxu0 0.0
      %1366 = vmatmul.mubr.f32.gmra.mrb[0].mxu0 %v1299
      %v1367 = vpop.f32.mrb[0].mxu0
      %v1368 = vadd.f32 0.0, %v1367
      %v1369 = vpop.f32.mrb[0].mxu0
      %1370 = vdwg.mxu0
      %1371 = vrot.lane.b32.xlu0 %v861, 104
      %v1372 = vpop.permute.xlu0 %1371
      %1373 = vrot.lane.b32.xlu0 %v861, 72
      %v1374 = vpop.permute.xlu0 %1373
      %v1375 = vsel %vm867, %v1372, 0
      %v1377 = vsel %vm867, %v1374, 0
      %1379 = vmatprep.subr.mxu0 0.0
      %1380 = vmatpush1.xpose.msra.mxu0 %v1377
      %1381 = vmatprep.subr.mxu0 0.0
      %1382 = vmatpush1.xpose.msra.mxu0 0.0
      %1383 = vmatprep.subr.mxu0 0.0
      %1384 = vmatpush1.xpose.msra.mxu0 0.0
      %1385 = vmatprep.subr.mxu0 0.0
      %1386 = vmatpush1.xpose.msra.mxu0 0.0
      %1387 = vmatprep.subr.mxu0 0.0
      %1388 = vmatpush1.xpose.msra.mxu0 0.0
      %1389 = vmatprep.subr.mxu0 0.0
      %1390 = vmatpush1.xpose.msra.mxu0 0.0
      %1391 = vmatprep.subr.mxu0 0.0
      %1392 = vmatpush1.xpose.msra.mxu0 0.0
      %1393 = vmatprep.subr.mxu0 0.0
      %1394 = vmatpush1.xpose.msra.mxu0 0.0
      %1395 = vmatprep.subr.mxu0 0.0
      %1396 = vmatpush1.xpose.msra.mxu0 0.0
      %1397 = vmatprep.subr.mxu0 0.0
      %1398 = vmatpush1.xpose.msra.mxu0 0.0
      %1399 = vmatprep.subr.mxu0 0.0
      %1400 = vmatpush1.xpose.msra.mxu0 0.0
      %1401 = vmatprep.subr.mxu0 0.0
      %1402 = vmatpush1.xpose.msra.mxu0 0.0
      %1403 = vmatprep.subr.mxu0 0.0
      %1404 = vmatpush1.xpose.msra.mxu0 0.0
      %1405 = vmatprep.subr.mxu0 0.0
      %1406 = vmatpush1.xpose.msra.mxu0 0.0
      %1407 = vmatprep.subr.mxu0 0.0
      %1408 = vmatpush1.xpose.msra.mxu0 0.0
      %1409 = vmatprep.subr.mxu0 0.0
      %1410 = vmatpush1.xpose.msra.mxu0 0.0
      %1411 = vmatprep.subr.mxu0 0.0
      %1412 = vmatpush1.xpose.msra.mxu0 0.0
      %1413 = vmatprep.subr.mxu0 0.0
      %1414 = vmatpush1.xpose.msra.mxu0 0.0
      %1415 = vmatprep.subr.mxu0 0.0
      %1416 = vmatpush1.xpose.msra.mxu0 0.0
      %1417 = vmatprep.subr.mxu0 0.0
      %1418 = vmatpush1.xpose.msra.mxu0 0.0
      %1419 = vmatprep.subr.mxu0 0.0
      %1420 = vmatpush1.xpose.msra.mxu0 0.0
      %1421 = vmatprep.subr.mxu0 0.0
      %1422 = vmatpush1.xpose.msra.mxu0 0.0
      %1423 = vmatprep.subr.mxu0 0.0
      %1424 = vmatpush1.xpose.msra.mxu0 0.0
      %1425 = vmatprep.subr.mxu0 0.0
      %1426 = vmatpush1.xpose.msra.mxu0 0.0
      %1427 = vmatprep.subr.mxu0 0.0
      %1428 = vmatpush1.xpose.msra.mxu0 0.0
      %1429 = vmatprep.subr.mxu0 0.0
      %1430 = vmatpush1.xpose.msra.mxu0 0.0
      %1431 = vmatprep.subr.mxu0 0.0
      %1432 = vmatpush1.xpose.msra.mxu0 0.0
      %1433 = vmatprep.subr.mxu0 0.0
      %1434 = vmatpush1.xpose.msra.mxu0 0.0
      %1435 = vmatprep.subr.mxu0 0.0
      %1436 = vmatpush1.xpose.msra.mxu0 0.0
      %1437 = vmatprep.subr.mxu0 0.0
      %1438 = vmatpush1.xpose.msra.mxu0 0.0
      %1439 = vmatprep.subr.mxu0 0.0
      %1440 = vmatpush1.xpose.msra.mxu0 0.0
      %1441 = vmatprep.subr.mxu0 0.0
      %1442 = vmatpush1.xpose.msra.mxu0 0.0
      %1443 = vmatprep.mubr.f32.mxu0 0.0
      %1444 = vmatmul.mubr.f32.gmra.mrb[0].mxu0 %v1375
      %v1445 = vpop.f32.mrb[0].mxu0
      %v1446 = vadd.f32 0.0, %v1445
      %v1447 = vpop.f32.mrb[0].mxu0
      %1448 = vdwg.mxu0
      %v1449 = vmul.f32 %v1446, 0.35355338
      %v1450 = vadd.f32 %v1449, %v947
      %v1451 = vsel %vm867, %v1450, -inf
      %1452 = vmax.xlane.f32.xlu0 %v1451
      %v1453 = vpop.xlane.xlu0 %1452
      %v1454 = vsub.f32 %v1450, %v1453
      %v1455 = vmul.f32 %v1454, 1.442695
      %v1456 = vpow.pop %v1455
      %v1457 = vsel %vm867, %v1456, 0.0
      %1458 = vadd.xlane.f32.xlu0 %v1457
      %v1459 = vpop.xlane.xlu0 %1458
      %v1460 = vrcp.pop %v1459
      %v1461 = vmul.f32 %v1456, %v1460
      %1462 = vrot.lane.b32.xlu0 %v861, 40
      %v1463 = vpop.permute.xlu0 %1462
      %v1466 = vsel %vm867, %v1461, 0
      %1468 = vmatprep.subr.mxu0 0.0
      %1469 = vmatpush1.msra.mxu0 %v1463
      %1470 = vmatprep.subr.mxu0 0.0
      %1471 = vmatpush1.msra.mxu0 0.0
      %1472 = vmatprep.subr.mxu0 0.0
      %1473 = vmatpush1.msra.mxu0 0.0
      %1474 = vmatprep.subr.mxu0 0.0
      %1475 = vmatpush1.msra.mxu0 0.0
      %1476 = vmatprep.subr.mxu0 0.0
      %1477 = vmatpush1.msra.mxu0 0.0
      %1478 = vmatprep.subr.mxu0 0.0
      %1479 = vmatpush1.msra.mxu0 0.0
      %1480 = vmatprep.subr.mxu0 0.0
      %1481 = vmatpush1.msra.mxu0 0.0
      %1482 = vmatprep.subr.mxu0 0.0
      %1483 = vmatpush1.msra.mxu0 0.0
      %1484 = vmatprep.subr.mxu0 0.0
      %1485 = vmatpush1.msra.mxu0 0.0
      %1486 = vmatprep.subr.mxu0 0.0
      %1487 = vmatpush1.msra.mxu0 0.0
      %1488 = vmatprep.subr.mxu0 0.0
      %1489 = vmatpush1.msra.mxu0 0.0
      %1490 = vmatprep.subr.mxu0 0.0
      %1491 = vmatpush1.msra.mxu0 0.0
      %1492 = vmatprep.subr.mxu0 0.0
      %1493 = vmatpush1.msra.mxu0 0.0
      %1494 = vmatprep.subr.mxu0 0.0
      %1495 = vmatpush1.msra.mxu0 0.0
      %1496 = vmatprep.subr.mxu0 0.0
      %1497 = vmatpush1.msra.mxu0 0.0
      %1498 = vmatprep.subr.mxu0 0.0
      %1499 = vmatpush1.msra.mxu0 0.0
      %1500 = vmatprep.subr.mxu0 0.0
      %1501 = vmatpush1.msra.mxu0 0.0
      %1502 = vmatprep.subr.mxu0 0.0
      %1503 = vmatpush1.msra.mxu0 0.0
      %1504 = vmatprep.subr.mxu0 0.0
      %1505 = vmatpush1.msra.mxu0 0.0
      %1506 = vmatprep.subr.mxu0 0.0
      %1507 = vmatpush1.msra.mxu0 0.0
      %1508 = vmatprep.subr.mxu0 0.0
      %1509 = vmatpush1.msra.mxu0 0.0
      %1510 = vmatprep.subr.mxu0 0.0
      %1511 = vmatpush1.msra.mxu0 0.0
      %1512 = vmatprep.subr.mxu0 0.0
      %1513 = vmatpush1.msra.mxu0 0.0
      %1514 = vmatprep.subr.mxu0 0.0
      %1515 = vmatpush1.msra.mxu0 0.0
      %1516 = vmatprep.subr.mxu0 0.0
      %1517 = vmatpush1.msra.mxu0 0.0
      %1518 = vmatprep.subr.mxu0 0.0
      %1519 = vmatpush1.msra.mxu0 0.0
      %1520 = vmatprep.subr.mxu0 0.0
      %1521 = vmatpush1.msra.mxu0 0.0
      %1522 = vmatprep.subr.mxu0 0.0
      %1523 = vmatpush1.msra.mxu0 0.0
      %1524 = vmatprep.subr.mxu0 0.0
      %1525 = vmatpush1.msra.mxu0 0.0
      %1526 = vmatprep.subr.mxu0 0.0
      %1527 = vmatpush1.msra.mxu0 0.0
      %1528 = vmatprep.subr.mxu0 0.0
      %1529 = vmatpush1.msra.mxu0 0.0
      %1530 = vmatprep.subr.mxu0 0.0
      %1531 = vmatpush1.msra.mxu0 0.0
      %1532 = vmatprep.mubr.f32.mxu0 0.0
      %1533 = vmatmul.mubr.f32.gmra.mrb[0].mxu0 %v1466
      %v1534 = vpop.f32.mrb[0].mxu0
      %v1535 = vadd.f32 0.0, %v1534
      %v1536 = vpop.f32.mrb[0].mxu0
      %1537 = vdwg.mxu0
      %1539 = vrot.lane.b32.xlu0 %v1201, 8
      %v1540 = vpop.permute.xlu0 %1539
      %1543 = vrot.lane.b32.xlu0 %v1368, 16
      %v1544 = vpop.permute.xlu0 %1543
      %1547 = vrot.lane.b32.xlu0 %v1535, 24
      %v1548 = vpop.permute.xlu0 %1547
      %v1550 = vsel %vm867, %v1034, %v1540
      %vm1551 = vcmask 130048
      %v1552 = vsel %vm1551, %v1550, %v1544
      %vm1553 = vcmask 195584
      %v1554 = vsel %vm1553, %v1552, %v1548
      %v1556 = vlaneseq
      %v1557 = vshrl.u32 %v1556, 7
      %v1558 = vsub.s32 0, %v1557
      %v1559 = vrot.slane %v784, %v1558
      %v1562 = vsel %vm746, %v1554, 0
      %1564 = vmatprep.subr.mxu0 0.0
      %1565 = vmatpush1.msra.mxu0 %v780
      %1566 = vmatprep.subr.mxu0 0.0
      %1567 = vmatpush1.msra.mxu0 %v781
      %1568 = vmatprep.subr.mxu0 0.0
      %1569 = vmatpush1.msra.mxu0 %v782
      %1570 = vmatprep.subr.mxu0 0.0
      %1571 = vmatpush1.msra.mxu0 %v783
      %1572 = vmatprep.subr.mxu0 0.0
      %1573 = vmatpush1.msra.mxu0 0.0
      %1574 = vmatprep.subr.mxu0 0.0
      %1575 = vmatpush1.msra.mxu0 0.0
      %1576 = vmatprep.subr.mxu0 0.0
      %1577 = vmatpush1.msra.mxu0 0.0
      %1578 = vmatprep.subr.mxu0 0.0
      %1579 = vmatpush1.msra.mxu0 0.0
      %1580 = vmatprep.subr.mxu0 0.0
      %1581 = vmatpush1.msra.mxu0 0.0
      %1582 = vmatprep.subr.mxu0 0.0
      %1583 = vmatpush1.msra.mxu0 0.0
      %1584 = vmatprep.subr.mxu0 0.0
      %1585 = vmatpush1.msra.mxu0 0.0
      %1586 = vmatprep.subr.mxu0 0.0
      %1587 = vmatpush1.msra.mxu0 0.0
      %1588 = vmatprep.subr.mxu0 0.0
      %1589 = vmatpush1.msra.mxu0 0.0
      %1590 = vmatprep.subr.mxu0 0.0
      %1591 = vmatpush1.msra.mxu0 0.0
      %1592 = vmatprep.subr.mxu0 0.0
      %1593 = vmatpush1.msra.mxu0 0.0
      %1594 = vmatprep.subr.mxu0 0.0
      %1595 = vmatpush1.msra.mxu0 0.0
      %1596 = vmatprep.subr.mxu0 0.0
      %1597 = vmatpush1.msra.mxu0 0.0
      %1598 = vmatprep.subr.mxu0 0.0
      %1599 = vmatpush1.msra.mxu0 0.0
      %1600 = vmatprep.subr.mxu0 0.0
      %1601 = vmatpush1.msra.mxu0 0.0
      %1602 = vmatprep.subr.mxu0 0.0
      %1603 = vmatpush1.msra.mxu0 0.0
      %1604 = vmatprep.subr.mxu0 0.0
      %1605 = vmatpush1.msra.mxu0 0.0
      %1606 = vmatprep.subr.mxu0 0.0
      %1607 = vmatpush1.msra.mxu0 0.0
      %1608 = vmatprep.subr.mxu0 0.0
      %1609 = vmatpush1.msra.mxu0 0.0
      %1610 = vmatprep.subr.mxu0 0.0
      %1611 = vmatpush1.msra.mxu0 0.0
      %1612 = vmatprep.subr.mxu0 0.0
      %1613 = vmatpush1.msra.mxu0 0.0
      %1614 = vmatprep.subr.mxu0 0.0
      %1615 = vmatpush1.msra.mxu0 0.0
      %1616 = vmatprep.subr.mxu0 0.0
      %1617 = vmatpush1.msra.mxu0 0.0
      %1618 = vmatprep.subr.mxu0 0.0
      %1619 = vmatpush1.msra.mxu0 0.0
      %1620 = vmatprep.subr.mxu0 0.0
      %1621 = vmatpush1.msra.mxu0 0.0
      %1622 = vmatprep.subr.mxu0 0.0
      %1623 = vmatpush1.msra.mxu0 0.0
      %1624 = vmatprep.subr.mxu0 0.0
      %1625 = vmatpush1.msra.mxu0 0.0
      %1626 = vmatprep.subr.mxu0 0.0
      %1627 = vmatpush1.msra.mxu0 0.0
      %1628 = vmatprep.mubr.f32.mxu0 0.0
      %1629 = vmatmul.mubr.f32.gmra.mrb[0].mxu0 %v1562
      %v1630 = vpop.f32.mrb[0].mxu0
      %v1631 = vadd.f32 %v1559, %v1630
      %v1632 = vpop.f32.mrb[0].mxu0
      %1633 = vdwg.mxu0
      %v1634 = vadd.f32 %v742, %v1631
      %v1635 = vld [vmem:[%s711] sm:$0x1]
      %v1636 = vld [vmem:[%s714] sm:$0x1]
      %v1637 = vsel %vm746, %v1634, 0.0
      %1638 = vadd.xlane.f32.xlu0 %v1637
      %v1639 = vpop.xlane.xlu0 %1638
      %v1640 = vmul.f32 %v1639, %v750
      %v1641 = vsub.f32 %v1634, %v1640
      %v1642 = vmul.f32 %v1641, %v1641
      %v1643 = vsel %vm746, %v1642, 0.0
      %1644 = vadd.xlane.f32.xlu0 %v1643
      %v1645 = vpop.xlane.xlu0 %1644
      %v1646 = vmul.f32 %v1645, %v750
      %v1647 = vadd.f32 %v1646, 1e-05
      %v1648 = vrsqrt.pop %v1647
      %v1649 = vmul.f32 %v1641, %v1648
      %v1651 = vlaneseq
      %v1652 = vshrl.u32 %v1651, 7
      %v1653 = vsub.s32 0, %v1652
      %v1654 = vrot.slane %v1635, %v1653
      %v1656 = vmul.f32 %v1649, %v1654
      %v1658 = vlaneseq
      %v1659 = vshrl.u32 %v1658, 7
      %v1660 = vsub.s32 0, %v1659
      %v1661 = vrot.slane %v1636, %v1660
      %v1663 = vadd.f32 %v1656, %v1661
      %v1664 = vld [vmem:[%s719] sm:$0xff]
      %v1665 = vld [vmem:[%s719 + $0x8] sm:$0xff]
      %v1666 = vld [vmem:[%s719 + $0x10] sm:$0xff]
      %v1667 = vld [vmem:[%s719 + $0x18] sm:$0xff]
      %v1668 = vld [vmem:[%s722] sm:$0x1]
      %v1670 = vlaneseq
      %v1671 = vshrl.u32 %v1670, 7
      %v1672 = vsub.s32 0, %v1671
      %v1673 = vrot.slane %v1668, %v1672
      %v1676 = vsel %vm746, %v1663, 0
      %1678 = vmatprep.subr.mxu0 0.0
      %1679 = vmatpush1.msra.mxu0 %v1664
      %1680 = vmatprep.subr.mxu0 0.0
      %1681 = vmatpush1.msra.mxu0 %v1665
      %1682 = vmatprep.subr.mxu0 0.0
      %1683 = vmatpush1.msra.mxu0 %v1666
      %1684 = vmatprep.subr.mxu0 0.0
      %1685 = vmatpush1.msra.mxu0 %v1667
      %1686 = vmatprep.subr.mxu0 0.0
      %1687 = vmatpush1.msra.mxu0 0.0
      %1688 = vmatprep.subr.mxu0 0.0
      %1689 = vmatpush1.msra.mxu0 0.0
      %1690 = vmatprep.subr.mxu0 0.0
      %1691 = vmatpush1.msra.mxu0 0.0
      %1692 = vmatprep.subr.mxu0 0.0
      %1693 = vmatpush1.msra.mxu0 0.0
      %1694 = vmatprep.subr.mxu0 0.0
      %1695 = vmatpush1.msra.mxu0 0.0
      %1696 = vmatprep.subr.mxu0 0.0
      %1697 = vmatpush1.msra.mxu0 0.0
      %1698 = vmatprep.subr.mxu0 0.0
      %1699 = vmatpush1.msra.mxu0 0.0
      %1700 = vmatprep.subr.mxu0 0.0
      %1701 = vmatpush1.msra.mxu0 0.0
      %1702 = vmatprep.subr.mxu0 0.0
      %1703 = vmatpush1.msra.mxu0 0.0
      %1704 = vmatprep.subr.mxu0 0.0
      %1705 = vmatpush1.msra.mxu0 0.0
      %1706 = vmatprep.subr.mxu0 0.0
      %1707 = vmatpush1.msra.mxu0 0.0
      %1708 = vmatprep.subr.mxu0 0.0
      %1709 = vmatpush1.msra.mxu0 0.0
      %1710 = vmatprep.subr.mxu0 0.0
      %1711 = vmatpush1.msra.mxu0 0.0
      %1712 = vmatprep.subr.mxu0 0.0
      %1713 = vmatpush1.msra.mxu0 0.0
      %1714 = vmatprep.subr.mxu0 0.0
      %1715 = vmatpush1.msra.mxu0 0.0
      %1716 = vmatprep.subr.mxu0 0.0
      %1717 = vmatpush1.msra.mxu0 0.0
      %1718 = vmatprep.subr.mxu0 0.0
      %1719 = vmatpush1.msra.mxu0 0.0
      %1720 = vmatprep.subr.mxu0 0.0
      %1721 = vmatpush1.msra.mxu0 0.0
      %1722 = vmatprep.subr.mxu0 0.0
      %1723 = vmatpush1.msra.mxu0 0.0
      %1724 = vmatprep.subr.mxu0 0.0
      %1725 = vmatpush1.msra.mxu0 0.0
      %1726 = vmatprep.subr.mxu0 0.0
      %1727 = vmatpush1.msra.mxu0 0.0
      %1728 = vmatprep.subr.mxu0 0.0
      %1729 = vmatpush1.msra.mxu0 0.0
      %1730 = vmatprep.subr.mxu0 0.0
      %1731 = vmatpush1.msra.mxu0 0.0
      %1732 = vmatprep.subr.mxu0 0.0
      %1733 = vmatpush1.msra.mxu0 0.0
      %1734 = vmatprep.subr.mxu0 0.0
      %1735 = vmatpush1.msra.mxu0 0.0
      %1736 = vmatprep.subr.mxu0 0.0
      %1737 = vmatpush1.msra.mxu0 0.0
      %1738 = vmatprep.subr.mxu0 0.0
      %1739 = vmatpush1.msra.mxu0 0.0
      %1740 = vmatprep.subr.mxu0 0.0
      %1741 = vmatpush1.msra.mxu0 0.0
      %1742 = vmatprep.mubr.f32.mxu0 0.0
      %1743 = vmatmul.mubr.f32.gmra.mrb[0].mxu0 %v1676
      %v1744 = vpop.f32.mrb[0].mxu0
      %v1745 = vadd.f32 %v1673, %v1744
      %v1746 = vpop.f32.mrb[0].mxu0
      %1747 = vdwg.mxu0
      %v1748 = vmax.f32 %v1745, 0.0
      %v1749 = vld [vmem:[%s727] sm:$0xff]
      %v1750 = vld [vmem:[%s727 + $0x8] sm:$0xff]
      %v1751 = vld [vmem:[%s727 + $0x10] sm:$0xff]
      %v1752 = vld [vmem:[%s727 + $0x18] sm:$0xff]
      %v1753 = vld [vmem:[%s727 + $0x20] sm:$0xff]
      %v1754 = vld [vmem:[%s727 + $0x28] sm:$0xff]
      %v1755 = vld [vmem:[%s727 + $0x30] sm:$0xff]
      %v1756 = vld [vmem:[%s727 + $0x38] sm:$0xff]
      %v1757 = vld [vmem:[%s730] sm:$0x1]
      %v1759 = vlaneseq
      %v1760 = vshrl.u32 %v1759, 7
      %v1761 = vsub.s32 0, %v1760
      %v1762 = vrot.slane %v1757, %v1761
      %vm1764 = vcmask 523264
      %v1766 = vsel %vm1764, %v1748, 0
      %1768 = vmatprep.subr.mxu0 0.0
      %1769 = vmatpush1.msra.mxu0 %v1749
      %1770 = vmatprep.subr.mxu0 0.0
      %1771 = vmatpush1.msra.mxu0 %v1750
      %1772 = vmatprep.subr.mxu0 0.0
      %1773 = vmatpush1.msra.mxu0 %v1751
      %1774 = vmatprep.subr.mxu0 0.0
      %1775 = vmatpush1.msra.mxu0 %v1752
      %1776 = vmatprep.subr.mxu0 0.0
      %1777 = vmatpush1.msra.mxu0 %v1753
      %1778 = vmatprep.subr.mxu0 0.0
      %1779 = vmatpush1.msra.mxu0 %v1754
      %1780 = vmatprep.subr.mxu0 0.0
      %1781 = vmatpush1.msra.mxu0 %v1755
      %1782 = vmatprep.subr.mxu0 0.0
      %1783 = vmatpush1.msra.mxu0 %v1756
      %1784 = vmatprep.subr.mxu0 0.0
      %1785 = vmatpush1.msra.mxu0 0.0
      %1786 = vmatprep.subr.mxu0 0.0
      %1787 = vmatpush1.msra.mxu0 0.0
      %1788 = vmatprep.subr.mxu0 0.0
      %1789 = vmatpush1.msra.mxu0 0.0
      %1790 = vmatprep.subr.mxu0 0.0
      %1791 = vmatpush1.msra.mxu0 0.0
      %1792 = vmatprep.subr.mxu0 0.0
      %1793 = vmatpush1.msra.mxu0 0.0
      %1794 = vmatprep.subr.mxu0 0.0
      %1795 = vmatpush1.msra.mxu0 0.0
      %1796 = vmatprep.subr.mxu0 0.0
      %1797 = vmatpush1.msra.mxu0 0.0
      %1798 = vmatprep.subr.mxu0 0.0
      %1799 = vmatpush1.msra.mxu0 0.0
      %1800 = vmatprep.subr.mxu0 0.0
      %1801 = vmatpush1.msra.mxu0 0.0
      %1802 = vmatprep.subr.mxu0 0.0
      %1803 = vmatpush1.msra.mxu0 0.0
      %1804 = vmatprep.subr.mxu0 0.0
      %1805 = vmatpush1.msra.mxu0 0.0
      %1806 = vmatprep.subr.mxu0 0.0
      %1807 = vmatpush1.msra.mxu0 0.0
      %1808 = vmatprep.subr.mxu0 0.0
      %1809 = vmatpush1.msra.mxu0 0.0
      %1810 = vmatprep.subr.mxu0 0.0
      %1811 = vmatpush1.msra.mxu0 0.0
      %1812 = vmatprep.subr.mxu0 0.0
      %1813 = vmatpush1.msra.mxu0 0.0
      %1814 = vmatprep.subr.mxu0 0.0
      %1815 = vmatpush1.msra.mxu0 0.0
      %1816 = vmatprep.subr.mxu0 0.0
      %1817 = vmatpush1.msra.mxu0 0.0
      %1818 = vmatprep.subr.mxu0 0.0
      %1819 = vmatpush1.msra.mxu0 0.0
      %1820 = vmatprep.subr.mxu0 0.0
      %1821 = vmatpush1.msra.mxu0 0.0
      %1822 = vmatprep.subr.mxu0 0.0
      %1823 = vmatpush1.msra.mxu0 0.0
      %1824 = vmatprep.subr.mxu0 0.0
      %1825 = vmatpush1.msra.mxu0 0.0
      %1826 = vmatprep.subr.mxu0 0.0
      %1827 = vmatpush1.msra.mxu0 0.0
      %1828 = vmatprep.subr.mxu0 0.0
      %1829 = vmatpush1.msra.mxu0 0.0
      %1830 = vmatprep.subr.mxu0 0.0
      %1831 = vmatpush1.msra.mxu0 0.0
      %1832 = vmatprep.mubr.f32.mxu0 0.0
      %1833 = vmatmul.mubr.f32.gmra.mrb[0].mxu0 %v1766
      %v1834 = vpop.f32.mrb[0].mxu0
      %v1835 = vadd.f32 %v1762, %v1834
      %v1836 = vpop.f32.mrb[0].mxu0
      %1837 = vdwg.mxu0
      %v1838 = vadd.f32 %v1634, %v1835
      %1839 = vst.msk [vmem:[%s734] sm:$0xff] %vm746, %v1838
      %p1840 = scmp.eq.s32.totalorder %s32, 1
      // Predicated region
      $region89: #{forward.2} parent=83 // pred_check
        %p1841 = pneg %p1840
      $region90: #{forward.2} parent=83 // pred_check_branch
        %1843 = sbr.rel (%p1841) target = $region92
      $region91: #{forward.2} parent=83 // pred_region
        %v1844 = vld [vmem:[%s14] sm:$0x1]
        %v1845 = vld [vmem:[%s15] sm:$0x1]
        %v1846 = vsel %vm746, %v1838, 0.0
        %1847 = vadd.xlane.f32.xlu0 %v1846
        %v1848 = vpop.xlane.xlu0 %1847
        %v1849 = vmul.f32 %v1848, %v750
        %v1850 = vsub.f32 %v1838, %v1849
        %v1851 = vmul.f32 %v1850, %v1850
        %v1852 = vsel %vm746, %v1851, 0.0
        %1853 = vadd.xlane.f32.xlu0 %v1852
        %v1854 = vpop.xlane.xlu0 %1853
        %v1855 = vmul.f32 %v1854, %v750
        %v1856 = vadd.f32 %v1855, 1e-05
        %v1857 = vrsqrt.pop %v1856
        %v1858 = vmul.f32 %v1850, %v1857
        %v1860 = vlaneseq
        %v1861 = vshrl.u32 %v1860, 7
        %v1862 = vsub.s32 0, %v1861
        %v1863 = vrot.slane %v1844, %v1862
        %v1865 = vmul.f32 %v1858, %v1863
        %v1867 = vlaneseq
        %v1868 = vshrl.u32 %v1867, 7
        %v1869 = vsub.s32 0, %v1868
        %v1870 = vrot.slane %v1845, %v1869
        %v1872 = vadd.f32 %v1865, %v1870
        %1873 = vst.msk [vmem:[%s734] sm:$0xff] %vm746, %v1872
      $region92: #{forward.2} parent=83 // pred_fallthru
        _
      %p1874 = scmp.lt.s32.totalorder %s31, 1
      %s1875 = scalar_select %p1874, %s31, 1
      %s1876 = smul.addr %s1875, 8
      %s1877 = scalar_lea.vmem %s16, %s1876
      // Predicated region
      $region93: #{forward.2} parent=83 // pred_check
        %p1878 = pneg %p463
      $region94: #{forward.2} parent=83 // pred_check_branch
        %1880 = sbr.rel (%p1878) target = $region96
      $region95: #{forward.2} parent=83 // pred_region
        _
      $region96: #{forward.2} parent=83 // pred_fallthru
        _
    $region84: #{forward.2} parent=5 // pred_fallthru
      _
    %p1881 = scmp.le.s32.totalorder 2, %s22
    // Predicated region
    $region97: #{forward.2} parent=5 // pred_check
      %p1882 = pneg %p1881
    $region98: #{forward.2} parent=5 // pred_check_branch
      %1884 = sbr.rel (%p1882) target = $region100
    $region99: #{forward.2} parent=5 // pred_region
      %s1885 = ssub.s32 %s22, 2
      // Predicated region
      $region101: #{forward.2} parent=99 // pred_check
        %p1886 = pneg %p469
      $region102: #{forward.2} parent=99 // pred_check_branch
        %1888 = sbr.rel (%p1886) target = $region104
      $region103: #{forward.2} parent=99 // pred_region
        %p1889 = scmp.lt.s32.totalorder %s33, 1
        %s1890 = scalar_select %p1889, %s33, 1
        %s1891 = smul.addr %s1890, 8
        %s1892 = scalar_lea.vmem %s16, %s1891
      $region104: #{forward.2} parent=99 // pred_fallthru
        _
    $region100: #{forward.2} parent=5 // pred_fallthru
      _
  $region6: #{forward.2} parent=0 // loop_footer
    %s26 = sadd.s32 1, %s22
  $region7: #{forward.2} parent=0 // loop_footer_branch
    %21 = sbr.rel target = $region3
  $region8: #{forward.2} parent=0 // loop_exit
    _

// kernel: forward.3
$region0: #{forward.3}
  #allocation0 [shape = 'u32[]', space=smem, size = 0x4, offset = 0x4, fixed_abs, tag = 'smem constant byte address 0x4 - core index']
  #allocation1 [shape = 'u32[144,128]{1,0:T(1,128)}', space=vmem, size = 0x12000, scoped, tag = 'internal scratch']
  #allocation2 [shape = 'f32[8,32]{1,0:T(8,128)}', space=vmem, size = 0x1000, scoped, tag = 'scratch operand']
  #allocation3 [shape = 'f32[1,1]{1,0:T(1,128)S(1)}', space=vmem, size = 0x200, scoped, tag = 'scoped memory for forward.3']
  %s0 = inlined_call_operand.smem [shape: u32[34], index: -1, kind: input, shape index: {}]
  %s1 = sld [smem:[%s0]]
  %s2 = scalar_lea.smem %s0, 1
  %s3 = sld [smem:[%s2]]
  %s4 = scalar_lea.smem %s0, 2
  %s5 = sld [smem:[%s4]]
  %s6 = scalar_lea.smem %s0, 3
  %s7 = sld [smem:[%s6]]
  %s8 = scalar_lea.smem %s0, 4
  %s9 = sld [smem:[%s8]]
  %s10 = scalar_lea.smem %s0, 5
  %s11 = sld [smem:[%s10]]
  %s12 = scalar_lea.smem %s0, 6
  %s13 = sld [smem:[%s12]]
  %s14 = scalar_lea.smem %s0, 7
  %s15 = sld [smem:[%s14]]
  %s16 = scalar_lea.smem %s0, 8
  %s17 = sld [smem:[%s16]]
  %s18 = scalar_lea.smem %s0, 9
  %s19 = sld [smem:[%s18]]
  %s20 = scalar_lea.smem %s0, 10
  %s21 = sld [smem:[%s20]]
  %s22 = scalar_lea.smem %s0, 11
  %s23 = sld [smem:[%s22]]
  %s24 = scalar_lea.smem %s0, 12
  %s25 = sld [smem:[%s24]]
  %s26 = scalar_lea.smem %s0, 13
  %s27 = sld [smem:[%s26]]
  %s28 = scalar_lea.smem %s0, 14
  %s29 = sld [smem:[%s28]]
  %s30 = scalar_lea.smem %s0, 15
  %s31 = sld [smem:[%s30]]
  %s32 = scalar_lea.smem %s0, 16
  %s33 = sld [smem:[%s32]]
  %s34 = scalar_lea.smem %s0, 17
  %s35 = sld [smem:[%s34]]
  %s36 = scalar_lea.smem %s0, 18
  %s37 = sld [smem:[%s36]]
  %s38 = scalar_lea.smem %s0, 19
  %s39 = sld [smem:[%s38]]
  %s40 = scalar_lea.smem %s0, 20
  %s41 = sld [smem:[%s40]]
  %s42 = scalar_lea.smem %s0, 21
  %s43 = sld [smem:[%s42]]
  %s44 = scalar_lea.smem %s0, 22
  %s45 = sld [smem:[%s44]]
  %s46 = scalar_lea.smem %s0, 23
  %s47 = sld [smem:[%s46]]
  %s48 = scalar_lea.smem %s0, 24
  %s49 = sld [smem:[%s48]]
  %s50 = scalar_lea.smem %s0, 25
  %s51 = sld [smem:[%s50]]
  %s52 = scalar_lea.smem %s0, 26
  %s53 = sld [smem:[%s52]]
  %s54 = scalar_lea.smem %s0, 27
  %s55 = sld [smem:[%s54]]
  %s56 = scalar_lea.smem %s0, 28
  %s57 = sld [smem:[%s56]]
  %s58 = scalar_lea.smem %s0, 29
  %s59 = sld [smem:[%s58]]
  %s60 = scalar_lea.smem %s0, 30
  %s61 = sld [smem:[%s60]]
  %s62 = scalar_lea.smem %s0, 31
  %s63 = sld [smem:[%s62]]
  %s64 = scalar_lea.smem %s0, 32
  %s65 = sld [smem:[%s64]]
  %s66 = scalar_lea.smem %s0, 33
  %s67 = sld [smem:[%s66]]
  %s68 = sld [smem:[#allocation0]]
  $region173: #{forward.3} parent=0
    _
  %s70 = ssub.s32 1, %s68
  %s71 = scalar_select 0, %s70, %s68
  %v72 = vstv %s65
  %73 = vst [vmem:[#allocation3] sm:$0x1] %v72
  loop: start=0, step=1, limit=6
  $region2: #{forward.3} parent=0 // loop_pre_header
    _
  $region3: #{forward.3} parent=0 // loop_header
    %s75 = sphi 0, %s79
    %p76 = scmp.ge.s32.totalorder %s75, 6
    %s82 = sphi 0, %s94
    %s83 = sphi 0, %s90
    %s84 = sphi 0, %s82
    %s85 = sphi 0, %s83
    %s86 = sphi 0, %s84
    %s87 = sphi 0, %s85
    %s97 = sphi 0, %s99
    %s100 = sphi 0, %s97
    %s101 = sphi 0, %s100
    %s117 = sphi 0, %s101
    %s123 = sphi 0, %s125
    %s126 = sphi 0, %s123
    %s127 = sphi 0, %s126
    %s143 = sphi 0, %s127
    %s149 = sphi 0, %s151
    %s152 = sphi 0, %s149
    %s153 = sphi 0, %s152
    %s169 = sphi 0, %s153
    %s175 = sphi 0, %s177
    %s178 = sphi 0, %s175
    %s179 = sphi 0, %s178
    %s195 = sphi 0, %s179
    %s201 = sphi 0, %s203
    %s204 = sphi 0, %s201
    %s205 = sphi 0, %s204
    %s221 = sphi 0, %s205
    %s227 = sphi 0, %s229
    %s230 = sphi 0, %s227
    %s231 = sphi 0, %s230
    %s247 = sphi 0, %s231
    %s253 = sphi 0, %s255
    %s256 = sphi 0, %s253
    %s257 = sphi 0, %s256
    %s273 = sphi 0, %s257
    %s279 = sphi 0, %s281
    %s282 = sphi 0, %s279
    %s283 = sphi 0, %s282
    %s299 = sphi 0, %s283
    %s305 = sphi 0, %s307
    %s308 = sphi 0, %s305
    %s309 = sphi 0, %s308
    %s325 = sphi 0, %s309
    %s331 = sphi 0, %s333
    %s334 = sphi 0, %s331
    %s335 = sphi 0, %s334
    %s351 = sphi 0, %s335
    %s357 = sphi 0, %s359
    %s360 = sphi 0, %s357
    %s361 = sphi 0, %s360
    %s377 = sphi 0, %s361
    %s383 = sphi 0, %s385
    %s386 = sphi 0, %s383
    %s387 = sphi 0, %s386
    %s403 = sphi 0, %s387
    %s409 = sphi 0, %s411
    %s412 = sphi 0, %s409
    %s413 = sphi 0, %s412
    %s429 = sphi 0, %s413
    %s435 = sphi 0, %s437
    %s438 = sphi 0, %s435
    %s439 = sphi 0, %s438
    %s455 = sphi 0, %s439
    %s461 = sphi 0, %s463
    %s464 = sphi 0, %s461
    %s465 = sphi 0, %s464
    %s481 = sphi 0, %s465
    %s487 = sphi 0, %s489
    %s490 = sphi 0, %s487
    %s491 = sphi 0, %s490
    %s507 = sphi 0, %s491
    %s513 = sphi 0, %s515
    %s516 = sphi 0, %s513
    %s517 = sphi 0, %s516
    %s533 = sphi 0, %s517
    %s539 = sphi 0, %s541
    %s542 = sphi 0, %s539
    %s543 = sphi 0, %s542
    %s559 = sphi 0, %s543
    %s565 = sphi 0, %s567
    %s568 = sphi 0, %s565
    %s569 = sphi 0, %s568
    %s585 = sphi 0, %s569
    %s591 = sphi 0, %s593
    %s594 = sphi 0, %s591
    %s595 = sphi 0, %s594
    %s611 = sphi 0, %s595
    %s617 = sphi 0, %s619
    %s620 = sphi 0, %s617
    %s621 = sphi 0, %s620
    %s637 = sphi 0, %s621
    %s643 = sphi 0, %s645
    %s646 = sphi 0, %s643
    %s647 = sphi 0, %s646
    %s663 = sphi 0, %s647
    %s669 = sphi 0, %s671
    %s672 = sphi 0, %s669
    %s673 = sphi 0, %s672
    %s689 = sphi 0, %s673
    %s695 = sphi 0, %s697
    %s698 = sphi 0, %s695
    %s699 = sphi 0, %s698
    %s715 = sphi 0, %s699
    %s721 = sphi 0, %s723
    %s724 = sphi 0, %s721
    %s725 = sphi 0, %s724
    %s741 = sphi 0, %s725
    %s745 = sphi 0, %s745
    %s747 = sphi 0, %s745
    %s748 = sphi 0, %s747
    %s762 = sphi 0, %s748
    %s766 = sphi 0, %s766
    %s768 = sphi 0, %s766
    %s769 = sphi 0, %s768
    %s783 = sphi 0, %s769
    %s787 = sphi 0, %s787
    %s789 = sphi 0, %s787
    %s790 = sphi 0, %s789
    %s804 = sphi 0, %s790
    %s808 = sphi 0, %s808
    %s810 = sphi 0, %s808
    %s811 = sphi 0, %s810
    %s825 = sphi 0, %s811
    %s829 = sphi 0, %s829
    %s831 = sphi 0, %s829
    %s832 = sphi 0, %s831
    %s846 = sphi 0, %s832
    %s850 = sphi 0, %s850
    %s852 = sphi 0, %s850
    %s853 = sphi 0, %s852
    %s867 = sphi 0, %s853
    %s871 = sphi 0, %s871
    %s873 = sphi 0, %s871
    %s874 = sphi 0, %s873
    %s888 = sphi 0, %s874
    %s892 = sphi 0, %s892
    %s894 = sphi 0, %s892
    %s895 = sphi 0, %s894
    %s909 = sphi 0, %s895
    %s915 = sphi 0, %s917
    %s918 = sphi 0, %s915
    %s919 = sphi 0, %s918
    %s935 = sphi 0, %s919
  $region4: #{forward.3} parent=0 // loop_header_branch
    %78 = sbr.rel (%p76) target = $region8
  $region5: #{forward.3} parent=0 // loop_body
    %s80 = ssub.s32 %s75, 1
    %s81 = ssub.s32 %s75, 2
    %s88 = sadd.s32 1, %s83
    %p89 = scmp.ge.s32.totalorder %s88, 2
    %s90 = scalar_select %p89, 0, %s88
    %s91 = sadd.s32 1, %s82
    %s92 = scalar_select %p89, %s91, %s82
    %p93 = scmp.ge.s32.totalorder %s92, 2
    %s94 = scalar_select %p93, 0, %s92
    %s95 = ssub.s32 %s82, %s94
    %p96 = scmp.eq.s32.totalorder %s95, 0
    %s98 = sadd.s32 %s97, 1
    %s99 = scalar_select %p96, %s97, %s98
    %p102 = pneg %p96
    %p103 = scmp.eq.s32.totalorder %s75, 3
    %p104 = por %p102, %p103
    %p105 = scmp.ne.s32.totalorder %s97, %s100
    %p106 = scmp.eq.s32.totalorder %s75, 0
    %p107 = por %p105, %p106
    %p108 = scmp.ne.s32.totalorder %s97, %s100
    %p109 = scmp.eq.s32.totalorder %s80, 3
    %p110 = por %p108, %p109
    %p111 = scmp.ne.s32.totalorder %s100, %s101
    %p112 = scmp.eq.s32.totalorder %s80, 0
    %p113 = por %p111, %p112
    %p114 = scmp.ne.s32.totalorder %s100, %s101
    %p115 = scmp.eq.s32.totalorder %s81, 3
    %p116 = por %p114, %p115
    %p118 = scmp.ne.s32.totalorder %s101, %s117
    %p119 = scmp.eq.s32.totalorder %s81, 0
    %p120 = por %p118, %p119
    %s121 = ssub.s32 %s82, %s94
    %p122 = scmp.eq.s32.totalorder %s121, 0
    %s124 = sadd.s32 %s123, 1
    %s125 = scalar_select %p122, %s123, %s124
    %p128 = pneg %p122
    %p129 = scmp.eq.s32.totalorder %s75, 3
    %p130 = por %p128, %p129
    %p131 = scmp.ne.s32.totalorder %s123, %s126
    %p132 = scmp.eq.s32.totalorder %s75, 0
    %p133 = por %p131, %p132
    %p134 = scmp.ne.s32.totalorder %s123, %s126
    %p135 = scmp.eq.s32.totalorder %s80, 3
    %p136 = por %p134, %p135
    %p137 = scmp.ne.s32.totalorder %s126, %s127
    %p138 = scmp.eq.s32.totalorder %s80, 0
    %p139 = por %p137, %p138
    %p140 = scmp.ne.s32.totalorder %s126, %s127
    %p141 = scmp.eq.s32.totalorder %s81, 3
    %p142 = por %p140, %p141
    %p144 = scmp.ne.s32.totalorder %s127, %s143
    %p145 = scmp.eq.s32.totalorder %s81, 0
    %p146 = por %p144, %p145
    %s147 = ssub.s32 %s82, %s94
    %p148 = scmp.eq.s32.totalorder %s147, 0
    %s150 = sadd.s32 %s149, 1
    %s151 = scalar_select %p148, %s149, %s150
    %p154 = pneg %p148
    %p155 = scmp.eq.s32.totalorder %s75, 3
    %p156 = por %p154, %p155
    %p157 = scmp.ne.s32.totalorder %s149, %s152
    %p158 = scmp.eq.s32.totalorder %s75, 0
    %p159 = por %p157, %p158
    %p160 = scmp.ne.s32.totalorder %s149, %s152
    %p161 = scmp.eq.s32.totalorder %s80, 3
    %p162 = por %p160, %p161
    %p163 = scmp.ne.s32.totalorder %s152, %s153
    %p164 = scmp.eq.s32.totalorder %s80, 0
    %p165 = por %p163, %p164
    %p166 = scmp.ne.s32.totalorder %s152, %s153
    %p167 = scmp.eq.s32.totalorder %s81, 3
    %p168 = por %p166, %p167
    %p170 = scmp.ne.s32.totalorder %s153, %s169
    %p171 = scmp.eq.s32.totalorder %s81, 0
    %p172 = por %p170, %p171
    %s173 = ssub.s32 %s82, %s94
    %p174 = scmp.eq.s32.totalorder %s173, 0
    %s176 = sadd.s32 %s175, 1
    %s177 = scalar_select %p174, %s175, %s176
    %p180 = pneg %p174
    %p181 = scmp.eq.s32.totalorder %s75, 3
    %p182 = por %p180, %p181
    %p183 = scmp.ne.s32.totalorder %s175, %s178
    %p184 = scmp.eq.s32.totalorder %s75, 0
    %p185 = por %p183, %p184
    %p186 = scmp.ne.s32.totalorder %s175, %s178
    %p187 = scmp.eq.s32.totalorder %s80, 3
    %p188 = por %p186, %p187
    %p189 = scmp.ne.s32.totalorder %s178, %s179
    %p190 = scmp.eq.s32.totalorder %s80, 0
    %p191 = por %p189, %p190
    %p192 = scmp.ne.s32.totalorder %s178, %s179
    %p193 = scmp.eq.s32.totalorder %s81, 3
    %p194 = por %p192, %p193
    %p196 = scmp.ne.s32.totalorder %s179, %s195
    %p197 = scmp.eq.s32.totalorder %s81, 0
    %p198 = por %p196, %p197
    %s199 = ssub.s32 %s82, %s94
    %p200 = scmp.eq.s32.totalorder %s199, 0
    %s202 = sadd.s32 %s201, 1
    %s203 = scalar_select %p200, %s201, %s202
    %p206 = pneg %p200
    %p207 = scmp.eq.s32.totalorder %s75, 3
    %p208 = por %p206, %p207
    %p209 = scmp.ne.s32.totalorder %s201, %s204
    %p210 = scmp.eq.s32.totalorder %s75, 0
    %p211 = por %p209, %p210
    %p212 = scmp.ne.s32.totalorder %s201, %s204
    %p213 = scmp.eq.s32.totalorder %s80, 3
    %p214 = por %p212, %p213
    %p215 = scmp.ne.s32.totalorder %s204, %s205
    %p216 = scmp.eq.s32.totalorder %s80, 0
    %p217 = por %p215, %p216
    %p218 = scmp.ne.s32.totalorder %s204, %s205
    %p219 = scmp.eq.s32.totalorder %s81, 3
    %p220 = por %p218, %p219
    %p222 = scmp.ne.s32.totalorder %s205, %s221
    %p223 = scmp.eq.s32.totalorder %s81, 0
    %p224 = por %p222, %p223
    %s225 = ssub.s32 %s83, %s90
    %p226 = scmp.eq.s32.totalorder %s225, 0
    %s228 = sadd.s32 %s227, 1
    %s229 = scalar_select %p226, %s227, %s228
    %p232 = pneg %p226
    %p233 = scmp.eq.s32.totalorder %s75, 3
    %p234 = por %p232, %p233
    %p235 = scmp.ne.s32.totalorder %s227, %s230
    %p236 = scmp.eq.s32.totalorder %s75, 0
    %p237 = por %p235, %p236
    %p238 = scmp.ne.s32.totalorder %s227, %s230
    %p239 = scmp.eq.s32.totalorder %s80, 3
    %p240 = por %p238, %p239
    %p241 = scmp.ne.s32.totalorder %s230, %s231
    %p242 = scmp.eq.s32.totalorder %s80, 0
    %p243 = por %p241, %p242
    %p244 = scmp.ne.s32.totalorder %s230, %s231
    %p245 = scmp.eq.s32.totalorder %s81, 3
    %p246 = por %p244, %p245
    %p248 = scmp.ne.s32.totalorder %s231, %s247
    %p249 = scmp.eq.s32.totalorder %s81, 0
    %p250 = por %p248, %p249
    %s251 = ssub.s32 %s83, %s90
    %p252 = scmp.eq.s32.totalorder %s251, 0
    %s254 = sadd.s32 %s253, 1
    %s255 = scalar_select %p252, %s253, %s254
    %p258 = pneg %p252
    %p259 = scmp.eq.s32.totalorder %s75, 3
    %p260 = por %p258, %p259
    %p261 = scmp.ne.s32.totalorder %s253, %s256
    %p262 = scmp.eq.s32.totalorder %s75, 0
    %p263 = por %p261, %p262
    %p264 = scmp.ne.s32.totalorder %s253, %s256
    %p265 = scmp.eq.s32.totalorder %s80, 3
    %p266 = por %p264, %p265
    %p267 = scmp.ne.s32.totalorder %s256, %s257
    %p268 = scmp.eq.s32.totalorder %s80, 0
    %p269 = por %p267, %p268
    %p270 = scmp.ne.s32.totalorder %s256, %s257
    %p271 = scmp.eq.s32.totalorder %s81, 3
    %p272 = por %p270, %p271
    %p274 = scmp.ne.s32.totalorder %s257, %s273
    %p275 = scmp.eq.s32.totalorder %s81, 0
    %p276 = por %p274, %p275
    %s277 = ssub.s32 %s83, %s90
    %p278 = scmp.eq.s32.totalorder %s277, 0
    %s280 = sadd.s32 %s279, 1
    %s281 = scalar_select %p278, %s279, %s280
    %p284 = pneg %p278
    %p285 = scmp.eq.s32.totalorder %s75, 3
    %p286 = por %p284, %p285
    %p287 = scmp.ne.s32.totalorder %s279, %s282
    %p288 = scmp.eq.s32.totalorder %s75, 0
    %p289 = por %p287, %p288
    %p290 = scmp.ne.s32.totalorder %s279, %s282
    %p291 = scmp.eq.s32.totalorder %s80, 3
    %p292 = por %p290, %p291
    %p293 = scmp.ne.s32.totalorder %s282, %s283
    %p294 = scmp.eq.s32.totalorder %s80, 0
    %p295 = por %p293, %p294
    %p296 = scmp.ne.s32.totalorder %s282, %s283
    %p297 = scmp.eq.s32.totalorder %s81, 3
    %p298 = por %p296, %p297
    %p300 = scmp.ne.s32.totalorder %s283, %s299
    %p301 = scmp.eq.s32.totalorder %s81, 0
    %p302 = por %p300, %p301
    %s303 = ssub.s32 %s83, %s90
    %p304 = scmp.eq.s32.totalorder %s303, 0
    %s306 = sadd.s32 %s305, 1
    %s307 = scalar_select %p304, %s305, %s306
    %p310 = pneg %p304
    %p311 = scmp.eq.s32.totalorder %s75, 3
    %p312 = por %p310, %p311
    %p313 = scmp.ne.s32.totalorder %s305, %s308
    %p314 = scmp.eq.s32.totalorder %s75, 0
    %p315 = por %p313, %p314
    %p316 = scmp.ne.s32.totalorder %s305, %s308
    %p317 = scmp.eq.s32.totalorder %s80, 3
    %p318 = por %p316, %p317
    %p319 = scmp.ne.s32.totalorder %s308, %s309
    %p320 = scmp.eq.s32.totalorder %s80, 0
    %p321 = por %p319, %p320
    %p322 = scmp.ne.s32.totalorder %s308, %s309
    %p323 = scmp.eq.s32.totalorder %s81, 3
    %p324 = por %p322, %p323
    %p326 = scmp.ne.s32.totalorder %s309, %s325
    %p327 = scmp.eq.s32.totalorder %s81, 0
    %p328 = por %p326, %p327
    %s329 = ssub.s32 %s83, %s90
    %p330 = scmp.eq.s32.totalorder %s329, 0
    %s332 = sadd.s32 %s331, 1
    %s333 = scalar_select %p330, %s331, %s332
    %p336 = pneg %p330
    %p337 = scmp.eq.s32.totalorder %s75, 3
    %p338 = por %p336, %p337
    %p339 = scmp.ne.s32.totalorder %s331, %s334
    %p340 = scmp.eq.s32.totalorder %s75, 0
    %p341 = por %p339, %p340
    %p342 = scmp.ne.s32.totalorder %s331, %s334
    %p343 = scmp.eq.s32.totalorder %s80, 3
    %p344 = por %p342, %p343
    %p345 = scmp.ne.s32.totalorder %s334, %s335
    %p346 = scmp.eq.s32.totalorder %s80, 0
    %p347 = por %p345, %p346
    %p348 = scmp.ne.s32.totalorder %s334, %s335
    %p349 = scmp.eq.s32.totalorder %s81, 3
    %p350 = por %p348, %p349
    %p352 = scmp.ne.s32.totalorder %s335, %s351
    %p353 = scmp.eq.s32.totalorder %s81, 0
    %p354 = por %p352, %p353
    %s355 = ssub.s32 %s83, %s90
    %p356 = scmp.eq.s32.totalorder %s355, 0
    %s358 = sadd.s32 %s357, 1
    %s359 = scalar_select %p356, %s357, %s358
    %p362 = pneg %p356
    %p363 = scmp.eq.s32.totalorder %s75, 3
    %p364 = por %p362, %p363
    %p365 = scmp.ne.s32.totalorder %s357, %s360
    %p366 = scmp.eq.s32.totalorder %s75, 0
    %p367 = por %p365, %p366
    %p368 = scmp.ne.s32.totalorder %s357, %s360
    %p369 = scmp.eq.s32.totalorder %s80, 3
    %p370 = por %p368, %p369
    %p371 = scmp.ne.s32.totalorder %s360, %s361
    %p372 = scmp.eq.s32.totalorder %s80, 0
    %p373 = por %p371, %p372
    %p374 = scmp.ne.s32.totalorder %s360, %s361
    %p375 = scmp.eq.s32.totalorder %s81, 3
    %p376 = por %p374, %p375
    %p378 = scmp.ne.s32.totalorder %s361, %s377
    %p379 = scmp.eq.s32.totalorder %s81, 0
    %p380 = por %p378, %p379
    %s381 = ssub.s32 %s83, %s90
    %p382 = scmp.eq.s32.totalorder %s381, 0
    %s384 = sadd.s32 %s383, 1
    %s385 = scalar_select %p382, %s383, %s384
    %p388 = pneg %p382
    %p389 = scmp.eq.s32.totalorder %s75, 3
    %p390 = por %p388, %p389
    %p391 = scmp.ne.s32.totalorder %s383, %s386
    %p392 = scmp.eq.s32.totalorder %s75, 0
    %p393 = por %p391, %p392
    %p394 = scmp.ne.s32.totalorder %s383, %s386
    %p395 = scmp.eq.s32.totalorder %s80, 3
    %p396 = por %p394, %p395
    %p397 = scmp.ne.s32.totalorder %s386, %s387
    %p398 = scmp.eq.s32.totalorder %s80, 0
    %p399 = por %p397, %p398
    %p400 = scmp.ne.s32.totalorder %s386, %s387
    %p401 = scmp.eq.s32.totalorder %s81, 3
    %p402 = por %p400, %p401
    %p404 = scmp.ne.s32.totalorder %s387, %s403
    %p405 = scmp.eq.s32.totalorder %s81, 0
    %p406 = por %p404, %p405
    %s407 = ssub.s32 %s83, %s90
    %p408 = scmp.eq.s32.totalorder %s407, 0
    %s410 = sadd.s32 %s409, 1
    %s411 = scalar_select %p408, %s409, %s410
    %p414 = pneg %p408
    %p415 = scmp.eq.s32.totalorder %s75, 3
    %p416 = por %p414, %p415
    %p417 = scmp.ne.s32.totalorder %s409, %s412
    %p418 = scmp.eq.s32.totalorder %s75, 0
    %p419 = por %p417, %p418
    %p420 = scmp.ne.s32.totalorder %s409, %s412
    %p421 = scmp.eq.s32.totalorder %s80, 3
    %p422 = por %p420, %p421
    %p423 = scmp.ne.s32.totalorder %s412, %s413
    %p424 = scmp.eq.s32.totalorder %s80, 0
    %p425 = por %p423, %p424
    %p426 = scmp.ne.s32.totalorder %s412, %s413
    %p427 = scmp.eq.s32.totalorder %s81, 3
    %p428 = por %p426, %p427
    %p430 = scmp.ne.s32.totalorder %s413, %s429
    %p431 = scmp.eq.s32.totalorder %s81, 0
    %p432 = por %p430, %p431
    %s433 = ssub.s32 %s83, %s90
    %p434 = scmp.eq.s32.totalorder %s433, 0
    %s436 = sadd.s32 %s435, 1
    %s437 = scalar_select %p434, %s435, %s436
    %p440 = pneg %p434
    %p441 = scmp.eq.s32.totalorder %s75, 3
    %p442 = por %p440, %p441
    %p443 = scmp.ne.s32.totalorder %s435, %s438
    %p444 = scmp.eq.s32.totalorder %s75, 0
    %p445 = por %p443, %p444
    %p446 = scmp.ne.s32.totalorder %s435, %s438
    %p447 = scmp.eq.s32.totalorder %s80, 3
    %p448 = por %p446, %p447
    %p449 = scmp.ne.s32.totalorder %s438, %s439
    %p450 = scmp.eq.s32.totalorder %s80, 0
    %p451 = por %p449, %p450
    %p452 = scmp.ne.s32.totalorder %s438, %s439
    %p453 = scmp.eq.s32.totalorder %s81, 3
    %p454 = por %p452, %p453
    %p456 = scmp.ne.s32.totalorder %s439, %s455
    %p457 = scmp.eq.s32.totalorder %s81, 0
    %p458 = por %p456, %p457
    %s459 = ssub.s32 %s83, %s90
    %p460 = scmp.eq.s32.totalorder %s459, 0
    %s462 = sadd.s32 %s461, 1
    %s463 = scalar_select %p460, %s461, %s462
    %p466 = pneg %p460
    %p467 = scmp.eq.s32.totalorder %s75, 3
    %p468 = por %p466, %p467
    %p469 = scmp.ne.s32.totalorder %s461, %s464
    %p470 = scmp.eq.s32.totalorder %s75, 0
    %p471 = por %p469, %p470
    %p472 = scmp.ne.s32.totalorder %s461, %s464
    %p473 = scmp.eq.s32.totalorder %s80, 3
    %p474 = por %p472, %p473
    %p475 = scmp.ne.s32.totalorder %s464, %s465
    %p476 = scmp.eq.s32.totalorder %s80, 0
    %p477 = por %p475, %p476
    %p478 = scmp.ne.s32.totalorder %s464, %s465
    %p479 = scmp.eq.s32.totalorder %s81, 3
    %p480 = por %p478, %p479
    %p482 = scmp.ne.s32.totalorder %s465, %s481
    %p483 = scmp.eq.s32.totalorder %s81, 0
    %p484 = por %p482, %p483
    %s485 = ssub.s32 %s83, %s90
    %p486 = scmp.eq.s32.totalorder %s485, 0
    %s488 = sadd.s32 %s487, 1
    %s489 = scalar_select %p486, %s487, %s488
    %p492 = pneg %p486
    %p493 = scmp.eq.s32.totalorder %s75, 3
    %p494 = por %p492, %p493
    %p495 = scmp.ne.s32.totalorder %s487, %s490
    %p496 = scmp.eq.s32.totalorder %s75, 0
    %p497 = por %p495, %p496
    %p498 = scmp.ne.s32.totalorder %s487, %s490
    %p499 = scmp.eq.s32.totalorder %s80, 3
    %p500 = por %p498, %p499
    %p501 = scmp.ne.s32.totalorder %s490, %s491
    %p502 = scmp.eq.s32.totalorder %s80, 0
    %p503 = por %p501, %p502
    %p504 = scmp.ne.s32.totalorder %s490, %s491
    %p505 = scmp.eq.s32.totalorder %s81, 3
    %p506 = por %p504, %p505
    %p508 = scmp.ne.s32.totalorder %s491, %s507
    %p509 = scmp.eq.s32.totalorder %s81, 0
    %p510 = por %p508, %p509
    %s511 = ssub.s32 %s83, %s90
    %p512 = scmp.eq.s32.totalorder %s511, 0
    %s514 = sadd.s32 %s513, 1
    %s515 = scalar_select %p512, %s513, %s514
    %p518 = pneg %p512
    %p519 = scmp.eq.s32.totalorder %s75, 3
    %p520 = por %p518, %p519
    %p521 = scmp.ne.s32.totalorder %s513, %s516
    %p522 = scmp.eq.s32.totalorder %s75, 0
    %p523 = por %p521, %p522
    %p524 = scmp.ne.s32.totalorder %s513, %s516
    %p525 = scmp.eq.s32.totalorder %s80, 3
    %p526 = por %p524, %p525
    %p527 = scmp.ne.s32.totalorder %s516, %s517
    %p528 = scmp.eq.s32.totalorder %s80, 0
    %p529 = por %p527, %p528
    %p530 = scmp.ne.s32.totalorder %s516, %s517
    %p531 = scmp.eq.s32.totalorder %s81, 3
    %p532 = por %p530, %p531
    %p534 = scmp.ne.s32.totalorder %s517, %s533
    %p535 = scmp.eq.s32.totalorder %s81, 0
    %p536 = por %p534, %p535
    %s537 = ssub.s32 %s83, %s90
    %p538 = scmp.eq.s32.totalorder %s537, 0
    %s540 = sadd.s32 %s539, 1
    %s541 = scalar_select %p538, %s539, %s540
    %p544 = pneg %p538
    %p545 = scmp.eq.s32.totalorder %s75, 3
    %p546 = por %p544, %p545
    %p547 = scmp.ne.s32.totalorder %s539, %s542
    %p548 = scmp.eq.s32.totalorder %s75, 0
    %p549 = por %p547, %p548
    %p550 = scmp.ne.s32.totalorder %s539, %s542
    %p551 = scmp.eq.s32.totalorder %s80, 3
    %p552 = por %p550, %p551
    %p553 = scmp.ne.s32.totalorder %s542, %s543
    %p554 = scmp.eq.s32.totalorder %s80, 0
    %p555 = por %p553, %p554
    %p556 = scmp.ne.s32.totalorder %s542, %s543
    %p557 = scmp.eq.s32.totalorder %s81, 3
    %p558 = por %p556, %p557
    %p560 = scmp.ne.s32.totalorder %s543, %s559
    %p561 = scmp.eq.s32.totalorder %s81, 0
    %p562 = por %p560, %p561
    %s563 = ssub.s32 %s83, %s90
    %p564 = scmp.eq.s32.totalorder %s563, 0
    %s566 = sadd.s32 %s565, 1
    %s567 = scalar_select %p564, %s565, %s566
    %p570 = pneg %p564
    %p571 = scmp.eq.s32.totalorder %s75, 3
    %p572 = por %p570, %p571
    %p573 = scmp.ne.s32.totalorder %s565, %s568
    %p574 = scmp.eq.s32.totalorder %s75, 0
    %p575 = por %p573, %p574
    %p576 = scmp.ne.s32.totalorder %s565, %s568
    %p577 = scmp.eq.s32.totalorder %s80, 3
    %p578 = por %p576, %p577
    %p579 = scmp.ne.s32.totalorder %s568, %s569
    %p580 = scmp.eq.s32.totalorder %s80, 0
    %p581 = por %p579, %p580
    %p582 = scmp.ne.s32.totalorder %s568, %s569
    %p583 = scmp.eq.s32.totalorder %s81, 3
    %p584 = por %p582, %p583
    %p586 = scmp.ne.s32.totalorder %s569, %s585
    %p587 = scmp.eq.s32.totalorder %s81, 0
    %p588 = por %p586, %p587
    %s589 = ssub.s32 %s83, %s90
    %p590 = scmp.eq.s32.totalorder %s589, 0
    %s592 = sadd.s32 %s591, 1
    %s593 = scalar_select %p590, %s591, %s592
    %p596 = pneg %p590
    %p597 = scmp.eq.s32.totalorder %s75, 3
    %p598 = por %p596, %p597
    %p599 = scmp.ne.s32.totalorder %s591, %s594
    %p600 = scmp.eq.s32.totalorder %s75, 0
    %p601 = por %p599, %p600
    %p602 = scmp.ne.s32.totalorder %s591, %s594
    %p603 = scmp.eq.s32.totalorder %s80, 3
    %p604 = por %p602, %p603
    %p605 = scmp.ne.s32.totalorder %s594, %s595
    %p606 = scmp.eq.s32.totalorder %s80, 0
    %p607 = por %p605, %p606
    %p608 = scmp.ne.s32.totalorder %s594, %s595
    %p609 = scmp.eq.s32.totalorder %s81, 3
    %p610 = por %p608, %p609
    %p612 = scmp.ne.s32.totalorder %s595, %s611
    %p613 = scmp.eq.s32.totalorder %s81, 0
    %p614 = por %p612, %p613
    %s615 = ssub.s32 %s83, %s90
    %p616 = scmp.eq.s32.totalorder %s615, 0
    %s618 = sadd.s32 %s617, 1
    %s619 = scalar_select %p616, %s617, %s618
    %p622 = pneg %p616
    %p623 = scmp.eq.s32.totalorder %s75, 3
    %p624 = por %p622, %p623
    %p625 = scmp.ne.s32.totalorder %s617, %s620
    %p626 = scmp.eq.s32.totalorder %s75, 0
    %p627 = por %p625, %p626
    %p628 = scmp.ne.s32.totalorder %s617, %s620
    %p629 = scmp.eq.s32.totalorder %s80, 3
    %p630 = por %p628, %p629
    %p631 = scmp.ne.s32.totalorder %s620, %s621
    %p632 = scmp.eq.s32.totalorder %s80, 0
    %p633 = por %p631, %p632
    %p634 = scmp.ne.s32.totalorder %s620, %s621
    %p635 = scmp.eq.s32.totalorder %s81, 3
    %p636 = por %p634, %p635
    %p638 = scmp.ne.s32.totalorder %s621, %s637
    %p639 = scmp.eq.s32.totalorder %s81, 0
    %p640 = por %p638, %p639
    %s641 = ssub.s32 %s83, %s90
    %p642 = scmp.eq.s32.totalorder %s641, 0
    %s644 = sadd.s32 %s643, 1
    %s645 = scalar_select %p642, %s643, %s644
    %p648 = pneg %p642
    %p649 = scmp.eq.s32.totalorder %s75, 3
    %p650 = por %p648, %p649
    %p651 = scmp.ne.s32.totalorder %s643, %s646
    %p652 = scmp.eq.s32.totalorder %s75, 0
    %p653 = por %p651, %p652
    %p654 = scmp.ne.s32.totalorder %s643, %s646
    %p655 = scmp.eq.s32.totalorder %s80, 3
    %p656 = por %p654, %p655
    %p657 = scmp.ne.s32.totalorder %s646, %s647
    %p658 = scmp.eq.s32.totalorder %s80, 0
    %p659 = por %p657, %p658
    %p660 = scmp.ne.s32.totalorder %s646, %s647
    %p661 = scmp.eq.s32.totalorder %s81, 3
    %p662 = por %p660, %p661
    %p664 = scmp.ne.s32.totalorder %s647, %s663
    %p665 = scmp.eq.s32.totalorder %s81, 0
    %p666 = por %p664, %p665
    %s667 = ssub.s32 %s83, %s90
    %p668 = scmp.eq.s32.totalorder %s667, 0
    %s670 = sadd.s32 %s669, 1
    %s671 = scalar_select %p668, %s669, %s670
    %p674 = pneg %p668
    %p675 = scmp.eq.s32.totalorder %s75, 3
    %p676 = por %p674, %p675
    %p677 = scmp.ne.s32.totalorder %s669, %s672
    %p678 = scmp.eq.s32.totalorder %s75, 0
    %p679 = por %p677, %p678
    %p680 = scmp.ne.s32.totalorder %s669, %s672
    %p681 = scmp.eq.s32.totalorder %s80, 3
    %p682 = por %p680, %p681
    %p683 = scmp.ne.s32.totalorder %s672, %s673
    %p684 = scmp.eq.s32.totalorder %s80, 0
    %p685 = por %p683, %p684
    %p686 = scmp.ne.s32.totalorder %s672, %s673
    %p687 = scmp.eq.s32.totalorder %s81, 3
    %p688 = por %p686, %p687
    %p690 = scmp.ne.s32.totalorder %s673, %s689
    %p691 = scmp.eq.s32.totalorder %s81, 0
    %p692 = por %p690, %p691
    %s693 = ssub.s32 %s83, %s90
    %p694 = scmp.eq.s32.totalorder %s693, 0
    %s696 = sadd.s32 %s695, 1
    %s697 = scalar_select %p694, %s695, %s696
    %p700 = pneg %p694
    %p701 = scmp.eq.s32.totalorder %s75, 3
    %p702 = por %p700, %p701
    %p703 = scmp.ne.s32.totalorder %s695, %s698
    %p704 = scmp.eq.s32.totalorder %s75, 0
    %p705 = por %p703, %p704
    %p706 = scmp.ne.s32.totalorder %s695, %s698
    %p707 = scmp.eq.s32.totalorder %s80, 3
    %p708 = por %p706, %p707
    %p709 = scmp.ne.s32.totalorder %s698, %s699
    %p710 = scmp.eq.s32.totalorder %s80, 0
    %p711 = por %p709, %p710
    %p712 = scmp.ne.s32.totalorder %s698, %s699
    %p713 = scmp.eq.s32.totalorder %s81, 3
    %p714 = por %p712, %p713
    %p716 = scmp.ne.s32.totalorder %s699, %s715
    %p717 = scmp.eq.s32.totalorder %s81, 0
    %p718 = por %p716, %p717
    %s719 = ssub.s32 %s83, %s90
    %p720 = scmp.eq.s32.totalorder %s719, 0
    %s722 = sadd.s32 %s721, 1
    %s723 = scalar_select %p720, %s721, %s722
    %p726 = pneg %p720
    %p727 = scmp.eq.s32.totalorder %s75, 3
    %p728 = por %p726, %p727
    %p729 = scmp.ne.s32.totalorder %s721, %s724
    %p730 = scmp.eq.s32.totalorder %s75, 0
    %p731 = por %p729, %p730
    %p732 = scmp.ne.s32.totalorder %s721, %s724
    %p733 = scmp.eq.s32.totalorder %s80, 3
    %p734 = por %p732, %p733
    %p735 = scmp.ne.s32.totalorder %s724, %s725
    %p736 = scmp.eq.s32.totalorder %s80, 0
    %p737 = por %p735, %p736
    %p738 = scmp.ne.s32.totalorder %s724, %s725
    %p739 = scmp.eq.s32.totalorder %s81, 3
    %p740 = por %p738, %p739
    %p742 = scmp.ne.s32.totalorder %s725, %s741
    %p743 = scmp.eq.s32.totalorder %s81, 0
    %p744 = por %p742, %p743
    %s746 = sadd.s32 %s745, 1
    %p749 = scmp.eq.s32.totalorder %s75, 3
    %p750 = scmp.ne.s32.totalorder %s745, %s747
    %p751 = scmp.eq.s32.totalorder %s75, 0
    %p752 = por %p750, %p751
    %p753 = scmp.ne.s32.totalorder %s745, %s747
    %p754 = scmp.eq.s32.totalorder %s80, 3
    %p755 = por %p753, %p754
    %p756 = scmp.ne.s32.totalorder %s747, %s748
    %p757 = scmp.eq.s32.totalorder %s80, 0
    %p758 = por %p756, %p757
    %p759 = scmp.ne.s32.totalorder %s747, %s748
    %p760 = scmp.eq.s32.totalorder %s81, 3
    %p761 = por %p759, %p760
    %p763 = scmp.ne.s32.totalorder %s748, %s762
    %p764 = scmp.eq.s32.totalorder %s81, 0
    %p765 = por %p763, %p764
    %s767 = sadd.s32 %s766, 1
    %p770 = scmp.eq.s32.totalorder %s75, 3
    %p771 = scmp.ne.s32.totalorder %s766, %s768
    %p772 = scmp.eq.s32.totalorder %s75, 0
    %p773 = por %p771, %p772
    %p774 = scmp.ne.s32.totalorder %s766, %s768
    %p775 = scmp.eq.s32.totalorder %s80, 3
    %p776 = por %p774, %p775
    %p777 = scmp.ne.s32.totalorder %s768, %s769
    %p778 = scmp.eq.s32.totalorder %s80, 0
    %p779 = por %p777, %p778
    %p780 = scmp.ne.s32.totalorder %s768, %s769
    %p781 = scmp.eq.s32.totalorder %s81, 3
    %p782 = por %p780, %p781
    %p784 = scmp.ne.s32.totalorder %s769, %s783
    %p785 = scmp.eq.s32.totalorder %s81, 0
    %p786 = por %p784, %p785
    %s788 = sadd.s32 %s787, 1
    %p791 = scmp.eq.s32.totalorder %s75, 3
    %p792 = scmp.ne.s32.totalorder %s787, %s789
    %p793 = scmp.eq.s32.totalorder %s75, 0
    %p794 = por %p792, %p793
    %p795 = scmp.ne.s32.totalorder %s787, %s789
    %p796 = scmp.eq.s32.totalorder %s80, 3
    %p797 = por %p795, %p796
    %p798 = scmp.ne.s32.totalorder %s789, %s790
    %p799 = scmp.eq.s32.totalorder %s80, 0
    %p800 = por %p798, %p799
    %p801 = scmp.ne.s32.totalorder %s789, %s790
    %p802 = scmp.eq.s32.totalorder %s81, 3
    %p803 = por %p801, %p802
    %p805 = scmp.ne.s32.totalorder %s790, %s804
    %p806 = scmp.eq.s32.totalorder %s81, 0
    %p807 = por %p805, %p806
    %s809 = sadd.s32 %s808, 1
    %p812 = scmp.eq.s32.totalorder %s75, 3
    %p813 = scmp.ne.s32.totalorder %s808, %s810
    %p814 = scmp.eq.s32.totalorder %s75, 0
    %p815 = por %p813, %p814
    %p816 = scmp.ne.s32.totalorder %s808, %s810
    %p817 = scmp.eq.s32.totalorder %s80, 3
    %p818 = por %p816, %p817
    %p819 = scmp.ne.s32.totalorder %s810, %s811
    %p820 = scmp.eq.s32.totalorder %s80, 0
    %p821 = por %p819, %p820
    %p822 = scmp.ne.s32.totalorder %s810, %s811
    %p823 = scmp.eq.s32.totalorder %s81, 3
    %p824 = por %p822, %p823
    %p826 = scmp.ne.s32.totalorder %s811, %s825
    %p827 = scmp.eq.s32.totalorder %s81, 0
    %p828 = por %p826, %p827
    %s830 = sadd.s32 %s829, 1
    %p833 = scmp.eq.s32.totalorder %s75, 3
    %p834 = scmp.ne.s32.totalorder %s829, %s831
    %p835 = scmp.eq.s32.totalorder %s75, 0
    %p836 = por %p834, %p835
    %p837 = scmp.ne.s32.totalorder %s829, %s831
    %p838 = scmp.eq.s32.totalorder %s80, 3
    %p839 = por %p837, %p838
    %p840 = scmp.ne.s32.totalorder %s831, %s832
    %p841 = scmp.eq.s32.totalorder %s80, 0
    %p842 = por %p840, %p841
    %p843 = scmp.ne.s32.totalorder %s831, %s832
    %p844 = scmp.eq.s32.totalorder %s81, 3
    %p845 = por %p843, %p844
    %p847 = scmp.ne.s32.totalorder %s832, %s846
    %p848 = scmp.eq.s32.totalorder %s81, 0
    %p849 = por %p847, %p848
    %s851 = sadd.s32 %s850, 1
    %p854 = scmp.eq.s32.totalorder %s75, 3
    %p855 = scmp.ne.s32.totalorder %s850, %s852
    %p856 = scmp.eq.s32.totalorder %s75, 0
    %p857 = por %p855, %p856
    %p858 = scmp.ne.s32.totalorder %s850, %s852
    %p859 = scmp.eq.s32.totalorder %s80, 3
    %p860 = por %p858, %p859
    %p861 = scmp.ne.s32.totalorder %s852, %s853
    %p862 = scmp.eq.s32.totalorder %s80, 0
    %p863 = por %p861, %p862
    %p864 = scmp.ne.s32.totalorder %s852, %s853
    %p865 = scmp.eq.s32.totalorder %s81, 3
    %p866 = por %p864, %p865
    %p868 = scmp.ne.s32.totalorder %s853, %s867
    %p869 = scmp.eq.s32.totalorder %s81, 0
    %p870 = por %p868, %p869
    %s872 = sadd.s32 %s871, 1
    %p875 = scmp.eq.s32.totalorder %s75, 3
    %p876 = scmp.ne.s32.totalorder %s871, %s873
    %p877 = scmp.eq.s32.totalorder %s75, 0
    %p878 = por %p876, %p877
    %p879 = scmp.ne.s32.totalorder %s871, %s873
    %p880 = scmp.eq.s32.totalorder %s80, 3
    %p881 = por %p879, %p880
    %p882 = scmp.ne.s32.totalorder %s873, %s874
    %p883 = scmp.eq.s32.totalorder %s80, 0
    %p884 = por %p882, %p883
    %p885 = scmp.ne.s32.totalorder %s873, %s874
    %p886 = scmp.eq.s32.totalorder %s81, 3
    %p887 = por %p885, %p886
    %p889 = scmp.ne.s32.totalorder %s874, %s888
    %p890 = scmp.eq.s32.totalorder %s81, 0
    %p891 = por %p889, %p890
    %s893 = sadd.s32 %s892, 1
    %p896 = scmp.eq.s32.totalorder %s75, 3
    %p897 = scmp.ne.s32.totalorder %s892, %s894
    %p898 = scmp.eq.s32.totalorder %s75, 0
    %p899 = por %p897, %p898
    %p900 = scmp.ne.s32.totalorder %s892, %s894
    %p901 = scmp.eq.s32.totalorder %s80, 3
    %p902 = por %p900, %p901
    %p903 = scmp.ne.s32.totalorder %s894, %s895
    %p904 = scmp.eq.s32.totalorder %s80, 0
    %p905 = por %p903, %p904
    %p906 = scmp.ne.s32.totalorder %s894, %s895
    %p907 = scmp.eq.s32.totalorder %s81, 3
    %p908 = por %p906, %p907
    %p910 = scmp.ne.s32.totalorder %s895, %s909
    %p911 = scmp.eq.s32.totalorder %s81, 0
    %p912 = por %p910, %p911
    %s913 = ssub.s32 %s82, %s94
    %p914 = scmp.eq.s32.totalorder %s913, 0
    %s916 = sadd.s32 %s915, 1
    %s917 = scalar_select %p914, %s915, %s916
    %p920 = pneg %p914
    %p921 = scmp.eq.s32.totalorder %s75, 3
    %p922 = por %p920, %p921
    %p923 = scmp.ne.s32.totalorder %s915, %s918
    %p924 = scmp.eq.s32.totalorder %s75, 0
    %p925 = por %p923, %p924
    %p926 = scmp.ne.s32.totalorder %s915, %s918
    %p927 = scmp.eq.s32.totalorder %s80, 3
    %p928 = por %p926, %p927
    %p929 = scmp.ne.s32.totalorder %s918, %s919
    %p930 = scmp.eq.s32.totalorder %s80, 0
    %p931 = por %p929, %p930
    %p932 = scmp.ne.s32.totalorder %s918, %s919
    %p933 = scmp.eq.s32.totalorder %s81, 3
    %p934 = por %p932, %p933
    %p936 = scmp.ne.s32.totalorder %s919, %s935
    %p937 = scmp.eq.s32.totalorder %s81, 0
    %p938 = por %p936, %p937
    %p939 = scmp.le.s32.totalorder 1, %s75
    %p940 = scmp.lt.s32.totalorder %s75, 5
    %p941 = pnand %p939, %p940
    %p942 = pneg %p941
    // Predicated region
    $region9: #{forward.3} parent=5 // pred_check
      _
    $region10: #{forward.3} parent=5 // pred_check_branch
      %944 = sbr.rel (%p941) target = $region12
    $region11: #{forward.3} parent=5 // pred_region
      %s945 = ssub.s32 %s75, 1
      // Predicated region
      $region13: #{forward.3} parent=11 // pred_check
        %p946 = pneg %p758
      $region14: #{forward.3} parent=11 // pred_check_branch
        %948 = sbr.rel (%p946) target = $region16
      $region15: #{forward.3} parent=11 // pred_region
        _
      $region16: #{forward.3} parent=11 // pred_fallthru
        _
      // Predicated region
      $region17: #{forward.3} parent=11 // pred_check
        %p949 = pneg %p779
      $region18: #{forward.3} parent=11 // pred_check_branch
        %951 = sbr.rel (%p949) target = $region20
      $region19: #{forward.3} parent=11 // pred_region
        _
      $region20: #{forward.3} parent=11 // pred_fallthru
        _
      // Predicated region
      $region21: #{forward.3} parent=11 // pred_check
        %p952 = pneg %p800
      $region22: #{forward.3} parent=11 // pred_check_branch
        %954 = sbr.rel (%p952) target = $region24
      $region23: #{forward.3} parent=11 // pred_region
        _
      $region24: #{forward.3} parent=11 // pred_fallthru
        _
      // Predicated region
      $region25: #{forward.3} parent=11 // pred_check
        %p955 = pneg %p821
      $region26: #{forward.3} parent=11 // pred_check_branch
        %957 = sbr.rel (%p955) target = $region28
      $region27: #{forward.3} parent=11 // pred_region
        _
      $region28: #{forward.3} parent=11 // pred_fallthru
        _
      // Predicated region
      $region29: #{forward.3} parent=11 // pred_check
        %p958 = pneg %p842
      $region30: #{forward.3} parent=11 // pred_check_branch
        %960 = sbr.rel (%p958) target = $region32
      $region31: #{forward.3} parent=11 // pred_region
        _
      $region32: #{forward.3} parent=11 // pred_fallthru
        _
      // Predicated region
      $region33: #{forward.3} parent=11 // pred_check
        %p961 = pneg %p863
      $region34: #{forward.3} parent=11 // pred_check_branch
        %963 = sbr.rel (%p961) target = $region36
      $region35: #{forward.3} parent=11 // pred_region
        _
      $region36: #{forward.3} parent=11 // pred_fallthru
        _
      // Predicated region
      $region37: #{forward.3} parent=11 // pred_check
        %p964 = pneg %p884
      $region38: #{forward.3} parent=11 // pred_check_branch
        %966 = sbr.rel (%p964) target = $region40
      $region39: #{forward.3} parent=11 // pred_region
        _
      $region40: #{forward.3} parent=11 // pred_fallthru
        _
      // Predicated region
      $region41: #{forward.3} parent=11 // pred_check
        %p967 = pneg %p905
      $region42: #{forward.3} parent=11 // pred_check_branch
        %969 = sbr.rel (%p967) target = $region44
      $region43: #{forward.3} parent=11 // pred_region
        _
      $region44: #{forward.3} parent=11 // pred_fallthru
        _
    $region12: #{forward.3} parent=5 // pred_fallthru
      _
    %p970 = scmp.lt.s32.totalorder %s75, 4
    // Predicated region
    $region45: #{forward.3} parent=5 // pred_check
      %p971 = pneg %p970
    $region46: #{forward.3} parent=5 // pred_check_branch
      %973 = sbr.rel (%p971) target = $region48
    $region47: #{forward.3} parent=5 // pred_region
      // Predicated region
      $region49: #{forward.3} parent=47 // pred_check
        %p974 = pneg %p107
      $region50: #{forward.3} parent=47 // pred_check_branch
        %976 = sbr.rel (%p974) target = $region52
      $region51: #{forward.3} parent=47 // pred_region
        %p977 = scmp.lt.s32.totalorder %s82, 1
        %s978 = scalar_select %p977, %s82, 1
        %s979 = smul.addr %s978, 8
        %s980 = scalar_lea.vmem %s1, %s979
      $region52: #{forward.3} parent=47 // pred_fallthru
        _
      // Predicated region
      $region53: #{forward.3} parent=47 // pred_check
        %p981 = pneg %p133
      $region54: #{forward.3} parent=47 // pred_check_branch
        %983 = sbr.rel (%p981) target = $region56
      $region55: #{forward.3} parent=47 // pred_region
        %p984 = scmp.lt.s32.totalorder %s82, 1
        %s985 = scalar_select %p984, %s82, 1
        %s986 = smul.addr %s985, 8
        %s987 = scalar_lea.vmem %s3, %s986
      $region56: #{forward.3} parent=47 // pred_fallthru
        _
      // Predicated region
      $region57: #{forward.3} parent=47 // pred_check
        %p988 = pneg %p159
      $region58: #{forward.3} parent=47 // pred_check_branch
        %990 = sbr.rel (%p988) target = $region60
      $region59: #{forward.3} parent=47 // pred_region
        %p991 = scmp.lt.s32.totalorder %s82, 1
        %s992 = scalar_select %p991, %s82, 1
        %s993 = scalar_lea.vmem %s5, %s992
      $region60: #{forward.3} parent=47 // pred_fallthru
        _
      // Predicated region
      $region61: #{forward.3} parent=47 // pred_check
        %p994 = pneg %p185
      $region62: #{forward.3} parent=47 // pred_check_branch
        %996 = sbr.rel (%p994) target = $region64
      $region63: #{forward.3} parent=47 // pred_region
        %p997 = scmp.lt.s32.totalorder %s82, 1
        %s998 = scalar_select %p997, %s82, 1
        %s999 = scalar_lea.vmem %s7, %s998
      $region64: #{forward.3} parent=47 // pred_fallthru
        _
      // Predicated region
      $region65: #{forward.3} parent=47 // pred_check
        %p1000 = pneg %p211
      $region66: #{forward.3} parent=47 // pred_check_branch
        %1002 = sbr.rel (%p1000) target = $region68
      $region67: #{forward.3} parent=47 // pred_region
        %p1003 = scmp.lt.s32.totalorder %s82, 1
        %s1004 = scalar_select %p1003, %s82, 1
        %s1005 = smul.addr %s1004, 8
        %s1006 = scalar_lea.vmem %s9, %s1005
      $region68: #{forward.3} parent=47 // pred_fallthru
        _
      // Predicated region
      $region69: #{forward.3} parent=47 // pred_check
        %p1007 = pneg %p237
      $region70: #{forward.3} parent=47 // pred_check_branch
        %1009 = sbr.rel (%p1007) target = $region72
      $region71: #{forward.3} parent=47 // pred_region
        %p1010 = scmp.lt.s32.totalorder %s83, 1
        %s1011 = scalar_select %p1010, %s83, 1
        %s1012 = scalar_lea.vmem %s11, %s1011
      $region72: #{forward.3} parent=47 // pred_fallthru
        _
      // Predicated region
      $region73: #{forward.3} parent=47 // pred_check
        %p1013 = pneg %p263
      $region74: #{forward.3} parent=47 // pred_check_branch
        %1015 = sbr.rel (%p1013) target = $region76
      $region75: #{forward.3} parent=47 // pred_region
        %p1016 = scmp.lt.s32.totalorder %s83, 1
        %s1017 = scalar_select %p1016, %s83, 1
        %s1018 = scalar_lea.vmem %s13, %s1017
      $region76: #{forward.3} parent=47 // pred_fallthru
        _
      // Predicated region
      $region77: #{forward.3} parent=47 // pred_check
        %p1019 = pneg %p289
      $region78: #{forward.3} parent=47 // pred_check_branch
        %1021 = sbr.rel (%p1019) target = $region80
      $region79: #{forward.3} parent=47 // pred_region
        %p1022 = scmp.lt.s32.totalorder %s83, 1
        %s1023 = scalar_select %p1022, %s83, 1
        %s1024 = smul.addr %s1023, 4
        %s1025 = smul.addr %s1024, 8
        %s1026 = scalar_lea.vmem %s15, %s1025
      $region80: #{forward.3} parent=47 // pred_fallthru
        _
      // Predicated region
      $region81: #{forward.3} parent=47 // pred_check
        %p1027 = pneg %p315
      $region82: #{forward.3} parent=47 // pred_check_branch
        %1029 = sbr.rel (%p1027) target = $region84
      $region83: #{forward.3} parent=47 // pred_region
        %p1030 = scmp.lt.s32.totalorder %s83, 1
        %s1031 = scalar_select %p1030, %s83, 1
        %s1032 = scalar_lea.vmem %s17, %s1031
      $region84: #{forward.3} parent=47 // pred_fallthru
        _
      // Predicated region
      $region85: #{forward.3} parent=47 // pred_check
        %p1033 = pneg %p341
      $region86: #{forward.3} parent=47 // pred_check_branch
        %1035 = sbr.rel (%p1033) target = $region88
      $region87: #{forward.3} parent=47 // pred_region
        %p1036 = scmp.lt.s32.totalorder %s83, 1
        %s1037 = scalar_select %p1036, %s83, 1
        %s1038 = smul.addr %s1037, 4
        %s1039 = smul.addr %s1038, 8
        %s1040 = scalar_lea.vmem %s19, %s1039
      $region88: #{forward.3} parent=47 // pred_fallthru
        _
      // Predicated region
      $region89: #{forward.3} parent=47 // pred_check
        %p1041 = pneg %p367
      $region90: #{forward.3} parent=47 // pred_check_branch
        %1043 = sbr.rel (%p1041) target = $region92
      $region91: #{forward.3} parent=47 // pred_region
        %p1044 = scmp.lt.s32.totalorder %s83, 1
        %s1045 = scalar_select %p1044, %s83, 1
        %s1046 = scalar_lea.vmem %s21, %s1045
      $region92: #{forward.3} parent=47 // pred_fallthru
        _
      // Predicated region
      $region93: #{forward.3} parent=47 // pred_check
        %p1047 = pneg %p393
      $region94: #{forward.3} parent=47 // pred_check_branch
        %1049 = sbr.rel (%p1047) target = $region96
      $region95: #{forward.3} parent=47 // pred_region
        %p1050 = scmp.lt.s32.totalorder %s83, 1
        %s1051 = scalar_select %p1050, %s83, 1
        %s1052 = scalar_lea.vmem %s23, %s1051
      $region96: #{forward.3} parent=47 // pred_fallthru
        _
      // Predicated region
      $region97: #{forward.3} parent=47 // pred_check
        %p1053 = pneg %p419
      $region98: #{forward.3} parent=47 // pred_check_branch
        %1055 = sbr.rel (%p1053) target = $region100
      $region99: #{forward.3} parent=47 // pred_region
        %p1056 = scmp.lt.s32.totalorder %s83, 1
        %s1057 = scalar_select %p1056, %s83, 1
        %s1058 = scalar_lea.vmem %s25, %s1057
      $region100: #{forward.3} parent=47 // pred_fallthru
        _
      // Predicated region
      $region101: #{forward.3} parent=47 // pred_check
        %p1059 = pneg %p445
      $region102: #{forward.3} parent=47 // pred_check_branch
        %1061 = sbr.rel (%p1059) target = $region104
      $region103: #{forward.3} parent=47 // pred_region
        %p1062 = scmp.lt.s32.totalorder %s83, 1
        %s1063 = scalar_select %p1062, %s83, 1
        %s1064 = smul.addr %s1063, 4
        %s1065 = smul.addr %s1064, 8
        %s1066 = scalar_lea.vmem %s27, %s1065
      $region104: #{forward.3} parent=47 // pred_fallthru
        _
      // Predicated region
      $region105: #{forward.3} parent=47 // pred_check
        %p1067 = pneg %p471
      $region106: #{forward.3} parent=47 // pred_check_branch
        %1069 = sbr.rel (%p1067) target = $region108
      $region107: #{forward.3} parent=47 // pred_region
        %p1070 = scmp.lt.s32.totalorder %s83, 1
        %s1071 = scalar_select %p1070, %s83, 1
        %s1072 = scalar_lea.vmem %s29, %s1071
      $region108: #{forward.3} parent=47 // pred_fallthru
        _
      // Predicated region
      $region109: #{forward.3} parent=47 // pred_check
        %p1073 = pneg %p497
      $region110: #{forward.3} parent=47 // pred_check_branch
        %1075 = sbr.rel (%p1073) target = $region112
      $region111: #{forward.3} parent=47 // pred_region
        %p1076 = scmp.lt.s32.totalorder %s83, 1
        %s1077 = scalar_select %p1076, %s83, 1
        %s1078 = smul.addr %s1077, 4
        %s1079 = smul.addr %s1078, 8
        %s1080 = scalar_lea.vmem %s31, %s1079
      $region112: #{forward.3} parent=47 // pred_fallthru
        _
      // Predicated region
      $region113: #{forward.3} parent=47 // pred_check
        %p1081 = pneg %p523
      $region114: #{forward.3} parent=47 // pred_check_branch
        %1083 = sbr.rel (%p1081) target = $region116
      $region115: #{forward.3} parent=47 // pred_region
        %p1084 = scmp.lt.s32.totalorder %s83, 1
        %s1085 = scalar_select %p1084, %s83, 1
        %s1086 = scalar_lea.vmem %s33, %s1085
      $region116: #{forward.3} parent=47 // pred_fallthru
        _
      // Predicated region
      $region117: #{forward.3} parent=47 // pred_check
        %p1087 = pneg %p549
      $region118: #{forward.3} parent=47 // pred_check_branch
        %1089 = sbr.rel (%p1087) target = $region120
      $region119: #{forward.3} parent=47 // pred_region
        %p1090 = scmp.lt.s32.totalorder %s83, 1
        %s1091 = scalar_select %p1090, %s83, 1
        %s1092 = smul.addr %s1091, 4
        %s1093 = smul.addr %s1092, 8
        %s1094 = scalar_lea.vmem %s35, %s1093
      $region120: #{forward.3} parent=47 // pred_fallthru
        _
      // Predicated region
      $region121: #{forward.3} parent=47 // pred_check
        %p1095 = pneg %p575
      $region122: #{forward.3} parent=47 // pred_check_branch
        %1097 = sbr.rel (%p1095) target = $region124
      $region123: #{forward.3} parent=47 // pred_region
        %p1098 = scmp.lt.s32.totalorder %s83, 1
        %s1099 = scalar_select %p1098, %s83, 1
        %s1100 = scalar_lea.vmem %s37, %s1099
      $region124: #{forward.3} parent=47 // pred_fallthru
        _
      // Predicated region
      $region125: #{forward.3} parent=47 // pred_check
        %p1101 = pneg %p601
      $region126: #{forward.3} parent=47 // pred_check_branch
        %1103 = sbr.rel (%p1101) target = $region128
      $region127: #{forward.3} parent=47 // pred_region
        %p1104 = scmp.lt.s32.totalorder %s83, 1
        %s1105 = scalar_select %p1104, %s83, 1
        %s1106 = scalar_lea.vmem %s39, %s1105
      $region128: #{forward.3} parent=47 // pred_fallthru
        _
      // Predicated region
      $region129: #{forward.3} parent=47 // pred_check
        %p1107 = pneg %p627
      $region130: #{forward.3} parent=47 // pred_check_branch
        %1109 = sbr.rel (%p1107) target = $region132
      $region131: #{forward.3} parent=47 // pred_region
        %p1110 = scmp.lt.s32.totalorder %s83, 1
        %s1111 = scalar_select %p1110, %s83, 1
        %s1112 = scalar_lea.vmem %s41, %s1111
      $region132: #{forward.3} parent=47 // pred_fallthru
        _
      // Predicated region
      $region133: #{forward.3} parent=47 // pred_check
        %p1113 = pneg %p653
      $region134: #{forward.3} parent=47 // pred_check_branch
        %1115 = sbr.rel (%p1113) target = $region136
      $region135: #{forward.3} parent=47 // pred_region
        %p1116 = scmp.lt.s32.totalorder %s83, 1
        %s1117 = scalar_select %p1116, %s83, 1
        %s1118 = smul.addr %s1117, 4
        %s1119 = smul.addr %s1118, 8
        %s1120 = scalar_lea.vmem %s43, %s1119
      $region136: #{forward.3} parent=47 // pred_fallthru
        _
      // Predicated region
      $region137: #{forward.3} parent=47 // pred_check
        %p1121 = pneg %p679
      $region138: #{forward.3} parent=47 // pred_check_branch
        %1123 = sbr.rel (%p1121) target = $region140
      $region139: #{forward.3} parent=47 // pred_region
        %p1124 = scmp.lt.s32.totalorder %s83, 1
        %s1125 = scalar_select %p1124, %s83, 1
        %s1126 = scalar_lea.vmem %s45, %s1125
      $region140: #{forward.3} parent=47 // pred_fallthru
        _
      // Predicated region
      $region141: #{forward.3} parent=47 // pred_check
        %p1127 = pneg %p705
      $region142: #{forward.3} parent=47 // pred_check_branch
        %1129 = sbr.rel (%p1127) target = $region144
      $region143: #{forward.3} parent=47 // pred_region
        %p1130 = scmp.lt.s32.totalorder %s83, 1
        %s1131 = scalar_select %p1130, %s83, 1
        %s1132 = smul.addr %s1131, 8
        %s1133 = smul.addr %s1132, 8
        %s1134 = scalar_lea.vmem %s47, %s1133
      $region144: #{forward.3} parent=47 // pred_fallthru
        _
      // Predicated region
      $region145: #{forward.3} parent=47 // pred_check
        %p1135 = pneg %p731
      $region146: #{forward.3} parent=47 // pred_check_branch
        %1137 = sbr.rel (%p1135) target = $region148
      $region147: #{forward.3} parent=47 // pred_region
        %p1138 = scmp.lt.s32.totalorder %s83, 1
        %s1139 = scalar_select %p1138, %s83, 1
        %s1140 = scalar_lea.vmem %s49, %s1139
      $region148: #{forward.3} parent=47 // pred_fallthru
        _
    $region48: #{forward.3} parent=5 // pred_fallthru
      _
    %p1141 = scmp.le.s32.totalorder 1, %s75
    %p1142 = scmp.lt.s32.totalorder %s75, 5
    %p1143 = pnand %p1141, %p1142
    %p1144 = pneg %p1143
    // Predicated region
    $region149: #{forward.3} parent=5 // pred_check
      _
    $region150: #{forward.3} parent=5 // pred_check_branch
      %1146 = sbr.rel (%p1143) target = $region152
    $region151: #{forward.3} parent=5 // pred_region
      %s1147 = ssub.s32 %s75, 1
      %p1148 = scmp.lt.s32.totalorder %s84, 1
      %s1149 = scalar_select %p1148, %s84, 1
      %s1150 = smul.addr %s1149, 8
      %s1151 = scalar_lea.vmem %s1, %s1150
      %p1152 = pneg %p113
      %p1153 = pneg %p110
      %p1154 = scmp.lt.s32.totalorder %s84, 1
      %s1155 = scalar_select %p1154, %s84, 1
      %s1156 = smul.addr %s1155, 8
      %s1157 = scalar_lea.vmem %s3, %s1156
      %p1158 = pneg %p139
      %p1159 = pneg %p136
      %p1160 = scmp.lt.s32.totalorder %s84, 1
      %s1161 = scalar_select %p1160, %s84, 1
      %s1162 = scalar_lea.vmem %s5, %s1161
      %p1163 = pneg %p165
      %p1164 = pneg %p162
      %p1165 = scmp.lt.s32.totalorder %s84, 1
      %s1166 = scalar_select %p1165, %s84, 1
      %s1167 = scalar_lea.vmem %s7, %s1166
      %p1168 = pneg %p191
      %p1169 = pneg %p188
      %p1170 = scmp.lt.s32.totalorder %s84, 1
      %s1171 = scalar_select %p1170, %s84, 1
      %s1172 = smul.addr %s1171, 8
      %s1173 = scalar_lea.vmem %s9, %s1172
      %p1174 = pneg %p217
      %p1175 = pneg %p214
      %p1176 = scmp.lt.s32.totalorder %s85, 1
      %s1177 = scalar_select %p1176, %s85, 1
      %s1178 = scalar_lea.vmem %s11, %s1177
      %p1179 = pneg %p243
      %p1180 = pneg %p240
      %p1181 = scmp.lt.s32.totalorder %s85, 1
      %s1182 = scalar_select %p1181, %s85, 1
      %s1183 = scalar_lea.vmem %s13, %s1182
      %p1184 = pneg %p269
      %p1185 = pneg %p266
      %p1186 = scmp.lt.s32.totalorder %s85, 1
      %s1187 = scalar_select %p1186, %s85, 1
      %s1188 = smul.addr %s1187, 4
      %s1189 = smul.addr %s1188, 8
      %s1190 = scalar_lea.vmem %s15, %s1189
      %p1191 = pneg %p295
      %p1192 = pneg %p292
      %p1193 = scmp.lt.s32.totalorder %s85, 1
      %s1194 = scalar_select %p1193, %s85, 1
      %s1195 = scalar_lea.vmem %s17, %s1194
      %p1196 = pneg %p321
      %p1197 = pneg %p318
      %p1198 = scmp.lt.s32.totalorder %s85, 1
      %s1199 = scalar_select %p1198, %s85, 1
      %s1200 = smul.addr %s1199, 4
      %s1201 = smul.addr %s1200, 8
      %s1202 = scalar_lea.vmem %s19, %s1201
      %p1203 = pneg %p347
      %p1204 = pneg %p344
      %p1205 = scmp.lt.s32.totalorder %s85, 1
      %s1206 = scalar_select %p1205, %s85, 1
      %s1207 = scalar_lea.vmem %s21, %s1206
      %p1208 = pneg %p373
      %p1209 = pneg %p370
      %p1210 = scmp.lt.s32.totalorder %s85, 1
      %s1211 = scalar_select %p1210, %s85, 1
      %s1212 = scalar_lea.vmem %s23, %s1211
      %p1213 = pneg %p399
      %p1214 = pneg %p396
      %p1215 = scmp.lt.s32.totalorder %s85, 1
      %s1216 = scalar_select %p1215, %s85, 1
      %s1217 = scalar_lea.vmem %s25, %s1216
      %p1218 = pneg %p425
      %p1219 = pneg %p422
      %p1220 = scmp.lt.s32.totalorder %s85, 1
      %s1221 = scalar_select %p1220, %s85, 1
      %s1222 = smul.addr %s1221, 4
      %s1223 = smul.addr %s1222, 8
      %s1224 = scalar_lea.vmem %s27, %s1223
      %p1225 = pneg %p451
      %p1226 = pneg %p448
      %p1227 = scmp.lt.s32.totalorder %s85, 1
      %s1228 = scalar_select %p1227, %s85, 1
      %s1229 = scalar_lea.vmem %s29, %s1228
      %p1230 = pneg %p477
      %p1231 = pneg %p474
      %p1232 = scmp.lt.s32.totalorder %s85, 1
      %s1233 = scalar_select %p1232, %s85, 1
      %s1234 = smul.addr %s1233, 4
      %s1235 = smul.addr %s1234, 8
      %s1236 = scalar_lea.vmem %s31, %s1235
      %p1237 = pneg %p503
      %p1238 = pneg %p500
      %p1239 = scmp.lt.s32.totalorder %s85, 1
      %s1240 = scalar_select %p1239, %s85, 1
      %s1241 = scalar_lea.vmem %s33, %s1240
      %p1242 = pneg %p529
      %p1243 = pneg %p526
      %p1244 = scmp.lt.s32.totalorder %s85, 1
      %s1245 = scalar_select %p1244, %s85, 1
      %s1246 = smul.addr %s1245, 4
      %s1247 = smul.addr %s1246, 8
      %s1248 = scalar_lea.vmem %s35, %s1247
      %p1249 = pneg %p555
      %p1250 = pneg %p552
      %p1251 = scmp.lt.s32.totalorder %s85, 1
      %s1252 = scalar_select %p1251, %s85, 1
      %s1253 = scalar_lea.vmem %s37, %s1252
      %p1254 = pneg %p581
      %p1255 = pneg %p578
      %p1256 = scmp.lt.s32.totalorder %s85, 1
      %s1257 = scalar_select %p1256, %s85, 1
      %s1258 = scalar_lea.vmem %s39, %s1257
      %p1259 = pneg %p607
      %p1260 = pneg %p604
      %p1261 = scmp.lt.s32.totalorder %s85, 1
      %s1262 = scalar_select %p1261, %s85, 1
      %s1263 = scalar_lea.vmem %s41, %s1262
      %p1264 = pneg %p633
      %p1265 = pneg %p630
      %p1266 = scmp.lt.s32.totalorder %s85, 1
      %s1267 = scalar_select %p1266, %s85, 1
      %s1268 = smul.addr %s1267, 4
      %s1269 = smul.addr %s1268, 8
      %s1270 = scalar_lea.vmem %s43, %s1269
      %p1271 = pneg %p659
      %p1272 = pneg %p656
      %p1273 = scmp.lt.s32.totalorder %s85, 1
      %s1274 = scalar_select %p1273, %s85, 1
      %s1275 = scalar_lea.vmem %s45, %s1274
      %p1276 = pneg %p685
      %p1277 = pneg %p682
      %p1278 = scmp.lt.s32.totalorder %s85, 1
      %s1279 = scalar_select %p1278, %s85, 1
      %s1280 = smul.addr %s1279, 8
      %s1281 = smul.addr %s1280, 8
      %s1282 = scalar_lea.vmem %s47, %s1281
      %p1283 = pneg %p711
      %p1284 = pneg %p708
      %p1285 = scmp.lt.s32.totalorder %s85, 1
      %s1286 = scalar_select %p1285, %s85, 1
      %s1287 = scalar_lea.vmem %s49, %s1286
      %p1288 = pneg %p737
      %p1289 = pneg %p734
      %p1290 = pneg %p758
      %p1291 = pneg %p755
      %p1292 = pneg %p779
      %p1293 = pneg %p776
      %p1294 = pneg %p800
      %p1295 = pneg %p797
      %p1296 = pneg %p821
      %p1297 = pneg %p818
      %p1298 = pneg %p842
      %p1299 = pneg %p839
      %p1300 = pneg %p863
      %p1301 = pneg %p860
      %p1302 = pneg %p884
      %p1303 = pneg %p881
      %p1304 = pneg %p905
      %p1305 = pneg %p902
      %p1306 = pneg %p931
      %p1307 = pneg %p928
      %p1308 = scmp.lt.s32.totalorder %s84, 1
      %s1309 = scalar_select %p1308, %s84, 1
      %s1310 = smul.addr %s1309, 8
      %s1311 = scalar_lea.vmem %s67, %s1310
      %p1312 = scmp.lt.s32.totalorder %s84, 1
      %s1313 = scalar_select %p1312, %s84, 1
      %s1314 = smul.addr %s1313, 8
      %s1315 = scalar_lea.vmem %s1, %s1314
      %p1316 = scmp.lt.s32.totalorder %s84, 1
      %s1317 = scalar_select %p1316, %s84, 1
      %s1318 = smul.addr %s1317, 8
      %s1319 = scalar_lea.vmem %s3, %s1318
      %p1320 = scmp.lt.s32.totalorder %s84, 1
      %s1321 = scalar_select %p1320, %s84, 1
      %s1322 = scalar_lea.vmem %s5, %s1321
      %p1323 = scmp.lt.s32.totalorder %s84, 1
      %s1324 = scalar_select %p1323, %s84, 1
      %s1325 = scalar_lea.vmem %s7, %s1324
      %p1326 = scmp.lt.s32.totalorder %s84, 1
      %s1327 = scalar_select %p1326, %s84, 1
      %s1328 = smul.addr %s1327, 8
      %s1329 = scalar_lea.vmem %s9, %s1328
      %p1330 = scmp.lt.s32.totalorder %s85, 1
      %s1331 = scalar_select %p1330, %s85, 1
      %s1332 = scalar_lea.vmem %s11, %s1331
      %p1333 = scmp.lt.s32.totalorder %s85, 1
      %s1334 = scalar_select %p1333, %s85, 1
      %s1335 = scalar_lea.vmem %s13, %s1334
      %p1336 = scmp.lt.s32.totalorder %s85, 1
      %s1337 = scalar_select %p1336, %s85, 1
      %s1338 = smul.addr %s1337, 4
      %s1339 = smul.addr %s1338, 8
      %s1340 = scalar_lea.vmem %s15, %s1339
      %p1341 = scmp.lt.s32.totalorder %s85, 1
      %s1342 = scalar_select %p1341, %s85, 1
      %s1343 = scalar_lea.vmem %s17, %s1342
      %p1344 = scmp.lt.s32.totalorder %s85, 1
      %s1345 = scalar_select %p1344, %s85, 1
      %s1346 = smul.addr %s1345, 4
      %s1347 = smul.addr %s1346, 8
      %s1348 = scalar_lea.vmem %s19, %s1347
      %p1349 = scmp.lt.s32.totalorder %s85, 1
      %s1350 = scalar_select %p1349, %s85, 1
      %s1351 = scalar_lea.vmem %s21, %s1350
      %p1352 = scmp.lt.s32.totalorder %s85, 1
      %s1353 = scalar_select %p1352, %s85, 1
      %s1354 = scalar_lea.vmem %s23, %s1353
      %p1355 = scmp.lt.s32.totalorder %s85, 1
      %s1356 = scalar_select %p1355, %s85, 1
      %s1357 = scalar_lea.vmem %s25, %s1356
      %p1358 = scmp.lt.s32.totalorder %s85, 1
      %s1359 = scalar_select %p1358, %s85, 1
      %s1360 = smul.addr %s1359, 4
      %s1361 = smul.addr %s1360, 8
      %s1362 = scalar_lea.vmem %s27, %s1361
      %p1363 = scmp.lt.s32.totalorder %s85, 1
      %s1364 = scalar_select %p1363, %s85, 1
      %s1365 = scalar_lea.vmem %s29, %s1364
      %p1366 = scmp.lt.s32.totalorder %s85, 1
      %s1367 = scalar_select %p1366, %s85, 1
      %s1368 = smul.addr %s1367, 4
      %s1369 = smul.addr %s1368, 8
      %s1370 = scalar_lea.vmem %s31, %s1369
      %p1371 = scmp.lt.s32.totalorder %s85, 1
      %s1372 = scalar_select %p1371, %s85, 1
      %s1373 = scalar_lea.vmem %s33, %s1372
      %p1374 = scmp.lt.s32.totalorder %s85, 1
      %s1375 = scalar_select %p1374, %s85, 1
      %s1376 = smul.addr %s1375, 4
      %s1377 = smul.addr %s1376, 8
      %s1378 = scalar_lea.vmem %s35, %s1377
      %p1379 = scmp.lt.s32.totalorder %s85, 1
      %s1380 = scalar_select %p1379, %s85, 1
      %s1381 = scalar_lea.vmem %s37, %s1380
      %p1382 = scmp.lt.s32.totalorder %s85, 1
      %s1383 = scalar_select %p1382, %s85, 1
      %s1384 = scalar_lea.vmem %s39, %s1383
      %p1385 = scmp.lt.s32.totalorder %s85, 1
      %s1386 = scalar_select %p1385, %s85, 1
      %s1387 = scalar_lea.vmem %s41, %s1386
      %p1388 = scmp.lt.s32.totalorder %s85, 1
      %s1389 = scalar_select %p1388, %s85, 1
      %s1390 = smul.addr %s1389, 4
      %s1391 = smul.addr %s1390, 8
      %s1392 = scalar_lea.vmem %s43, %s1391
      %p1393 = scmp.lt.s32.totalorder %s85, 1
      %s1394 = scalar_select %p1393, %s85, 1
      %s1395 = scalar_lea.vmem %s45, %s1394
      %p1396 = scmp.lt.s32.totalorder %s85, 1
      %s1397 = scalar_select %p1396, %s85, 1
      %s1398 = smul.addr %s1397, 8
      %s1399 = smul.addr %s1398, 8
      %s1400 = scalar_lea.vmem %s47, %s1399
      %p1401 = scmp.lt.s32.totalorder %s85, 1
      %s1402 = scalar_select %p1401, %s85, 1
      %s1403 = scalar_lea.vmem %s49, %s1402
      %p1404 = scmp.lt.s32.totalorder %s84, 1
      %s1405 = scalar_select %p1404, %s84, 1
      %s1406 = smul.addr %s1405, 8
      %s1407 = scalar_lea.vmem %s67, %s1406
      %p1408 = scmp.eq.s32.totalorder %s85, 0
      // Predicated region
      $region153: #{forward.3} parent=151 // pred_check
        %p1409 = pneg %p1408
      $region154: #{forward.3} parent=151 // pred_check_branch
        %1411 = sbr.rel (%p1409) target = $region156
      $region155: #{forward.3} parent=151 // pred_region
        %v1412 = vld [vmem:[%s1315] sm:$0xff]
        %vm1413 = vcmask 261120
        %1414 = vst.msk [vmem:[#allocation2] sm:$0xff] %vm1413, %v1412
      $region156: #{forward.3} parent=151 // pred_fallthru
        _
      %v1415 = vld [vmem:[#allocation2] sm:$0xff]
      %v1416 = vld [vmem:[%s1319] sm:$0xff]
      %v1417 = vlaneseq
      %v1418 = vshrl.u32 %v1417, 7
      %v1419 = vlaneseq
      %v1420 = vand.u32 %v1419, 127
      %vm1421 = vcmp.ge.s32.totalorder %v1418, %v1420
      %v1422 = vsel %vm1421, 0.0, -1e+09
      %v1423 = vld [vmem:[%s1322] sm:$0x1]
      %v1425 = vlaneseq
      %v1426 = vshrl.u32 %v1425, 7
      %v1427 = vsub.s32 0, %v1426
      %v1428 = vrot.slane %v1423, %v1427
      %v1430 = vadd.f32 %v1422, %v1428
      %v1431 = vld [vmem:[%s1325] sm:$0x1]
      %v1432 = vld [vmem:[%s1332] sm:$0x1]
      %v1433 = vld [vmem:[%s1335] sm:$0x1]
      %vm1434 = vcmask 261120
      %v1435 = vsel %vm1434, %v1415, 0.0
      %1436 = vadd.xlane.f32.xlu0 %v1435
      %v1437 = vpop.xlane.xlu0 %1436
      %v1438 = vrcp.pop 32.0
      %v1439 = vmul.f32 %v1437, %v1438
      %v1440 = vsub.f32 %v1415, %v1439
      %v1441 = vmul.f32 %v1440, %v1440
      %v1442 = vsel %vm1434, %v1441, 0.0
      %1443 = vadd.xlane.f32.xlu0 %v1442
      %v1444 = vpop.xlane.xlu0 %1443
      %v1445 = vmul.f32 %v1444, %v1438
      %v1446 = vadd.f32 %v1445, 1e-05
      %v1447 = vrsqrt.pop %v1446
      %v1448 = vmul.f32 %v1440, %v1447
      %v1450 = vlaneseq
      %v1451 = vshrl.u32 %v1450, 7
      %v1452 = vsub.s32 0, %v1451
      %v1453 = vrot.slane %v1432, %v1452
      %v1455 = vmul.f32 %v1448, %v1453
      %v1457 = vlaneseq
      %v1458 = vshrl.u32 %v1457, 7
      %v1459 = vsub.s32 0, %v1458
      %v1460 = vrot.slane %v1433, %v1459
      %v1462 = vadd.f32 %v1455, %v1460
      %v1463 = vld [vmem:[%s1340] sm:$0xff]
      %v1464 = vld [vmem:[%s1340 + $0x8] sm:$0xff]
      %v1465 = vld [vmem:[%s1340 + $0x10] sm:$0xff]
      %v1466 = vld [vmem:[%s1340 + $0x18] sm:$0xff]
      %v1467 = vld [vmem:[%s1343] sm:$0x1]
      %v1468 = vld [vmem:[%s1348] sm:$0xff]
      %v1469 = vld [vmem:[%s1348 + $0x8] sm:$0xff]
      %v1470 = vld [vmem:[%s1348 + $0x10] sm:$0xff]
      %v1471 = vld [vmem:[%s1348 + $0x18] sm:$0xff]
      %v1472 = vld [vmem:[%s1351] sm:$0x1]
      %v1474 = vlaneseq
      %v1475 = vshrl.u32 %v1474, 7
      %v1476 = vsub.s32 0, %v1475
      %v1477 = vrot.slane %v1467, %v1476
      %v1480 = vsel %vm1434, %v1462, 0
      %1482 = vmatprep.subr.mxu0 0.0
      %1483 = vmatpush1.msra.mxu0 %v1463
      %1484 = vmatprep.subr.mxu0 0.0
      %1485 = vmatpush1.msra.mxu0 %v1464
      %1486 = vmatprep.subr.mxu0 0.0
      %1487 = vmatpush1.msra.mxu0 %v1465
      %1488 = vmatprep.subr.mxu0 0.0
      %1489 = vmatpush1.msra.mxu0 %v1466
      %1490 = vmatprep.subr.mxu0 0.0
      %1491 = vmatpush1.msra.mxu0 0.0
      %1492 = vmatprep.subr.mxu0 0.0
      %1493 = vmatpush1.msra.mxu0 0.0
      %1494 = vmatprep.subr.mxu0 0.0
      %1495 = vmatpush1.msra.mxu0 0.0
      %1496 = vmatprep.subr.mxu0 0.0
      %1497 = vmatpush1.msra.mxu0 0.0
      %1498 = vmatprep.subr.mxu0 0.0
      %1499 = vmatpush1.msra.mxu0 0.0
      %1500 = vmatprep.subr.mxu0 0.0
      %1501 = vmatpush1.msra.mxu0 0.0
      %1502 = vmatprep.subr.mxu0 0.0
      %1503 = vmatpush1.msra.mxu0 0.0
      %1504 = vmatprep.subr.mxu0 0.0
      %1505 = vmatpush1.msra.mxu0 0.0
      %1506 = vmatprep.subr.mxu0 0.0
      %1507 = vmatpush1.msra.mxu0 0.0
      %1508 = vmatprep.subr.mxu0 0.0
      %1509 = vmatpush1.msra.mxu0 0.0
      %1510 = vmatprep.subr.mxu0 0.0
      %1511 = vmatpush1.msra.mxu0 0.0
      %1512 = vmatprep.subr.mxu0 0.0
      %1513 = vmatpush1.msra.mxu0 0.0
      %1514 = vmatprep.subr.mxu0 0.0
      %1515 = vmatpush1.msra.mxu0 0.0
      %1516 = vmatprep.subr.mxu0 0.0
      %1517 = vmatpush1.msra.mxu0 0.0
      %1518 = vmatprep.subr.mxu0 0.0
      %1519 = vmatpush1.msra.mxu0 0.0
      %1520 = vmatprep.subr.mxu0 0.0
      %1521 = vmatpush1.msra.mxu0 0.0
      %1522 = vmatprep.subr.mxu0 0.0
      %1523 = vmatpush1.msra.mxu0 0.0
      %1524 = vmatprep.subr.mxu0 0.0
      %1525 = vmatpush1.msra.mxu0 0.0
      %1526 = vmatprep.subr.mxu0 0.0
      %1527 = vmatpush1.msra.mxu0 0.0
      %1528 = vmatprep.subr.mxu0 0.0
      %1529 = vmatpush1.msra.mxu0 0.0
      %1530 = vmatprep.subr.mxu0 0.0
      %1531 = vmatpush1.msra.mxu0 0.0
      %1532 = vmatprep.subr.mxu0 0.0
      %1533 = vmatpush1.msra.mxu0 0.0
      %1534 = vmatprep.subr.mxu0 0.0
      %1535 = vmatpush1.msra.mxu0 0.0
      %1536 = vmatprep.subr.mxu0 0.0
      %1537 = vmatpush1.msra.mxu0 0.0
      %1538 = vmatprep.subr.mxu0 0.0
      %1539 = vmatpush1.msra.mxu0 0.0
      %1540 = vmatprep.subr.mxu0 0.0
      %1541 = vmatpush1.msra.mxu0 0.0
      %1542 = vmatprep.subr.mxu0 0.0
      %1543 = vmatpush1.msra.mxu0 0.0
      %1544 = vmatprep.subr.mxu0 0.0
      %1545 = vmatpush1.msra.mxu0 0.0
      %1546 = vmatprep.mubr.f32.mxu0 0.0
      %1547 = vmatmul.mubr.f32.gmra.mrb[0].mxu0 %v1480
      %v1548 = vpop.f32.mrb[0].mxu0
      %v1549 = vadd.f32 %v1477, %v1548
      %v1550 = vpop.f32.mrb[0].mxu0
      %1551 = vdwg.mxu0
      %1553 = vrot.lane.b32.xlu0 %v1549, 96
      %v1554 = vpop.permute.xlu0 %1553
      %vm1555 = vcmask 64512
      %v1556 = vsel %vm1555, %v1549, 0
      %v1558 = vsel %vm1555, %v1554, 0
      %1560 = vmatprep.subr.mxu0 0.0
      %1561 = vmatpush1.xpose.msra.mxu0 %v1558
      %1562 = vmatprep.subr.mxu0 0.0
      %1563 = vmatpush1.xpose.msra.mxu0 0.0
      %1564 = vmatprep.subr.mxu0 0.0
      %1565 = vmatpush1.xpose.msra.mxu0 0.0
      %1566 = vmatprep.subr.mxu0 0.0
      %1567 = vmatpush1.xpose.msra.mxu0 0.0
      %1568 = vmatprep.subr.mxu0 0.0
      %1569 = vmatpush1.xpose.msra.mxu0 0.0
      %1570 = vmatprep.subr.mxu0 0.0
      %1571 = vmatpush1.xpose.msra.mxu0 0.0
      %1572 = vmatprep.subr.mxu0 0.0
      %1573 = vmatpush1.xpose.msra.mxu0 0.0
      %1574 = vmatprep.subr.mxu0 0.0
      %1575 = vmatpush1.xpose.msra.mxu0 0.0
      %1576 = vmatprep.subr.mxu0 0.0
      %1577 = vmatpush1.xpose.msra.mxu0 0.0
      %1578 = vmatprep.subr.mxu0 0.0
      %1579 = vmatpush1.xpose.msra.mxu0 0.0
      %1580 = vmatprep.subr.mxu0 0.0
      %1581 = vmatpush1.xpose.msra.mxu0 0.0
      %1582 = vmatprep.subr.mxu0 0.0
      %1583 = vmatpush1.xpose.msra.mxu0 0.0
      %1584 = vmatprep.subr.mxu0 0.0
      %1585 = vmatpush1.xpose.msra.mxu0 0.0
      %1586 = vmatprep.subr.mxu0 0.0
      %1587 = vmatpush1.xpose.msra.mxu0 0.0
      %1588 = vmatprep.subr.mxu0 0.0
      %1589 = vmatpush1.xpose.msra.mxu0 0.0
      %1590 = vmatprep.subr.mxu0 0.0
      %1591 = vmatpush1.xpose.msra.mxu0 0.0
      %1592 = vmatprep.subr.mxu0 0.0
      %1593 = vmatpush1.xpose.msra.mxu0 0.0
      %1594 = vmatprep.subr.mxu0 0.0
      %1595 = vmatpush1.xpose.msra.mxu0 0.0
      %1596 = vmatprep.subr.mxu0 0.0
      %1597 = vmatpush1.xpose.msra.mxu0 0.0
      %1598 = vmatprep.subr.mxu0 0.0
      %1599 = vmatpush1.xpose.msra.mxu0 0.0
      %1600 = vmatprep.subr.mxu0 0.0
      %1601 = vmatpush1.xpose.msra.mxu0 0.0
      %1602 = vmatprep.subr.mxu0 0.0
      %1603 = vmatpush1.xpose.msra.mxu0 0.0
      %1604 = vmatprep.subr.mxu0 0.0
      %1605 = vmatpush1.xpose.msra.mxu0 0.0
      %1606 = vmatprep.subr.mxu0 0.0
      %1607 = vmatpush1.xpose.msra.mxu0 0.0
      %1608 = vmatprep.subr.mxu0 0.0
      %1609 = vmatpush1.xpose.msra.mxu0 0.0
      %1610 = vmatprep.subr.mxu0 0.0
      %1611 = vmatpush1.xpose.msra.mxu0 0.0
      %1612 = vmatprep.subr.mxu0 0.0
      %1613 = vmatpush1.xpose.msra.mxu0 0.0
      %1614 = vmatprep.subr.mxu0 0.0
      %1615 = vmatpush1.xpose.msra.mxu0 0.0
      %1616 = vmatprep.subr.mxu0 0.0
      %1617 = vmatpush1.xpose.msra.mxu0 0.0
      %1618 = vmatprep.subr.mxu0 0.0
      %1619 = vmatpush1.xpose.msra.mxu0 0.0
      %1620 = vmatprep.subr.mxu0 0.0
      %1621 = vmatpush1.xpose.msra.mxu0 0.0
      %1622 = vmatprep.subr.mxu0 0.0
      %1623 = vmatpush1.xpose.msra.mxu0 0.0
      %1624 = vmatprep.mubr.f32.mxu0 0.0
      %1625 = vmatmul.mubr.f32.gmra.mrb[0].mxu0 %v1556
      %v1626 = vpop.f32.mrb[0].mxu0
      %v1627 = vadd.f32 0.0, %v1626
      %v1628 = vpop.f32.mrb[0].mxu0
      %1629 = vdwg.mxu0
      %v1630 = vmul.f32 %v1627, 0.35355338
      %v1631 = vadd.f32 %v1630, %v1430
      %v1632 = vsel %vm1555, %v1631, -inf
      %1633 = vmax.xlane.f32.xlu0 %v1632
      %v1634 = vpop.xlane.xlu0 %1633
      %v1635 = vsub.f32 %v1631, %v1634
      %v1636 = vmul.f32 %v1635, 1.442695
      %v1637 = vpow.pop %v1636
      %v1638 = vsel %vm1555, %v1637, 0.0
      %1639 = vadd.xlane.f32.xlu0 %v1638
      %v1640 = vpop.xlane.xlu0 %1639
      %v1641 = vrcp.pop %v1640
      %v1642 = vmul.f32 %v1637, %v1641
      %1643 = vrot.lane.b32.xlu0 %v1549, 64
      %v1644 = vpop.permute.xlu0 %1643
      %v1647 = vsel %vm1555, %v1642, 0
      %1649 = vmatprep.subr.mxu0 0.0
      %1650 = vmatpush1.msra.mxu0 %v1644
      %1651 = vmatprep.subr.mxu0 0.0
      %1652 = vmatpush1.msra.mxu0 0.0
      %1653 = vmatprep.subr.mxu0 0.0
      %1654 = vmatpush1.msra.mxu0 0.0
      %1655 = vmatprep.subr.mxu0 0.0
      %1656 = vmatpush1.msra.mxu0 0.0
      %1657 = vmatprep.subr.mxu0 0.0
      %1658 = vmatpush1.msra.mxu0 0.0
      %1659 = vmatprep.subr.mxu0 0.0
      %1660 = vmatpush1.msra.mxu0 0.0
      %1661 = vmatprep.subr.mxu0 0.0
      %1662 = vmatpush1.msra.mxu0 0.0
      %1663 = vmatprep.subr.mxu0 0.0
      %1664 = vmatpush1.msra.mxu0 0.0
      %1665 = vmatprep.subr.mxu0 0.0
      %1666 = vmatpush1.msra.mxu0 0.0
      %1667 = vmatprep.subr.mxu0 0.0
      %1668 = vmatpush1.msra.mxu0 0.0
      %1669 = vmatprep.subr.mxu0 0.0
      %1670 = vmatpush1.msra.mxu0 0.0
      %1671 = vmatprep.subr.mxu0 0.0
      %1672 = vmatpush1.msra.mxu0 0.0
      %1673 = vmatprep.subr.mxu0 0.0
      %1674 = vmatpush1.msra.mxu0 0.0
      %1675 = vmatprep.subr.mxu0 0.0
      %1676 = vmatpush1.msra.mxu0 0.0
      %1677 = vmatprep.subr.mxu0 0.0
      %1678 = vmatpush1.msra.mxu0 0.0
      %1679 = vmatprep.subr.mxu0 0.0
      %1680 = vmatpush1.msra.mxu0 0.0
      %1681 = vmatprep.subr.mxu0 0.0
      %1682 = vmatpush1.msra.mxu0 0.0
      %1683 = vmatprep.subr.mxu0 0.0
      %1684 = vmatpush1.msra.mxu0 0.0
      %1685 = vmatprep.subr.mxu0 0.0
      %1686 = vmatpush1.msra.mxu0 0.0
      %1687 = vmatprep.subr.mxu0 0.0
      %1688 = vmatpush1.msra.mxu0 0.0
      %1689 = vmatprep.subr.mxu0 0.0
      %1690 = vmatpush1.msra.mxu0 0.0
      %1691 = vmatprep.subr.mxu0 0.0
      %1692 = vmatpush1.msra.mxu0 0.0
      %1693 = vmatprep.subr.mxu0 0.0
      %1694 = vmatpush1.msra.mxu0 0.0
      %1695 = vmatprep.subr.mxu0 0.0
      %1696 = vmatpush1.msra.mxu0 0.0
      %1697 = vmatprep.subr.mxu0 0.0
      %1698 = vmatpush1.msra.mxu0 0.0
      %1699 = vmatprep.subr.mxu0 0.0
      %1700 = vmatpush1.msra.mxu0 0.0
      %1701 = vmatprep.subr.mxu0 0.0
      %1702 = vmatpush1.msra.mxu0 0.0
      %1703 = vmatprep.subr.mxu0 0.0
      %1704 = vmatpush1.msra.mxu0 0.0
      %1705 = vmatprep.subr.mxu0 0.0
      %1706 = vmatpush1.msra.mxu0 0.0
      %1707 = vmatprep.subr.mxu0 0.0
      %1708 = vmatpush1.msra.mxu0 0.0
      %1709 = vmatprep.subr.mxu0 0.0
      %1710 = vmatpush1.msra.mxu0 0.0
      %1711 = vmatprep.subr.mxu0 0.0
      %1712 = vmatpush1.msra.mxu0 0.0
      %1713 = vmatprep.mubr.f32.mxu0 0.0
      %1714 = vmatmul.mubr.f32.gmra.mrb[0].mxu0 %v1647
      %v1715 = vpop.f32.mrb[0].mxu0
      %v1716 = vadd.f32 0.0, %v1715
      %v1717 = vpop.f32.mrb[0].mxu0
      %1718 = vdwg.mxu0
      %1719 = vrot.lane.b32.xlu0 %v1549, 120
      %v1720 = vpop.permute.xlu0 %1719
      %1721 = vrot.lane.b32.xlu0 %v1549, 88
      %v1722 = vpop.permute.xlu0 %1721
      %v1723 = vsel %vm1555, %v1720, 0
      %v1725 = vsel %vm1555, %v1722, 0
      %1727 = vmatprep.subr.mxu0 0.0
      %1728 = vmatpush1.xpose.msra.mxu0 %v1725
      %1729 = vmatprep.subr.mxu0 0.0
      %1730 = vmatpush1.xpose.msra.mxu0 0.0
      %1731 = vmatprep.subr.mxu0 0.0
      %1732 = vmatpush1.xpose.msra.mxu0 0.0
      %1733 = vmatprep.subr.mxu0 0.0
      %1734 = vmatpush1.xpose.msra.mxu0 0.0
      %1735 = vmatprep.subr.mxu0 0.0
      %1736 = vmatpush1.xpose.msra.mxu0 0.0
      %1737 = vmatprep.subr.mxu0 0.0
      %1738 = vmatpush1.xpose.msra.mxu0 0.0
      %1739 = vmatprep.subr.mxu0 0.0
      %1740 = vmatpush1.xpose.msra.mxu0 0.0
      %1741 = vmatprep.subr.mxu0 0.0
      %1742 = vmatpush1.xpose.msra.mxu0 0.0
      %1743 = vmatprep.subr.mxu0 0.0
      %1744 = vmatpush1.xpose.msra.mxu0 0.0
      %1745 = vmatprep.subr.mxu0 0.0
      %1746 = vmatpush1.xpose.msra.mxu0 0.0
      %1747 = vmatprep.subr.mxu0 0.0
      %1748 = vmatpush1.xpose.msra.mxu0 0.0
      %1749 = vmatprep.subr.mxu0 0.0
      %1750 = vmatpush1.xpose.msra.mxu0 0.0
      %1751 = vmatprep.subr.mxu0 0.0
      %1752 = vmatpush1.xpose.msra.mxu0 0.0
      %1753 = vmatprep.subr.mxu0 0.0
      %1754 = vmatpush1.xpose.msra.mxu0 0.0
      %1755 = vmatprep.subr.mxu0 0.0
      %1756 = vmatpush1.xpose.msra.mxu0 0.0
      %1757 = vmatprep.subr.mxu0 0.0
      %1758 = vmatpush1.xpose.msra.mxu0 0.0
      %1759 = vmatprep.subr.mxu0 0.0
      %1760 = vmatpush1.xpose.msra.mxu0 0.0
      %1761 = vmatprep.subr.mxu0 0.0
      %1762 = vmatpush1.xpose.msra.mxu0 0.0
      %1763 = vmatprep.subr.mxu0 0.0
      %1764 = vmatpush1.xpose.msra.mxu0 0.0
      %1765 = vmatprep.subr.mxu0 0.0
      %1766 = vmatpush1.xpose.msra.mxu0 0.0
      %1767 = vmatprep.subr.mxu0 0.0
      %1768 = vmatpush1.xpose.msra.mxu0 0.0
      %1769 = vmatprep.subr.mxu0 0.0
      %1770 = vmatpush1.xpose.msra.mxu0 0.0
      %1771 = vmatprep.subr.mxu0 0.0
      %1772 = vmatpush1.xpose.msra.mxu0 0.0
      %1773 = vmatprep.subr.mxu0 0.0
      %1774 = vmatpush1.xpose.msra.mxu0 0.0
      %1775 = vmatprep.subr.mxu0 0.0
      %1776 = vmatpush1.xpose.msra.mxu0 0.0
      %1777 = vmatprep.subr.mxu0 0.0
      %1778 = vmatpush1.xpose.msra.mxu0 0.0
      %1779 = vmatprep.subr.mxu0 0.0
      %1780 = vmatpush1.xpose.msra.mxu0 0.0
      %1781 = vmatprep.subr.mxu0 0.0
      %1782 = vmatpush1.xpose.msra.mxu0 0.0
      %1783 = vmatprep.subr.mxu0 0.0
      %1784 = vmatpush1.xpose.msra.mxu0 0.0
      %1785 = vmatprep.subr.mxu0 0.0
      %1786 = vmatpush1.xpose.msra.mxu0 0.0
      %1787 = vmatprep.subr.mxu0 0.0
      %1788 = vmatpush1.xpose.msra.mxu0 0.0
      %1789 = vmatprep.subr.mxu0 0.0
      %1790 = vmatpush1.xpose.msra.mxu0 0.0
      %1791 = vmatprep.mubr.f32.mxu0 0.0
      %1792 = vmatmul.mubr.f32.gmra.mrb[0].mxu0 %v1723
      %v1793 = vpop.f32.mrb[0].mxu0
      %v1794 = vadd.f32 0.0, %v1793
      %v1795 = vpop.f32.mrb[0].mxu0
      %1796 = vdwg.mxu0
      %v1797 = vmul.f32 %v1794, 0.35355338
      %v1798 = vadd.f32 %v1797, %v1430
      %v1799 = vsel %vm1555, %v1798, -inf
      %1800 = vmax.xlane.f32.xlu0 %v1799
      %v1801 = vpop.xlane.xlu0 %1800
      %v1802 = vsub.f32 %v1798, %v1801
      %v1803 = vmul.f32 %v1802, 1.442695
      %v1804 = vpow.pop %v1803
      %v1805 = vsel %vm1555, %v1804, 0.0
      %1806 = vadd.xlane.f32.xlu0 %v1805
      %v1807 = vpop.xlane.xlu0 %1806
      %v1808 = vrcp.pop %v1807
      %v1809 = vmul.f32 %v1804, %v1808
      %1810 = vrot.lane.b32.xlu0 %v1549, 56
      %v1811 = vpop.permute.xlu0 %1810
      %v1814 = vsel %vm1555, %v1809, 0
      %1816 = vmatprep.subr.mxu0 0.0
      %1817 = vmatpush1.msra.mxu0 %v1811
      %1818 = vmatprep.subr.mxu0 0.0
      %1819 = vmatpush1.msra.mxu0 0.0
      %1820 = vmatprep.subr.mxu0 0.0
      %1821 = vmatpush1.msra.mxu0 0.0
      %1822 = vmatprep.subr.mxu0 0.0
      %1823 = vmatpush1.msra.mxu0 0.0
      %1824 = vmatprep.subr.mxu0 0.0
      %1825 = vmatpush1.msra.mxu0 0.0
      %1826 = vmatprep.subr.mxu0 0.0
      %1827 = vmatpush1.msra.mxu0 0.0
      %1828 = vmatprep.subr.mxu0 0.0
      %1829 = vmatpush1.msra.mxu0 0.0
      %1830 = vmatprep.subr.mxu0 0.0
      %1831 = vmatpush1.msra.mxu0 0.0
      %1832 = vmatprep.subr.mxu0 0.0
      %1833 = vmatpush1.msra.mxu0 0.0
      %1834 = vmatprep.subr.mxu0 0.0
      %1835 = vmatpush1.msra.mxu0 0.0
      %1836 = vmatprep.subr.mxu0 0.0
      %1837 = vmatpush1.msra.mxu0 0.0
      %1838 = vmatprep.subr.mxu0 0.0
      %1839 = vmatpush1.msra.mxu0 0.0
      %1840 = vmatprep.subr.mxu0 0.0
      %1841 = vmatpush1.msra.mxu0 0.0
      %1842 = vmatprep.subr.mxu0 0.0
      %1843 = vmatpush1.msra.mxu0 0.0
      %1844 = vmatprep.subr.mxu0 0.0
      %1845 = vmatpush1.msra.mxu0 0.0
      %1846 = vmatprep.subr.mxu0 0.0
      %1847 = vmatpush1.msra.mxu0 0.0
      %1848 = vmatprep.subr.mxu0 0.0
      %1849 = vmatpush1.msra.mxu0 0.0
      %1850 = vmatprep.subr.mxu0 0.0
      %1851 = vmatpush1.msra.mxu0 0.0
      %1852 = vmatprep.subr.mxu0 0.0
      %1853 = vmatpush1.msra.mxu0 0.0
      %1854 = vmatprep.subr.mxu0 0.0
      %1855 = vmatpush1.msra.mxu0 0.0
      %1856 = vmatprep.subr.mxu0 0.0
      %1857 = vmatpush1.msra.mxu0 0.0
      %1858 = vmatprep.subr.mxu0 0.0
      %1859 = vmatpush1.msra.mxu0 0.0
      %1860 = vmatprep.subr.mxu0 0.0
      %1861 = vmatpush1.msra.mxu0 0.0
      %1862 = vmatprep.subr.mxu0 0.0
      %1863 = vmatpush1.msra.mxu0 0.0
      %1864 = vmatprep.subr.mxu0 0.0
      %1865 = vmatpush1.msra.mxu0 0.0
      %1866 = vmatprep.subr.mxu0 0.0
      %1867 = vmatpush1.msra.mxu0 0.0
      %1868 = vmatprep.subr.mxu0 0.0
      %1869 = vmatpush1.msra.mxu0 0.0
      %1870 = vmatprep.subr.mxu0 0.0
      %1871 = vmatpush1.msra.mxu0 0.0
      %1872 = vmatprep.subr.mxu0 0.0
      %1873 = vmatpush1.msra.mxu0 0.0
      %1874 = vmatprep.subr.mxu0 0.0
      %1875 = vmatpush1.msra.mxu0 0.0
      %1876 = vmatprep.subr.mxu0 0.0
      %1877 = vmatpush1.msra.mxu0 0.0
      %1878 = vmatprep.subr.mxu0 0.0
      %1879 = vmatpush1.msra.mxu0 0.0
      %1880 = vmatprep.mubr.f32.mxu0 0.0
      %1881 = vmatmul.mubr.f32.gmra.mrb[0].mxu0 %v1814
      %v1882 = vpop.f32.mrb[0].mxu0
      %v1883 = vadd.f32 0.0, %v1882
      %v1884 = vpop.f32.mrb[0].mxu0
      %1885 = vdwg.mxu0
      %1886 = vrot.lane.b32.xlu0 %v1549, 112
      %v1887 = vpop.permute.xlu0 %1886
      %1888 = vrot.lane.b32.xlu0 %v1549, 80
      %v1889 = vpop.permute.xlu0 %1888
      %v1890 = vsel %vm1555, %v1887, 0
      %v1892 = vsel %vm1555, %v1889, 0
      %1894 = vmatprep.subr.mxu0 0.0
      %1895 = vmatpush1.xpose.msra.mxu0 %v1892
      %1896 = vmatprep.subr.mxu0 0.0
      %1897 = vmatpush1.xpose.msra.mxu0 0.0
      %1898 = vmatprep.subr.mxu0 0.0
      %1899 = vmatpush1.xpose.msra.mxu0 0.0
      %1900 = vmatprep.subr.mxu0 0.0
      %1901 = vmatpush1.xpose.msra.mxu0 0.0
      %1902 = vmatprep.subr.mxu0 0.0
      %1903 = vmatpush1.xpose.msra.mxu0 0.0
      %1904 = vmatprep.subr.mxu0 0.0
      %1905 = vmatpush1.xpose.msra.mxu0 0.0
      %1906 = vmatprep.subr.mxu0 0.0
      %1907 = vmatpush1.xpose.msra.mxu0 0.0
      %1908 = vmatprep.subr.mxu0 0.0
      %1909 = vmatpush1.xpose.msra.mxu0 0.0
      %1910 = vmatprep.subr.mxu0 0.0
      %1911 = vmatpush1.xpose.msra.mxu0 0.0
      %1912 = vmatprep.subr.mxu0 0.0
      %1913 = vmatpush1.xpose.msra.mxu0 0.0
      %1914 = vmatprep.subr.mxu0 0.0
      %1915 = vmatpush1.xpose.msra.mxu0 0.0
      %1916 = vmatprep.subr.mxu0 0.0
      %1917 = vmatpush1.xpose.msra.mxu0 0.0
      %1918 = vmatprep.subr.mxu0 0.0
      %1919 = vmatpush1.xpose.msra.mxu0 0.0
      %1920 = vmatprep.subr.mxu0 0.0
      %1921 = vmatpush1.xpose.msra.mxu0 0.0
      %1922 = vmatprep.subr.mxu0 0.0
      %1923 = vmatpush1.xpose.msra.mxu0 0.0
      %1924 = vmatprep.subr.mxu0 0.0
      %1925 = vmatpush1.xpose.msra.mxu0 0.0
      %1926 = vmatprep.subr.mxu0 0.0
      %1927 = vmatpush1.xpose.msra.mxu0 0.0
      %1928 = vmatprep.subr.mxu0 0.0
      %1929 = vmatpush1.xpose.msra.mxu0 0.0
      %1930 = vmatprep.subr.mxu0 0.0
      %1931 = vmatpush1.xpose.msra.mxu0 0.0
      %1932 = vmatprep.subr.mxu0 0.0
      %1933 = vmatpush1.xpose.msra.mxu0 0.0
      %1934 = vmatprep.subr.mxu0 0.0
      %1935 = vmatpush1.xpose.msra.mxu0 0.0
      %1936 = vmatprep.subr.mxu0 0.0
      %1937 = vmatpush1.xpose.msra.mxu0 0.0
      %1938 = vmatprep.subr.mxu0 0.0
      %1939 = vmatpush1.xpose.msra.mxu0 0.0
      %1940 = vmatprep.subr.mxu0 0.0
      %1941 = vmatpush1.xpose.msra.mxu0 0.0
      %1942 = vmatprep.subr.mxu0 0.0
      %1943 = vmatpush1.xpose.msra.mxu0 0.0
      %1944 = vmatprep.subr.mxu0 0.0
      %1945 = vmatpush1.xpose.msra.mxu0 0.0
      %1946 = vmatprep.subr.mxu0 0.0
      %1947 = vmatpush1.xpose.msra.mxu0 0.0
      %1948 = vmatprep.subr.mxu0 0.0
      %1949 = vmatpush1.xpose.msra.mxu0 0.0
      %1950 = vmatprep.subr.mxu0 0.0
      %1951 = vmatpush1.xpose.msra.mxu0 0.0
      %1952 = vmatprep.subr.mxu0 0.0
      %1953 = vmatpush1.xpose.msra.mxu0 0.0
      %1954 = vmatprep.subr.mxu0 0.0
      %1955 = vmatpush1.xpose.msra.mxu0 0.0
      %1956 = vmatprep.subr.mxu0 0.0
      %1957 = vmatpush1.xpose.msra.mxu0 0.0
      %1958 = vmatprep.mubr.f32.mxu0 0.0
      %1959 = vmatmul.mubr.f32.gmra.mrb[0].mxu0 %v1890
      %v1960 = vpop.f32.mrb[0].mxu0
      %v1961 = vadd.f32 0.0, %v1960
      %v1962 = vpop.f32.mrb[0].mxu0
      %1963 = vdwg.mxu0
      %v1964 = vmul.f32 %v1961, 0.35355338
      %v1965 = vadd.f32 %v1964, %v1430
      %v1966 = vsel %vm1555, %v1965, -inf
      %1967 = vmax.xlane.f32.xlu0 %v1966
      %v1968 = vpop.xlane.xlu0 %1967
      %v1969 = vsub.f32 %v1965, %v1968
      %v1970 = vmul.f32 %v1969, 1.442695
      %v1971 = vpow.pop %v1970
      %v1972 = vsel %vm1555, %v1971, 0.0
      %1973 = vadd.xlane.f32.xlu0 %v1972
      %v1974 = vpop.xlane.xlu0 %1973
      %v1975 = vrcp.pop %v1974
      %v1976 = vmul.f32 %v1971, %v1975
      %1977 = vrot.lane.b32.xlu0 %v1549, 48
      %v1978 = vpop.permute.xlu0 %1977
      %v1981 = vsel %vm1555, %v1976, 0
      %1983 = vmatprep.subr.mxu0 0.0
      %1984 = vmatpush1.msra.mxu0 %v1978
      %1985 = vmatprep.subr.mxu0 0.0
      %1986 = vmatpush1.msra.mxu0 0.0
      %1987 = vmatprep.subr.mxu0 0.0
      %1988 = vmatpush1.msra.mxu0 0.0
      %1989 = vmatprep.subr.mxu0 0.0
      %1990 = vmatpush1.msra.mxu0 0.0
      %1991 = vmatprep.subr.mxu0 0.0
      %1992 = vmatpush1.msra.mxu0 0.0
      %1993 = vmatprep.subr.mxu0 0.0
      %1994 = vmatpush1.msra.mxu0 0.0
      %1995 = vmatprep.subr.mxu0 0.0
      %1996 = vmatpush1.msra.mxu0 0.0
      %1997 = vmatprep.subr.mxu0 0.0
      %1998 = vmatpush1.msra.mxu0 0.0
      %1999 = vmatprep.subr.mxu0 0.0
      %2000 = vmatpush1.msra.mxu0 0.0
      %2001 = vmatprep.subr.mxu0 0.0
      %2002 = vmatpush1.msra.mxu0 0.0
      %2003 = vmatprep.subr.mxu0 0.0
      %2004 = vmatpush1.msra.mxu0 0.0
      %2005 = vmatprep.subr.mxu0 0.0
      %2006 = vmatpush1.msra.mxu0 0.0
      %2007 = vmatprep.subr.mxu0 0.0
      %2008 = vmatpush1.msra.mxu0 0.0
      %2009 = vmatprep.subr.mxu0 0.0
      %2010 = vmatpush1.msra.mxu0 0.0
      %2011 = vmatprep.subr.mxu0 0.0
      %2012 = vmatpush1.msra.mxu0 0.0
      %2013 = vmatprep.subr.mxu0 0.0
      %2014 = vmatpush1.msra.mxu0 0.0
      %2015 = vmatprep.subr.mxu0 0.0
      %2016 = vmatpush1.msra.mxu0 0.0
      %2017 = vmatprep.subr.mxu0 0.0
      %2018 = vmatpush1.msra.mxu0 0.0
      %2019 = vmatprep.subr.mxu0 0.0
      %2020 = vmatpush1.msra.mxu0 0.0
      %2021 = vmatprep.subr.mxu0 0.0
      %2022 = vmatpush1.msra.mxu0 0.0
      %2023 = vmatprep.subr.mxu0 0.0
      %2024 = vmatpush1.msra.mxu0 0.0
      %2025 = vmatprep.subr.mxu0 0.0
      %2026 = vmatpush1.msra.mxu0 0.0
      %2027 = vmatprep.subr.mxu0 0.0
      %2028 = vmatpush1.msra.mxu0 0.0
      %2029 = vmatprep.subr.mxu0 0.0
      %2030 = vmatpush1.msra.mxu0 0.0
      %2031 = vmatprep.subr.mxu0 0.0
      %2032 = vmatpush1.msra.mxu0 0.0
      %2033 = vmatprep.subr.mxu0 0.0
      %2034 = vmatpush1.msra.mxu0 0.0
      %2035 = vmatprep.subr.mxu0 0.0
      %2036 = vmatpush1.msra.mxu0 0.0
      %2037 = vmatprep.subr.mxu0 0.0
      %2038 = vmatpush1.msra.mxu0 0.0
      %2039 = vmatprep.subr.mxu0 0.0
      %2040 = vmatpush1.msra.mxu0 0.0
      %2041 = vmatprep.subr.mxu0 0.0
      %2042 = vmatpush1.msra.mxu0 0.0
      %2043 = vmatprep.subr.mxu0 0.0
      %2044 = vmatpush1.msra.mxu0 0.0
      %2045 = vmatprep.subr.mxu0 0.0
      %2046 = vmatpush1.msra.mxu0 0.0
      %2047 = vmatprep.mubr.f32.mxu0 0.0
      %2048 = vmatmul.mubr.f32.gmra.mrb[0].mxu0 %v1981
      %v2049 = vpop.f32.mrb[0].mxu0
      %v2050 = vadd.f32 0.0, %v2049
      %v2051 = vpop.f32.mrb[0].mxu0
      %2052 = vdwg.mxu0
      %2053 = vrot.lane.b32.xlu0 %v1549, 104
      %v2054 = vpop.permute.xlu0 %2053
      %2055 = vrot.lane.b32.xlu0 %v1549, 72
      %v2056 = vpop.permute.xlu0 %2055
      %v2057 = vsel %vm1555, %v2054, 0
      %v2059 = vsel %vm1555, %v2056, 0
      %2061 = vmatprep.subr.mxu0 0.0
      %2062 = vmatpush1.xpose.msra.mxu0 %v2059
      %2063 = vmatprep.subr.mxu0 0.0
      %2064 = vmatpush1.xpose.msra.mxu0 0.0
      %2065 = vmatprep.subr.mxu0 0.0
      %2066 = vmatpush1.xpose.msra.mxu0 0.0
      %2067 = vmatprep.subr.mxu0 0.0
      %2068 = vmatpush1.xpose.msra.mxu0 0.0
      %2069 = vmatprep.subr.mxu0 0.0
      %2070 = vmatpush1.xpose.msra.mxu0 0.0
      %2071 = vmatprep.subr.mxu0 0.0
      %2072 = vmatpush1.xpose.msra.mxu0 0.0
      %2073 = vmatprep.subr.mxu0 0.0
      %2074 = vmatpush1.xpose.msra.mxu0 0.0
      %2075 = vmatprep.subr.mxu0 0.0
      %2076 = vmatpush1.xpose.msra.mxu0 0.0
      %2077 = vmatprep.subr.mxu0 0.0
      %2078 = vmatpush1.xpose.msra.mxu0 0.0
      %2079 = vmatprep.subr.mxu0 0.0
      %2080 = vmatpush1.xpose.msra.mxu0 0.0
      %2081 = vmatprep.subr.mxu0 0.0
      %2082 = vmatpush1.xpose.msra.mxu0 0.0
      %2083 = vmatprep.subr.mxu0 0.0
      %2084 = vmatpush1.xpose.msra.mxu0 0.0
      %2085 = vmatprep.subr.mxu0 0.0
      %2086 = vmatpush1.xpose.msra.mxu0 0.0
      %2087 = vmatprep.subr.mxu0 0.0
      %2088 = vmatpush1.xpose.msra.mxu0 0.0
      %2089 = vmatprep.subr.mxu0 0.0
      %2090 = vmatpush1.xpose.msra.mxu0 0.0
      %2091 = vmatprep.subr.mxu0 0.0
      %2092 = vmatpush1.xpose.msra.mxu0 0.0
      %2093 = vmatprep.subr.mxu0 0.0
      %2094 = vmatpush1.xpose.msra.mxu0 0.0
      %2095 = vmatprep.subr.mxu0 0.0
      %2096 = vmatpush1.xpose.msra.mxu0 0.0
      %2097 = vmatprep.subr.mxu0 0.0
      %2098 = vmatpush1.xpose.msra.mxu0 0.0
      %2099 = vmatprep.subr.mxu0 0.0
      %2100 = vmatpush1.xpose.msra.mxu0 0.0
      %2101 = vmatprep.subr.mxu0 0.0
      %2102 = vmatpush1.xpose.msra.mxu0 0.0
      %2103 = vmatprep.subr.mxu0 0.0
      %2104 = vmatpush1.xpose.msra.mxu0 0.0
      %2105 = vmatprep.subr.mxu0 0.0
      %2106 = vmatpush1.xpose.msra.mxu0 0.0
      %2107 = vmatprep.subr.mxu0 0.0
      %2108 = vmatpush1.xpose.msra.mxu0 0.0
      %2109 = vmatprep.subr.mxu0 0.0
      %2110 = vmatpush1.xpose.msra.mxu0 0.0
      %2111 = vmatprep.subr.mxu0 0.0
      %2112 = vmatpush1.xpose.msra.mxu0 0.0
      %2113 = vmatprep.subr.mxu0 0.0
      %2114 = vmatpush1.xpose.msra.mxu0 0.0
      %2115 = vmatprep.subr.mxu0 0.0
      %2116 = vmatpush1.xpose.msra.mxu0 0.0
      %2117 = vmatprep.subr.mxu0 0.0
      %2118 = vmatpush1.xpose.msra.mxu0 0.0
      %2119 = vmatprep.subr.mxu0 0.0
      %2120 = vmatpush1.xpose.msra.mxu0 0.0
      %2121 = vmatprep.subr.mxu0 0.0
      %2122 = vmatpush1.xpose.msra.mxu0 0.0
      %2123 = vmatprep.subr.mxu0 0.0
      %2124 = vmatpush1.xpose.msra.mxu0 0.0
      %2125 = vmatprep.mubr.f32.mxu0 0.0
      %2126 = vmatmul.mubr.f32.gmra.mrb[0].mxu0 %v2057
      %v2127 = vpop.f32.mrb[0].mxu0
      %v2128 = vadd.f32 0.0, %v2127
      %v2129 = vpop.f32.mrb[0].mxu0
      %2130 = vdwg.mxu0
      %v2131 = vmul.f32 %v2128, 0.35355338
      %v2132 = vadd.f32 %v2131, %v1430
      %v2133 = vsel %vm1555, %v2132, -inf
      %2134 = vmax.xlane.f32.xlu0 %v2133
      %v2135 = vpop.xlane.xlu0 %2134
      %v2136 = vsub.f32 %v2132, %v2135
      %v2137 = vmul.f32 %v2136, 1.442695
      %v2138 = vpow.pop %v2137
      %v2139 = vsel %vm1555, %v2138, 0.0
      %2140 = vadd.xlane.f32.xlu0 %v2139
      %v2141 = vpop.xlane.xlu0 %2140
      %v2142 = vrcp.pop %v2141
      %v2143 = vmul.f32 %v2138, %v2142
      %2144 = vrot.lane.b32.xlu0 %v1549, 40
      %v2145 = vpop.permute.xlu0 %2144
      %v2148 = vsel %vm1555, %v2143, 0
      %2150 = vmatprep.subr.mxu0 0.0
      %2151 = vmatpush1.msra.mxu0 %v2145
      %2152 = vmatprep.subr.mxu0 0.0
      %2153 = vmatpush1.msra.mxu0 0.0
      %2154 = vmatprep.subr.mxu0 0.0
      %2155 = vmatpush1.msra.mxu0 0.0
      %2156 = vmatprep.subr.mxu0 0.0
      %2157 = vmatpush1.msra.mxu0 0.0
      %2158 = vmatprep.subr.mxu0 0.0
      %2159 = vmatpush1.msra.mxu0 0.0
      %2160 = vmatprep.subr.mxu0 0.0
      %2161 = vmatpush1.msra.mxu0 0.0
      %2162 = vmatprep.subr.mxu0 0.0
      %2163 = vmatpush1.msra.mxu0 0.0
      %2164 = vmatprep.subr.mxu0 0.0
      %2165 = vmatpush1.msra.mxu0 0.0
      %2166 = vmatprep.subr.mxu0 0.0
      %2167 = vmatpush1.msra.mxu0 0.0
      %2168 = vmatprep.subr.mxu0 0.0
      %2169 = vmatpush1.msra.mxu0 0.0
      %2170 = vmatprep.subr.mxu0 0.0
      %2171 = vmatpush1.msra.mxu0 0.0
      %2172 = vmatprep.subr.mxu0 0.0
      %2173 = vmatpush1.msra.mxu0 0.0
      %2174 = vmatprep.subr.mxu0 0.0
      %2175 = vmatpush1.msra.mxu0 0.0
      %2176 = vmatprep.subr.mxu0 0.0
      %2177 = vmatpush1.msra.mxu0 0.0
      %2178 = vmatprep.subr.mxu0 0.0
      %2179 = vmatpush1.msra.mxu0 0.0
      %2180 = vmatprep.subr.mxu0 0.0
      %2181 = vmatpush1.msra.mxu0 0.0
      %2182 = vmatprep.subr.mxu0 0.0
      %2183 = vmatpush1.msra.mxu0 0.0
      %2184 = vmatprep.subr.mxu0 0.0
      %2185 = vmatpush1.msra.mxu0 0.0
      %2186 = vmatprep.subr.mxu0 0.0
      %2187 = vmatpush1.msra.mxu0 0.0
      %2188 = vmatprep.subr.mxu0 0.0
      %2189 = vmatpush1.msra.mxu0 0.0
      %2190 = vmatprep.subr.mxu0 0.0
      %2191 = vmatpush1.msra.mxu0 0.0
      %2192 = vmatprep.subr.mxu0 0.0
      %2193 = vmatpush1.msra.mxu0 0.0
      %2194 = vmatprep.subr.mxu0 0.0
      %2195 = vmatpush1.msra.mxu0 0.0
      %2196 = vmatprep.subr.mxu0 0.0
      %2197 = vmatpush1.msra.mxu0 0.0
      %2198 = vmatprep.subr.mxu0 0.0
      %2199 = vmatpush1.msra.mxu0 0.0
      %2200 = vmatprep.subr.mxu0 0.0
      %2201 = vmatpush1.msra.mxu0 0.0
      %2202 = vmatprep.subr.mxu0 0.0
      %2203 = vmatpush1.msra.mxu0 0.0
      %2204 = vmatprep.subr.mxu0 0.0
      %2205 = vmatpush1.msra.mxu0 0.0
      %2206 = vmatprep.subr.mxu0 0.0
      %2207 = vmatpush1.msra.mxu0 0.0
      %2208 = vmatprep.subr.mxu0 0.0
      %2209 = vmatpush1.msra.mxu0 0.0
      %2210 = vmatprep.subr.mxu0 0.0
      %2211 = vmatpush1.msra.mxu0 0.0
      %2212 = vmatprep.subr.mxu0 0.0
      %2213 = vmatpush1.msra.mxu0 0.0
      %2214 = vmatprep.mubr.f32.mxu0 0.0
      %2215 = vmatmul.mubr.f32.gmra.mrb[0].mxu0 %v2148
      %v2216 = vpop.f32.mrb[0].mxu0
      %v2217 = vadd.f32 0.0, %v2216
      %v2218 = vpop.f32.mrb[0].mxu0
      %2219 = vdwg.mxu0
      %2221 = vrot.lane.b32.xlu0 %v1883, 8
      %v2222 = vpop.permute.xlu0 %2221
      %2225 = vrot.lane.b32.xlu0 %v2050, 16
      %v2226 = vpop.permute.xlu0 %2225
      %2229 = vrot.lane.b32.xlu0 %v2217, 24
      %v2230 = vpop.permute.xlu0 %2229
      %v2232 = vsel %vm1555, %v1716, %v2222
      %vm2233 = vcmask 130048
      %v2234 = vsel %vm2233, %v2232, %v2226
      %vm2235 = vcmask 195584
      %v2236 = vsel %vm2235, %v2234, %v2230
      %v2238 = vlaneseq
      %v2239 = vshrl.u32 %v2238, 7
      %v2240 = vsub.s32 0, %v2239
      %v2241 = vrot.slane %v1472, %v2240
      %v2244 = vsel %vm1434, %v2236, 0
      %2246 = vmatprep.subr.mxu0 0.0
      %2247 = vmatpush1.msra.mxu0 %v1468
      %2248 = vmatprep.subr.mxu0 0.0
      %2249 = vmatpush1.msra.mxu0 %v1469
      %2250 = vmatprep.subr.mxu0 0.0
      %2251 = vmatpush1.msra.mxu0 %v1470
      %2252 = vmatprep.subr.mxu0 0.0
      %2253 = vmatpush1.msra.mxu0 %v1471
      %2254 = vmatprep.subr.mxu0 0.0
      %2255 = vmatpush1.msra.mxu0 0.0
      %2256 = vmatprep.subr.mxu0 0.0
      %2257 = vmatpush1.msra.mxu0 0.0
      %2258 = vmatprep.subr.mxu0 0.0
      %2259 = vmatpush1.msra.mxu0 0.0
      %2260 = vmatprep.subr.mxu0 0.0
      %2261 = vmatpush1.msra.mxu0 0.0
      %2262 = vmatprep.subr.mxu0 0.0
      %2263 = vmatpush1.msra.mxu0 0.0
      %2264 = vmatprep.subr.mxu0 0.0
      %2265 = vmatpush1.msra.mxu0 0.0
      %2266 = vmatprep.subr.mxu0 0.0
      %2267 = vmatpush1.msra.mxu0 0.0
      %2268 = vmatprep.subr.mxu0 0.0
      %2269 = vmatpush1.msra.mxu0 0.0
      %2270 = vmatprep.subr.mxu0 0.0
      %2271 = vmatpush1.msra.mxu0 0.0
      %2272 = vmatprep.subr.mxu0 0.0
      %2273 = vmatpush1.msra.mxu0 0.0
      %2274 = vmatprep.subr.mxu0 0.0
      %2275 = vmatpush1.msra.mxu0 0.0
      %2276 = vmatprep.subr.mxu0 0.0
      %2277 = vmatpush1.msra.mxu0 0.0
      %2278 = vmatprep.subr.mxu0 0.0
      %2279 = vmatpush1.msra.mxu0 0.0
      %2280 = vmatprep.subr.mxu0 0.0
      %2281 = vmatpush1.msra.mxu0 0.0
      %2282 = vmatprep.subr.mxu0 0.0
      %2283 = vmatpush1.msra.mxu0 0.0
      %2284 = vmatprep.subr.mxu0 0.0
      %2285 = vmatpush1.msra.mxu0 0.0
      %2286 = vmatprep.subr.mxu0 0.0
      %2287 = vmatpush1.msra.mxu0 0.0
      %2288 = vmatprep.subr.mxu0 0.0
      %2289 = vmatpush1.msra.mxu0 0.0
      %2290 = vmatprep.subr.mxu0 0.0
      %2291 = vmatpush1.msra.mxu0 0.0
      %2292 = vmatprep.subr.mxu0 0.0
      %2293 = vmatpush1.msra.mxu0 0.0
      %2294 = vmatprep.subr.mxu0 0.0
      %2295 = vmatpush1.msra.mxu0 0.0
      %2296 = vmatprep.subr.mxu0 0.0
      %2297 = vmatpush1.msra.mxu0 0.0
      %2298 = vmatprep.subr.mxu0 0.0
      %2299 = vmatpush1.msra.mxu0 0.0
      %2300 = vmatprep.subr.mxu0 0.0
      %2301 = vmatpush1.msra.mxu0 0.0
      %2302 = vmatprep.subr.mxu0 0.0
      %2303 = vmatpush1.msra.mxu0 0.0
      %2304 = vmatprep.subr.mxu0 0.0
      %2305 = vmatpush1.msra.mxu0 0.0
      %2306 = vmatprep.subr.mxu0 0.0
      %2307 = vmatpush1.msra.mxu0 0.0
      %2308 = vmatprep.subr.mxu0 0.0
      %2309 = vmatpush1.msra.mxu0 0.0
      %2310 = vmatprep.mubr.f32.mxu0 0.0
      %2311 = vmatmul.mubr.f32.gmra.mrb[0].mxu0 %v2244
      %v2312 = vpop.f32.mrb[0].mxu0
      %v2313 = vadd.f32 %v2241, %v2312
      %v2314 = vpop.f32.mrb[0].mxu0
      %2315 = vdwg.mxu0
      %v2316 = vadd.f32 %v1415, %v2313
      %v2317 = vld [vmem:[%s1354] sm:$0x1]
      %v2318 = vld [vmem:[%s1357] sm:$0x1]
      %v2319 = vsel %vm1434, %v2316, 0.0
      %2320 = vadd.xlane.f32.xlu0 %v2319
      %v2321 = vpop.xlane.xlu0 %2320
      %v2322 = vmul.f32 %v2321, %v1438
      %v2323 = vsub.f32 %v2316, %v2322
      %v2324 = vmul.f32 %v2323, %v2323
      %v2325 = vsel %vm1434, %v2324, 0.0
      %2326 = vadd.xlane.f32.xlu0 %v2325
      %v2327 = vpop.xlane.xlu0 %2326
      %v2328 = vmul.f32 %v2327, %v1438
      %v2329 = vadd.f32 %v2328, 1e-05
      %v2330 = vrsqrt.pop %v2329
      %v2331 = vmul.f32 %v2323, %v2330
      %v2333 = vlaneseq
      %v2334 = vshrl.u32 %v2333, 7
      %v2335 = vsub.s32 0, %v2334
      %v2336 = vrot.slane %v2317, %v2335
      %v2338 = vmul.f32 %v2331, %v2336
      %v2340 = vlaneseq
      %v2341 = vshrl.u32 %v2340, 7
      %v2342 = vsub.s32 0, %v2341
      %v2343 = vrot.slane %v2318, %v2342
      %v2345 = vadd.f32 %v2338, %v2343
      %v2346 = vld [vmem:[%s1362] sm:$0xff]
      %v2347 = vld [vmem:[%s1362 + $0x8] sm:$0xff]
      %v2348 = vld [vmem:[%s1362 + $0x10] sm:$0xff]
      %v2349 = vld [vmem:[%s1362 + $0x18] sm:$0xff]
      %v2350 = vld [vmem:[%s1365] sm:$0x1]
      %v2351 = vld [vmem:[%s1370] sm:$0xff]
      %v2352 = vld [vmem:[%s1370 + $0x8] sm:$0xff]
      %v2353 = vld [vmem:[%s1370 + $0x10] sm:$0xff]
      %v2354 = vld [vmem:[%s1370 + $0x18] sm:$0xff]
      %v2355 = vld [vmem:[%s1373] sm:$0x1]
      %v2356 = vld [vmem:[%s1378] sm:$0xff]
      %v2357 = vld [vmem:[%s1378 + $0x8] sm:$0xff]
      %v2358 = vld [vmem:[%s1378 + $0x10] sm:$0xff]
      %v2359 = vld [vmem:[%s1378 + $0x18] sm:$0xff]
      %v2360 = vld [vmem:[%s1381] sm:$0x1]
      %v2362 = vlaneseq
      %v2363 = vshrl.u32 %v2362, 7
      %v2364 = vsub.s32 0, %v2363
      %v2365 = vrot.slane %v2350, %v2364
      %v2368 = vsel %vm1434, %v2345, 0
      %2370 = vmatprep.subr.mxu0 0.0
      %2371 = vmatpush1.msra.mxu0 %v2346
      %2372 = vmatprep.subr.mxu0 0.0
      %2373 = vmatpush1.msra.mxu0 %v2347
      %2374 = vmatprep.subr.mxu0 0.0
      %2375 = vmatpush1.msra.mxu0 %v2348
      %2376 = vmatprep.subr.mxu0 0.0
      %2377 = vmatpush1.msra.mxu0 %v2349
      %2378 = vmatprep.subr.mxu0 0.0
      %2379 = vmatpush1.msra.mxu0 0.0
      %2380 = vmatprep.subr.mxu0 0.0
      %2381 = vmatpush1.msra.mxu0 0.0
      %2382 = vmatprep.subr.mxu0 0.0
      %2383 = vmatpush1.msra.mxu0 0.0
      %2384 = vmatprep.subr.mxu0 0.0
      %2385 = vmatpush1.msra.mxu0 0.0
      %2386 = vmatprep.subr.mxu0 0.0
      %2387 = vmatpush1.msra.mxu0 0.0
      %2388 = vmatprep.subr.mxu0 0.0
      %2389 = vmatpush1.msra.mxu0 0.0
      %2390 = vmatprep.subr.mxu0 0.0
      %2391 = vmatpush1.msra.mxu0 0.0
      %2392 = vmatprep.subr.mxu0 0.0
      %2393 = vmatpush1.msra.mxu0 0.0
      %2394 = vmatprep.subr.mxu0 0.0
      %2395 = vmatpush1.msra.mxu0 0.0
      %2396 = vmatprep.subr.mxu0 0.0
      %2397 = vmatpush1.msra.mxu0 0.0
      %2398 = vmatprep.subr.mxu0 0.0
      %2399 = vmatpush1.msra.mxu0 0.0
      %2400 = vmatprep.subr.mxu0 0.0
      %2401 = vmatpush1.msra.mxu0 0.0
      %2402 = vmatprep.subr.mxu0 0.0
      %2403 = vmatpush1.msra.mxu0 0.0
      %2404 = vmatprep.subr.mxu0 0.0
      %2405 = vmatpush1.msra.mxu0 0.0
      %2406 = vmatprep.subr.mxu0 0.0
      %2407 = vmatpush1.msra.mxu0 0.0
      %2408 = vmatprep.subr.mxu0 0.0
      %2409 = vmatpush1.msra.mxu0 0.0
      %2410 = vmatprep.subr.mxu0 0.0
      %2411 = vmatpush1.msra.mxu0 0.0
      %2412 = vmatprep.subr.mxu0 0.0
      %2413 = vmatpush1.msra.mxu0 0.0
      %2414 = vmatprep.subr.mxu0 0.0
      %2415 = vmatpush1.msra.mxu0 0.0
      %2416 = vmatprep.subr.mxu0 0.0
      %2417 = vmatpush1.msra.mxu0 0.0
      %2418 = vmatprep.subr.mxu0 0.0
      %2419 = vmatpush1.msra.mxu0 0.0
      %2420 = vmatprep.subr.mxu0 0.0
      %2421 = vmatpush1.msra.mxu0 0.0
      %2422 = vmatprep.subr.mxu0 0.0
      %2423 = vmatpush1.msra.mxu0 0.0
      %2424 = vmatprep.subr.mxu0 0.0
      %2425 = vmatpush1.msra.mxu0 0.0
      %2426 = vmatprep.subr.mxu0 0.0
      %2427 = vmatpush1.msra.mxu0 0.0
      %2428 = vmatprep.subr.mxu0 0.0
      %2429 = vmatpush1.msra.mxu0 0.0
      %2430 = vmatprep.subr.mxu0 0.0
      %2431 = vmatpush1.msra.mxu0 0.0
      %2432 = vmatprep.subr.mxu0 0.0
      %2433 = vmatpush1.msra.mxu0 0.0
      %2434 = vmatprep.mubr.f32.mxu0 0.0
      %2435 = vmatmul.mubr.f32.gmra.mrb[0].mxu0 %v2368
      %v2436 = vpop.f32.mrb[0].mxu0
      %v2437 = vadd.f32 %v2365, %v2436
      %v2438 = vpop.f32.mrb[0].mxu0
      %2439 = vdwg.mxu0
      %v2441 = vlaneseq
      %v2442 = vshrl.u32 %v2441, 7
      %v2443 = vsub.s32 0, %v2442
      %v2444 = vrot.slane %v2355, %v2443
      %v2447 = vsel %vm1434, %v1416, 0
      %2449 = vmatprep.subr.mxu0 0.0
      %2450 = vmatpush1.msra.mxu0 %v2351
      %2451 = vmatprep.subr.mxu0 0.0
      %2452 = vmatpush1.msra.mxu0 %v2352
      %2453 = vmatprep.subr.mxu0 0.0
      %2454 = vmatpush1.msra.mxu0 %v2353
      %2455 = vmatprep.subr.mxu0 0.0
      %2456 = vmatpush1.msra.mxu0 %v2354
      %2457 = vmatprep.subr.mxu0 0.0
      %2458 = vmatpush1.msra.mxu0 0.0
      %2459 = vmatprep.subr.mxu0 0.0
      %2460 = vmatpush1.msra.mxu0 0.0
      %2461 = vmatprep.subr.mxu0 0.0
      %2462 = vmatpush1.msra.mxu0 0.0
      %2463 = vmatprep.subr.mxu0 0.0
      %2464 = vmatpush1.msra.mxu0 0.0
      %2465 = vmatprep.subr.mxu0 0.0
      %2466 = vmatpush1.msra.mxu0 0.0
      %2467 = vmatprep.subr.mxu0 0.0
      %2468 = vmatpush1.msra.mxu0 0.0
      %2469 = vmatprep.subr.mxu0 0.0
      %2470 = vmatpush1.msra.mxu0 0.0
      %2471 = vmatprep.subr.mxu0 0.0
      %2472 = vmatpush1.msra.mxu0 0.0
      %2473 = vmatprep.subr.mxu0 0.0
      %2474 = vmatpush1.msra.mxu0 0.0
      %2475 = vmatprep.subr.mxu0 0.0
      %2476 = vmatpush1.msra.mxu0 0.0
      %2477 = vmatprep.subr.mxu0 0.0
      %2478 = vmatpush1.msra.mxu0 0.0
      %2479 = vmatprep.subr.mxu0 0.0
      %2480 = vmatpush1.msra.mxu0 0.0
      %2481 = vmatprep.subr.mxu0 0.0
      %2482 = vmatpush1.msra.mxu0 0.0
      %2483 = vmatprep.subr.mxu0 0.0
      %2484 = vmatpush1.msra.mxu0 0.0
      %2485 = vmatprep.subr.mxu0 0.0
      %2486 = vmatpush1.msra.mxu0 0.0
      %2487 = vmatprep.subr.mxu0 0.0
      %2488 = vmatpush1.msra.mxu0 0.0
      %2489 = vmatprep.subr.mxu0 0.0
      %2490 = vmatpush1.msra.mxu0 0.0
      %2491 = vmatprep.subr.mxu0 0.0
      %2492 = vmatpush1.msra.mxu0 0.0
      %2493 = vmatprep.subr.mxu0 0.0
      %2494 = vmatpush1.msra.mxu0 0.0
      %2495 = vmatprep.subr.mxu0 0.0
      %2496 = vmatpush1.msra.mxu0 0.0
      %2497 = vmatprep.subr.mxu0 0.0
      %2498 = vmatpush1.msra.mxu0 0.0
      %2499 = vmatprep.subr.mxu0 0.0
      %2500 = vmatpush1.msra.mxu0 0.0
      %2501 = vmatprep.subr.mxu0 0.0
      %2502 = vmatpush1.msra.mxu0 0.0
      %2503 = vmatprep.subr.mxu0 0.0
      %2504 = vmatpush1.msra.mxu0 0.0
      %2505 = vmatprep.subr.mxu0 0.0
      %2506 = vmatpush1.msra.mxu0 0.0
      %2507 = vmatprep.subr.mxu0 0.0
      %2508 = vmatpush1.msra.mxu0 0.0
      %2509 = vmatprep.subr.mxu0 0.0
      %2510 = vmatpush1.msra.mxu0 0.0
      %2511 = vmatprep.subr.mxu0 0.0
      %2512 = vmatpush1.msra.mxu0 0.0
      %2513 = vmatprep.mubr.f32.mxu0 0.0
      %2514 = vmatmul.mubr.f32.gmra.mrb[0].mxu0 %v2447
      %v2515 = vpop.f32.mrb[0].mxu0
      %v2516 = vadd.f32 %v2444, %v2515
      %v2517 = vpop.f32.mrb[0].mxu0
      %2518 = vdwg.mxu0
      %v2520 = vsel %vm1555, %v2437, 0
      %v2523 = vsel %vm1555, %v2516, 0
      %2525 = vmatprep.subr.mxu0 0.0
      %2526 = vmatpush1.xpose.msra.mxu0 %v2523
      %2527 = vmatprep.subr.mxu0 0.0
      %2528 = vmatpush1.xpose.msra.mxu0 0.0
      %2529 = vmatprep.subr.mxu0 0.0
      %2530 = vmatpush1.xpose.msra.mxu0 0.0
      %2531 = vmatprep.subr.mxu0 0.0
      %2532 = vmatpush1.xpose.msra.mxu0 0.0
      %2533 = vmatprep.subr.mxu0 0.0
      %2534 = vmatpush1.xpose.msra.mxu0 0.0
      %2535 = vmatprep.subr.mxu0 0.0
      %2536 = vmatpush1.xpose.msra.mxu0 0.0
      %2537 = vmatprep.subr.mxu0 0.0
      %2538 = vmatpush1.xpose.msra.mxu0 0.0
      %2539 = vmatprep.subr.mxu0 0.0
      %2540 = vmatpush1.xpose.msra.mxu0 0.0
      %2541 = vmatprep.subr.mxu0 0.0
      %2542 = vmatpush1.xpose.msra.mxu0 0.0
      %2543 = vmatprep.subr.mxu0 0.0
      %2544 = vmatpush1.xpose.msra.mxu0 0.0
      %2545 = vmatprep.subr.mxu0 0.0
      %2546 = vmatpush1.xpose.msra.mxu0 0.0
      %2547 = vmatprep.subr.mxu0 0.0
      %2548 = vmatpush1.xpose.msra.mxu0 0.0
      %2549 = vmatprep.subr.mxu0 0.0
      %2550 = vmatpush1.xpose.msra.mxu0 0.0
      %2551 = vmatprep.subr.mxu0 0.0
      %2552 = vmatpush1.xpose.msra.mxu0 0.0
      %2553 = vmatprep.subr.mxu0 0.0
      %2554 = vmatpush1.xpose.msra.mxu0 0.0
      %2555 = vmatprep.subr.mxu0 0.0
      %2556 = vmatpush1.xpose.msra.mxu0 0.0
      %2557 = vmatprep.subr.mxu0 0.0
      %2558 = vmatpush1.xpose.msra.mxu0 0.0
      %2559 = vmatprep.subr.mxu0 0.0
      %2560 = vmatpush1.xpose.msra.mxu0 0.0
      %2561 = vmatprep.subr.mxu0 0.0
      %2562 = vmatpush1.xpose.msra.mxu0 0.0
      %2563 = vmatprep.subr.mxu0 0.0
      %2564 = vmatpush1.xpose.msra.mxu0 0.0
      %2565 = vmatprep.subr.mxu0 0.0
      %2566 = vmatpush1.xpose.msra.mxu0 0.0
      %2567 = vmatprep.subr.mxu0 0.0
      %2568 = vmatpush1.xpose.msra.mxu0 0.0
      %2569 = vmatprep.subr.mxu0 0.0
      %2570 = vmatpush1.xpose.msra.mxu0 0.0
      %2571 = vmatprep.subr.mxu0 0.0
      %2572 = vmatpush1.xpose.msra.mxu0 0.0
      %2573 = vmatprep.subr.mxu0 0.0
      %2574 = vmatpush1.xpose.msra.mxu0 0.0
      %2575 = vmatprep.subr.mxu0 0.0
      %2576 = vmatpush1.xpose.msra.mxu0 0.0
      %2577 = vmatprep.subr.mxu0 0.0
      %2578 = vmatpush1.xpose.msra.mxu0 0.0
      %2579 = vmatprep.subr.mxu0 0.0
      %2580 = vmatpush1.xpose.msra.mxu0 0.0
      %2581 = vmatprep.subr.mxu0 0.0
      %2582 = vmatpush1.xpose.msra.mxu0 0.0
      %2583 = vmatprep.subr.mxu0 0.0
      %2584 = vmatpush1.xpose.msra.mxu0 0.0
      %2585 = vmatprep.subr.mxu0 0.0
      %2586 = vmatpush1.xpose.msra.mxu0 0.0
      %2587 = vmatprep.subr.mxu0 0.0
      %2588 = vmatpush1.xpose.msra.mxu0 0.0
      %2589 = vmatprep.mubr.f32.mxu0 0.0
      %2590 = vmatmul.mubr.f32.gmra.mrb[0].mxu0 %v2520
      %v2591 = vpop.f32.mrb[0].mxu0
      %v2592 = vadd.f32 0.0, %v2591
      %v2593 = vpop.f32.mrb[0].mxu0
      %2594 = vdwg.mxu0
      %v2595 = vmul.f32 %v2592, 0.35355338
      %v2597 = vlaneseq
      %v2598 = vshrl.u32 %v2597, 7
      %v2599 = vsub.s32 0, %v2598
      %v2600 = vrot.slane %v1431, %v2599
      %v2602 = vadd.f32 %v2595, %v2600
      %v2603 = vsel %vm1555, %v2602, -inf
      %2604 = vmax.xlane.f32.xlu0 %v2603
      %v2605 = vpop.xlane.xlu0 %2604
      %v2606 = vsub.f32 %v2602, %v2605
      %v2607 = vmul.f32 %v2606, 1.442695
      %v2608 = vpow.pop %v2607
      %v2609 = vsel %vm1555, %v2608, 0.0
      %2610 = vadd.xlane.f32.xlu0 %v2609
      %v2611 = vpop.xlane.xlu0 %2610
      %v2612 = vrcp.pop %v2611
      %v2613 = vmul.f32 %v2608, %v2612
      %2614 = vrot.lane.b32.xlu0 %v2516, 96
      %v2615 = vpop.permute.xlu0 %2614
      %v2618 = vsel %vm1555, %v2613, 0
      %2620 = vmatprep.subr.mxu0 0.0
      %2621 = vmatpush1.msra.mxu0 %v2615
      %2622 = vmatprep.subr.mxu0 0.0
      %2623 = vmatpush1.msra.mxu0 0.0
      %2624 = vmatprep.subr.mxu0 0.0
      %2625 = vmatpush1.msra.mxu0 0.0
      %2626 = vmatprep.subr.mxu0 0.0
      %2627 = vmatpush1.msra.mxu0 0.0
      %2628 = vmatprep.subr.mxu0 0.0
      %2629 = vmatpush1.msra.mxu0 0.0
      %2630 = vmatprep.subr.mxu0 0.0
      %2631 = vmatpush1.msra.mxu0 0.0
      %2632 = vmatprep.subr.mxu0 0.0
      %2633 = vmatpush1.msra.mxu0 0.0
      %2634 = vmatprep.subr.mxu0 0.0
      %2635 = vmatpush1.msra.mxu0 0.0
      %2636 = vmatprep.subr.mxu0 0.0
      %2637 = vmatpush1.msra.mxu0 0.0
      %2638 = vmatprep.subr.mxu0 0.0
      %2639 = vmatpush1.msra.mxu0 0.0
      %2640 = vmatprep.subr.mxu0 0.0
      %2641 = vmatpush1.msra.mxu0 0.0
      %2642 = vmatprep.subr.mxu0 0.0
      %2643 = vmatpush1.msra.mxu0 0.0
      %2644 = vmatprep.subr.mxu0 0.0
      %2645 = vmatpush1.msra.mxu0 0.0
      %2646 = vmatprep.subr.mxu0 0.0
      %2647 = vmatpush1.msra.mxu0 0.0
      %2648 = vmatprep.subr.mxu0 0.0
      %2649 = vmatpush1.msra.mxu0 0.0
      %2650 = vmatprep.subr.mxu0 0.0
      %2651 = vmatpush1.msra.mxu0 0.0
      %2652 = vmatprep.subr.mxu0 0.0
      %2653 = vmatpush1.msra.mxu0 0.0
      %2654 = vmatprep.subr.mxu0 0.0
      %2655 = vmatpush1.msra.mxu0 0.0
      %2656 = vmatprep.subr.mxu0 0.0
      %2657 = vmatpush1.msra.mxu0 0.0
      %2658 = vmatprep.subr.mxu0 0.0
      %2659 = vmatpush1.msra.mxu0 0.0
      %2660 = vmatprep.subr.mxu0 0.0
      %2661 = vmatpush1.msra.mxu0 0.0
      %2662 = vmatprep.subr.mxu0 0.0
      %2663 = vmatpush1.msra.mxu0 0.0
      %2664 = vmatprep.subr.mxu0 0.0
      %2665 = vmatpush1.msra.mxu0 0.0
      %2666 = vmatprep.subr.mxu0 0.0
      %2667 = vmatpush1.msra.mxu0 0.0
      %2668 = vmatprep.subr.mxu0 0.0
      %2669 = vmatpush1.msra.mxu0 0.0
      %2670 = vmatprep.subr.mxu0 0.0
      %2671 = vmatpush1.msra.mxu0 0.0
      %2672 = vmatprep.subr.mxu0 0.0
      %2673 = vmatpush1.msra.mxu0 0.0
      %2674 = vmatprep.subr.mxu0 0.0
      %2675 = vmatpush1.msra.mxu0 0.0
      %2676 = vmatprep.subr.mxu0 0.0
      %2677 = vmatpush1.msra.mxu0 0.0
      %2678 = vmatprep.subr.mxu0 0.0
      %2679 = vmatpush1.msra.mxu0 0.0
      %2680 = vmatprep.subr.mxu0 0.0
      %2681 = vmatpush1.msra.mxu0 0.0
      %2682 = vmatprep.subr.mxu0 0.0
      %2683 = vmatpush1.msra.mxu0 0.0
      %2684 = vmatprep.mubr.f32.mxu0 0.0
      %2685 = vmatmul.mubr.f32.gmra.mrb[0].mxu0 %v2618
      %v2686 = vpop.f32.mrb[0].mxu0
      %v2687 = vadd.f32 0.0, %v2686
      %v2688 = vpop.f32.mrb[0].mxu0
      %2689 = vdwg.mxu0
      %2690 = vrot.lane.b32.xlu0 %v2437, 120
      %v2691 = vpop.permute.xlu0 %2690
      %2692 = vrot.lane.b32.xlu0 %v2516, 120
      %v2693 = vpop.permute.xlu0 %2692
      %v2694 = vsel %vm1555, %v2691, 0
      %v2696 = vsel %vm1555, %v2693, 0
      %2698 = vmatprep.subr.mxu0 0.0
      %2699 = vmatpush1.xpose.msra.mxu0 %v2696
      %2700 = vmatprep.subr.mxu0 0.0
      %2701 = vmatpush1.xpose.msra.mxu0 0.0
      %2702 = vmatprep.subr.mxu0 0.0
      %2703 = vmatpush1.xpose.msra.mxu0 0.0
      %2704 = vmatprep.subr.mxu0 0.0
      %2705 = vmatpush1.xpose.msra.mxu0 0.0
      %2706 = vmatprep.subr.mxu0 0.0
      %2707 = vmatpush1.xpose.msra.mxu0 0.0
      %2708 = vmatprep.subr.mxu0 0.0
      %2709 = vmatpush1.xpose.msra.mxu0 0.0
      %2710 = vmatprep.subr.mxu0 0.0
      %2711 = vmatpush1.xpose.msra.mxu0 0.0
      %2712 = vmatprep.subr.mxu0 0.0
      %2713 = vmatpush1.xpose.msra.mxu0 0.0
      %2714 = vmatprep.subr.mxu0 0.0
      %2715 = vmatpush1.xpose.msra.mxu0 0.0
      %2716 = vmatprep.subr.mxu0 0.0
      %2717 = vmatpush1.xpose.msra.mxu0 0.0
      %2718 = vmatprep.subr.mxu0 0.0
      %2719 = vmatpush1.xpose.msra.mxu0 0.0
      %2720 = vmatprep.subr.mxu0 0.0
      %2721 = vmatpush1.xpose.msra.mxu0 0.0
      %2722 = vmatprep.subr.mxu0 0.0
      %2723 = vmatpush1.xpose.msra.mxu0 0.0
      %2724 = vmatprep.subr.mxu0 0.0
      %2725 = vmatpush1.xpose.msra.mxu0 0.0
      %2726 = vmatprep.subr.mxu0 0.0
      %2727 = vmatpush1.xpose.msra.mxu0 0.0
      %2728 = vmatprep.subr.mxu0 0.0
      %2729 = vmatpush1.xpose.msra.mxu0 0.0
      %2730 = vmatprep.subr.mxu0 0.0
      %2731 = vmatpush1.xpose.msra.mxu0 0.0
      %2732 = vmatprep.subr.mxu0 0.0
      %2733 = vmatpush1.xpose.msra.mxu0 0.0
      %2734 = vmatprep.subr.mxu0 0.0
      %2735 = vmatpush1.xpose.msra.mxu0 0.0
      %2736 = vmatprep.subr.mxu0 0.0
      %2737 = vmatpush1.xpose.msra.mxu0 0.0
      %2738 = vmatprep.subr.mxu0 0.0
      %2739 = vmatpush1.xpose.msra.mxu0 0.0
      %2740 = vmatprep.subr.mxu0 0.0
      %2741 = vmatpush1.xpose.msra.mxu0 0.0
      %2742 = vmatprep.subr.mxu0 0.0
      %2743 = vmatpush1.xpose.msra.mxu0 0.0
      %2744 = vmatprep.subr.mxu0 0.0
      %2745 = vmatpush1.xpose.msra.mxu0 0.0
      %2746 = vmatprep.subr.mxu0 0.0
      %2747 = vmatpush1.xpose.msra.mxu0 0.0
      %2748 = vmatprep.subr.mxu0 0.0
      %2749 = vmatpush1.xpose.msra.mxu0 0.0
      %2750 = vmatprep.subr.mxu0 0.0
      %2751 = vmatpush1.xpose.msra.mxu0 0.0
      %2752 = vmatprep.subr.mxu0 0.0
      %2753 = vmatpush1.xpose.msra.mxu0 0.0
      %2754 = vmatprep.subr.mxu0 0.0
      %2755 = vmatpush1.xpose.msra.mxu0 0.0
      %2756 = vmatprep.subr.mxu0 0.0
      %2757 = vmatpush1.xpose.msra.mxu0 0.0
      %2758 = vmatprep.subr.mxu0 0.0
      %2759 = vmatpush1.xpose.msra.mxu0 0.0
      %2760 = vmatprep.subr.mxu0 0.0
      %2761 = vmatpush1.xpose.msra.mxu0 0.0
      %2762 = vmatprep.mubr.f32.mxu0 0.0
      %2763 = vmatmul.mubr.f32.gmra.mrb[0].mxu0 %v2694
      %v2764 = vpop.f32.mrb[0].mxu0
      %v2765 = vadd.f32 0.0, %v2764
      %v2766 = vpop.f32.mrb[0].mxu0
      %2767 = vdwg.mxu0
      %v2768 = vmul.f32 %v2765, 0.35355338
      %v2769 = vadd.f32 %v2768, %v2600
      %v2770 = vsel %vm1555, %v2769, -inf
      %2771 = vmax.xlane.f32.xlu0 %v2770
      %v2772 = vpop.xlane.xlu0 %2771
      %v2773 = vsub.f32 %v2769, %v2772
      %v2774 = vmul.f32 %v2773, 1.442695
      %v2775 = vpow.pop %v2774
      %v2776 = vsel %vm1555, %v2775, 0.0
      %2777 = vadd.xlane.f32.xlu0 %v2776
      %v2778 = vpop.xlane.xlu0 %2777
      %v2779 = vrcp.pop %v2778
      %v2780 = vmul.f32 %v2775, %v2779
      %2781 = vrot.lane.b32.xlu0 %v2516, 88
      %v2782 = vpop.permute.xlu0 %2781
      %v2785 = vsel %vm1555, %v2780, 0
      %2787 = vmatprep.subr.mxu0 0.0
      %2788 = vmatpush1.msra.mxu0 %v2782
      %2789 = vmatprep.subr.mxu0 0.0
      %2790 = vmatpush1.msra.mxu0 0.0
      %2791 = vmatprep.subr.mxu0 0.0
      %2792 = vmatpush1.msra.mxu0 0.0
      %2793 = vmatprep.subr.mxu0 0.0
      %2794 = vmatpush1.msra.mxu0 0.0
      %2795 = vmatprep.subr.mxu0 0.0
      %2796 = vmatpush1.msra.mxu0 0.0
      %2797 = vmatprep.subr.mxu0 0.0
      %2798 = vmatpush1.msra.mxu0 0.0
      %2799 = vmatprep.subr.mxu0 0.0
      %2800 = vmatpush1.msra.mxu0 0.0
      %2801 = vmatprep.subr.mxu0 0.0
      %2802 = vmatpush1.msra.mxu0 0.0
      %2803 = vmatprep.subr.mxu0 0.0
      %2804 = vmatpush1.msra.mxu0 0.0
      %2805 = vmatprep.subr.mxu0 0.0
      %2806 = vmatpush1.msra.mxu0 0.0
      %2807 = vmatprep.subr.mxu0 0.0
      %2808 = vmatpush1.msra.mxu0 0.0
      %2809 = vmatprep.subr.mxu0 0.0
      %2810 = vmatpush1.msra.mxu0 0.0
      %2811 = vmatprep.subr.mxu0 0.0
      %2812 = vmatpush1.msra.mxu0 0.0
      %2813 = vmatprep.subr.mxu0 0.0
      %2814 = vmatpush1.msra.mxu0 0.0
      %2815 = vmatprep.subr.mxu0 0.0
      %2816 = vmatpush1.msra.mxu0 0.0
      %2817 = vmatprep.subr.mxu0 0.0
      %2818 = vmatpush1.msra.mxu0 0.0
      %2819 = vmatprep.subr.mxu0 0.0
      %2820 = vmatpush1.msra.mxu0 0.0
      %2821 = vmatprep.subr.mxu0 0.0
      %2822 = vmatpush1.msra.mxu0 0.0
      %2823 = vmatprep.subr.mxu0 0.0
      %2824 = vmatpush1.msra.mxu0 0.0
      %2825 = vmatprep.subr.mxu0 0.0
      %2826 = vmatpush1.msra.mxu0 0.0
      %2827 = vmatprep.subr.mxu0 0.0
      %2828 = vmatpush1.msra.mxu0 0.0
      %2829 = vmatprep.subr.mxu0 0.0
      %2830 = vmatpush1.msra.mxu0 0.0
      %2831 = vmatprep.subr.mxu0 0.0
      %2832 = vmatpush1.msra.mxu0 0.0
      %2833 = vmatprep.subr.mxu0 0.0
      %2834 = vmatpush1.msra.mxu0 0.0
      %2835 = vmatprep.subr.mxu0 0.0
      %2836 = vmatpush1.msra.mxu0 0.0
      %2837 = vmatprep.subr.mxu0 0.0
      %2838 = vmatpush1.msra.mxu0 0.0
      %2839 = vmatprep.subr.mxu0 0.0
      %2840 = vmatpush1.msra.mxu0 0.0
      %2841 = vmatprep.subr.mxu0 0.0
      %2842 = vmatpush1.msra.mxu0 0.0
      %2843 = vmatprep.subr.mxu0 0.0
      %2844 = vmatpush1.msra.mxu0 0.0
      %2845 = vmatprep.subr.mxu0 0.0
      %2846 = vmatpush1.msra.mxu0 0.0
      %2847 = vmatprep.subr.mxu0 0.0
      %2848 = vmatpush1.msra.mxu0 0.0
      %2849 = vmatprep.subr.mxu0 0.0
      %2850 = vmatpush1.msra.mxu0 0.0
      %2851 = vmatprep.mubr.f32.mxu0 0.0
      %2852 = vmatmul.mubr.f32.gmra.mrb[0].mxu0 %v2785
      %v2853 = vpop.f32.mrb[0].mxu0
      %v2854 = vadd.f32 0.0, %v2853
      %v2855 = vpop.f32.mrb[0].mxu0
      %2856 = vdwg.mxu0
      %v2857 = vadd.f32 %v2613, %v2780
      %2858 = vrot.lane.b32.xlu0 %v2437, 112
      %v2859 = vpop.permute.xlu0 %2858
      %2860 = vrot.lane.b32.xlu0 %v2516, 112
      %v2861 = vpop.permute.xlu0 %2860
      %v2862 = vsel %vm1555, %v2859, 0
      %v2864 = vsel %vm1555, %v2861, 0
      %2866 = vmatprep.subr.mxu0 0.0
      %2867 = vmatpush1.xpose.msra.mxu0 %v2864
      %2868 = vmatprep.subr.mxu0 0.0
      %2869 = vmatpush1.xpose.msra.mxu0 0.0
      %2870 = vmatprep.subr.mxu0 0.0
      %2871 = vmatpush1.xpose.msra.mxu0 0.0
      %2872 = vmatprep.subr.mxu0 0.0
      %2873 = vmatpush1.xpose.msra.mxu0 0.0
      %2874 = vmatprep.subr.mxu0 0.0
      %2875 = vmatpush1.xpose.msra.mxu0 0.0
      %2876 = vmatprep.subr.mxu0 0.0
      %2877 = vmatpush1.xpose.msra.mxu0 0.0
      %2878 = vmatprep.subr.mxu0 0.0
      %2879 = vmatpush1.xpose.msra.mxu0 0.0
      %2880 = vmatprep.subr.mxu0 0.0
      %2881 = vmatpush1.xpose.msra.mxu0 0.0
      %2882 = vmatprep.subr.mxu0 0.0
      %2883 = vmatpush1.xpose.msra.mxu0 0.0
      %2884 = vmatprep.subr.mxu0 0.0
      %2885 = vmatpush1.xpose.msra.mxu0 0.0
      %2886 = vmatprep.subr.mxu0 0.0
      %2887 = vmatpush1.xpose.msra.mxu0 0.0
      %2888 = vmatprep.subr.mxu0 0.0
      %2889 = vmatpush1.xpose.msra.mxu0 0.0
      %2890 = vmatprep.subr.mxu0 0.0
      %2891 = vmatpush1.xpose.msra.mxu0 0.0
      %2892 = vmatprep.subr.mxu0 0.0
      %2893 = vmatpush1.xpose.msra.mxu0 0.0
      %2894 = vmatprep.subr.mxu0 0.0
      %2895 = vmatpush1.xpose.msra.mxu0 0.0
      %2896 = vmatprep.subr.mxu0 0.0
      %2897 = vmatpush1.xpose.msra.mxu0 0.0
      %2898 = vmatprep.subr.mxu0 0.0
      %2899 = vmatpush1.xpose.msra.mxu0 0.0
      %2900 = vmatprep.subr.mxu0 0.0
      %2901 = vmatpush1.xpose.msra.mxu0 0.0
      %2902 = vmatprep.subr.mxu0 0.0
      %2903 = vmatpush1.xpose.msra.mxu0 0.0
      %2904 = vmatprep.subr.mxu0 0.0
      %2905 = vmatpush1.xpose.msra.mxu0 0.0
      %2906 = vmatprep.subr.mxu0 0.0
      %2907 = vmatpush1.xpose.msra.mxu0 0.0
      %2908 = vmatprep.subr.mxu0 0.0
      %2909 = vmatpush1.xpose.msra.mxu0 0.0
      %2910 = vmatprep.subr.mxu0 0.0
      %2911 = vmatpush1.xpose.msra.mxu0 0.0
      %2912 = vmatprep.subr.mxu0 0.0
      %2913 = vmatpush1.xpose.msra.mxu0 0.0
      %2914 = vmatprep.subr.mxu0 0.0
      %2915 = vmatpush1.xpose.msra.mxu0 0.0
      %2916 = vmatprep.subr.mxu0 0.0
      %2917 = vmatpush1.xpose.msra.mxu0 0.0
      %2918 = vmatprep.subr.mxu0 0.0
      %2919 = vmatpush1.xpose.msra.mxu0 0.0
      %2920 = vmatprep.subr.mxu0 0.0
      %2921 = vmatpush1.xpose.msra.mxu0 0.0
      %2922 = vmatprep.subr.mxu0 0.0
      %2923 = vmatpush1.xpose.msra.mxu0 0.0
      %2924 = vmatprep.subr.mxu0 0.0
      %2925 = vmatpush1.xpose.msra.mxu0 0.0
      %2926 = vmatprep.subr.mxu0 0.0
      %2927 = vmatpush1.xpose.msra.mxu0 0.0
      %2928 = vmatprep.subr.mxu0 0.0
      %2929 = vmatpush1.xpose.msra.mxu0 0.0
      %2930 = vmatprep.mubr.f32.mxu0 0.0
      %2931 = vmatmul.mubr.f32.gmra.mrb[0].mxu0 %v2862
      %v2932 = vpop.f32.mrb[0].mxu0
      %v2933 = vadd.f32 0.0, %v2932
      %v2934 = vpop.f32.mrb[0].mxu0
      %2935 = vdwg.mxu0
      %v2936 = vmul.f32 %v2933, 0.35355338
      %v2937 = vadd.f32 %v2936, %v2600
      %v2938 = vsel %vm1555, %v2937, -inf
      %2939 = vmax.xlane.f32.xlu0 %v2938
      %v2940 = vpop.xlane.xlu0 %2939
      %v2941 = vsub.f32 %v2937, %v2940
      %v2942 = vmul.f32 %v2941, 1.442695
      %v2943 = vpow.pop %v2942
      %v2944 = vsel %vm1555, %v2943, 0.0
      %2945 = vadd.xlane.f32.xlu0 %v2944
      %v2946 = vpop.xlane.xlu0 %2945
      %v2947 = vrcp.pop %v2946
      %v2948 = vmul.f32 %v2943, %v2947
      %2949 = vrot.lane.b32.xlu0 %v2516, 80
      %v2950 = vpop.permute.xlu0 %2949
      %v2953 = vsel %vm1555, %v2948, 0
      %2955 = vmatprep.subr.mxu0 0.0
      %2956 = vmatpush1.msra.mxu0 %v2950
      %2957 = vmatprep.subr.mxu0 0.0
      %2958 = vmatpush1.msra.mxu0 0.0
      %2959 = vmatprep.subr.mxu0 0.0
      %2960 = vmatpush1.msra.mxu0 0.0
      %2961 = vmatprep.subr.mxu0 0.0
      %2962 = vmatpush1.msra.mxu0 0.0
      %2963 = vmatprep.subr.mxu0 0.0
      %2964 = vmatpush1.msra.mxu0 0.0
      %2965 = vmatprep.subr.mxu0 0.0
      %2966 = vmatpush1.msra.mxu0 0.0
      %2967 = vmatprep.subr.mxu0 0.0
      %2968 = vmatpush1.msra.mxu0 0.0
      %2969 = vmatprep.subr.mxu0 0.0
      %2970 = vmatpush1.msra.mxu0 0.0
      %2971 = vmatprep.subr.mxu0 0.0
      %2972 = vmatpush1.msra.mxu0 0.0
      %2973 = vmatprep.subr.mxu0 0.0
      %2974 = vmatpush1.msra.mxu0 0.0
      %2975 = vmatprep.subr.mxu0 0.0
      %2976 = vmatpush1.msra.mxu0 0.0
      %2977 = vmatprep.subr.mxu0 0.0
      %2978 = vmatpush1.msra.mxu0 0.0
      %2979 = vmatprep.subr.mxu0 0.0
      %2980 = vmatpush1.msra.mxu0 0.0
      %2981 = vmatprep.subr.mxu0 0.0
      %2982 = vmatpush1.msra.mxu0 0.0
      %2983 = vmatprep.subr.mxu0 0.0
      %2984 = vmatpush1.msra.mxu0 0.0
      %2985 = vmatprep.subr.mxu0 0.0
      %2986 = vmatpush1.msra.mxu0 0.0
      %2987 = vmatprep.subr.mxu0 0.0
      %2988 = vmatpush1.msra.mxu0 0.0
      %2989 = vmatprep.subr.mxu0 0.0
      %2990 = vmatpush1.msra.mxu0 0.0
      %2991 = vmatprep.subr.mxu0 0.0
      %2992 = vmatpush1.msra.mxu0 0.0
      %2993 = vmatprep.subr.mxu0 0.0
      %2994 = vmatpush1.msra.mxu0 0.0
      %2995 = vmatprep.subr.mxu0 0.0
      %2996 = vmatpush1.msra.mxu0 0.0
      %2997 = vmatprep.subr.mxu0 0.0
      %2998 = vmatpush1.msra.mxu0 0.0
      %2999 = vmatprep.subr.mxu0 0.0
      %3000 = vmatpush1.msra.mxu0 0.0
      %3001 = vmatprep.subr.mxu0 0.0
      %3002 = vmatpush1.msra.mxu0 0.0
      %3003 = vmatprep.subr.mxu0 0.0
      %3004 = vmatpush1.msra.mxu0 0.0
      %3005 = vmatprep.subr.mxu0 0.0
      %3006 = vmatpush1.msra.mxu0 0.0
      %3007 = vmatprep.subr.mxu0 0.0
      %3008 = vmatpush1.msra.mxu0 0.0
      %3009 = vmatprep.subr.mxu0 0.0
      %3010 = vmatpush1.msra.mxu0 0.0
      %3011 = vmatprep.subr.mxu0 0.0
      %3012 = vmatpush1.msra.mxu0 0.0
      %3013 = vmatprep.subr.mxu0 0.0
      %3014 = vmatpush1.msra.mxu0 0.0
      %3015 = vmatprep.subr.mxu0 0.0
      %3016 = vmatpush1.msra.mxu0 0.0
      %3017 = vmatprep.subr.mxu0 0.0
      %3018 = vmatpush1.msra.mxu0 0.0
      %3019 = vmatprep.mubr.f32.mxu0 0.0
      %3020 = vmatmul.mubr.f32.gmra.mrb[0].mxu0 %v2953
      %v3021 = vpop.f32.mrb[0].mxu0
      %v3022 = vadd.f32 0.0, %v3021
      %v3023 = vpop.f32.mrb[0].mxu0
      %3024 = vdwg.mxu0
      %v3025 = vadd.f32 %v2857, %v2948
      %3026 = vrot.lane.b32.xlu0 %v2437, 104
      %v3027 = vpop.permute.xlu0 %3026
      %3028 = vrot.lane.b32.xlu0 %v2516, 104
      %v3029 = vpop.permute.xlu0 %3028
      %v3030 = vsel %vm1555, %v3027, 0
      %v3032 = vsel %vm1555, %v3029, 0
      %3034 = vmatprep.subr.mxu0 0.0
      %3035 = vmatpush1.xpose.msra.mxu0 %v3032
      %3036 = vmatprep.subr.mxu0 0.0
      %3037 = vmatpush1.xpose.msra.mxu0 0.0
      %3038 = vmatprep.subr.mxu0 0.0
      %3039 = vmatpush1.xpose.msra.mxu0 0.0
      %3040 = vmatprep.subr.mxu0 0.0
      %3041 = vmatpush1.xpose.msra.mxu0 0.0
      %3042 = vmatprep.subr.mxu0 0.0
      %3043 = vmatpush1.xpose.msra.mxu0 0.0
      %3044 = vmatprep.subr.mxu0 0.0
      %3045 = vmatpush1.xpose.msra.mxu0 0.0
      %3046 = vmatprep.subr.mxu0 0.0
      %3047 = vmatpush1.xpose.msra.mxu0 0.0
      %3048 = vmatprep.subr.mxu0 0.0
      %3049 = vmatpush1.xpose.msra.mxu0 0.0
      %3050 = vmatprep.subr.mxu0 0.0
      %3051 = vmatpush1.xpose.msra.mxu0 0.0
      %3052 = vmatprep.subr.mxu0 0.0
      %3053 = vmatpush1.xpose.msra.mxu0 0.0
      %3054 = vmatprep.subr.mxu0 0.0
      %3055 = vmatpush1.xpose.msra.mxu0 0.0
      %3056 = vmatprep.subr.mxu0 0.0
      %3057 = vmatpush1.xpose.msra.mxu0 0.0
      %3058 = vmatprep.subr.mxu0 0.0
      %3059 = vmatpush1.xpose.msra.mxu0 0.0
      %3060 = vmatprep.subr.mxu0 0.0
      %3061 = vmatpush1.xpose.msra.mxu0 0.0
      %3062 = vmatprep.subr.mxu0 0.0
      %3063 = vmatpush1.xpose.msra.mxu0 0.0
      %3064 = vmatprep.subr.mxu0 0.0
      %3065 = vmatpush1.xpose.msra.mxu0 0.0
      %3066 = vmatprep.subr.mxu0 0.0
      %3067 = vmatpush1.xpose.msra.mxu0 0.0
      %3068 = vmatprep.subr.mxu0 0.0
      %3069 = vmatpush1.xpose.msra.mxu0 0.0
      %3070 = vmatprep.subr.mxu0 0.0
      %3071 = vmatpush1.xpose.msra.mxu0 0.0
      %3072 = vmatprep.subr.mxu0 0.0
      %3073 = vmatpush1.xpose.msra.mxu0 0.0
      %3074 = vmatprep.subr.mxu0 0.0
      %3075 = vmatpush1.xpose.msra.mxu0 0.0
      %3076 = vmatprep.subr.mxu0 0.0
      %3077 = vmatpush1.xpose.msra.mxu0 0.0
      %3078 = vmatprep.subr.mxu0 0.0
      %3079 = vmatpush1.xpose.msra.mxu0 0.0
      %3080 = vmatprep.subr.mxu0 0.0
      %3081 = vmatpush1.xpose.msra.mxu0 0.0
      %3082 = vmatprep.subr.mxu0 0.0
      %3083 = vmatpush1.xpose.msra.mxu0 0.0
      %3084 = vmatprep.subr.mxu0 0.0
      %3085 = vmatpush1.xpose.msra.mxu0 0.0
      %3086 = vmatprep.subr.mxu0 0.0
      %3087 = vmatpush1.xpose.msra.mxu0 0.0
      %3088 = vmatprep.subr.mxu0 0.0
      %3089 = vmatpush1.xpose.msra.mxu0 0.0
      %3090 = vmatprep.subr.mxu0 0.0
      %3091 = vmatpush1.xpose.msra.mxu0 0.0
      %3092 = vmatprep.subr.mxu0 0.0
      %3093 = vmatpush1.xpose.msra.mxu0 0.0
      %3094 = vmatprep.subr.mxu0 0.0
      %3095 = vmatpush1.xpose.msra.mxu0 0.0
      %3096 = vmatprep.subr.mxu0 0.0
      %3097 = vmatpush1.xpose.msra.mxu0 0.0
      %3098 = vmatprep.mubr.f32.mxu0 0.0
      %3099 = vmatmul.mubr.f32.gmra.mrb[0].mxu0 %v3030
      %v3100 = vpop.f32.mrb[0].mxu0
      %v3101 = vadd.f32 0.0, %v3100
      %v3102 = vpop.f32.mrb[0].mxu0
      %3103 = vdwg.mxu0
      %v3104 = vmul.f32 %v3101, 0.35355338
      %v3105 = vadd.f32 %v3104, %v2600
      %v3106 = vsel %vm1555, %v3105, -inf
      %3107 = vmax.xlane.f32.xlu0 %v3106
      %v3108 = vpop.xlane.xlu0 %3107
      %v3109 = vsub.f32 %v3105, %v3108
      %v3110 = vmul.f32 %v3109, 1.442695
      %v3111 = vpow.pop %v3110
      %v3112 = vsel %vm1555, %v3111, 0.0
      %3113 = vadd.xlane.f32.xlu0 %v3112
      %v3114 = vpop.xlane.xlu0 %3113
      %v3115 = vrcp.pop %v3114
      %v3116 = vmul.f32 %v3111, %v3115
      %3117 = vrot.lane.b32.xlu0 %v2516, 72
      %v3118 = vpop.permute.xlu0 %3117
      %v3121 = vsel %vm1555, %v3116, 0
      %3123 = vmatprep.subr.mxu0 0.0
      %3124 = vmatpush1.msra.mxu0 %v3118
      %3125 = vmatprep.subr.mxu0 0.0
      %3126 = vmatpush1.msra.mxu0 0.0
      %3127 = vmatprep.subr.mxu0 0.0
      %3128 = vmatpush1.msra.mxu0 0.0
      %3129 = vmatprep.subr.mxu0 0.0
      %3130 = vmatpush1.msra.mxu0 0.0
      %3131 = vmatprep.subr.mxu0 0.0
      %3132 = vmatpush1.msra.mxu0 0.0
      %3133 = vmatprep.subr.mxu0 0.0
      %3134 = vmatpush1.msra.mxu0 0.0
      %3135 = vmatprep.subr.mxu0 0.0
      %3136 = vmatpush1.msra.mxu0 0.0
      %3137 = vmatprep.subr.mxu0 0.0
      %3138 = vmatpush1.msra.mxu0 0.0
      %3139 = vmatprep.subr.mxu0 0.0
      %3140 = vmatpush1.msra.mxu0 0.0
      %3141 = vmatprep.subr.mxu0 0.0
      %3142 = vmatpush1.msra.mxu0 0.0
      %3143 = vmatprep.subr.mxu0 0.0
      %3144 = vmatpush1.msra.mxu0 0.0
      %3145 = vmatprep.subr.mxu0 0.0
      %3146 = vmatpush1.msra.mxu0 0.0
      %3147 = vmatprep.subr.mxu0 0.0
      %3148 = vmatpush1.msra.mxu0 0.0
      %3149 = vmatprep.subr.mxu0 0.0
      %3150 = vmatpush1.msra.mxu0 0.0
      %3151 = vmatprep.subr.mxu0 0.0
      %3152 = vmatpush1.msra.mxu0 0.0
      %3153 = vmatprep.subr.mxu0 0.0
      %3154 = vmatpush1.msra.mxu0 0.0
      %3155 = vmatprep.subr.mxu0 0.0
      %3156 = vmatpush1.msra.mxu0 0.0
      %3157 = vmatprep.subr.mxu0 0.0
      %3158 = vmatpush1.msra.mxu0 0.0
      %3159 = vmatprep.subr.mxu0 0.0
      %3160 = vmatpush1.msra.mxu0 0.0
      %3161 = vmatprep.subr.mxu0 0.0
      %3162 = vmatpush1.msra.mxu0 0.0
      %3163 = vmatprep.subr.mxu0 0.0
      %3164 = vmatpush1.msra.mxu0 0.0
      %3165 = vmatprep.subr.mxu0 0.0
      %3166 = vmatpush1.msra.mxu0 0.0
      %3167 = vmatprep.subr.mxu0 0.0
      %3168 = vmatpush1.msra.mxu0 0.0
      %3169 = vmatprep.subr.mxu0 0.0
      %3170 = vmatpush1.msra.mxu0 0.0
      %3171 = vmatprep.subr.mxu0 0.0
      %3172 = vmatpush1.msra.mxu0 0.0
      %3173 = vmatprep.subr.mxu0 0.0
      %3174 = vmatpush1.msra.mxu0 0.0
      %3175 = vmatprep.subr.mxu0 0.0
      %3176 = vmatpush1.msra.mxu0 0.0
      %3177 = vmatprep.subr.mxu0 0.0
      %3178 = vmatpush1.msra.mxu0 0.0
      %3179 = vmatprep.subr.mxu0 0.0
      %3180 = vmatpush1.msra.mxu0 0.0
      %3181 = vmatprep.subr.mxu0 0.0
      %3182 = vmatpush1.msra.mxu0 0.0
      %3183 = vmatprep.subr.mxu0 0.0
      %3184 = vmatpush1.msra.mxu0 0.0
      %3185 = vmatprep.subr.mxu0 0.0
      %3186 = vmatpush1.msra.mxu0 0.0
      %3187 = vmatprep.mubr.f32.mxu0 0.0
      %3188 = vmatmul.mubr.f32.gmra.mrb[0].mxu0 %v3121
      %v3189 = vpop.f32.mrb[0].mxu0
      %v3190 = vadd.f32 0.0, %v3189
      %v3191 = vpop.f32.mrb[0].mxu0
      %3192 = vdwg.mxu0
      %v3193 = vadd.f32 %v3025, %v3116
      %3195 = vrot.lane.b32.xlu0 %v2854, 8
      %v3196 = vpop.permute.xlu0 %3195
      %3199 = vrot.lane.b32.xlu0 %v3022, 16
      %v3200 = vpop.permute.xlu0 %3199
      %3203 = vrot.lane.b32.xlu0 %v3190, 24
      %v3204 = vpop.permute.xlu0 %3203
      %v3206 = vsel %vm1555, %v2687, %v3196
      %v3207 = vsel %vm2233, %v3206, %v3200
      %v3208 = vsel %vm2235, %v3207, %v3204
      %v3210 = vlaneseq
      %v3211 = vshrl.u32 %v3210, 7
      %v3212 = vsub.s32 0, %v3211
      %v3213 = vrot.slane %v2360, %v3212
      %v3216 = vsel %vm1434, %v3208, 0
      %3218 = vmatprep.subr.mxu0 0.0
      %3219 = vmatpush1.msra.mxu0 %v2356
      %3220 = vmatprep.subr.mxu0 0.0
      %3221 = vmatpush1.msra.mxu0 %v2357
      %3222 = vmatprep.subr.mxu0 0.0
      %3223 = vmatpush1.msra.mxu0 %v2358
      %3224 = vmatprep.subr.mxu0 0.0
      %3225 = vmatpush1.msra.mxu0 %v2359
      %3226 = vmatprep.subr.mxu0 0.0
      %3227 = vmatpush1.msra.mxu0 0.0
      %3228 = vmatprep.subr.mxu0 0.0
      %3229 = vmatpush1.msra.mxu0 0.0
      %3230 = vmatprep.subr.mxu0 0.0
      %3231 = vmatpush1.msra.mxu0 0.0
      %3232 = vmatprep.subr.mxu0 0.0
      %3233 = vmatpush1.msra.mxu0 0.0
      %3234 = vmatprep.subr.mxu0 0.0
      %3235 = vmatpush1.msra.mxu0 0.0
      %3236 = vmatprep.subr.mxu0 0.0
      %3237 = vmatpush1.msra.mxu0 0.0
      %3238 = vmatprep.subr.mxu0 0.0
      %3239 = vmatpush1.msra.mxu0 0.0
      %3240 = vmatprep.subr.mxu0 0.0
      %3241 = vmatpush1.msra.mxu0 0.0
      %3242 = vmatprep.subr.mxu0 0.0
      %3243 = vmatpush1.msra.mxu0 0.0
      %3244 = vmatprep.subr.mxu0 0.0
      %3245 = vmatpush1.msra.mxu0 0.0
      %3246 = vmatprep.subr.mxu0 0.0
      %3247 = vmatpush1.msra.mxu0 0.0
      %3248 = vmatprep.subr.mxu0 0.0
      %3249 = vmatpush1.msra.mxu0 0.0
      %3250 = vmatprep.subr.mxu0 0.0
      %3251 = vmatpush1.msra.mxu0 0.0
      %3252 = vmatprep.subr.mxu0 0.0
      %3253 = vmatpush1.msra.mxu0 0.0
      %3254 = vmatprep.subr.mxu0 0.0
      %3255 = vmatpush1.msra.mxu0 0.0
      %3256 = vmatprep.subr.mxu0 0.0
      %3257 = vmatpush1.msra.mxu0 0.0
      %3258 = vmatprep.subr.mxu0 0.0
      %3259 = vmatpush1.msra.mxu0 0.0
      %3260 = vmatprep.subr.mxu0 0.0
      %3261 = vmatpush1.msra.mxu0 0.0
      %3262 = vmatprep.subr.mxu0 0.0
      %3263 = vmatpush1.msra.mxu0 0.0
      %3264 = vmatprep.subr.mxu0 0.0
      %3265 = vmatpush1.msra.mxu0 0.0
      %3266 = vmatprep.subr.mxu0 0.0
      %3267 = vmatpush1.msra.mxu0 0.0
      %3268 = vmatprep.subr.mxu0 0.0
      %3269 = vmatpush1.msra.mxu0 0.0
      %3270 = vmatprep.subr.mxu0 0.0
      %3271 = vmatpush1.msra.mxu0 0.0
      %3272 = vmatprep.subr.mxu0 0.0
      %3273 = vmatpush1.msra.mxu0 0.0
      %3274 = vmatprep.subr.mxu0 0.0
      %3275 = vmatpush1.msra.mxu0 0.0
      %3276 = vmatprep.subr.mxu0 0.0
      %3277 = vmatpush1.msra.mxu0 0.0
      %3278 = vmatprep.subr.mxu0 0.0
      %3279 = vmatpush1.msra.mxu0 0.0
      %3280 = vmatprep.subr.mxu0 0.0
      %3281 = vmatpush1.msra.mxu0 0.0
      %3282 = vmatprep.mubr.f32.mxu0 0.0
      %3283 = vmatmul.mubr.f32.gmra.mrb[0].mxu0 %v3216
      %v3284 = vpop.f32.mrb[0].mxu0
      %v3285 = vadd.f32 %v3213, %v3284
      %v3286 = vpop.f32.mrb[0].mxu0
      %3287 = vdwg.mxu0
      %v3288 = vmul.f32 %v3193, 0.25
      %v3289 = vadd.f32 %v2316, %v3285
      %v3290 = vld [vmem:[%s1384] sm:$0x1]
      %v3291 = vld [vmem:[%s1387] sm:$0x1]
      %v3292 = vsel %vm1434, %v3289, 0.0
      %3293 = vadd.xlane.f32.xlu0 %v3292
      %v3294 = vpop.xlane.xlu0 %3293
      %v3295 = vmul.f32 %v3294, %v1438
      %v3296 = vsub.f32 %v3289, %v3295
      %v3297 = vmul.f32 %v3296, %v3296
      %v3298 = vsel %vm1434, %v3297, 0.0
      %3299 = vadd.xlane.f32.xlu0 %v3298
      %v3300 = vpop.xlane.xlu0 %3299
      %v3301 = vmul.f32 %v3300, %v1438
      %v3302 = vadd.f32 %v3301, 1e-05
      %v3303 = vrsqrt.pop %v3302
      %v3304 = vmul.f32 %v3296, %v3303
      %v3306 = vlaneseq
      %v3307 = vshrl.u32 %v3306, 7
      %v3308 = vsub.s32 0, %v3307
      %v3309 = vrot.slane %v3290, %v3308
      %v3311 = vmul.f32 %v3304, %v3309
      %v3313 = vlaneseq
      %v3314 = vshrl.u32 %v3313, 7
      %v3315 = vsub.s32 0, %v3314
      %v3316 = vrot.slane %v3291, %v3315
      %v3318 = vadd.f32 %v3311, %v3316
      %v3319 = vld [vmem:[%s1392] sm:$0xff]
      %v3320 = vld [vmem:[%s1392 + $0x8] sm:$0xff]
      %v3321 = vld [vmem:[%s1392 + $0x10] sm:$0xff]
      %v3322 = vld [vmem:[%s1392 + $0x18] sm:$0xff]
      %v3323 = vld [vmem:[%s1395] sm:$0x1]
      %v3325 = vlaneseq
      %v3326 = vshrl.u32 %v3325, 7
      %v3327 = vsub.s32 0, %v3326
      %v3328 = vrot.slane %v3323, %v3327
      %v3331 = vsel %vm1434, %v3318, 0
      %3333 = vmatprep.subr.mxu0 0.0
      %3334 = vmatpush1.msra.mxu0 %v3319
      %3335 = vmatprep.subr.mxu0 0.0
      %3336 = vmatpush1.msra.mxu0 %v3320
      %3337 = vmatprep.subr.mxu0 0.0
      %3338 = vmatpush1.msra.mxu0 %v3321
      %3339 = vmatprep.subr.mxu0 0.0
      %3340 = vmatpush1.msra.mxu0 %v3322
      %3341 = vmatprep.subr.mxu0 0.0
      %3342 = vmatpush1.msra.mxu0 0.0
      %3343 = vmatprep.subr.mxu0 0.0
      %3344 = vmatpush1.msra.mxu0 0.0
      %3345 = vmatprep.subr.mxu0 0.0
      %3346 = vmatpush1.msra.mxu0 0.0
      %3347 = vmatprep.subr.mxu0 0.0
      %3348 = vmatpush1.msra.mxu0 0.0
      %3349 = vmatprep.subr.mxu0 0.0
      %3350 = vmatpush1.msra.mxu0 0.0
      %3351 = vmatprep.subr.mxu0 0.0
      %3352 = vmatpush1.msra.mxu0 0.0
      %3353 = vmatprep.subr.mxu0 0.0
      %3354 = vmatpush1.msra.mxu0 0.0
      %3355 = vmatprep.subr.mxu0 0.0
      %3356 = vmatpush1.msra.mxu0 0.0
      %3357 = vmatprep.subr.mxu0 0.0
      %3358 = vmatpush1.msra.mxu0 0.0
      %3359 = vmatprep.subr.mxu0 0.0
      %3360 = vmatpush1.msra.mxu0 0.0
      %3361 = vmatprep.subr.mxu0 0.0
      %3362 = vmatpush1.msra.mxu0 0.0
      %3363 = vmatprep.subr.mxu0 0.0
      %3364 = vmatpush1.msra.mxu0 0.0
      %3365 = vmatprep.subr.mxu0 0.0
      %3366 = vmatpush1.msra.mxu0 0.0
      %3367 = vmatprep.subr.mxu0 0.0
      %3368 = vmatpush1.msra.mxu0 0.0
      %3369 = vmatprep.subr.mxu0 0.0
      %3370 = vmatpush1.msra.mxu0 0.0
      %3371 = vmatprep.subr.mxu0 0.0
      %3372 = vmatpush1.msra.mxu0 0.0
      %3373 = vmatprep.subr.mxu0 0.0
      %3374 = vmatpush1.msra.mxu0 0.0
      %3375 = vmatprep.subr.mxu0 0.0
      %3376 = vmatpush1.msra.mxu0 0.0
      %3377 = vmatprep.subr.mxu0 0.0
      %3378 = vmatpush1.msra.mxu0 0.0
      %3379 = vmatprep.subr.mxu0 0.0
      %3380 = vmatpush1.msra.mxu0 0.0
      %3381 = vmatprep.subr.mxu0 0.0
      %3382 = vmatpush1.msra.mxu0 0.0
      %3383 = vmatprep.subr.mxu0 0.0
      %3384 = vmatpush1.msra.mxu0 0.0
      %3385 = vmatprep.subr.mxu0 0.0
      %3386 = vmatpush1.msra.mxu0 0.0
      %3387 = vmatprep.subr.mxu0 0.0
      %3388 = vmatpush1.msra.mxu0 0.0
      %3389 = vmatprep.subr.mxu0 0.0
      %3390 = vmatpush1.msra.mxu0 0.0
      %3391 = vmatprep.subr.mxu0 0.0
      %3392 = vmatpush1.msra.mxu0 0.0
      %3393 = vmatprep.subr.mxu0 0.0
      %3394 = vmatpush1.msra.mxu0 0.0
      %3395 = vmatprep.subr.mxu0 0.0
      %3396 = vmatpush1.msra.mxu0 0.0
      %3397 = vmatprep.mubr.f32.mxu0 0.0
      %3398 = vmatmul.mubr.f32.gmra.mrb[0].mxu0 %v3331
      %v3399 = vpop.f32.mrb[0].mxu0
      %v3400 = vadd.f32 %v3328, %v3399
      %v3401 = vpop.f32.mrb[0].mxu0
      %3402 = vdwg.mxu0
      %v3403 = vmax.f32 %v3400, 0.0
      %v3404 = vld [vmem:[%s1400] sm:$0xff]
      %v3405 = vld [vmem:[%s1400 + $0x8] sm:$0xff]
      %v3406 = vld [vmem:[%s1400 + $0x10] sm:$0xff]
      %v3407 = vld [vmem:[%s1400 + $0x18] sm:$0xff]
      %v3408 = vld [vmem:[%s1400 + $0x20] sm:$0xff]
      %v3409 = vld [vmem:[%s1400 + $0x28] sm:$0xff]
      %v3410 = vld [vmem:[%s1400 + $0x30] sm:$0xff]
      %v3411 = vld [vmem:[%s1400 + $0x38] sm:$0xff]
      %v3412 = vld [vmem:[%s1403] sm:$0x1]
      %v3414 = vlaneseq
      %v3415 = vshrl.u32 %v3414, 7
      %v3416 = vsub.s32 0, %v3415
      %v3417 = vrot.slane %v3412, %v3416
      %vm3419 = vcmask 523264
      %v3421 = vsel %vm3419, %v3403, 0
      %3423 = vmatprep.subr.mxu0 0.0
      %3424 = vmatpush1.msra.mxu0 %v3404
      %3425 = vmatprep.subr.mxu0 0.0
      %3426 = vmatpush1.msra.mxu0 %v3405
      %3427 = vmatprep.subr.mxu0 0.0
      %3428 = vmatpush1.msra.mxu0 %v3406
      %3429 = vmatprep.subr.mxu0 0.0
      %3430 = vmatpush1.msra.mxu0 %v3407
      %3431 = vmatprep.subr.mxu0 0.0
      %3432 = vmatpush1.msra.mxu0 %v3408
      %3433 = vmatprep.subr.mxu0 0.0
      %3434 = vmatpush1.msra.mxu0 %v3409
      %3435 = vmatprep.subr.mxu0 0.0
      %3436 = vmatpush1.msra.mxu0 %v3410
      %3437 = vmatprep.subr.mxu0 0.0
      %3438 = vmatpush1.msra.mxu0 %v3411
      %3439 = vmatprep.subr.mxu0 0.0
      %3440 = vmatpush1.msra.mxu0 0.0
      %3441 = vmatprep.subr.mxu0 0.0
      %3442 = vmatpush1.msra.mxu0 0.0
      %3443 = vmatprep.subr.mxu0 0.0
      %3444 = vmatpush1.msra.mxu0 0.0
      %3445 = vmatprep.subr.mxu0 0.0
      %3446 = vmatpush1.msra.mxu0 0.0
      %3447 = vmatprep.subr.mxu0 0.0
      %3448 = vmatpush1.msra.mxu0 0.0
      %3449 = vmatprep.subr.mxu0 0.0
      %3450 = vmatpush1.msra.mxu0 0.0
      %3451 = vmatprep.subr.mxu0 0.0
      %3452 = vmatpush1.msra.mxu0 0.0
      %3453 = vmatprep.subr.mxu0 0.0
      %3454 = vmatpush1.msra.mxu0 0.0
      %3455 = vmatprep.subr.mxu0 0.0
      %3456 = vmatpush1.msra.mxu0 0.0
      %3457 = vmatprep.subr.mxu0 0.0
      %3458 = vmatpush1.msra.mxu0 0.0
      %3459 = vmatprep.subr.mxu0 0.0
      %3460 = vmatpush1.msra.mxu0 0.0
      %3461 = vmatprep.subr.mxu0 0.0
      %3462 = vmatpush1.msra.mxu0 0.0
      %3463 = vmatprep.subr.mxu0 0.0
      %3464 = vmatpush1.msra.mxu0 0.0
      %3465 = vmatprep.subr.mxu0 0.0
      %3466 = vmatpush1.msra.mxu0 0.0
      %3467 = vmatprep.subr.mxu0 0.0
      %3468 = vmatpush1.msra.mxu0 0.0
      %3469 = vmatprep.subr.mxu0 0.0
      %3470 = vmatpush1.msra.mxu0 0.0
      %3471 = vmatprep.subr.mxu0 0.0
      %3472 = vmatpush1.msra.mxu0 0.0
      %3473 = vmatprep.subr.mxu0 0.0
      %3474 = vmatpush1.msra.mxu0 0.0
      %3475 = vmatprep.subr.mxu0 0.0
      %3476 = vmatpush1.msra.mxu0 0.0
      %3477 = vmatprep.subr.mxu0 0.0
      %3478 = vmatpush1.msra.mxu0 0.0
      %3479 = vmatprep.subr.mxu0 0.0
      %3480 = vmatpush1.msra.mxu0 0.0
      %3481 = vmatprep.subr.mxu0 0.0
      %3482 = vmatpush1.msra.mxu0 0.0
      %3483 = vmatprep.subr.mxu0 0.0
      %3484 = vmatpush1.msra.mxu0 0.0
      %3485 = vmatprep.subr.mxu0 0.0
      %3486 = vmatpush1.msra.mxu0 0.0
      %3487 = vmatprep.mubr.f32.mxu0 0.0
      %3488 = vmatmul.mubr.f32.gmra.mrb[0].mxu0 %v3421
      %v3489 = vpop.f32.mrb[0].mxu0
      %v3490 = vadd.f32 %v3417, %v3489
      %v3491 = vpop.f32.mrb[0].mxu0
      %3492 = vdwg.mxu0
      %v3493 = vadd.f32 %v3289, %v3490
      %3494 = vst.msk [vmem:[#allocation2] sm:$0xff] %vm1434, %v3493
      %p3495 = scmp.eq.s32.totalorder %s85, 1
      // Predicated region
      $region157: #{forward.3} parent=151 // pred_check
        %p3496 = pneg %p3495
      $region158: #{forward.3} parent=151 // pred_check_branch
        %3498 = sbr.rel (%p3496) target = $region160
      $region159: #{forward.3} parent=151 // pred_region
        %v3499 = vld [vmem:[%s51] sm:$0x1]
        %v3500 = vld [vmem:[%s53] sm:$0x1]
        %v3501 = vsel %vm1434, %v3493, 0.0
        %3502 = vadd.xlane.f32.xlu0 %v3501
        %v3503 = vpop.xlane.xlu0 %3502
        %v3504 = vmul.f32 %v3503, %v1438
        %v3505 = vsub.f32 %v3493, %v3504
        %v3506 = vmul.f32 %v3505, %v3505
        %v3507 = vsel %vm1434, %v3506, 0.0
        %3508 = vadd.xlane.f32.xlu0 %v3507
        %v3509 = vpop.xlane.xlu0 %3508
        %v3510 = vmul.f32 %v3509, %v1438
        %v3511 = vadd.f32 %v3510, 1e-05
        %v3512 = vrsqrt.pop %v3511
        %v3513 = vmul.f32 %v3505, %v3512
        %v3515 = vlaneseq
        %v3516 = vshrl.u32 %v3515, 7
        %v3517 = vsub.s32 0, %v3516
        %v3518 = vrot.slane %v3499, %v3517
        %v3520 = vmul.f32 %v3513, %v3518
        %v3522 = vlaneseq
        %v3523 = vshrl.u32 %v3522, 7
        %v3524 = vsub.s32 0, %v3523
        %v3525 = vrot.slane %v3500, %v3524
        %v3527 = vadd.f32 %v3520, %v3525
        %v3528 = vld [vmem:[%s55] sm:$0xff]
        %v3529 = vld [vmem:[%s55 + $0x8] sm:$0xff]
        %v3530 = vld [vmem:[%s55 + $0x10] sm:$0xff]
        %v3531 = vld [vmem:[%s55 + $0x18] sm:$0xff]
        %v3532 = vld [vmem:[%s57] sm:$0x1]
        %v3534 = vlaneseq
        %v3535 = vshrl.u32 %v3534, 7
        %v3536 = vsub.s32 0, %v3535
        %v3537 = vrot.slane %v3532, %v3536
        %v3540 = vsel %vm1434, %v3527, 0
        %3542 = vmatprep.subr.mxu0 0.0
        %3543 = vmatpush1.msra.mxu0 %v3528
        %3544 = vmatprep.subr.mxu0 0.0
        %3545 = vmatpush1.msra.mxu0 %v3529
        %3546 = vmatprep.subr.mxu0 0.0
        %3547 = vmatpush1.msra.mxu0 %v3530
        %3548 = vmatprep.subr.mxu0 0.0
        %3549 = vmatpush1.msra.mxu0 %v3531
        %3550 = vmatprep.subr.mxu0 0.0
        %3551 = vmatpush1.msra.mxu0 0.0
        %3552 = vmatprep.subr.mxu0 0.0
        %3553 = vmatpush1.msra.mxu0 0.0
        %3554 = vmatprep.subr.mxu0 0.0
        %3555 = vmatpush1.msra.mxu0 0.0
        %3556 = vmatprep.subr.mxu0 0.0
        %3557 = vmatpush1.msra.mxu0 0.0
        %3558 = vmatprep.subr.mxu0 0.0
        %3559 = vmatpush1.msra.mxu0 0.0
        %3560 = vmatprep.subr.mxu0 0.0
        %3561 = vmatpush1.msra.mxu0 0.0
        %3562 = vmatprep.subr.mxu0 0.0
        %3563 = vmatpush1.msra.mxu0 0.0
        %3564 = vmatprep.subr.mxu0 0.0
        %3565 = vmatpush1.msra.mxu0 0.0
        %3566 = vmatprep.subr.mxu0 0.0
        %3567 = vmatpush1.msra.mxu0 0.0
        %3568 = vmatprep.subr.mxu0 0.0
        %3569 = vmatpush1.msra.mxu0 0.0
        %3570 = vmatprep.subr.mxu0 0.0
        %3571 = vmatpush1.msra.mxu0 0.0
        %3572 = vmatprep.subr.mxu0 0.0
        %3573 = vmatpush1.msra.mxu0 0.0
        %3574 = vmatprep.subr.mxu0 0.0
        %3575 = vmatpush1.msra.mxu0 0.0
        %3576 = vmatprep.subr.mxu0 0.0
        %3577 = vmatpush1.msra.mxu0 0.0
        %3578 = vmatprep.subr.mxu0 0.0
        %3579 = vmatpush1.msra.mxu0 0.0
        %3580 = vmatprep.subr.mxu0 0.0
        %3581 = vmatpush1.msra.mxu0 0.0
        %3582 = vmatprep.subr.mxu0 0.0
        %3583 = vmatpush1.msra.mxu0 0.0
        %3584 = vmatprep.subr.mxu0 0.0
        %3585 = vmatpush1.msra.mxu0 0.0
        %3586 = vmatprep.subr.mxu0 0.0
        %3587 = vmatpush1.msra.mxu0 0.0
        %3588 = vmatprep.subr.mxu0 0.0
        %3589 = vmatpush1.msra.mxu0 0.0
        %3590 = vmatprep.subr.mxu0 0.0
        %3591 = vmatpush1.msra.mxu0 0.0
        %3592 = vmatprep.subr.mxu0 0.0
        %3593 = vmatpush1.msra.mxu0 0.0
        %3594 = vmatprep.subr.mxu0 0.0
        %3595 = vmatpush1.msra.mxu0 0.0
        %3596 = vmatprep.subr.mxu0 0.0
        %3597 = vmatpush1.msra.mxu0 0.0
        %3598 = vmatprep.subr.mxu0 0.0
        %3599 = vmatpush1.msra.mxu0 0.0
        %3600 = vmatprep.subr.mxu0 0.0
        %3601 = vmatpush1.msra.mxu0 0.0
        %3602 = vmatprep.subr.mxu0 0.0
        %3603 = vmatpush1.msra.mxu0 0.0
        %3604 = vmatprep.subr.mxu0 0.0
        %3605 = vmatpush1.msra.mxu0 0.0
        %3606 = vmatprep.mubr.f32.mxu0 0.0
        %3607 = vmatmul.mubr.f32.gmra.mrb[0].mxu0 %v3540
        %v3608 = vpop.f32.mrb[0].mxu0
        %v3609 = vadd.f32 %v3537, %v3608
        %v3610 = vpop.f32.mrb[0].mxu0
        %3611 = vdwg.mxu0
        %3612 = vmax.xlane.f32.xlu0 %v3609
        %v3613 = vpop.xlane.xlu0 %3612
        %v3614 = vsub.f32 %v3609, %v3613
        %v3615 = vmul.f32 %v3614, 1.442695
        %v3616 = vpow.pop %v3615
        %3617 = vadd.xlane.f32.xlu0 %v3616
        %v3618 = vpop.xlane.xlu0 %3617
        %v3619 = vrcp.pop %v3618
        %v3620 = vmul.f32 %v3616, %v3619
        %v3622 = vsel %vm1555, %v3288, 0
        %3624 = vmatprep.subr.mxu0 0.0
        %3625 = vmatpush1.msra.mxu0 %v1416
        %3626 = vmatprep.subr.mxu0 0.0
        %3627 = vmatpush1.msra.mxu0 0.0
        %3628 = vmatprep.subr.mxu0 0.0
        %3629 = vmatpush1.msra.mxu0 0.0
        %3630 = vmatprep.subr.mxu0 0.0
        %3631 = vmatpush1.msra.mxu0 0.0
        %3632 = vmatprep.subr.mxu0 0.0
        %3633 = vmatpush1.msra.mxu0 0.0
        %3634 = vmatprep.subr.mxu0 0.0
        %3635 = vmatpush1.msra.mxu0 0.0
        %3636 = vmatprep.subr.mxu0 0.0
        %3637 = vmatpush1.msra.mxu0 0.0
        %3638 = vmatprep.subr.mxu0 0.0
        %3639 = vmatpush1.msra.mxu0 0.0
        %3640 = vmatprep.subr.mxu0 0.0
        %3641 = vmatpush1.msra.mxu0 0.0
        %3642 = vmatprep.subr.mxu0 0.0
        %3643 = vmatpush1.msra.mxu0 0.0
        %3644 = vmatprep.subr.mxu0 0.0
        %3645 = vmatpush1.msra.mxu0 0.0
        %3646 = vmatprep.subr.mxu0 0.0
        %3647 = vmatpush1.msra.mxu0 0.0
        %3648 = vmatprep.subr.mxu0 0.0
        %3649 = vmatpush1.msra.mxu0 0.0
        %3650 = vmatprep.subr.mxu0 0.0
        %3651 = vmatpush1.msra.mxu0 0.0
        %3652 = vmatprep.subr.mxu0 0.0
        %3653 = vmatpush1.msra.mxu0 0.0
        %3654 = vmatprep.subr.mxu0 0.0
        %3655 = vmatpush1.msra.mxu0 0.0
        %3656 = vmatprep.subr.mxu0 0.0
        %3657 = vmatpush1.msra.mxu0 0.0
        %3658 = vmatprep.subr.mxu0 0.0
        %3659 = vmatpush1.msra.mxu0 0.0
        %3660 = vmatprep.subr.mxu0 0.0
        %3661 = vmatpush1.msra.mxu0 0.0
        %3662 = vmatprep.subr.mxu0 0.0
        %3663 = vmatpush1.msra.mxu0 0.0
        %3664 = vmatprep.subr.mxu0 0.0
        %3665 = vmatpush1.msra.mxu0 0.0
        %3666 = vmatprep.subr.mxu0 0.0
        %3667 = vmatpush1.msra.mxu0 0.0
        %3668 = vmatprep.subr.mxu0 0.0
        %3669 = vmatpush1.msra.mxu0 0.0
        %3670 = vmatprep.subr.mxu0 0.0
        %3671 = vmatpush1.msra.mxu0 0.0
        %3672 = vmatprep.subr.mxu0 0.0
        %3673 = vmatpush1.msra.mxu0 0.0
        %3674 = vmatprep.subr.mxu0 0.0
        %3675 = vmatpush1.msra.mxu0 0.0
        %3676 = vmatprep.subr.mxu0 0.0
        %3677 = vmatpush1.msra.mxu0 0.0
        %3678 = vmatprep.subr.mxu0 0.0
        %3679 = vmatpush1.msra.mxu0 0.0
        %3680 = vmatprep.subr.mxu0 0.0
        %3681 = vmatpush1.msra.mxu0 0.0
        %3682 = vmatprep.subr.mxu0 0.0
        %3683 = vmatpush1.msra.mxu0 0.0
        %3684 = vmatprep.subr.mxu0 0.0
        %3685 = vmatpush1.msra.mxu0 0.0
        %3686 = vmatprep.subr.mxu0 0.0
        %3687 = vmatpush1.msra.mxu0 0.0
        %3688 = vmatprep.mubr.f32.mxu0 0.0
        %3689 = vmatmul.mubr.f32.gmra.mrb[0].mxu0 %v3622
        %v3690 = vpop.f32.mrb[0].mxu0
        %v3691 = vadd.f32 0.0, %v3690
        %v3692 = vpop.f32.mrb[0].mxu0
        %3693 = vdwg.mxu0
        %v3694 = vld [vmem:[%s1329] sm:$0xff]
        %3695 = vset.pattern.permute.xlu0 0
        %3696 = vperm.xlu0 %3695, %v3694
        %v3697 = vpop.permute.xlu0 %3696
        %vm3698 = vcmp.eq.s32.totalorder %v3697, %v1420
        %v3699 = vsel %vm3698, 1, 0
        %v3700 = vcvt.s32.f32 %v3699
        %3701 = vmatprep.subr.mxu0 0.0
        %3702 = vmatpush1.msra.mxu0 %v3700
        %3703 = vmatprep.subr.mxu0 0.0
        %3704 = vmatpush1.msra.mxu0 0.0
        %3705 = vmatprep.subr.mxu0 0.0
        %3706 = vmatpush1.msra.mxu0 0.0
        %3707 = vmatprep.subr.mxu0 0.0
        %3708 = vmatpush1.msra.mxu0 0.0
        %3709 = vmatprep.subr.mxu0 0.0
        %3710 = vmatpush1.msra.mxu0 0.0
        %3711 = vmatprep.subr.mxu0 0.0
        %3712 = vmatpush1.msra.mxu0 0.0
        %3713 = vmatprep.subr.mxu0 0.0
        %3714 = vmatpush1.msra.mxu0 0.0
        %3715 = vmatprep.subr.mxu0 0.0
        %3716 = vmatpush1.msra.mxu0 0.0
        %3717 = vmatprep.subr.mxu0 0.0
        %3718 = vmatpush1.msra.mxu0 0.0
        %3719 = vmatprep.subr.mxu0 0.0
        %3720 = vmatpush1.msra.mxu0 0.0
        %3721 = vmatprep.subr.mxu0 0.0
        %3722 = vmatpush1.msra.mxu0 0.0
        %3723 = vmatprep.subr.mxu0 0.0
        %3724 = vmatpush1.msra.mxu0 0.0
        %3725 = vmatprep.subr.mxu0 0.0
        %3726 = vmatpush1.msra.mxu0 0.0
        %3727 = vmatprep.subr.mxu0 0.0
        %3728 = vmatpush1.msra.mxu0 0.0
        %3729 = vmatprep.subr.mxu0 0.0
        %3730 = vmatpush1.msra.mxu0 0.0
        %3731 = vmatprep.subr.mxu0 0.0
        %3732 = vmatpush1.msra.mxu0 0.0
        %3733 = vmatprep.subr.mxu0 0.0
        %3734 = vmatpush1.msra.mxu0 0.0
        %3735 = vmatprep.subr.mxu0 0.0
        %3736 = vmatpush1.msra.mxu0 0.0
        %3737 = vmatprep.subr.mxu0 0.0
        %3738 = vmatpush1.msra.mxu0 0.0
        %3739 = vmatprep.subr.mxu0 0.0
        %3740 = vmatpush1.msra.mxu0 0.0
        %3741 = vmatprep.subr.mxu0 0.0
        %3742 = vmatpush1.msra.mxu0 0.0
        %3743 = vmatprep.subr.mxu0 0.0
        %3744 = vmatpush1.msra.mxu0 0.0
        %3745 = vmatprep.subr.mxu0 0.0
        %3746 = vmatpush1.msra.mxu0 0.0
        %3747 = vmatprep.subr.mxu0 0.0
        %3748 = vmatpush1.msra.mxu0 0.0
        %3749 = vmatprep.subr.mxu0 0.0
        %3750 = vmatpush1.msra.mxu0 0.0
        %3751 = vmatprep.subr.mxu0 0.0
        %3752 = vmatpush1.msra.mxu0 0.0
        %3753 = vmatprep.subr.mxu0 0.0
        %3754 = vmatpush1.msra.mxu0 0.0
        %3755 = vmatprep.subr.mxu0 0.0
        %3756 = vmatpush1.msra.mxu0 0.0
        %3757 = vmatprep.subr.mxu0 0.0
        %3758 = vmatpush1.msra.mxu0 0.0
        %3759 = vmatprep.subr.mxu0 0.0
        %3760 = vmatpush1.msra.mxu0 0.0
        %3761 = vmatprep.subr.mxu0 0.0
        %3762 = vmatpush1.msra.mxu0 0.0
        %3763 = vmatprep.subr.mxu0 0.0
        %3764 = vmatpush1.msra.mxu0 0.0
        %3765 = vmatprep.mubr.f32.mxu0 0.0
        %3766 = vmatmul.mubr.f32.gmra.mrb[0].mxu0 %v3622
        %v3767 = vpop.f32.mrb[0].mxu0
        %v3768 = vadd.f32 0.0, %v3767
        %v3769 = vpop.f32.mrb[0].mxu0
        %3770 = vdwg.mxu0
        %v3771 = vld [vmem:[%s1315] sm:$0xff]
        %v3772 = vld [vmem:[%s59] sm:$0x1]
        %v3774 = vlaneseq
        %v3775 = vshrl.u32 %v3774, 7
        %v3776 = vsub.s32 0, %v3775
        %v3777 = vrot.slane %v3772, %v3776
        %v3779 = vmul.f32 %v3691, %v3777
        %v3780 = vsel %vm1434, %v3779, 0.0
        %3781 = vadd.xlane.f32.xlu0 %v3780
        %v3782 = vpop.xlane.xlu0 %3781
        %v3783 = vld [vmem:[%s61] sm:$0x1]
        %v3785 = vlaneseq
        %v3786 = vshrl.u32 %v3785, 7
        %v3787 = vsub.s32 0, %v3786
        %v3788 = vrot.slane %v3783, %v3787
        %v3790 = vmul.f32 %v3527, %v3788
        %v3791 = vsel %vm1434, %v3790, 0.0
        %3792 = vadd.xlane.f32.xlu0 %v3791
        %v3793 = vpop.xlane.xlu0 %3792
        %v3794 = vadd.f32 %v3782, %v3793
        %v3795 = vld [vmem:[%s63] sm:$0x1]
        %v3797 = vlaneseq
        %v3798 = vshrl.u32 %v3797, 7
        %v3799 = vsub.s32 0, %v3798
        %v3800 = vrot.slane %v3795, %v3799
        %v3802 = vmul.f32 %v3771, %v3800
        %v3803 = vsel %vm1434, %v3802, 0.0
        %3804 = vadd.xlane.f32.xlu0 %v3803
        %v3805 = vpop.xlane.xlu0 %3804
        %v3806 = vadd.f32 %v3794, %v3805
        %v3807 = vld [vmem:[#allocation3] sm:$0x1]
        %v3809 = vlaneseq
        %v3810 = vshrl.u32 %v3809, 7
        %v3811 = vsub.s32 0, %v3810
        %v3812 = vrot.slane %v3807, %v3811
        %v3814 = vadd.f32 %v3806, %v3812
        %v3815 = vsub.f32 0.0, %v3814
        %v3816 = vmul.f32 %v3815, 1.442695
        %v3817 = vpow.pop %v3816
        %v3818 = vadd.f32 %v3817, 1.0
        %v3819 = vrcp.pop %v3818
        %v3820 = vmul.f32 1.0, %v3819
        %3822 = vset.pattern.permute.xlu0 0
        %3823 = vperm.xlu0 %3822, %v3820
        %v3824 = vpop.permute.xlu0 %3823
        %v3826 = vmul.f32 %v3620, %v3824
        %v3827 = vsub.f32 1.0, %v3820
        %3829 = vset.pattern.permute.xlu0 0
        %3830 = vperm.xlu0 %3829, %v3827
        %v3831 = vpop.permute.xlu0 %3830
        %v3833 = vmul.f32 %v3768, %v3831
        %v3834 = vadd.f32 %v3826, %v3833
        %vm3835 = vcmp.lt.s32.totalorder %v1420, 18
        %v3836 = vlog2.pop %v3834
        %v3837 = vmul.f32 %v3836, 0.6931472
        %v3838 = vsel %vm3835, %v3837, 0.0
        %3839 = vst [vmem:[%s1407] sm:$0xff] %v3838
      $region160: #{forward.3} parent=151 // pred_fallthru
        _
      %p3840 = scmp.lt.s32.totalorder %s84, 1
      %s3841 = scalar_select %p3840, %s84, 1
      %s3842 = smul.addr %s3841, 8
      %s3843 = scalar_lea.vmem %s67, %s3842
      // Predicated region
      $region161: #{forward.3} parent=151 // pred_check
        %p3844 = pneg %p928
      $region162: #{forward.3} parent=151 // pred_check_branch
        %3846 = sbr.rel (%p3844) target = $region164
      $region163: #{forward.3} parent=151 // pred_region
        _
      $region164: #{forward.3} parent=151 // pred_fallthru
        _
    $region152: #{forward.3} parent=5 // pred_fallthru
      _
    %p3847 = scmp.le.s32.totalorder 2, %s75
    // Predicated region
    $region165: #{forward.3} parent=5 // pred_check
      %p3848 = pneg %p3847
    $region166: #{forward.3} parent=5 // pred_check_branch
      %3850 = sbr.rel (%p3848) target = $region168
    $region167: #{forward.3} parent=5 // pred_region
      %s3851 = ssub.s32 %s75, 2
      // Predicated region
      $region169: #{forward.3} parent=167 // pred_check
        %p3852 = pneg %p934
      $region170: #{forward.3} parent=167 // pred_check_branch
        %3854 = sbr.rel (%p3852) target = $region172
      $region171: #{forward.3} parent=167 // pred_region
        %p3855 = scmp.lt.s32.totalorder %s86, 1
        %s3856 = scalar_select %p3855, %s86, 1
        %s3857 = smul.addr %s3856, 8
        %s3858 = scalar_lea.vmem %s67, %s3857
      $region172: #{forward.3} parent=167 // pred_fallthru
        _
    $region168: #{forward.3} parent=5 // pred_fallthru
      _
  $region6: #{forward.3} parent=0 // loop_footer
    %s79 = sadd.s32 1, %s75
  $region7: #{forward.3} parent=0 // loop_footer_branch
    %74 = sbr.rel target = $region3
  $region8: #{forward.3} parent=0 // loop_exit
    _

</llo_original>
